<compile_context>
chip_gen: v7x
topology: tpu7x:2x2x1
jax: 0.10.0
libtpu: 0.0.40
codegen_flags: <defaults>
</compile_context>

<pallas_src>
import functools

import jax
import jax.numpy as jnp
import numpy as np
from jax import lax
from jax.experimental import pallas as pl
from jax.experimental.pallas import tpu as pltpu


def _lighthead_kernel(x_ref, w1l_ref, w1r_ref, w2_ref, blu_ref, bru_ref, b2_ref,
                      out_ref, *, k, p):
    Hp, Wp, cin = x_ref.shape[1], x_ref.shape[2], x_ref.shape[3]
    H, W = Hp - 2 * p, Wp - 2 * p
    mid = w1l_ref.shape[1]
    cout = out_ref.shape[1]

    x = x_ref[0]  # (Hp, Wp, cin) f32, spatially pre-padded NHWC

    dot = functools.partial(jnp.dot, preferred_element_type=jnp.float32)
    bf16 = jnp.bfloat16

    # ---- first convs: all k taps folded into one bf16 MXU contraction -------
    # left branch: (k,1) conv over H, evaluated on all Wp columns
    slab_l = jnp.concatenate([x[t:t + H] for t in range(k)], axis=-1)       # (H, Wp, k*cin)
    mid_l = dot(slab_l.reshape(H * Wp, k * cin).astype(bf16), w1l_ref[...])
    mid_l = mid_l.reshape(H, Wp, mid) + blu_ref[...]    # masked bias: zero on W-halo

    # right branch: (1,k) conv over W, evaluated on all Hp rows
    slab_r = jnp.concatenate([x[:, t:t + W, :] for t in range(k)], axis=-1)  # (Hp, W, k*cin)
    mid_r = dot(slab_r.reshape(Hp * W, k * cin).astype(bf16), w1r_ref[...])
    mid_r = mid_r.reshape(Hp, W, mid) + bru_ref[...]    # masked bias: zero on H-halo

    # ---- second convs of both branches merged into one K = 2*k*mid matmul ---
    slab2 = jnp.concatenate(
        [mid_l[:, t:t + W, :] for t in range(k)]   # left branch: taps over W
        + [mid_r[t:t + H] for t in range(k)],      # right branch: taps over H
        axis=-1)                                   # (H, W, 2*k*mid)
    acc = dot(slab2.reshape(H * W, 2 * k * mid).astype(bf16), w2_ref[...])   # (H*W, cout_p)
    acc = acc + b2_ref[...]                        # bld + brd pre-summed, added once

    # lane-dense channel-major output: aligned f32 transpose, slice to real cout
    out_ref[0] = jnp.transpose(acc)[:cout, :]      # (cout, H*W)


def light_head_block(x_nchw, params, *, kernel_size):
    """Pallas implementation of LightHeadBlock.forward.  x_nchw: (N,Cin,H,W)."""
    k = kernel_size
    p = (k - 1) // 2
    wlu, blu, wld, bld, wru, bru, wrd, brd = params
    N, cin, H, W = x_nchw.shape
    mid = wlu.shape[2]
    cout = wld.shape[2]
    Hp, Wp = H + 2 * p, W + 2 * p
    HW = H * W
    cout_p = ((cout + 127) // 128) * 128  # pad out-channels to full lane tiles

    # NCHW -> NHWC + spatial zero pad (one fused XLA pass over the small input).
    x = jnp.transpose(x_nchw, (0, 2, 3, 1)).astype(jnp.float32)
    x = jnp.pad(x, ((0, 0), (p, p), (p, p), (0, 0)))

    # Tap-folded weights (single MXU contraction per conv), cast to bf16.
    w1l = wlu.reshape(k * cin, mid).astype(jnp.bfloat16)
    w1r = wru.reshape(k * cin, mid).astype(jnp.bfloat16)
    w2 = jnp.concatenate([wld.reshape(k * mid, cout),
                          wrd.reshape(k * mid, cout)], axis=0)
    w2 = jnp.pad(w2, ((0, 0), (0, cout_p - cout))).astype(jnp.bfloat16)

    # Precomputed masked first-conv biases (zero on halo positions) -- replaces
    # the in-kernel iota/where masks.
    col = jnp.arange(Wp)
    blu_row = jnp.where(((col >= p) & (col < p + W))[:, None],
                        blu[0][None, :], 0.0).astype(jnp.float32)          # (Wp, mid)
    row = jnp.arange(Hp)
    bru_col = jnp.where(((row >= p) & (row < p + H))[:, None, None],
                        bru[0][None, None, :], 0.0).astype(jnp.float32)    # (Hp, 1, mid)

    b2 = jnp.pad((bld + brd).astype(jnp.float32),
                 ((0, 0), (0, cout_p - cout)))                             # (1, cout_p)

    kernel = functools.partial(_lighthead_kernel, k=k, p=p)
    out = pl.pallas_call(
        kernel,
        out_shape=jax.ShapeDtypeStruct((N, cout, HW), jnp.float32),
        grid_spec=pltpu.PrefetchScalarGridSpec(
            num_scalar_prefetch=0,
            grid=(N,),
            in_specs=[
                pl.BlockSpec((1, Hp, Wp, cin), lambda n: (n, 0, 0, 0)),
                pl.BlockSpec((k * cin, mid), lambda n: (0, 0)),
                pl.BlockSpec((k * cin, mid), lambda n: (0, 0)),
                pl.BlockSpec((2 * k * mid, cout_p), lambda n: (0, 0)),
                pl.BlockSpec((Wp, mid), lambda n: (0, 0)),
                pl.BlockSpec((Hp, 1, mid), lambda n: (0, 0, 0)),
                pl.BlockSpec((1, cout_p), lambda n: (0, 0)),
            ],
            out_specs=pl.BlockSpec((1, cout, HW), lambda n: (n, 0, 0)),
        ),
        compiler_params=pltpu.CompilerParams(
            dimension_semantics=("parallel",)),
    )(x, w1l, w1r, w2, blu_row, bru_col, b2)
    # Output already channel-major (NCHW flat); this reshape is metadata only.
    return out.reshape(N, cout, H, W)


def reference(x_nchw, params, *, kernel_size):
    """Pure-JAX reference (lax.conv) matching the PyTorch module exactly."""
    k = kernel_size
    p = (k - 1) // 2
    wlu, blu, wld, bld, wru, bru, wrd, brd = params
    dn = ('NCHW', 'OIHW', 'NCHW')

    def conv(x, w_oihw, b, pad):
        y = lax.conv_general_dilated(x, w_oihw, (1, 1), pad,
                                     dimension_numbers=dn,
                                     precision=lax.Precision.HIGHEST)
        return y + b.reshape(1, -1, 1, 1)

    wlu_o = jnp.transpose(wlu, (2, 1, 0))[:, :, :, None]   # (mid,cin,k,1)
    wld_o = jnp.transpose(wld, (2, 1, 0))[:, :, None, :]   # (cout,mid,1,k)
    wru_o = jnp.transpose(wru, (2, 1, 0))[:, :, None, :]   # (mid,cin,1,k)
    wrd_o = jnp.transpose(wrd, (2, 1, 0))[:, :, :, None]   # (cout,mid,k,1)

    xl = conv(conv(x_nchw, wlu_o, blu[0], ((p, p), (0, 0))),
              wld_o, bld[0], ((0, 0), (p, p)))
    xr = conv(conv(x_nchw, wru_o, bru[0], ((0, 0), (p, p))),
              wrd_o, brd[0], ((p, p), (0, 0)))
    return xl + xr


if __name__ == "__main__":
    # Small, module-consistent shapes: in_chs=4, mid_chs=8, out_chs=16,
    # kernel_size=9 (pad=4), batch=2, spatial 16x16.
    N, Cin, H, W = 2, 4, 16, 16
    Mid, Cout, K = 8, 16, 9

    key = jax.random.PRNGKey(0)
    ks = jax.random.split(key, 9)
    s = 0.1
    # Per-tap weight layout: vertical/horizontal 1-D conv weights as (k, Cin, Cout).
    wlu = jax.random.normal(ks[0], (K, Cin, Mid), jnp.float32) * s   # conv_lu (k,1)
    blu = jax.random.normal(ks[1], (1, Mid), jnp.float32) * s
    wld = jax.random.normal(ks[2], (K, Mid, Cout), jnp.float32) * s  # conv_ld (1,k)
    bld = jax.random.normal(ks[3], (1, Cout), jnp.float32) * s
    wru = jax.random.normal(ks[4], (K, Cin, Mid), jnp.float32) * s   # conv_ru (1,k)
    bru = jax.random.normal(ks[5], (1, Mid), jnp.float32) * s
    wrd = jax.random.normal(ks[6], (K, Mid, Cout), jnp.float32) * s  # conv_rd (k,1)
    brd = jax.random.normal(ks[7], (1, Cout), jnp.float32) * s
    params = (wlu, blu, wld, bld, wru, bru, wrd, brd)

    x = jax.random.normal(ks[8], (N, Cin, H, W), jnp.float32)

    out = light_head_block(x, params, kernel_size=K)
    out = jax.block_until_ready(out)

    ref = reference(x, params, kernel_size=K)
    np.testing.assert_allclose(np.asarray(out), np.asarray(ref),
                               rtol=2e-2, atol=2e-2)
    print("KERNEL_OK")
</pallas_src>

<mosaic_0001>
module attributes {stable_mosaic.version = 11 : i64} {
  func.func @_lighthead_kernel(%arg0: i32, %arg1: memref<1x24x24x4xf32, #tpu.memory_space<vmem>>, %arg2: memref<36x8xbf16, #tpu.memory_space<vmem>>, %arg3: memref<36x8xbf16, #tpu.memory_space<vmem>>, %arg4: memref<144x128xbf16, #tpu.memory_space<vmem>>, %arg5: memref<24x8xf32, #tpu.memory_space<vmem>>, %arg6: memref<24x1x8xf32, #tpu.memory_space<vmem>>, %arg7: memref<1x128xf32, #tpu.memory_space<vmem>>, %arg8: memref<1x16x256xf32, #tpu.memory_space<vmem>>) attributes {dimension_semantics = [#tpu.dimension_semantics<parallel>], iteration_bounds = array<i64: 2>, scalar_prefetch = 0 : i64, scratch_operands = 0 : i64, tpu.core_type = #tpu.core_type<tc>, window_params = [{transform_indices = @transform_0, window_bounds = array<i64: 1, 24, 24, 4>}, {pipeline_mode = #tpu.pipeline_mode<synchronous>, transform_indices = @transform_1, window_bounds = array<i64: 36, 8>}, {pipeline_mode = #tpu.pipeline_mode<synchronous>, transform_indices = @transform_2, window_bounds = array<i64: 36, 8>}, {pipeline_mode = #tpu.pipeline_mode<synchronous>, transform_indices = @transform_3, window_bounds = array<i64: 144, 128>}, {pipeline_mode = #tpu.pipeline_mode<synchronous>, transform_indices = @transform_4, window_bounds = array<i64: 24, 8>}, {pipeline_mode = #tpu.pipeline_mode<synchronous>, transform_indices = @transform_5, window_bounds = array<i64: 24, 1, 8>}, {pipeline_mode = #tpu.pipeline_mode<synchronous>, transform_indices = @transform_6, window_bounds = array<i64: 1, 128>}, {transform_indices = @transform_7, window_bounds = array<i64: 1, 16, 256>}]} {
    %c0 = arith.constant 0 : index
    %c0_0 = arith.constant 0 : index
    %c0_1 = arith.constant 0 : index
    %c0_2 = arith.constant 0 : index
    %0 = vector.load %arg1[%c0, %c0_0, %c0_1, %c0_2] : memref<1x24x24x4xf32, #tpu.memory_space<vmem>>, vector<1x24x24x4xf32>
    %1 = vector.shape_cast %0 : vector<1x24x24x4xf32> to vector<24x24x4xf32>
    %2 = vector.extract_strided_slice %1 {offsets = [0, 0, 0], sizes = [16, 24, 4], strides = [1, 1, 1]} : vector<24x24x4xf32> to vector<16x24x4xf32>
    %3 = vector.extract_strided_slice %1 {offsets = [1, 0, 0], sizes = [16, 24, 4], strides = [1, 1, 1]} : vector<24x24x4xf32> to vector<16x24x4xf32>
    %4 = vector.extract_strided_slice %1 {offsets = [2, 0, 0], sizes = [16, 24, 4], strides = [1, 1, 1]} : vector<24x24x4xf32> to vector<16x24x4xf32>
    %5 = vector.extract_strided_slice %1 {offsets = [3, 0, 0], sizes = [16, 24, 4], strides = [1, 1, 1]} : vector<24x24x4xf32> to vector<16x24x4xf32>
    %6 = vector.extract_strided_slice %1 {offsets = [4, 0, 0], sizes = [16, 24, 4], strides = [1, 1, 1]} : vector<24x24x4xf32> to vector<16x24x4xf32>
    %7 = vector.extract_strided_slice %1 {offsets = [5, 0, 0], sizes = [16, 24, 4], strides = [1, 1, 1]} : vector<24x24x4xf32> to vector<16x24x4xf32>
    %8 = vector.extract_strided_slice %1 {offsets = [6, 0, 0], sizes = [16, 24, 4], strides = [1, 1, 1]} : vector<24x24x4xf32> to vector<16x24x4xf32>
    %9 = vector.extract_strided_slice %1 {offsets = [7, 0, 0], sizes = [16, 24, 4], strides = [1, 1, 1]} : vector<24x24x4xf32> to vector<16x24x4xf32>
    %10 = vector.extract_strided_slice %1 {offsets = [8, 0, 0], sizes = [16, 24, 4], strides = [1, 1, 1]} : vector<24x24x4xf32> to vector<16x24x4xf32>
    %11 = tpu.concatenate %2, %3, %4, %5, %6, %7, %8, %9, %10 in 2 : vector<16x24x4xf32>, vector<16x24x4xf32>, vector<16x24x4xf32>, vector<16x24x4xf32>, vector<16x24x4xf32>, vector<16x24x4xf32>, vector<16x24x4xf32>, vector<16x24x4xf32>, vector<16x24x4xf32> -> vector<16x24x36xf32>
    %12 = vector.shape_cast %11 : vector<16x24x36xf32> to vector<384x36xf32>
    %13 = arith.truncf %12 : vector<384x36xf32> to vector<384x36xbf16>
    %c0_3 = arith.constant 0 : index
    %c0_4 = arith.constant 0 : index
    %14 = vector.load %arg2[%c0_3, %c0_4] : memref<36x8xbf16, #tpu.memory_space<vmem>>, vector<36x8xbf16>
    %cst = arith.constant dense<0.000000e+00> : vector<384x8xf32>
    %15 = tpu.matmul %13, %14, %cst {dimension_numbers = #tpu.dot_dimension_numbers<[1], [0], [0], [1], [0, 0, 1, 1], [], []>} : vector<384x36xbf16>, vector<36x8xbf16>, vector<384x8xf32> -> vector<384x8xf32>
    %16 = vector.shape_cast %15 : vector<384x8xf32> to vector<16x24x8xf32>
    %c0_5 = arith.constant 0 : index
    %c0_6 = arith.constant 0 : index
    %17 = vector.load %arg5[%c0_5, %c0_6] : memref<24x8xf32, #tpu.memory_space<vmem>>, vector<24x8xf32>
    %18 = vector.shape_cast %17 : vector<24x8xf32> to vector<1x24x8xf32>
    %19 = vector.broadcast %18 : vector<1x24x8xf32> to vector<16x24x8xf32>
    %20 = arith.addf %16, %19 : vector<16x24x8xf32>
    %21 = vector.extract_strided_slice %1 {offsets = [0, 0, 0], sizes = [24, 16, 4], strides = [1, 1, 1]} : vector<24x24x4xf32> to vector<24x16x4xf32>
    %22 = vector.extract_strided_slice %1 {offsets = [0, 1, 0], sizes = [24, 16, 4], strides = [1, 1, 1]} : vector<24x24x4xf32> to vector<24x16x4xf32>
    %23 = vector.extract_strided_slice %1 {offsets = [0, 2, 0], sizes = [24, 16, 4], strides = [1, 1, 1]} : vector<24x24x4xf32> to vector<24x16x4xf32>
    %24 = vector.extract_strided_slice %1 {offsets = [0, 3, 0], sizes = [24, 16, 4], strides = [1, 1, 1]} : vector<24x24x4xf32> to vector<24x16x4xf32>
    %25 = vector.extract_strided_slice %1 {offsets = [0, 4, 0], sizes = [24, 16, 4], strides = [1, 1, 1]} : vector<24x24x4xf32> to vector<24x16x4xf32>
    %26 = vector.extract_strided_slice %1 {offsets = [0, 5, 0], sizes = [24, 16, 4], strides = [1, 1, 1]} : vector<24x24x4xf32> to vector<24x16x4xf32>
    %27 = vector.extract_strided_slice %1 {offsets = [0, 6, 0], sizes = [24, 16, 4], strides = [1, 1, 1]} : vector<24x24x4xf32> to vector<24x16x4xf32>
    %28 = vector.extract_strided_slice %1 {offsets = [0, 7, 0], sizes = [24, 16, 4], strides = [1, 1, 1]} : vector<24x24x4xf32> to vector<24x16x4xf32>
    %29 = vector.extract_strided_slice %1 {offsets = [0, 8, 0], sizes = [24, 16, 4], strides = [1, 1, 1]} : vector<24x24x4xf32> to vector<24x16x4xf32>
    %30 = tpu.concatenate %21, %22, %23, %24, %25, %26, %27, %28, %29 in 2 : vector<24x16x4xf32>, vector<24x16x4xf32>, vector<24x16x4xf32>, vector<24x16x4xf32>, vector<24x16x4xf32>, vector<24x16x4xf32>, vector<24x16x4xf32>, vector<24x16x4xf32>, vector<24x16x4xf32> -> vector<24x16x36xf32>
    %31 = vector.shape_cast %30 : vector<24x16x36xf32> to vector<384x36xf32>
    %32 = arith.truncf %31 : vector<384x36xf32> to vector<384x36xbf16>
    %c0_7 = arith.constant 0 : index
    %c0_8 = arith.constant 0 : index
    %33 = vector.load %arg3[%c0_7, %c0_8] : memref<36x8xbf16, #tpu.memory_space<vmem>>, vector<36x8xbf16>
    %cst_9 = arith.constant dense<0.000000e+00> : vector<384x8xf32>
    %34 = tpu.matmul %32, %33, %cst_9 {dimension_numbers = #tpu.dot_dimension_numbers<[1], [0], [0], [1], [0, 0, 1, 1], [], []>} : vector<384x36xbf16>, vector<36x8xbf16>, vector<384x8xf32> -> vector<384x8xf32>
    %35 = vector.shape_cast %34 : vector<384x8xf32> to vector<24x16x8xf32>
    %c0_10 = arith.constant 0 : index
    %c0_11 = arith.constant 0 : index
    %c0_12 = arith.constant 0 : index
    %36 = vector.load %arg6[%c0_10, %c0_11, %c0_12] : memref<24x1x8xf32, #tpu.memory_space<vmem>>, vector<24x1x8xf32>
    %37 = vector.broadcast %36 : vector<24x1x8xf32> to vector<24x16x8xf32>
    %38 = arith.addf %35, %37 : vector<24x16x8xf32>
    %39 = vector.extract_strided_slice %20 {offsets = [0, 0, 0], sizes = [16, 16, 8], strides = [1, 1, 1]} : vector<16x24x8xf32> to vector<16x16x8xf32>
    %40 = vector.extract_strided_slice %20 {offsets = [0, 1, 0], sizes = [16, 16, 8], strides = [1, 1, 1]} : vector<16x24x8xf32> to vector<16x16x8xf32>
    %41 = vector.extract_strided_slice %20 {offsets = [0, 2, 0], sizes = [16, 16, 8], strides = [1, 1, 1]} : vector<16x24x8xf32> to vector<16x16x8xf32>
    %42 = vector.extract_strided_slice %20 {offsets = [0, 3, 0], sizes = [16, 16, 8], strides = [1, 1, 1]} : vector<16x24x8xf32> to vector<16x16x8xf32>
    %43 = vector.extract_strided_slice %20 {offsets = [0, 4, 0], sizes = [16, 16, 8], strides = [1, 1, 1]} : vector<16x24x8xf32> to vector<16x16x8xf32>
    %44 = vector.extract_strided_slice %20 {offsets = [0, 5, 0], sizes = [16, 16, 8], strides = [1, 1, 1]} : vector<16x24x8xf32> to vector<16x16x8xf32>
    %45 = vector.extract_strided_slice %20 {offsets = [0, 6, 0], sizes = [16, 16, 8], strides = [1, 1, 1]} : vector<16x24x8xf32> to vector<16x16x8xf32>
    %46 = vector.extract_strided_slice %20 {offsets = [0, 7, 0], sizes = [16, 16, 8], strides = [1, 1, 1]} : vector<16x24x8xf32> to vector<16x16x8xf32>
    %47 = vector.extract_strided_slice %20 {offsets = [0, 8, 0], sizes = [16, 16, 8], strides = [1, 1, 1]} : vector<16x24x8xf32> to vector<16x16x8xf32>
    %48 = vector.extract_strided_slice %38 {offsets = [0, 0, 0], sizes = [16, 16, 8], strides = [1, 1, 1]} : vector<24x16x8xf32> to vector<16x16x8xf32>
    %49 = vector.extract_strided_slice %38 {offsets = [1, 0, 0], sizes = [16, 16, 8], strides = [1, 1, 1]} : vector<24x16x8xf32> to vector<16x16x8xf32>
    %50 = vector.extract_strided_slice %38 {offsets = [2, 0, 0], sizes = [16, 16, 8], strides = [1, 1, 1]} : vector<24x16x8xf32> to vector<16x16x8xf32>
    %51 = vector.extract_strided_slice %38 {offsets = [3, 0, 0], sizes = [16, 16, 8], strides = [1, 1, 1]} : vector<24x16x8xf32> to vector<16x16x8xf32>
    %52 = vector.extract_strided_slice %38 {offsets = [4, 0, 0], sizes = [16, 16, 8], strides = [1, 1, 1]} : vector<24x16x8xf32> to vector<16x16x8xf32>
    %53 = vector.extract_strided_slice %38 {offsets = [5, 0, 0], sizes = [16, 16, 8], strides = [1, 1, 1]} : vector<24x16x8xf32> to vector<16x16x8xf32>
    %54 = vector.extract_strided_slice %38 {offsets = [6, 0, 0], sizes = [16, 16, 8], strides = [1, 1, 1]} : vector<24x16x8xf32> to vector<16x16x8xf32>
    %55 = vector.extract_strided_slice %38 {offsets = [7, 0, 0], sizes = [16, 16, 8], strides = [1, 1, 1]} : vector<24x16x8xf32> to vector<16x16x8xf32>
    %56 = vector.extract_strided_slice %38 {offsets = [8, 0, 0], sizes = [16, 16, 8], strides = [1, 1, 1]} : vector<24x16x8xf32> to vector<16x16x8xf32>
    %57 = tpu.concatenate %39, %40, %41, %42, %43, %44, %45, %46, %47, %48, %49, %50, %51, %52, %53, %54 in 2 : vector<16x16x8xf32>, vector<16x16x8xf32>, vector<16x16x8xf32>, vector<16x16x8xf32>, vector<16x16x8xf32>, vector<16x16x8xf32>, vector<16x16x8xf32>, vector<16x16x8xf32>, vector<16x16x8xf32>, vector<16x16x8xf32>, vector<16x16x8xf32>, vector<16x16x8xf32>, vector<16x16x8xf32>, vector<16x16x8xf32>, vector<16x16x8xf32>, vector<16x16x8xf32> -> vector<16x16x128xf32>
    %58 = tpu.concatenate %55, %56 in 2 : vector<16x16x8xf32>, vector<16x16x8xf32> -> vector<16x16x16xf32>
    %59 = tpu.concatenate %57, %58 in 2 : vector<16x16x128xf32>, vector<16x16x16xf32> -> vector<16x16x144xf32>
    %60 = vector.shape_cast %59 : vector<16x16x144xf32> to vector<256x144xf32>
    %61 = arith.truncf %60 : vector<256x144xf32> to vector<256x144xbf16>
    %c0_13 = arith.constant 0 : index
    %c0_14 = arith.constant 0 : index
    %62 = vector.load %arg4[%c0_13, %c0_14] : memref<144x128xbf16, #tpu.memory_space<vmem>>, vector<144x128xbf16>
    %cst_15 = arith.constant dense<0.000000e+00> : vector<256x128xf32>
    %63 = tpu.matmul %61, %62, %cst_15 {dimension_numbers = #tpu.dot_dimension_numbers<[1], [0], [0], [1], [0, 0, 1, 1], [], []>} : vector<256x144xbf16>, vector<144x128xbf16>, vector<256x128xf32> -> vector<256x128xf32>
    %c0_16 = arith.constant 0 : index
    %c0_17 = arith.constant 0 : index
    %64 = vector.load %arg7[%c0_16, %c0_17] : memref<1x128xf32, #tpu.memory_space<vmem>>, vector<1x128xf32>
    %65 = vector.broadcast %64 : vector<1x128xf32> to vector<256x128xf32>
    %66 = arith.addf %63, %65 : vector<256x128xf32>
    %67 = tpu.transpose %66, [1, 0] : vector<256x128xf32> -> vector<128x256xf32>
    %68 = vector.extract_strided_slice %67 {offsets = [0, 0], sizes = [16, 256], strides = [1, 1]} : vector<128x256xf32> to vector<16x256xf32>
    %c0_18 = arith.constant 0 : index
    %c0_19 = arith.constant 0 : index
    %c0_20 = arith.constant 0 : index
    %69 = vector.load %arg8[%c0_18, %c0_19, %c0_20] : memref<1x16x256xf32, #tpu.memory_space<vmem>>, vector<1x16x256xf32>
    %70 = vector.shape_cast %69 : vector<1x16x256xf32> to vector<16x256xf32>
    %71 = vector.shape_cast %68 : vector<16x256xf32> to vector<1x16x256xf32>
    tpu.vector_store %arg8[%c0_18, %c0_19, %c0_20], %71 {strides = array<i32>} : memref<1x16x256xf32, #tpu.memory_space<vmem>>, vector<1x16x256xf32>,
    return
  }
  func.func @transform_0(%arg0: i32) -> (i32, i32, i32, i32) {
    %c0_i32 = arith.constant 0 : i32
    %c0_i32_0 = arith.constant 0 : i32
    %c0_i32_1 = arith.constant 0 : i32
    %c0_i32_2 = arith.constant 0 : i32
    return %arg0, %c0_i32, %c0_i32_0, %c0_i32_1 : i32, i32, i32, i32
  }
  func.func @transform_1(%arg0: i32) -> (i32, i32) {
    %c0_i32 = arith.constant 0 : i32
    %c0_i32_0 = arith.constant 0 : i32
    %c0_i32_1 = arith.constant 0 : i32
    return %c0_i32, %c0_i32_0 : i32, i32
  }
  func.func @transform_2(%arg0: i32) -> (i32, i32) {
    %c0_i32 = arith.constant 0 : i32
    %c0_i32_0 = arith.constant 0 : i32
    %c0_i32_1 = arith.constant 0 : i32
    return %c0_i32, %c0_i32_0 : i32, i32
  }
  func.func @transform_3(%arg0: i32) -> (i32, i32) {
    %c0_i32 = arith.constant 0 : i32
    %c0_i32_0 = arith.constant 0 : i32
    %c0_i32_1 = arith.constant 0 : i32
    return %c0_i32, %c0_i32_0 : i32, i32
  }
  func.func @transform_4(%arg0: i32) -> (i32, i32) {
    %c0_i32 = arith.constant 0 : i32
    %c0_i32_0 = arith.constant 0 : i32
    %c0_i32_1 = arith.constant 0 : i32
    return %c0_i32, %c0_i32_0 : i32, i32
  }
  func.func @transform_5(%arg0: i32) -> (i32, i32, i32) {
    %c0_i32 = arith.constant 0 : i32
    %c0_i32_0 = arith.constant 0 : i32
    %c0_i32_1 = arith.constant 0 : i32
    %c0_i32_2 = arith.constant 0 : i32
    return %c0_i32, %c0_i32_0, %c0_i32_1 : i32, i32, i32
  }
  func.func @transform_6(%arg0: i32) -> (i32, i32) {
    %c0_i32 = arith.constant 0 : i32
    %c0_i32_0 = arith.constant 0 : i32
    %c0_i32_1 = arith.constant 0 : i32
    return %c0_i32, %c0_i32_0 : i32, i32
  }
  func.func @transform_7(%arg0: i32) -> (i32, i32, i32) {
    %c0_i32 = arith.constant 0 : i32
    %c0_i32_0 = arith.constant 0 : i32
    %c0_i32_1 = arith.constant 0 : i32
    return %arg0, %c0_i32, %c0_i32_0 : i32, i32, i32
  }
}

</mosaic_0001>

<llo_original>
// kernel: tpu_custom_call.1
$region0: #{tpu_custom_call.1}
  #allocation0 [shape = 'u32[]', space=smem, size = 0x4, offset = 0x4, fixed_abs, tag = 'smem constant byte address 0x4 - core index']
  #allocation1 [shape = 'u32[144,128]{1,0:T(1,128)}', space=vmem, size = 0x12000, scoped, tag = 'internal scratch']
  %s0 = inlined_call_operand.vmem [shape: f32[2,24,24,4], index: 0, kind: input, shape index: {}]
  %s1 = inlined_call_operand.vmem [shape: bf16[36,8], index: 1, kind: input, shape index: {}]
  %s2 = inlined_call_operand.vmem [shape: bf16[36,8], index: 2, kind: input, shape index: {}]
  %s3 = inlined_call_operand.vmem [shape: bf16[144,128], index: 3, kind: input, shape index: {}]
  %s4 = inlined_call_operand.vmem [shape: f32[24,8], index: 4, kind: input, shape index: {}]
  %s5 = inlined_call_operand.vmem [shape: f32[24,1,8], index: 5, kind: input, shape index: {}]
  %s6 = inlined_call_operand.vmem [shape: f32[1,128], index: 6, kind: input, shape index: {}]
  %s7 = inlined_call_operand.hbm [shape: f32[2,16,256], index: 7, kind: output, shape index: {}]
  %s8 = sld [smem:[#allocation0]]
  $region61: #{tpu_custom_call.1} parent=0
    _
  %s10 = ssub.s32 1, %s8
  %s11 = scalar_select 0, %s10, %s8
  $region1: #{tpu_custom_call.1} parent=0
    #allocation2 [shape = 'u8[32768]{0}', space=vmem, size = 0x8000, scoped, tag = 'output window, operand 0']
    #allocation3 [shape = 's32[2]{0}', space=sflag, size = 0x8, scoped, tag = 'scoped memory for tpu_custom_call.1']
    %12 = vsyncpa [#allocation3], 0
    %s13 = scalar_lea.sflag [#allocation3], 1
    %14 = vsyncpa %s13, 0
    loop: start=0, step=1, limit=4
    $region2: #{tpu_custom_call.1} parent=1 // loop_pre_header
      _
    $region3: #{tpu_custom_call.1} parent=1 // loop_header
      %s16 = sphi 0, %s20
      %p17 = scmp.ge.s32.totalorder %s16, 4
      %s26 = sphi 0, %s28
      %s29 = sphi 0, %s26
      %s30 = sphi 0, %s29
      %s46 = sphi 0, %s30
      %s50 = sphi 0, %s50
      %s52 = sphi 0, %s50
      %s53 = sphi 0, %s52
      %s67 = sphi 0, %s53
      %s71 = sphi 0, %s71
      %s73 = sphi 0, %s71
      %s74 = sphi 0, %s73
      %s88 = sphi 0, %s74
      %s92 = sphi 0, %s92
      %s94 = sphi 0, %s92
      %s95 = sphi 0, %s94
      %s109 = sphi 0, %s95
      %s113 = sphi 0, %s113
      %s115 = sphi 0, %s113
      %s116 = sphi 0, %s115
      %s130 = sphi 0, %s116
      %s134 = sphi 0, %s134
      %s136 = sphi 0, %s134
      %s137 = sphi 0, %s136
      %s151 = sphi 0, %s137
      %s155 = sphi 0, %s155
      %s157 = sphi 0, %s155
      %s158 = sphi 0, %s157
      %s172 = sphi 0, %s158
      %s178 = sphi 0, %s180
      %s181 = sphi 0, %s178
      %s182 = sphi 0, %s181
      %s198 = sphi 0, %s182
    $region4: #{tpu_custom_call.1} parent=1 // loop_header_branch
      %19 = sbr.rel (%p17) target = $region8
    $region5: #{tpu_custom_call.1} parent=1 // loop_body
      %s21 = ssub.s32 %s16, 1
      %s22 = ssub.s32 %s16, 2
      %s23 = sadd.s32 %s16, 1
      %s24 = ssub.s32 %s16, %s23
      %p25 = scmp.eq.s32.totalorder %s24, 0
      %s27 = sadd.s32 %s26, 1
      %s28 = scalar_select %p25, %s26, %s27
      %p31 = pneg %p25
      %p32 = scmp.eq.s32.totalorder %s16, 1
      %p33 = por %p31, %p32
      %p34 = scmp.ne.s32.totalorder %s26, %s29
      %p35 = scmp.eq.s32.totalorder %s16, 0
      %p36 = por %p34, %p35
      %p37 = scmp.ne.s32.totalorder %s26, %s29
      %p38 = scmp.eq.s32.totalorder %s21, 1
      %p39 = por %p37, %p38
      %p40 = scmp.ne.s32.totalorder %s29, %s30
      %p41 = scmp.eq.s32.totalorder %s21, 0
      %p42 = por %p40, %p41
      %p43 = scmp.ne.s32.totalorder %s29, %s30
      %p44 = scmp.eq.s32.totalorder %s22, 1
      %p45 = por %p43, %p44
      %p47 = scmp.ne.s32.totalorder %s30, %s46
      %p48 = scmp.eq.s32.totalorder %s22, 0
      %p49 = por %p47, %p48
      %s51 = sadd.s32 %s50, 1
      %p54 = scmp.eq.s32.totalorder %s16, 1
      %p55 = scmp.ne.s32.totalorder %s50, %s52
      %p56 = scmp.eq.s32.totalorder %s16, 0
      %p57 = por %p55, %p56
      %p58 = scmp.ne.s32.totalorder %s50, %s52
      %p59 = scmp.eq.s32.totalorder %s21, 1
      %p60 = por %p58, %p59
      %p61 = scmp.ne.s32.totalorder %s52, %s53
      %p62 = scmp.eq.s32.totalorder %s21, 0
      %p63 = por %p61, %p62
      %p64 = scmp.ne.s32.totalorder %s52, %s53
      %p65 = scmp.eq.s32.totalorder %s22, 1
      %p66 = por %p64, %p65
      %p68 = scmp.ne.s32.totalorder %s53, %s67
      %p69 = scmp.eq.s32.totalorder %s22, 0
      %p70 = por %p68, %p69
      %s72 = sadd.s32 %s71, 1
      %p75 = scmp.eq.s32.totalorder %s16, 1
      %p76 = scmp.ne.s32.totalorder %s71, %s73
      %p77 = scmp.eq.s32.totalorder %s16, 0
      %p78 = por %p76, %p77
      %p79 = scmp.ne.s32.totalorder %s71, %s73
      %p80 = scmp.eq.s32.totalorder %s21, 1
      %p81 = por %p79, %p80
      %p82 = scmp.ne.s32.totalorder %s73, %s74
      %p83 = scmp.eq.s32.totalorder %s21, 0
      %p84 = por %p82, %p83
      %p85 = scmp.ne.s32.totalorder %s73, %s74
      %p86 = scmp.eq.s32.totalorder %s22, 1
      %p87 = por %p85, %p86
      %p89 = scmp.ne.s32.totalorder %s74, %s88
      %p90 = scmp.eq.s32.totalorder %s22, 0
      %p91 = por %p89, %p90
      %s93 = sadd.s32 %s92, 1
      %p96 = scmp.eq.s32.totalorder %s16, 1
      %p97 = scmp.ne.s32.totalorder %s92, %s94
      %p98 = scmp.eq.s32.totalorder %s16, 0
      %p99 = por %p97, %p98
      %p100 = scmp.ne.s32.totalorder %s92, %s94
      %p101 = scmp.eq.s32.totalorder %s21, 1
      %p102 = por %p100, %p101
      %p103 = scmp.ne.s32.totalorder %s94, %s95
      %p104 = scmp.eq.s32.totalorder %s21, 0
      %p105 = por %p103, %p104
      %p106 = scmp.ne.s32.totalorder %s94, %s95
      %p107 = scmp.eq.s32.totalorder %s22, 1
      %p108 = por %p106, %p107
      %p110 = scmp.ne.s32.totalorder %s95, %s109
      %p111 = scmp.eq.s32.totalorder %s22, 0
      %p112 = por %p110, %p111
      %s114 = sadd.s32 %s113, 1
      %p117 = scmp.eq.s32.totalorder %s16, 1
      %p118 = scmp.ne.s32.totalorder %s113, %s115
      %p119 = scmp.eq.s32.totalorder %s16, 0
      %p120 = por %p118, %p119
      %p121 = scmp.ne.s32.totalorder %s113, %s115
      %p122 = scmp.eq.s32.totalorder %s21, 1
      %p123 = por %p121, %p122
      %p124 = scmp.ne.s32.totalorder %s115, %s116
      %p125 = scmp.eq.s32.totalorder %s21, 0
      %p126 = por %p124, %p125
      %p127 = scmp.ne.s32.totalorder %s115, %s116
      %p128 = scmp.eq.s32.totalorder %s22, 1
      %p129 = por %p127, %p128
      %p131 = scmp.ne.s32.totalorder %s116, %s130
      %p132 = scmp.eq.s32.totalorder %s22, 0
      %p133 = por %p131, %p132
      %s135 = sadd.s32 %s134, 1
      %p138 = scmp.eq.s32.totalorder %s16, 1
      %p139 = scmp.ne.s32.totalorder %s134, %s136
      %p140 = scmp.eq.s32.totalorder %s16, 0
      %p141 = por %p139, %p140
      %p142 = scmp.ne.s32.totalorder %s134, %s136
      %p143 = scmp.eq.s32.totalorder %s21, 1
      %p144 = por %p142, %p143
      %p145 = scmp.ne.s32.totalorder %s136, %s137
      %p146 = scmp.eq.s32.totalorder %s21, 0
      %p147 = por %p145, %p146
      %p148 = scmp.ne.s32.totalorder %s136, %s137
      %p149 = scmp.eq.s32.totalorder %s22, 1
      %p150 = por %p148, %p149
      %p152 = scmp.ne.s32.totalorder %s137, %s151
      %p153 = scmp.eq.s32.totalorder %s22, 0
      %p154 = por %p152, %p153
      %s156 = sadd.s32 %s155, 1
      %p159 = scmp.eq.s32.totalorder %s16, 1
      %p160 = scmp.ne.s32.totalorder %s155, %s157
      %p161 = scmp.eq.s32.totalorder %s16, 0
      %p162 = por %p160, %p161
      %p163 = scmp.ne.s32.totalorder %s155, %s157
      %p164 = scmp.eq.s32.totalorder %s21, 1
      %p165 = por %p163, %p164
      %p166 = scmp.ne.s32.totalorder %s157, %s158
      %p167 = scmp.eq.s32.totalorder %s21, 0
      %p168 = por %p166, %p167
      %p169 = scmp.ne.s32.totalorder %s157, %s158
      %p170 = scmp.eq.s32.totalorder %s22, 1
      %p171 = por %p169, %p170
      %p173 = scmp.ne.s32.totalorder %s158, %s172
      %p174 = scmp.eq.s32.totalorder %s22, 0
      %p175 = por %p173, %p174
      %s176 = ssub.s32 %s16, %s23
      %p177 = scmp.eq.s32.totalorder %s176, 0
      %s179 = sadd.s32 %s178, 1
      %s180 = scalar_select %p177, %s178, %s179
      %p183 = pneg %p177
      %p184 = scmp.eq.s32.totalorder %s16, 1
      %p185 = por %p183, %p184
      %p186 = scmp.ne.s32.totalorder %s178, %s181
      %p187 = scmp.eq.s32.totalorder %s16, 0
      %p188 = por %p186, %p187
      %p189 = scmp.ne.s32.totalorder %s178, %s181
      %p190 = scmp.eq.s32.totalorder %s21, 1
      %p191 = por %p189, %p190
      %p192 = scmp.ne.s32.totalorder %s181, %s182
      %p193 = scmp.eq.s32.totalorder %s21, 0
      %p194 = por %p192, %p193
      %p195 = scmp.ne.s32.totalorder %s181, %s182
      %p196 = scmp.eq.s32.totalorder %s22, 1
      %p197 = por %p195, %p196
      %p199 = scmp.ne.s32.totalorder %s182, %s198
      %p200 = scmp.eq.s32.totalorder %s22, 0
      %p201 = por %p199, %p200
      %p202 = scmp.le.s32.totalorder 1, %s16
      %p203 = scmp.lt.s32.totalorder %s16, 3
      %p204 = pnand %p202, %p203
      %p205 = pneg %p204
      // Predicated region
      $region9: #{tpu_custom_call.1} parent=5 // pred_check
        _
      $region10: #{tpu_custom_call.1} parent=5 // pred_check_branch
        %207 = sbr.rel (%p204) target = $region12
      $region11: #{tpu_custom_call.1} parent=5 // pred_region
        %s208 = ssub.s32 %s16, 1
        // Predicated region
        $region13: #{tpu_custom_call.1} parent=11 // pred_check
          %p209 = pneg %p63
        $region14: #{tpu_custom_call.1} parent=11 // pred_check_branch
          %211 = sbr.rel (%p209) target = $region16
        $region15: #{tpu_custom_call.1} parent=11 // pred_region
          _
        $region16: #{tpu_custom_call.1} parent=11 // pred_fallthru
          _
        // Predicated region
        $region17: #{tpu_custom_call.1} parent=11 // pred_check
          %p212 = pneg %p84
        $region18: #{tpu_custom_call.1} parent=11 // pred_check_branch
          %214 = sbr.rel (%p212) target = $region20
        $region19: #{tpu_custom_call.1} parent=11 // pred_region
          _
        $region20: #{tpu_custom_call.1} parent=11 // pred_fallthru
          _
        // Predicated region
        $region21: #{tpu_custom_call.1} parent=11 // pred_check
          %p215 = pneg %p105
        $region22: #{tpu_custom_call.1} parent=11 // pred_check_branch
          %217 = sbr.rel (%p215) target = $region24
        $region23: #{tpu_custom_call.1} parent=11 // pred_region
          _
        $region24: #{tpu_custom_call.1} parent=11 // pred_fallthru
          _
        // Predicated region
        $region25: #{tpu_custom_call.1} parent=11 // pred_check
          %p218 = pneg %p126
        $region26: #{tpu_custom_call.1} parent=11 // pred_check_branch
          %220 = sbr.rel (%p218) target = $region28
        $region27: #{tpu_custom_call.1} parent=11 // pred_region
          _
        $region28: #{tpu_custom_call.1} parent=11 // pred_fallthru
          _
        // Predicated region
        $region29: #{tpu_custom_call.1} parent=11 // pred_check
          %p221 = pneg %p147
        $region30: #{tpu_custom_call.1} parent=11 // pred_check_branch
          %223 = sbr.rel (%p221) target = $region32
        $region31: #{tpu_custom_call.1} parent=11 // pred_region
          _
        $region32: #{tpu_custom_call.1} parent=11 // pred_fallthru
          _
        // Predicated region
        $region33: #{tpu_custom_call.1} parent=11 // pred_check
          %p224 = pneg %p168
        $region34: #{tpu_custom_call.1} parent=11 // pred_check_branch
          %226 = sbr.rel (%p224) target = $region36
        $region35: #{tpu_custom_call.1} parent=11 // pred_region
          _
        $region36: #{tpu_custom_call.1} parent=11 // pred_fallthru
          _
      $region12: #{tpu_custom_call.1} parent=5 // pred_fallthru
        _
      %p227 = scmp.lt.s32.totalorder %s16, 2
      // Predicated region
      $region37: #{tpu_custom_call.1} parent=5 // pred_check
        %p228 = pneg %p227
      $region38: #{tpu_custom_call.1} parent=5 // pred_check_branch
        %230 = sbr.rel (%p228) target = $region40
      $region39: #{tpu_custom_call.1} parent=5 // pred_region
        // Predicated region
        $region41: #{tpu_custom_call.1} parent=39 // pred_check
          %p231 = pneg %p36
        $region42: #{tpu_custom_call.1} parent=39 // pred_check_branch
          %233 = sbr.rel (%p231) target = $region44
        $region43: #{tpu_custom_call.1} parent=39 // pred_region
          %p234 = scmp.lt.s32.totalorder %s16, 1
          %s235 = scalar_select %p234, %s16, 1
          %s236 = smul.addr %s235, 72
          %s237 = smul.addr %s236, 8
          %s238 = scalar_lea.vmem %s0, %s237
        $region44: #{tpu_custom_call.1} parent=39 // pred_fallthru
          _
      $region40: #{tpu_custom_call.1} parent=5 // pred_fallthru
        _
      %p239 = scmp.le.s32.totalorder 1, %s16
      %p240 = scmp.lt.s32.totalorder %s16, 3
      %p241 = pnand %p239, %p240
      %p242 = pneg %p241
      // Predicated region
      $region45: #{tpu_custom_call.1} parent=5 // pred_check
        _
      $region46: #{tpu_custom_call.1} parent=5 // pred_check_branch
        %244 = sbr.rel (%p241) target = $region48
      $region47: #{tpu_custom_call.1} parent=5 // pred_region
        %s245 = ssub.s32 %s16, 1
        %p246 = scmp.lt.s32.totalorder %s21, 1
        %s247 = scalar_select %p246, %s21, 1
        %s248 = smul.addr %s247, 72
        %s249 = smul.addr %s248, 8
        %s250 = scalar_lea.vmem %s0, %s249
        %p251 = pneg %p42
        %p252 = pneg %p39
        %p253 = pneg %p63
        %p254 = pneg %p60
        %p255 = pneg %p84
        %p256 = pneg %p81
        %p257 = pneg %p105
        %p258 = pneg %p102
        %p259 = pneg %p126
        %p260 = pneg %p123
        %p261 = pneg %p147
        %p262 = pneg %p144
        %p263 = pneg %p168
        %p264 = pneg %p165
        %p265 = pneg %p194
        %p266 = pneg %p191
        %s267 = sand.u32 %s181, 1
        %s268 = scalar_lea.sflag [#allocation3], %s267
        %s269 = sand.u32 %s181, 1
        %s270 = smul.addr %s269, 32
        %s271 = scalar_lea.vmem [#allocation2], %s270
        %p272 = scmp.lt.s32.totalorder %s21, 1
        %s273 = scalar_select %p272, %s21, 1
        %s274 = smul.addr %s273, 72
        %s275 = smul.addr %s274, 8
        %s276 = scalar_lea.vmem %s0, %s275
        %v278 = vld [vmem:[%s276] sm:$0xff]
        %v279 = vld [vmem:[%s276 + $0x8] sm:$0xff]
        %v280 = vld [vmem:[%s276 + $0x10] sm:$0xff]
        %v281 = vld [vmem:[%s276 + $0x18] sm:$0xff]
        %v282 = vld [vmem:[%s276 + $0x20] sm:$0xff]
        %v283 = vld [vmem:[%s276 + $0x28] sm:$0xff]
        %v284 = vld [vmem:[%s276 + $0x30] sm:$0xff]
        %v285 = vld [vmem:[%s276 + $0x38] sm:$0xff]
        %v286 = vld [vmem:[%s276 + $0x40] sm:$0xff]
        %v287 = vld [vmem:[%s276 + $0x48] sm:$0xff]
        %v288 = vld [vmem:[%s276 + $0x50] sm:$0xff]
        %v289 = vld [vmem:[%s276 + $0x58] sm:$0xff]
        %v290 = vld [vmem:[%s276 + $0x60] sm:$0xff]
        %v291 = vld [vmem:[%s276 + $0x68] sm:$0xff]
        %v292 = vld [vmem:[%s276 + $0x70] sm:$0xff]
        %v293 = vld [vmem:[%s276 + $0x78] sm:$0xff]
        %v294 = vld [vmem:[%s276 + $0x80] sm:$0xff]
        %v295 = vld [vmem:[%s276 + $0x88] sm:$0xff]
        %v296 = vld [vmem:[%s276 + $0x90] sm:$0xff]
        %v297 = vld [vmem:[%s276 + $0x98] sm:$0xff]
        %v298 = vld [vmem:[%s276 + $0xa0] sm:$0xff]
        %v299 = vld [vmem:[%s276 + $0xa8] sm:$0xff]
        %v300 = vld [vmem:[%s276 + $0xb0] sm:$0xff]
        %v301 = vld [vmem:[%s276 + $0xb8] sm:$0xff]
        %v302 = vld [vmem:[%s276 + $0xc0] sm:$0xff]
        %v303 = vld [vmem:[%s276 + $0xc8] sm:$0xff]
        %v304 = vld [vmem:[%s276 + $0xd0] sm:$0xff]
        %v305 = vld [vmem:[%s276 + $0xd8] sm:$0xff]
        %v306 = vld [vmem:[%s276 + $0xe0] sm:$0xff]
        %v307 = vld [vmem:[%s276 + $0xe8] sm:$0xff]
        %v308 = vld [vmem:[%s276 + $0xf0] sm:$0xff]
        %v309 = vld [vmem:[%s276 + $0xf8] sm:$0xff]
        %v310 = vld [vmem:[%s276 + $0x100] sm:$0xff]
        %v311 = vld [vmem:[%s276 + $0x108] sm:$0xff]
        %v312 = vld [vmem:[%s276 + $0x110] sm:$0xff]
        %v313 = vld [vmem:[%s276 + $0x118] sm:$0xff]
        %v314 = vld [vmem:[%s276 + $0x120] sm:$0xff]
        %v315 = vld [vmem:[%s276 + $0x128] sm:$0xff]
        %v316 = vld [vmem:[%s276 + $0x130] sm:$0xff]
        %v317 = vld [vmem:[%s276 + $0x138] sm:$0xff]
        %v318 = vld [vmem:[%s276 + $0x140] sm:$0xff]
        %v319 = vld [vmem:[%s276 + $0x148] sm:$0xff]
        %v320 = vld [vmem:[%s276 + $0x150] sm:$0xff]
        %v321 = vld [vmem:[%s276 + $0x158] sm:$0xff]
        %v322 = vld [vmem:[%s276 + $0x160] sm:$0xff]
        %v323 = vld [vmem:[%s276 + $0x168] sm:$0xff]
        %v324 = vld [vmem:[%s276 + $0x170] sm:$0xff]
        %v325 = vld [vmem:[%s276 + $0x178] sm:$0xff]
        %v326 = vld [vmem:[%s276 + $0x180] sm:$0xff]
        %v327 = vld [vmem:[%s276 + $0x188] sm:$0xff]
        %v328 = vld [vmem:[%s276 + $0x190] sm:$0xff]
        %v329 = vld [vmem:[%s276 + $0x198] sm:$0xff]
        %v330 = vld [vmem:[%s276 + $0x1a0] sm:$0xff]
        %v331 = vld [vmem:[%s276 + $0x1a8] sm:$0xff]
        %v332 = vld [vmem:[%s276 + $0x1b0] sm:$0xff]
        %v333 = vld [vmem:[%s276 + $0x1b8] sm:$0xff]
        %v334 = vld [vmem:[%s276 + $0x1c0] sm:$0xff]
        %v335 = vld [vmem:[%s276 + $0x1c8] sm:$0xff]
        %v336 = vld [vmem:[%s276 + $0x1d0] sm:$0xff]
        %v337 = vld [vmem:[%s276 + $0x1d8] sm:$0xff]
        %v338 = vld [vmem:[%s276 + $0x1e0] sm:$0xff]
        %v339 = vld [vmem:[%s276 + $0x1e8] sm:$0xff]
        %v340 = vld [vmem:[%s276 + $0x1f0] sm:$0xff]
        %v341 = vld [vmem:[%s276 + $0x1f8] sm:$0xff]
        %v342 = vld [vmem:[%s276 + $0x200] sm:$0xff]
        %v343 = vld [vmem:[%s276 + $0x208] sm:$0xff]
        %v344 = vld [vmem:[%s276 + $0x210] sm:$0xff]
        %v345 = vld [vmem:[%s276 + $0x218] sm:$0xff]
        %v346 = vld [vmem:[%s276 + $0x220] sm:$0xff]
        %v347 = vld [vmem:[%s276 + $0x228] sm:$0xff]
        %v348 = vld [vmem:[%s276 + $0x230] sm:$0xff]
        %v349 = vld [vmem:[%s276 + $0x238] sm:$0xff]
        %398 = vrot.lane.b32.xlu0 %v281, 4
        %v399 = vpop.permute.xlu0 %398
        %400 = vrot.lane.b32.xlu0 %v282, 4
        %v401 = vpop.permute.xlu0 %400
        %402 = vrot.lane.b32.xlu0 %v283, 4
        %v403 = vpop.permute.xlu0 %402
        %404 = vrot.lane.b32.xlu0 %v284, 4
        %v405 = vpop.permute.xlu0 %404
        %406 = vrot.lane.b32.xlu0 %v285, 4
        %v407 = vpop.permute.xlu0 %406
        %408 = vrot.lane.b32.xlu0 %v286, 4
        %v409 = vpop.permute.xlu0 %408
        %410 = vrot.lane.b32.xlu0 %v287, 4
        %v411 = vpop.permute.xlu0 %410
        %412 = vrot.lane.b32.xlu0 %v288, 4
        %v413 = vpop.permute.xlu0 %412
        %414 = vrot.lane.b32.xlu0 %v289, 4
        %v415 = vpop.permute.xlu0 %414
        %416 = vrot.lane.b32.xlu0 %v290, 4
        %v417 = vpop.permute.xlu0 %416
        %418 = vrot.lane.b32.xlu0 %v291, 4
        %v419 = vpop.permute.xlu0 %418
        %420 = vrot.lane.b32.xlu0 %v292, 4
        %v421 = vpop.permute.xlu0 %420
        %422 = vrot.lane.b32.xlu0 %v293, 4
        %v423 = vpop.permute.xlu0 %422
        %424 = vrot.lane.b32.xlu0 %v294, 4
        %v425 = vpop.permute.xlu0 %424
        %426 = vrot.lane.b32.xlu0 %v295, 4
        %v427 = vpop.permute.xlu0 %426
        %428 = vrot.lane.b32.xlu0 %v296, 4
        %v429 = vpop.permute.xlu0 %428
        %430 = vrot.lane.b32.xlu0 %v297, 4
        %v431 = vpop.permute.xlu0 %430
        %432 = vrot.lane.b32.xlu0 %v298, 4
        %v433 = vpop.permute.xlu0 %432
        %434 = vrot.lane.b32.xlu0 %v299, 4
        %v435 = vpop.permute.xlu0 %434
        %436 = vrot.lane.b32.xlu0 %v300, 4
        %v437 = vpop.permute.xlu0 %436
        %438 = vrot.lane.b32.xlu0 %v301, 4
        %v439 = vpop.permute.xlu0 %438
        %440 = vrot.lane.b32.xlu0 %v302, 4
        %v441 = vpop.permute.xlu0 %440
        %442 = vrot.lane.b32.xlu0 %v303, 4
        %v443 = vpop.permute.xlu0 %442
        %444 = vrot.lane.b32.xlu0 %v304, 4
        %v445 = vpop.permute.xlu0 %444
        %446 = vrot.lane.b32.xlu0 %v305, 4
        %v447 = vpop.permute.xlu0 %446
        %448 = vrot.lane.b32.xlu0 %v306, 4
        %v449 = vpop.permute.xlu0 %448
        %450 = vrot.lane.b32.xlu0 %v307, 4
        %v451 = vpop.permute.xlu0 %450
        %452 = vrot.lane.b32.xlu0 %v308, 4
        %v453 = vpop.permute.xlu0 %452
        %454 = vrot.lane.b32.xlu0 %v309, 4
        %v455 = vpop.permute.xlu0 %454
        %456 = vrot.lane.b32.xlu0 %v310, 4
        %v457 = vpop.permute.xlu0 %456
        %458 = vrot.lane.b32.xlu0 %v311, 4
        %v459 = vpop.permute.xlu0 %458
        %460 = vrot.lane.b32.xlu0 %v312, 4
        %v461 = vpop.permute.xlu0 %460
        %462 = vrot.lane.b32.xlu0 %v313, 4
        %v463 = vpop.permute.xlu0 %462
        %464 = vrot.lane.b32.xlu0 %v314, 4
        %v465 = vpop.permute.xlu0 %464
        %466 = vrot.lane.b32.xlu0 %v315, 4
        %v467 = vpop.permute.xlu0 %466
        %468 = vrot.lane.b32.xlu0 %v316, 4
        %v469 = vpop.permute.xlu0 %468
        %470 = vrot.lane.b32.xlu0 %v317, 4
        %v471 = vpop.permute.xlu0 %470
        %472 = vrot.lane.b32.xlu0 %v318, 4
        %v473 = vpop.permute.xlu0 %472
        %474 = vrot.lane.b32.xlu0 %v319, 4
        %v475 = vpop.permute.xlu0 %474
        %476 = vrot.lane.b32.xlu0 %v320, 4
        %v477 = vpop.permute.xlu0 %476
        %478 = vrot.lane.b32.xlu0 %v321, 4
        %v479 = vpop.permute.xlu0 %478
        %480 = vrot.lane.b32.xlu0 %v322, 4
        %v481 = vpop.permute.xlu0 %480
        %482 = vrot.lane.b32.xlu0 %v323, 4
        %v483 = vpop.permute.xlu0 %482
        %484 = vrot.lane.b32.xlu0 %v324, 4
        %v485 = vpop.permute.xlu0 %484
        %486 = vrot.lane.b32.xlu0 %v325, 4
        %v487 = vpop.permute.xlu0 %486
        %488 = vrot.lane.b32.xlu0 %v326, 4
        %v489 = vpop.permute.xlu0 %488
        %490 = vrot.lane.b32.xlu0 %v327, 4
        %v491 = vpop.permute.xlu0 %490
        %492 = vrot.lane.b32.xlu0 %v328, 4
        %v493 = vpop.permute.xlu0 %492
        %545 = vrot.lane.b32.xlu0 %v284, 8
        %v546 = vpop.permute.xlu0 %545
        %547 = vrot.lane.b32.xlu0 %v285, 8
        %v548 = vpop.permute.xlu0 %547
        %549 = vrot.lane.b32.xlu0 %v286, 8
        %v550 = vpop.permute.xlu0 %549
        %551 = vrot.lane.b32.xlu0 %v287, 8
        %v552 = vpop.permute.xlu0 %551
        %553 = vrot.lane.b32.xlu0 %v288, 8
        %v554 = vpop.permute.xlu0 %553
        %555 = vrot.lane.b32.xlu0 %v289, 8
        %v556 = vpop.permute.xlu0 %555
        %557 = vrot.lane.b32.xlu0 %v290, 8
        %v558 = vpop.permute.xlu0 %557
        %559 = vrot.lane.b32.xlu0 %v291, 8
        %v560 = vpop.permute.xlu0 %559
        %561 = vrot.lane.b32.xlu0 %v292, 8
        %v562 = vpop.permute.xlu0 %561
        %563 = vrot.lane.b32.xlu0 %v293, 8
        %v564 = vpop.permute.xlu0 %563
        %565 = vrot.lane.b32.xlu0 %v294, 8
        %v566 = vpop.permute.xlu0 %565
        %567 = vrot.lane.b32.xlu0 %v295, 8
        %v568 = vpop.permute.xlu0 %567
        %569 = vrot.lane.b32.xlu0 %v296, 8
        %v570 = vpop.permute.xlu0 %569
        %571 = vrot.lane.b32.xlu0 %v297, 8
        %v572 = vpop.permute.xlu0 %571
        %573 = vrot.lane.b32.xlu0 %v298, 8
        %v574 = vpop.permute.xlu0 %573
        %575 = vrot.lane.b32.xlu0 %v299, 8
        %v576 = vpop.permute.xlu0 %575
        %577 = vrot.lane.b32.xlu0 %v300, 8
        %v578 = vpop.permute.xlu0 %577
        %579 = vrot.lane.b32.xlu0 %v301, 8
        %v580 = vpop.permute.xlu0 %579
        %581 = vrot.lane.b32.xlu0 %v302, 8
        %v582 = vpop.permute.xlu0 %581
        %583 = vrot.lane.b32.xlu0 %v303, 8
        %v584 = vpop.permute.xlu0 %583
        %585 = vrot.lane.b32.xlu0 %v304, 8
        %v586 = vpop.permute.xlu0 %585
        %587 = vrot.lane.b32.xlu0 %v305, 8
        %v588 = vpop.permute.xlu0 %587
        %589 = vrot.lane.b32.xlu0 %v306, 8
        %v590 = vpop.permute.xlu0 %589
        %591 = vrot.lane.b32.xlu0 %v307, 8
        %v592 = vpop.permute.xlu0 %591
        %593 = vrot.lane.b32.xlu0 %v308, 8
        %v594 = vpop.permute.xlu0 %593
        %595 = vrot.lane.b32.xlu0 %v309, 8
        %v596 = vpop.permute.xlu0 %595
        %597 = vrot.lane.b32.xlu0 %v310, 8
        %v598 = vpop.permute.xlu0 %597
        %599 = vrot.lane.b32.xlu0 %v311, 8
        %v600 = vpop.permute.xlu0 %599
        %601 = vrot.lane.b32.xlu0 %v312, 8
        %v602 = vpop.permute.xlu0 %601
        %603 = vrot.lane.b32.xlu0 %v313, 8
        %v604 = vpop.permute.xlu0 %603
        %605 = vrot.lane.b32.xlu0 %v314, 8
        %v606 = vpop.permute.xlu0 %605
        %607 = vrot.lane.b32.xlu0 %v315, 8
        %v608 = vpop.permute.xlu0 %607
        %609 = vrot.lane.b32.xlu0 %v316, 8
        %v610 = vpop.permute.xlu0 %609
        %611 = vrot.lane.b32.xlu0 %v317, 8
        %v612 = vpop.permute.xlu0 %611
        %613 = vrot.lane.b32.xlu0 %v318, 8
        %v614 = vpop.permute.xlu0 %613
        %615 = vrot.lane.b32.xlu0 %v319, 8
        %v616 = vpop.permute.xlu0 %615
        %617 = vrot.lane.b32.xlu0 %v320, 8
        %v618 = vpop.permute.xlu0 %617
        %619 = vrot.lane.b32.xlu0 %v321, 8
        %v620 = vpop.permute.xlu0 %619
        %621 = vrot.lane.b32.xlu0 %v322, 8
        %v622 = vpop.permute.xlu0 %621
        %623 = vrot.lane.b32.xlu0 %v323, 8
        %v624 = vpop.permute.xlu0 %623
        %625 = vrot.lane.b32.xlu0 %v324, 8
        %v626 = vpop.permute.xlu0 %625
        %627 = vrot.lane.b32.xlu0 %v325, 8
        %v628 = vpop.permute.xlu0 %627
        %629 = vrot.lane.b32.xlu0 %v326, 8
        %v630 = vpop.permute.xlu0 %629
        %631 = vrot.lane.b32.xlu0 %v327, 8
        %v632 = vpop.permute.xlu0 %631
        %633 = vrot.lane.b32.xlu0 %v328, 8
        %v634 = vpop.permute.xlu0 %633
        %635 = vrot.lane.b32.xlu0 %v329, 8
        %v636 = vpop.permute.xlu0 %635
        %637 = vrot.lane.b32.xlu0 %v330, 8
        %v638 = vpop.permute.xlu0 %637
        %639 = vrot.lane.b32.xlu0 %v331, 8
        %v640 = vpop.permute.xlu0 %639
        %692 = vrot.lane.b32.xlu0 %v287, 12
        %v693 = vpop.permute.xlu0 %692
        %694 = vrot.lane.b32.xlu0 %v288, 12
        %v695 = vpop.permute.xlu0 %694
        %696 = vrot.lane.b32.xlu0 %v289, 12
        %v697 = vpop.permute.xlu0 %696
        %698 = vrot.lane.b32.xlu0 %v290, 12
        %v699 = vpop.permute.xlu0 %698
        %700 = vrot.lane.b32.xlu0 %v291, 12
        %v701 = vpop.permute.xlu0 %700
        %702 = vrot.lane.b32.xlu0 %v292, 12
        %v703 = vpop.permute.xlu0 %702
        %704 = vrot.lane.b32.xlu0 %v293, 12
        %v705 = vpop.permute.xlu0 %704
        %706 = vrot.lane.b32.xlu0 %v294, 12
        %v707 = vpop.permute.xlu0 %706
        %708 = vrot.lane.b32.xlu0 %v295, 12
        %v709 = vpop.permute.xlu0 %708
        %710 = vrot.lane.b32.xlu0 %v296, 12
        %v711 = vpop.permute.xlu0 %710
        %712 = vrot.lane.b32.xlu0 %v297, 12
        %v713 = vpop.permute.xlu0 %712
        %714 = vrot.lane.b32.xlu0 %v298, 12
        %v715 = vpop.permute.xlu0 %714
        %716 = vrot.lane.b32.xlu0 %v299, 12
        %v717 = vpop.permute.xlu0 %716
        %718 = vrot.lane.b32.xlu0 %v300, 12
        %v719 = vpop.permute.xlu0 %718
        %720 = vrot.lane.b32.xlu0 %v301, 12
        %v721 = vpop.permute.xlu0 %720
        %722 = vrot.lane.b32.xlu0 %v302, 12
        %v723 = vpop.permute.xlu0 %722
        %724 = vrot.lane.b32.xlu0 %v303, 12
        %v725 = vpop.permute.xlu0 %724
        %726 = vrot.lane.b32.xlu0 %v304, 12
        %v727 = vpop.permute.xlu0 %726
        %728 = vrot.lane.b32.xlu0 %v305, 12
        %v729 = vpop.permute.xlu0 %728
        %730 = vrot.lane.b32.xlu0 %v306, 12
        %v731 = vpop.permute.xlu0 %730
        %732 = vrot.lane.b32.xlu0 %v307, 12
        %v733 = vpop.permute.xlu0 %732
        %734 = vrot.lane.b32.xlu0 %v308, 12
        %v735 = vpop.permute.xlu0 %734
        %736 = vrot.lane.b32.xlu0 %v309, 12
        %v737 = vpop.permute.xlu0 %736
        %738 = vrot.lane.b32.xlu0 %v310, 12
        %v739 = vpop.permute.xlu0 %738
        %740 = vrot.lane.b32.xlu0 %v311, 12
        %v741 = vpop.permute.xlu0 %740
        %742 = vrot.lane.b32.xlu0 %v312, 12
        %v743 = vpop.permute.xlu0 %742
        %744 = vrot.lane.b32.xlu0 %v313, 12
        %v745 = vpop.permute.xlu0 %744
        %746 = vrot.lane.b32.xlu0 %v314, 12
        %v747 = vpop.permute.xlu0 %746
        %748 = vrot.lane.b32.xlu0 %v315, 12
        %v749 = vpop.permute.xlu0 %748
        %750 = vrot.lane.b32.xlu0 %v316, 12
        %v751 = vpop.permute.xlu0 %750
        %752 = vrot.lane.b32.xlu0 %v317, 12
        %v753 = vpop.permute.xlu0 %752
        %754 = vrot.lane.b32.xlu0 %v318, 12
        %v755 = vpop.permute.xlu0 %754
        %756 = vrot.lane.b32.xlu0 %v319, 12
        %v757 = vpop.permute.xlu0 %756
        %758 = vrot.lane.b32.xlu0 %v320, 12
        %v759 = vpop.permute.xlu0 %758
        %760 = vrot.lane.b32.xlu0 %v321, 12
        %v761 = vpop.permute.xlu0 %760
        %762 = vrot.lane.b32.xlu0 %v322, 12
        %v763 = vpop.permute.xlu0 %762
        %764 = vrot.lane.b32.xlu0 %v323, 12
        %v765 = vpop.permute.xlu0 %764
        %766 = vrot.lane.b32.xlu0 %v324, 12
        %v767 = vpop.permute.xlu0 %766
        %768 = vrot.lane.b32.xlu0 %v325, 12
        %v769 = vpop.permute.xlu0 %768
        %770 = vrot.lane.b32.xlu0 %v326, 12
        %v771 = vpop.permute.xlu0 %770
        %772 = vrot.lane.b32.xlu0 %v327, 12
        %v773 = vpop.permute.xlu0 %772
        %774 = vrot.lane.b32.xlu0 %v328, 12
        %v775 = vpop.permute.xlu0 %774
        %776 = vrot.lane.b32.xlu0 %v329, 12
        %v777 = vpop.permute.xlu0 %776
        %778 = vrot.lane.b32.xlu0 %v330, 12
        %v779 = vpop.permute.xlu0 %778
        %780 = vrot.lane.b32.xlu0 %v331, 12
        %v781 = vpop.permute.xlu0 %780
        %782 = vrot.lane.b32.xlu0 %v332, 12
        %v783 = vpop.permute.xlu0 %782
        %784 = vrot.lane.b32.xlu0 %v333, 12
        %v785 = vpop.permute.xlu0 %784
        %786 = vrot.lane.b32.xlu0 %v334, 12
        %v787 = vpop.permute.xlu0 %786
        %839 = vrot.lane.b32.xlu0 %v290, 16
        %v840 = vpop.permute.xlu0 %839
        %841 = vrot.lane.b32.xlu0 %v291, 16
        %v842 = vpop.permute.xlu0 %841
        %843 = vrot.lane.b32.xlu0 %v292, 16
        %v844 = vpop.permute.xlu0 %843
        %845 = vrot.lane.b32.xlu0 %v293, 16
        %v846 = vpop.permute.xlu0 %845
        %847 = vrot.lane.b32.xlu0 %v294, 16
        %v848 = vpop.permute.xlu0 %847
        %849 = vrot.lane.b32.xlu0 %v295, 16
        %v850 = vpop.permute.xlu0 %849
        %851 = vrot.lane.b32.xlu0 %v296, 16
        %v852 = vpop.permute.xlu0 %851
        %853 = vrot.lane.b32.xlu0 %v297, 16
        %v854 = vpop.permute.xlu0 %853
        %855 = vrot.lane.b32.xlu0 %v298, 16
        %v856 = vpop.permute.xlu0 %855
        %857 = vrot.lane.b32.xlu0 %v299, 16
        %v858 = vpop.permute.xlu0 %857
        %859 = vrot.lane.b32.xlu0 %v300, 16
        %v860 = vpop.permute.xlu0 %859
        %861 = vrot.lane.b32.xlu0 %v301, 16
        %v862 = vpop.permute.xlu0 %861
        %863 = vrot.lane.b32.xlu0 %v302, 16
        %v864 = vpop.permute.xlu0 %863
        %865 = vrot.lane.b32.xlu0 %v303, 16
        %v866 = vpop.permute.xlu0 %865
        %867 = vrot.lane.b32.xlu0 %v304, 16
        %v868 = vpop.permute.xlu0 %867
        %869 = vrot.lane.b32.xlu0 %v305, 16
        %v870 = vpop.permute.xlu0 %869
        %871 = vrot.lane.b32.xlu0 %v306, 16
        %v872 = vpop.permute.xlu0 %871
        %873 = vrot.lane.b32.xlu0 %v307, 16
        %v874 = vpop.permute.xlu0 %873
        %875 = vrot.lane.b32.xlu0 %v308, 16
        %v876 = vpop.permute.xlu0 %875
        %877 = vrot.lane.b32.xlu0 %v309, 16
        %v878 = vpop.permute.xlu0 %877
        %879 = vrot.lane.b32.xlu0 %v310, 16
        %v880 = vpop.permute.xlu0 %879
        %881 = vrot.lane.b32.xlu0 %v311, 16
        %v882 = vpop.permute.xlu0 %881
        %883 = vrot.lane.b32.xlu0 %v312, 16
        %v884 = vpop.permute.xlu0 %883
        %885 = vrot.lane.b32.xlu0 %v313, 16
        %v886 = vpop.permute.xlu0 %885
        %887 = vrot.lane.b32.xlu0 %v314, 16
        %v888 = vpop.permute.xlu0 %887
        %889 = vrot.lane.b32.xlu0 %v315, 16
        %v890 = vpop.permute.xlu0 %889
        %891 = vrot.lane.b32.xlu0 %v316, 16
        %v892 = vpop.permute.xlu0 %891
        %893 = vrot.lane.b32.xlu0 %v317, 16
        %v894 = vpop.permute.xlu0 %893
        %895 = vrot.lane.b32.xlu0 %v318, 16
        %v896 = vpop.permute.xlu0 %895
        %897 = vrot.lane.b32.xlu0 %v319, 16
        %v898 = vpop.permute.xlu0 %897
        %899 = vrot.lane.b32.xlu0 %v320, 16
        %v900 = vpop.permute.xlu0 %899
        %901 = vrot.lane.b32.xlu0 %v321, 16
        %v902 = vpop.permute.xlu0 %901
        %903 = vrot.lane.b32.xlu0 %v322, 16
        %v904 = vpop.permute.xlu0 %903
        %905 = vrot.lane.b32.xlu0 %v323, 16
        %v906 = vpop.permute.xlu0 %905
        %907 = vrot.lane.b32.xlu0 %v324, 16
        %v908 = vpop.permute.xlu0 %907
        %909 = vrot.lane.b32.xlu0 %v325, 16
        %v910 = vpop.permute.xlu0 %909
        %911 = vrot.lane.b32.xlu0 %v326, 16
        %v912 = vpop.permute.xlu0 %911
        %913 = vrot.lane.b32.xlu0 %v327, 16
        %v914 = vpop.permute.xlu0 %913
        %915 = vrot.lane.b32.xlu0 %v328, 16
        %v916 = vpop.permute.xlu0 %915
        %917 = vrot.lane.b32.xlu0 %v329, 16
        %v918 = vpop.permute.xlu0 %917
        %919 = vrot.lane.b32.xlu0 %v330, 16
        %v920 = vpop.permute.xlu0 %919
        %921 = vrot.lane.b32.xlu0 %v331, 16
        %v922 = vpop.permute.xlu0 %921
        %923 = vrot.lane.b32.xlu0 %v332, 16
        %v924 = vpop.permute.xlu0 %923
        %925 = vrot.lane.b32.xlu0 %v333, 16
        %v926 = vpop.permute.xlu0 %925
        %927 = vrot.lane.b32.xlu0 %v334, 16
        %v928 = vpop.permute.xlu0 %927
        %929 = vrot.lane.b32.xlu0 %v335, 16
        %v930 = vpop.permute.xlu0 %929
        %931 = vrot.lane.b32.xlu0 %v336, 16
        %v932 = vpop.permute.xlu0 %931
        %933 = vrot.lane.b32.xlu0 %v337, 16
        %v934 = vpop.permute.xlu0 %933
        %986 = vrot.lane.b32.xlu0 %v293, 20
        %v987 = vpop.permute.xlu0 %986
        %988 = vrot.lane.b32.xlu0 %v294, 20
        %v989 = vpop.permute.xlu0 %988
        %990 = vrot.lane.b32.xlu0 %v295, 20
        %v991 = vpop.permute.xlu0 %990
        %992 = vrot.lane.b32.xlu0 %v296, 20
        %v993 = vpop.permute.xlu0 %992
        %994 = vrot.lane.b32.xlu0 %v297, 20
        %v995 = vpop.permute.xlu0 %994
        %996 = vrot.lane.b32.xlu0 %v298, 20
        %v997 = vpop.permute.xlu0 %996
        %998 = vrot.lane.b32.xlu0 %v299, 20
        %v999 = vpop.permute.xlu0 %998
        %1000 = vrot.lane.b32.xlu0 %v300, 20
        %v1001 = vpop.permute.xlu0 %1000
        %1002 = vrot.lane.b32.xlu0 %v301, 20
        %v1003 = vpop.permute.xlu0 %1002
        %1004 = vrot.lane.b32.xlu0 %v302, 20
        %v1005 = vpop.permute.xlu0 %1004
        %1006 = vrot.lane.b32.xlu0 %v303, 20
        %v1007 = vpop.permute.xlu0 %1006
        %1008 = vrot.lane.b32.xlu0 %v304, 20
        %v1009 = vpop.permute.xlu0 %1008
        %1010 = vrot.lane.b32.xlu0 %v305, 20
        %v1011 = vpop.permute.xlu0 %1010
        %1012 = vrot.lane.b32.xlu0 %v306, 20
        %v1013 = vpop.permute.xlu0 %1012
        %1014 = vrot.lane.b32.xlu0 %v307, 20
        %v1015 = vpop.permute.xlu0 %1014
        %1016 = vrot.lane.b32.xlu0 %v308, 20
        %v1017 = vpop.permute.xlu0 %1016
        %1018 = vrot.lane.b32.xlu0 %v309, 20
        %v1019 = vpop.permute.xlu0 %1018
        %1020 = vrot.lane.b32.xlu0 %v310, 20
        %v1021 = vpop.permute.xlu0 %1020
        %1022 = vrot.lane.b32.xlu0 %v311, 20
        %v1023 = vpop.permute.xlu0 %1022
        %1024 = vrot.lane.b32.xlu0 %v312, 20
        %v1025 = vpop.permute.xlu0 %1024
        %1026 = vrot.lane.b32.xlu0 %v313, 20
        %v1027 = vpop.permute.xlu0 %1026
        %1028 = vrot.lane.b32.xlu0 %v314, 20
        %v1029 = vpop.permute.xlu0 %1028
        %1030 = vrot.lane.b32.xlu0 %v315, 20
        %v1031 = vpop.permute.xlu0 %1030
        %1032 = vrot.lane.b32.xlu0 %v316, 20
        %v1033 = vpop.permute.xlu0 %1032
        %1034 = vrot.lane.b32.xlu0 %v317, 20
        %v1035 = vpop.permute.xlu0 %1034
        %1036 = vrot.lane.b32.xlu0 %v318, 20
        %v1037 = vpop.permute.xlu0 %1036
        %1038 = vrot.lane.b32.xlu0 %v319, 20
        %v1039 = vpop.permute.xlu0 %1038
        %1040 = vrot.lane.b32.xlu0 %v320, 20
        %v1041 = vpop.permute.xlu0 %1040
        %1042 = vrot.lane.b32.xlu0 %v321, 20
        %v1043 = vpop.permute.xlu0 %1042
        %1044 = vrot.lane.b32.xlu0 %v322, 20
        %v1045 = vpop.permute.xlu0 %1044
        %1046 = vrot.lane.b32.xlu0 %v323, 20
        %v1047 = vpop.permute.xlu0 %1046
        %1048 = vrot.lane.b32.xlu0 %v324, 20
        %v1049 = vpop.permute.xlu0 %1048
        %1050 = vrot.lane.b32.xlu0 %v325, 20
        %v1051 = vpop.permute.xlu0 %1050
        %1052 = vrot.lane.b32.xlu0 %v326, 20
        %v1053 = vpop.permute.xlu0 %1052
        %1054 = vrot.lane.b32.xlu0 %v327, 20
        %v1055 = vpop.permute.xlu0 %1054
        %1056 = vrot.lane.b32.xlu0 %v328, 20
        %v1057 = vpop.permute.xlu0 %1056
        %1058 = vrot.lane.b32.xlu0 %v329, 20
        %v1059 = vpop.permute.xlu0 %1058
        %1060 = vrot.lane.b32.xlu0 %v330, 20
        %v1061 = vpop.permute.xlu0 %1060
        %1062 = vrot.lane.b32.xlu0 %v331, 20
        %v1063 = vpop.permute.xlu0 %1062
        %1064 = vrot.lane.b32.xlu0 %v332, 20
        %v1065 = vpop.permute.xlu0 %1064
        %1066 = vrot.lane.b32.xlu0 %v333, 20
        %v1067 = vpop.permute.xlu0 %1066
        %1068 = vrot.lane.b32.xlu0 %v334, 20
        %v1069 = vpop.permute.xlu0 %1068
        %1070 = vrot.lane.b32.xlu0 %v335, 20
        %v1071 = vpop.permute.xlu0 %1070
        %1072 = vrot.lane.b32.xlu0 %v336, 20
        %v1073 = vpop.permute.xlu0 %1072
        %1074 = vrot.lane.b32.xlu0 %v337, 20
        %v1075 = vpop.permute.xlu0 %1074
        %1076 = vrot.lane.b32.xlu0 %v338, 20
        %v1077 = vpop.permute.xlu0 %1076
        %1078 = vrot.lane.b32.xlu0 %v339, 20
        %v1079 = vpop.permute.xlu0 %1078
        %1080 = vrot.lane.b32.xlu0 %v340, 20
        %v1081 = vpop.permute.xlu0 %1080
        %1133 = vrot.lane.b32.xlu0 %v296, 24
        %v1134 = vpop.permute.xlu0 %1133
        %1135 = vrot.lane.b32.xlu0 %v297, 24
        %v1136 = vpop.permute.xlu0 %1135
        %1137 = vrot.lane.b32.xlu0 %v298, 24
        %v1138 = vpop.permute.xlu0 %1137
        %1139 = vrot.lane.b32.xlu0 %v299, 24
        %v1140 = vpop.permute.xlu0 %1139
        %1141 = vrot.lane.b32.xlu0 %v300, 24
        %v1142 = vpop.permute.xlu0 %1141
        %1143 = vrot.lane.b32.xlu0 %v301, 24
        %v1144 = vpop.permute.xlu0 %1143
        %1145 = vrot.lane.b32.xlu0 %v302, 24
        %v1146 = vpop.permute.xlu0 %1145
        %1147 = vrot.lane.b32.xlu0 %v303, 24
        %v1148 = vpop.permute.xlu0 %1147
        %1149 = vrot.lane.b32.xlu0 %v304, 24
        %v1150 = vpop.permute.xlu0 %1149
        %1151 = vrot.lane.b32.xlu0 %v305, 24
        %v1152 = vpop.permute.xlu0 %1151
        %1153 = vrot.lane.b32.xlu0 %v306, 24
        %v1154 = vpop.permute.xlu0 %1153
        %1155 = vrot.lane.b32.xlu0 %v307, 24
        %v1156 = vpop.permute.xlu0 %1155
        %1157 = vrot.lane.b32.xlu0 %v308, 24
        %v1158 = vpop.permute.xlu0 %1157
        %1159 = vrot.lane.b32.xlu0 %v309, 24
        %v1160 = vpop.permute.xlu0 %1159
        %1161 = vrot.lane.b32.xlu0 %v310, 24
        %v1162 = vpop.permute.xlu0 %1161
        %1163 = vrot.lane.b32.xlu0 %v311, 24
        %v1164 = vpop.permute.xlu0 %1163
        %1165 = vrot.lane.b32.xlu0 %v312, 24
        %v1166 = vpop.permute.xlu0 %1165
        %1167 = vrot.lane.b32.xlu0 %v313, 24
        %v1168 = vpop.permute.xlu0 %1167
        %1169 = vrot.lane.b32.xlu0 %v314, 24
        %v1170 = vpop.permute.xlu0 %1169
        %1171 = vrot.lane.b32.xlu0 %v315, 24
        %v1172 = vpop.permute.xlu0 %1171
        %1173 = vrot.lane.b32.xlu0 %v316, 24
        %v1174 = vpop.permute.xlu0 %1173
        %1175 = vrot.lane.b32.xlu0 %v317, 24
        %v1176 = vpop.permute.xlu0 %1175
        %1177 = vrot.lane.b32.xlu0 %v318, 24
        %v1178 = vpop.permute.xlu0 %1177
        %1179 = vrot.lane.b32.xlu0 %v319, 24
        %v1180 = vpop.permute.xlu0 %1179
        %1181 = vrot.lane.b32.xlu0 %v320, 24
        %v1182 = vpop.permute.xlu0 %1181
        %1183 = vrot.lane.b32.xlu0 %v321, 24
        %v1184 = vpop.permute.xlu0 %1183
        %1185 = vrot.lane.b32.xlu0 %v322, 24
        %v1186 = vpop.permute.xlu0 %1185
        %1187 = vrot.lane.b32.xlu0 %v323, 24
        %v1188 = vpop.permute.xlu0 %1187
        %1189 = vrot.lane.b32.xlu0 %v324, 24
        %v1190 = vpop.permute.xlu0 %1189
        %1191 = vrot.lane.b32.xlu0 %v325, 24
        %v1192 = vpop.permute.xlu0 %1191
        %1193 = vrot.lane.b32.xlu0 %v326, 24
        %v1194 = vpop.permute.xlu0 %1193
        %1195 = vrot.lane.b32.xlu0 %v327, 24
        %v1196 = vpop.permute.xlu0 %1195
        %1197 = vrot.lane.b32.xlu0 %v328, 24
        %v1198 = vpop.permute.xlu0 %1197
        %1199 = vrot.lane.b32.xlu0 %v329, 24
        %v1200 = vpop.permute.xlu0 %1199
        %1201 = vrot.lane.b32.xlu0 %v330, 24
        %v1202 = vpop.permute.xlu0 %1201
        %1203 = vrot.lane.b32.xlu0 %v331, 24
        %v1204 = vpop.permute.xlu0 %1203
        %1205 = vrot.lane.b32.xlu0 %v332, 24
        %v1206 = vpop.permute.xlu0 %1205
        %1207 = vrot.lane.b32.xlu0 %v333, 24
        %v1208 = vpop.permute.xlu0 %1207
        %1209 = vrot.lane.b32.xlu0 %v334, 24
        %v1210 = vpop.permute.xlu0 %1209
        %1211 = vrot.lane.b32.xlu0 %v335, 24
        %v1212 = vpop.permute.xlu0 %1211
        %1213 = vrot.lane.b32.xlu0 %v336, 24
        %v1214 = vpop.permute.xlu0 %1213
        %1215 = vrot.lane.b32.xlu0 %v337, 24
        %v1216 = vpop.permute.xlu0 %1215
        %1217 = vrot.lane.b32.xlu0 %v338, 24
        %v1218 = vpop.permute.xlu0 %1217
        %1219 = vrot.lane.b32.xlu0 %v339, 24
        %v1220 = vpop.permute.xlu0 %1219
        %1221 = vrot.lane.b32.xlu0 %v340, 24
        %v1222 = vpop.permute.xlu0 %1221
        %1223 = vrot.lane.b32.xlu0 %v341, 24
        %v1224 = vpop.permute.xlu0 %1223
        %1225 = vrot.lane.b32.xlu0 %v342, 24
        %v1226 = vpop.permute.xlu0 %1225
        %1227 = vrot.lane.b32.xlu0 %v343, 24
        %v1228 = vpop.permute.xlu0 %1227
        %1280 = vrot.lane.b32.xlu0 %v299, 28
        %v1281 = vpop.permute.xlu0 %1280
        %1282 = vrot.lane.b32.xlu0 %v300, 28
        %v1283 = vpop.permute.xlu0 %1282
        %1284 = vrot.lane.b32.xlu0 %v301, 28
        %v1285 = vpop.permute.xlu0 %1284
        %1286 = vrot.lane.b32.xlu0 %v302, 28
        %v1287 = vpop.permute.xlu0 %1286
        %1288 = vrot.lane.b32.xlu0 %v303, 28
        %v1289 = vpop.permute.xlu0 %1288
        %1290 = vrot.lane.b32.xlu0 %v304, 28
        %v1291 = vpop.permute.xlu0 %1290
        %1292 = vrot.lane.b32.xlu0 %v305, 28
        %v1293 = vpop.permute.xlu0 %1292
        %1294 = vrot.lane.b32.xlu0 %v306, 28
        %v1295 = vpop.permute.xlu0 %1294
        %1296 = vrot.lane.b32.xlu0 %v307, 28
        %v1297 = vpop.permute.xlu0 %1296
        %1298 = vrot.lane.b32.xlu0 %v308, 28
        %v1299 = vpop.permute.xlu0 %1298
        %1300 = vrot.lane.b32.xlu0 %v309, 28
        %v1301 = vpop.permute.xlu0 %1300
        %1302 = vrot.lane.b32.xlu0 %v310, 28
        %v1303 = vpop.permute.xlu0 %1302
        %1304 = vrot.lane.b32.xlu0 %v311, 28
        %v1305 = vpop.permute.xlu0 %1304
        %1306 = vrot.lane.b32.xlu0 %v312, 28
        %v1307 = vpop.permute.xlu0 %1306
        %1308 = vrot.lane.b32.xlu0 %v313, 28
        %v1309 = vpop.permute.xlu0 %1308
        %1310 = vrot.lane.b32.xlu0 %v314, 28
        %v1311 = vpop.permute.xlu0 %1310
        %1312 = vrot.lane.b32.xlu0 %v315, 28
        %v1313 = vpop.permute.xlu0 %1312
        %1314 = vrot.lane.b32.xlu0 %v316, 28
        %v1315 = vpop.permute.xlu0 %1314
        %1316 = vrot.lane.b32.xlu0 %v317, 28
        %v1317 = vpop.permute.xlu0 %1316
        %1318 = vrot.lane.b32.xlu0 %v318, 28
        %v1319 = vpop.permute.xlu0 %1318
        %1320 = vrot.lane.b32.xlu0 %v319, 28
        %v1321 = vpop.permute.xlu0 %1320
        %1322 = vrot.lane.b32.xlu0 %v320, 28
        %v1323 = vpop.permute.xlu0 %1322
        %1324 = vrot.lane.b32.xlu0 %v321, 28
        %v1325 = vpop.permute.xlu0 %1324
        %1326 = vrot.lane.b32.xlu0 %v322, 28
        %v1327 = vpop.permute.xlu0 %1326
        %1328 = vrot.lane.b32.xlu0 %v323, 28
        %v1329 = vpop.permute.xlu0 %1328
        %1330 = vrot.lane.b32.xlu0 %v324, 28
        %v1331 = vpop.permute.xlu0 %1330
        %1332 = vrot.lane.b32.xlu0 %v325, 28
        %v1333 = vpop.permute.xlu0 %1332
        %1334 = vrot.lane.b32.xlu0 %v326, 28
        %v1335 = vpop.permute.xlu0 %1334
        %1336 = vrot.lane.b32.xlu0 %v327, 28
        %v1337 = vpop.permute.xlu0 %1336
        %1338 = vrot.lane.b32.xlu0 %v328, 28
        %v1339 = vpop.permute.xlu0 %1338
        %1340 = vrot.lane.b32.xlu0 %v329, 28
        %v1341 = vpop.permute.xlu0 %1340
        %1342 = vrot.lane.b32.xlu0 %v330, 28
        %v1343 = vpop.permute.xlu0 %1342
        %1344 = vrot.lane.b32.xlu0 %v331, 28
        %v1345 = vpop.permute.xlu0 %1344
        %1346 = vrot.lane.b32.xlu0 %v332, 28
        %v1347 = vpop.permute.xlu0 %1346
        %1348 = vrot.lane.b32.xlu0 %v333, 28
        %v1349 = vpop.permute.xlu0 %1348
        %1350 = vrot.lane.b32.xlu0 %v334, 28
        %v1351 = vpop.permute.xlu0 %1350
        %1352 = vrot.lane.b32.xlu0 %v335, 28
        %v1353 = vpop.permute.xlu0 %1352
        %1354 = vrot.lane.b32.xlu0 %v336, 28
        %v1355 = vpop.permute.xlu0 %1354
        %1356 = vrot.lane.b32.xlu0 %v337, 28
        %v1357 = vpop.permute.xlu0 %1356
        %1358 = vrot.lane.b32.xlu0 %v338, 28
        %v1359 = vpop.permute.xlu0 %1358
        %1360 = vrot.lane.b32.xlu0 %v339, 28
        %v1361 = vpop.permute.xlu0 %1360
        %1362 = vrot.lane.b32.xlu0 %v340, 28
        %v1363 = vpop.permute.xlu0 %1362
        %1364 = vrot.lane.b32.xlu0 %v341, 28
        %v1365 = vpop.permute.xlu0 %1364
        %1366 = vrot.lane.b32.xlu0 %v342, 28
        %v1367 = vpop.permute.xlu0 %1366
        %1368 = vrot.lane.b32.xlu0 %v343, 28
        %v1369 = vpop.permute.xlu0 %1368
        %1370 = vrot.lane.b32.xlu0 %v344, 28
        %v1371 = vpop.permute.xlu0 %1370
        %1372 = vrot.lane.b32.xlu0 %v345, 28
        %v1373 = vpop.permute.xlu0 %1372
        %1374 = vrot.lane.b32.xlu0 %v346, 28
        %v1375 = vpop.permute.xlu0 %1374
        %1427 = vrot.lane.b32.xlu0 %v302, 32
        %v1428 = vpop.permute.xlu0 %1427
        %1429 = vrot.lane.b32.xlu0 %v303, 32
        %v1430 = vpop.permute.xlu0 %1429
        %1431 = vrot.lane.b32.xlu0 %v304, 32
        %v1432 = vpop.permute.xlu0 %1431
        %1433 = vrot.lane.b32.xlu0 %v305, 32
        %v1434 = vpop.permute.xlu0 %1433
        %1435 = vrot.lane.b32.xlu0 %v306, 32
        %v1436 = vpop.permute.xlu0 %1435
        %1437 = vrot.lane.b32.xlu0 %v307, 32
        %v1438 = vpop.permute.xlu0 %1437
        %1439 = vrot.lane.b32.xlu0 %v308, 32
        %v1440 = vpop.permute.xlu0 %1439
        %1441 = vrot.lane.b32.xlu0 %v309, 32
        %v1442 = vpop.permute.xlu0 %1441
        %1443 = vrot.lane.b32.xlu0 %v310, 32
        %v1444 = vpop.permute.xlu0 %1443
        %1445 = vrot.lane.b32.xlu0 %v311, 32
        %v1446 = vpop.permute.xlu0 %1445
        %1447 = vrot.lane.b32.xlu0 %v312, 32
        %v1448 = vpop.permute.xlu0 %1447
        %1449 = vrot.lane.b32.xlu0 %v313, 32
        %v1450 = vpop.permute.xlu0 %1449
        %1451 = vrot.lane.b32.xlu0 %v314, 32
        %v1452 = vpop.permute.xlu0 %1451
        %1453 = vrot.lane.b32.xlu0 %v315, 32
        %v1454 = vpop.permute.xlu0 %1453
        %1455 = vrot.lane.b32.xlu0 %v316, 32
        %v1456 = vpop.permute.xlu0 %1455
        %1457 = vrot.lane.b32.xlu0 %v317, 32
        %v1458 = vpop.permute.xlu0 %1457
        %1459 = vrot.lane.b32.xlu0 %v318, 32
        %v1460 = vpop.permute.xlu0 %1459
        %1461 = vrot.lane.b32.xlu0 %v319, 32
        %v1462 = vpop.permute.xlu0 %1461
        %1463 = vrot.lane.b32.xlu0 %v320, 32
        %v1464 = vpop.permute.xlu0 %1463
        %1465 = vrot.lane.b32.xlu0 %v321, 32
        %v1466 = vpop.permute.xlu0 %1465
        %1467 = vrot.lane.b32.xlu0 %v322, 32
        %v1468 = vpop.permute.xlu0 %1467
        %1469 = vrot.lane.b32.xlu0 %v323, 32
        %v1470 = vpop.permute.xlu0 %1469
        %1471 = vrot.lane.b32.xlu0 %v324, 32
        %v1472 = vpop.permute.xlu0 %1471
        %1473 = vrot.lane.b32.xlu0 %v325, 32
        %v1474 = vpop.permute.xlu0 %1473
        %1475 = vrot.lane.b32.xlu0 %v326, 32
        %v1476 = vpop.permute.xlu0 %1475
        %1477 = vrot.lane.b32.xlu0 %v327, 32
        %v1478 = vpop.permute.xlu0 %1477
        %1479 = vrot.lane.b32.xlu0 %v328, 32
        %v1480 = vpop.permute.xlu0 %1479
        %1481 = vrot.lane.b32.xlu0 %v329, 32
        %v1482 = vpop.permute.xlu0 %1481
        %1483 = vrot.lane.b32.xlu0 %v330, 32
        %v1484 = vpop.permute.xlu0 %1483
        %1485 = vrot.lane.b32.xlu0 %v331, 32
        %v1486 = vpop.permute.xlu0 %1485
        %1487 = vrot.lane.b32.xlu0 %v332, 32
        %v1488 = vpop.permute.xlu0 %1487
        %1489 = vrot.lane.b32.xlu0 %v333, 32
        %v1490 = vpop.permute.xlu0 %1489
        %1491 = vrot.lane.b32.xlu0 %v334, 32
        %v1492 = vpop.permute.xlu0 %1491
        %1493 = vrot.lane.b32.xlu0 %v335, 32
        %v1494 = vpop.permute.xlu0 %1493
        %1495 = vrot.lane.b32.xlu0 %v336, 32
        %v1496 = vpop.permute.xlu0 %1495
        %1497 = vrot.lane.b32.xlu0 %v337, 32
        %v1498 = vpop.permute.xlu0 %1497
        %1499 = vrot.lane.b32.xlu0 %v338, 32
        %v1500 = vpop.permute.xlu0 %1499
        %1501 = vrot.lane.b32.xlu0 %v339, 32
        %v1502 = vpop.permute.xlu0 %1501
        %1503 = vrot.lane.b32.xlu0 %v340, 32
        %v1504 = vpop.permute.xlu0 %1503
        %1505 = vrot.lane.b32.xlu0 %v341, 32
        %v1506 = vpop.permute.xlu0 %1505
        %1507 = vrot.lane.b32.xlu0 %v342, 32
        %v1508 = vpop.permute.xlu0 %1507
        %1509 = vrot.lane.b32.xlu0 %v343, 32
        %v1510 = vpop.permute.xlu0 %1509
        %1511 = vrot.lane.b32.xlu0 %v344, 32
        %v1512 = vpop.permute.xlu0 %1511
        %1513 = vrot.lane.b32.xlu0 %v345, 32
        %v1514 = vpop.permute.xlu0 %1513
        %1515 = vrot.lane.b32.xlu0 %v346, 32
        %v1516 = vpop.permute.xlu0 %1515
        %1517 = vrot.lane.b32.xlu0 %v347, 32
        %v1518 = vpop.permute.xlu0 %1517
        %1519 = vrot.lane.b32.xlu0 %v348, 32
        %v1520 = vpop.permute.xlu0 %1519
        %1521 = vrot.lane.b32.xlu0 %v349, 32
        %v1522 = vpop.permute.xlu0 %1521
        %vm1571 = vcmask 31744
        %v1572 = vsel %vm1571, %v278, %v399
        %v1573 = vsel %vm1571, %v279, %v401
        %v1574 = vsel %vm1571, %v280, %v403
        %v1575 = vsel %vm1571, %v281, %v405
        %v1576 = vsel %vm1571, %v282, %v407
        %v1577 = vsel %vm1571, %v283, %v409
        %v1578 = vsel %vm1571, %v284, %v411
        %v1579 = vsel %vm1571, %v285, %v413
        %v1580 = vsel %vm1571, %v286, %v415
        %v1581 = vsel %vm1571, %v287, %v417
        %v1582 = vsel %vm1571, %v288, %v419
        %v1583 = vsel %vm1571, %v289, %v421
        %v1584 = vsel %vm1571, %v290, %v423
        %v1585 = vsel %vm1571, %v291, %v425
        %v1586 = vsel %vm1571, %v292, %v427
        %v1587 = vsel %vm1571, %v293, %v429
        %v1588 = vsel %vm1571, %v294, %v431
        %v1589 = vsel %vm1571, %v295, %v433
        %v1590 = vsel %vm1571, %v296, %v435
        %v1591 = vsel %vm1571, %v297, %v437
        %v1592 = vsel %vm1571, %v298, %v439
        %v1593 = vsel %vm1571, %v299, %v441
        %v1594 = vsel %vm1571, %v300, %v443
        %v1595 = vsel %vm1571, %v301, %v445
        %v1596 = vsel %vm1571, %v302, %v447
        %v1597 = vsel %vm1571, %v303, %v449
        %v1598 = vsel %vm1571, %v304, %v451
        %v1599 = vsel %vm1571, %v305, %v453
        %v1600 = vsel %vm1571, %v306, %v455
        %v1601 = vsel %vm1571, %v307, %v457
        %v1602 = vsel %vm1571, %v308, %v459
        %v1603 = vsel %vm1571, %v309, %v461
        %v1604 = vsel %vm1571, %v310, %v463
        %v1605 = vsel %vm1571, %v311, %v465
        %v1606 = vsel %vm1571, %v312, %v467
        %v1607 = vsel %vm1571, %v313, %v469
        %v1608 = vsel %vm1571, %v314, %v471
        %v1609 = vsel %vm1571, %v315, %v473
        %v1610 = vsel %vm1571, %v316, %v475
        %v1611 = vsel %vm1571, %v317, %v477
        %v1612 = vsel %vm1571, %v318, %v479
        %v1613 = vsel %vm1571, %v319, %v481
        %v1614 = vsel %vm1571, %v320, %v483
        %v1615 = vsel %vm1571, %v321, %v485
        %v1616 = vsel %vm1571, %v322, %v487
        %v1617 = vsel %vm1571, %v323, %v489
        %v1618 = vsel %vm1571, %v324, %v491
        %v1619 = vsel %vm1571, %v325, %v493
        %vm1620 = vcmask 64512
        %v1621 = vsel %vm1620, %v1572, %v546
        %v1622 = vsel %vm1620, %v1573, %v548
        %v1623 = vsel %vm1620, %v1574, %v550
        %v1624 = vsel %vm1620, %v1575, %v552
        %v1625 = vsel %vm1620, %v1576, %v554
        %v1626 = vsel %vm1620, %v1577, %v556
        %v1627 = vsel %vm1620, %v1578, %v558
        %v1628 = vsel %vm1620, %v1579, %v560
        %v1629 = vsel %vm1620, %v1580, %v562
        %v1630 = vsel %vm1620, %v1581, %v564
        %v1631 = vsel %vm1620, %v1582, %v566
        %v1632 = vsel %vm1620, %v1583, %v568
        %v1633 = vsel %vm1620, %v1584, %v570
        %v1634 = vsel %vm1620, %v1585, %v572
        %v1635 = vsel %vm1620, %v1586, %v574
        %v1636 = vsel %vm1620, %v1587, %v576
        %v1637 = vsel %vm1620, %v1588, %v578
        %v1638 = vsel %vm1620, %v1589, %v580
        %v1639 = vsel %vm1620, %v1590, %v582
        %v1640 = vsel %vm1620, %v1591, %v584
        %v1641 = vsel %vm1620, %v1592, %v586
        %v1642 = vsel %vm1620, %v1593, %v588
        %v1643 = vsel %vm1620, %v1594, %v590
        %v1644 = vsel %vm1620, %v1595, %v592
        %v1645 = vsel %vm1620, %v1596, %v594
        %v1646 = vsel %vm1620, %v1597, %v596
        %v1647 = vsel %vm1620, %v1598, %v598
        %v1648 = vsel %vm1620, %v1599, %v600
        %v1649 = vsel %vm1620, %v1600, %v602
        %v1650 = vsel %vm1620, %v1601, %v604
        %v1651 = vsel %vm1620, %v1602, %v606
        %v1652 = vsel %vm1620, %v1603, %v608
        %v1653 = vsel %vm1620, %v1604, %v610
        %v1654 = vsel %vm1620, %v1605, %v612
        %v1655 = vsel %vm1620, %v1606, %v614
        %v1656 = vsel %vm1620, %v1607, %v616
        %v1657 = vsel %vm1620, %v1608, %v618
        %v1658 = vsel %vm1620, %v1609, %v620
        %v1659 = vsel %vm1620, %v1610, %v622
        %v1660 = vsel %vm1620, %v1611, %v624
        %v1661 = vsel %vm1620, %v1612, %v626
        %v1662 = vsel %vm1620, %v1613, %v628
        %v1663 = vsel %vm1620, %v1614, %v630
        %v1664 = vsel %vm1620, %v1615, %v632
        %v1665 = vsel %vm1620, %v1616, %v634
        %v1666 = vsel %vm1620, %v1617, %v636
        %v1667 = vsel %vm1620, %v1618, %v638
        %v1668 = vsel %vm1620, %v1619, %v640
        %vm1669 = vcmask 97280
        %v1670 = vsel %vm1669, %v1621, %v693
        %v1671 = vsel %vm1669, %v1622, %v695
        %v1672 = vsel %vm1669, %v1623, %v697
        %v1673 = vsel %vm1669, %v1624, %v699
        %v1674 = vsel %vm1669, %v1625, %v701
        %v1675 = vsel %vm1669, %v1626, %v703
        %v1676 = vsel %vm1669, %v1627, %v705
        %v1677 = vsel %vm1669, %v1628, %v707
        %v1678 = vsel %vm1669, %v1629, %v709
        %v1679 = vsel %vm1669, %v1630, %v711
        %v1680 = vsel %vm1669, %v1631, %v713
        %v1681 = vsel %vm1669, %v1632, %v715
        %v1682 = vsel %vm1669, %v1633, %v717
        %v1683 = vsel %vm1669, %v1634, %v719
        %v1684 = vsel %vm1669, %v1635, %v721
        %v1685 = vsel %vm1669, %v1636, %v723
        %v1686 = vsel %vm1669, %v1637, %v725
        %v1687 = vsel %vm1669, %v1638, %v727
        %v1688 = vsel %vm1669, %v1639, %v729
        %v1689 = vsel %vm1669, %v1640, %v731
        %v1690 = vsel %vm1669, %v1641, %v733
        %v1691 = vsel %vm1669, %v1642, %v735
        %v1692 = vsel %vm1669, %v1643, %v737
        %v1693 = vsel %vm1669, %v1644, %v739
        %v1694 = vsel %vm1669, %v1645, %v741
        %v1695 = vsel %vm1669, %v1646, %v743
        %v1696 = vsel %vm1669, %v1647, %v745
        %v1697 = vsel %vm1669, %v1648, %v747
        %v1698 = vsel %vm1669, %v1649, %v749
        %v1699 = vsel %vm1669, %v1650, %v751
        %v1700 = vsel %vm1669, %v1651, %v753
        %v1701 = vsel %vm1669, %v1652, %v755
        %v1702 = vsel %vm1669, %v1653, %v757
        %v1703 = vsel %vm1669, %v1654, %v759
        %v1704 = vsel %vm1669, %v1655, %v761
        %v1705 = vsel %vm1669, %v1656, %v763
        %v1706 = vsel %vm1669, %v1657, %v765
        %v1707 = vsel %vm1669, %v1658, %v767
        %v1708 = vsel %vm1669, %v1659, %v769
        %v1709 = vsel %vm1669, %v1660, %v771
        %v1710 = vsel %vm1669, %v1661, %v773
        %v1711 = vsel %vm1669, %v1662, %v775
        %v1712 = vsel %vm1669, %v1663, %v777
        %v1713 = vsel %vm1669, %v1664, %v779
        %v1714 = vsel %vm1669, %v1665, %v781
        %v1715 = vsel %vm1669, %v1666, %v783
        %v1716 = vsel %vm1669, %v1667, %v785
        %v1717 = vsel %vm1669, %v1668, %v787
        %vm1718 = vcmask 130048
        %v1719 = vsel %vm1718, %v1670, %v840
        %v1720 = vsel %vm1718, %v1671, %v842
        %v1721 = vsel %vm1718, %v1672, %v844
        %v1722 = vsel %vm1718, %v1673, %v846
        %v1723 = vsel %vm1718, %v1674, %v848
        %v1724 = vsel %vm1718, %v1675, %v850
        %v1725 = vsel %vm1718, %v1676, %v852
        %v1726 = vsel %vm1718, %v1677, %v854
        %v1727 = vsel %vm1718, %v1678, %v856
        %v1728 = vsel %vm1718, %v1679, %v858
        %v1729 = vsel %vm1718, %v1680, %v860
        %v1730 = vsel %vm1718, %v1681, %v862
        %v1731 = vsel %vm1718, %v1682, %v864
        %v1732 = vsel %vm1718, %v1683, %v866
        %v1733 = vsel %vm1718, %v1684, %v868
        %v1734 = vsel %vm1718, %v1685, %v870
        %v1735 = vsel %vm1718, %v1686, %v872
        %v1736 = vsel %vm1718, %v1687, %v874
        %v1737 = vsel %vm1718, %v1688, %v876
        %v1738 = vsel %vm1718, %v1689, %v878
        %v1739 = vsel %vm1718, %v1690, %v880
        %v1740 = vsel %vm1718, %v1691, %v882
        %v1741 = vsel %vm1718, %v1692, %v884
        %v1742 = vsel %vm1718, %v1693, %v886
        %v1743 = vsel %vm1718, %v1694, %v888
        %v1744 = vsel %vm1718, %v1695, %v890
        %v1745 = vsel %vm1718, %v1696, %v892
        %v1746 = vsel %vm1718, %v1697, %v894
        %v1747 = vsel %vm1718, %v1698, %v896
        %v1748 = vsel %vm1718, %v1699, %v898
        %v1749 = vsel %vm1718, %v1700, %v900
        %v1750 = vsel %vm1718, %v1701, %v902
        %v1751 = vsel %vm1718, %v1702, %v904
        %v1752 = vsel %vm1718, %v1703, %v906
        %v1753 = vsel %vm1718, %v1704, %v908
        %v1754 = vsel %vm1718, %v1705, %v910
        %v1755 = vsel %vm1718, %v1706, %v912
        %v1756 = vsel %vm1718, %v1707, %v914
        %v1757 = vsel %vm1718, %v1708, %v916
        %v1758 = vsel %vm1718, %v1709, %v918
        %v1759 = vsel %vm1718, %v1710, %v920
        %v1760 = vsel %vm1718, %v1711, %v922
        %v1761 = vsel %vm1718, %v1712, %v924
        %v1762 = vsel %vm1718, %v1713, %v926
        %v1763 = vsel %vm1718, %v1714, %v928
        %v1764 = vsel %vm1718, %v1715, %v930
        %v1765 = vsel %vm1718, %v1716, %v932
        %v1766 = vsel %vm1718, %v1717, %v934
        %vm1767 = vcmask 162816
        %v1768 = vsel %vm1767, %v1719, %v987
        %v1769 = vsel %vm1767, %v1720, %v989
        %v1770 = vsel %vm1767, %v1721, %v991
        %v1771 = vsel %vm1767, %v1722, %v993
        %v1772 = vsel %vm1767, %v1723, %v995
        %v1773 = vsel %vm1767, %v1724, %v997
        %v1774 = vsel %vm1767, %v1725, %v999
        %v1775 = vsel %vm1767, %v1726, %v1001
        %v1776 = vsel %vm1767, %v1727, %v1003
        %v1777 = vsel %vm1767, %v1728, %v1005
        %v1778 = vsel %vm1767, %v1729, %v1007
        %v1779 = vsel %vm1767, %v1730, %v1009
        %v1780 = vsel %vm1767, %v1731, %v1011
        %v1781 = vsel %vm1767, %v1732, %v1013
        %v1782 = vsel %vm1767, %v1733, %v1015
        %v1783 = vsel %vm1767, %v1734, %v1017
        %v1784 = vsel %vm1767, %v1735, %v1019
        %v1785 = vsel %vm1767, %v1736, %v1021
        %v1786 = vsel %vm1767, %v1737, %v1023
        %v1787 = vsel %vm1767, %v1738, %v1025
        %v1788 = vsel %vm1767, %v1739, %v1027
        %v1789 = vsel %vm1767, %v1740, %v1029
        %v1790 = vsel %vm1767, %v1741, %v1031
        %v1791 = vsel %vm1767, %v1742, %v1033
        %v1792 = vsel %vm1767, %v1743, %v1035
        %v1793 = vsel %vm1767, %v1744, %v1037
        %v1794 = vsel %vm1767, %v1745, %v1039
        %v1795 = vsel %vm1767, %v1746, %v1041
        %v1796 = vsel %vm1767, %v1747, %v1043
        %v1797 = vsel %vm1767, %v1748, %v1045
        %v1798 = vsel %vm1767, %v1749, %v1047
        %v1799 = vsel %vm1767, %v1750, %v1049
        %v1800 = vsel %vm1767, %v1751, %v1051
        %v1801 = vsel %vm1767, %v1752, %v1053
        %v1802 = vsel %vm1767, %v1753, %v1055
        %v1803 = vsel %vm1767, %v1754, %v1057
        %v1804 = vsel %vm1767, %v1755, %v1059
        %v1805 = vsel %vm1767, %v1756, %v1061
        %v1806 = vsel %vm1767, %v1757, %v1063
        %v1807 = vsel %vm1767, %v1758, %v1065
        %v1808 = vsel %vm1767, %v1759, %v1067
        %v1809 = vsel %vm1767, %v1760, %v1069
        %v1810 = vsel %vm1767, %v1761, %v1071
        %v1811 = vsel %vm1767, %v1762, %v1073
        %v1812 = vsel %vm1767, %v1763, %v1075
        %v1813 = vsel %vm1767, %v1764, %v1077
        %v1814 = vsel %vm1767, %v1765, %v1079
        %v1815 = vsel %vm1767, %v1766, %v1081
        %vm1816 = vcmask 195584
        %v1817 = vsel %vm1816, %v1768, %v1134
        %v1818 = vsel %vm1816, %v1769, %v1136
        %v1819 = vsel %vm1816, %v1770, %v1138
        %v1820 = vsel %vm1816, %v1771, %v1140
        %v1821 = vsel %vm1816, %v1772, %v1142
        %v1822 = vsel %vm1816, %v1773, %v1144
        %v1823 = vsel %vm1816, %v1774, %v1146
        %v1824 = vsel %vm1816, %v1775, %v1148
        %v1825 = vsel %vm1816, %v1776, %v1150
        %v1826 = vsel %vm1816, %v1777, %v1152
        %v1827 = vsel %vm1816, %v1778, %v1154
        %v1828 = vsel %vm1816, %v1779, %v1156
        %v1829 = vsel %vm1816, %v1780, %v1158
        %v1830 = vsel %vm1816, %v1781, %v1160
        %v1831 = vsel %vm1816, %v1782, %v1162
        %v1832 = vsel %vm1816, %v1783, %v1164
        %v1833 = vsel %vm1816, %v1784, %v1166
        %v1834 = vsel %vm1816, %v1785, %v1168
        %v1835 = vsel %vm1816, %v1786, %v1170
        %v1836 = vsel %vm1816, %v1787, %v1172
        %v1837 = vsel %vm1816, %v1788, %v1174
        %v1838 = vsel %vm1816, %v1789, %v1176
        %v1839 = vsel %vm1816, %v1790, %v1178
        %v1840 = vsel %vm1816, %v1791, %v1180
        %v1841 = vsel %vm1816, %v1792, %v1182
        %v1842 = vsel %vm1816, %v1793, %v1184
        %v1843 = vsel %vm1816, %v1794, %v1186
        %v1844 = vsel %vm1816, %v1795, %v1188
        %v1845 = vsel %vm1816, %v1796, %v1190
        %v1846 = vsel %vm1816, %v1797, %v1192
        %v1847 = vsel %vm1816, %v1798, %v1194
        %v1848 = vsel %vm1816, %v1799, %v1196
        %v1849 = vsel %vm1816, %v1800, %v1198
        %v1850 = vsel %vm1816, %v1801, %v1200
        %v1851 = vsel %vm1816, %v1802, %v1202
        %v1852 = vsel %vm1816, %v1803, %v1204
        %v1853 = vsel %vm1816, %v1804, %v1206
        %v1854 = vsel %vm1816, %v1805, %v1208
        %v1855 = vsel %vm1816, %v1806, %v1210
        %v1856 = vsel %vm1816, %v1807, %v1212
        %v1857 = vsel %vm1816, %v1808, %v1214
        %v1858 = vsel %vm1816, %v1809, %v1216
        %v1859 = vsel %vm1816, %v1810, %v1218
        %v1860 = vsel %vm1816, %v1811, %v1220
        %v1861 = vsel %vm1816, %v1812, %v1222
        %v1862 = vsel %vm1816, %v1813, %v1224
        %v1863 = vsel %vm1816, %v1814, %v1226
        %v1864 = vsel %vm1816, %v1815, %v1228
        %vm1865 = vcmask 228352
        %v1866 = vsel %vm1865, %v1817, %v1281
        %v1867 = vsel %vm1865, %v1818, %v1283
        %v1868 = vsel %vm1865, %v1819, %v1285
        %v1869 = vsel %vm1865, %v1820, %v1287
        %v1870 = vsel %vm1865, %v1821, %v1289
        %v1871 = vsel %vm1865, %v1822, %v1291
        %v1872 = vsel %vm1865, %v1823, %v1293
        %v1873 = vsel %vm1865, %v1824, %v1295
        %v1874 = vsel %vm1865, %v1825, %v1297
        %v1875 = vsel %vm1865, %v1826, %v1299
        %v1876 = vsel %vm1865, %v1827, %v1301
        %v1877 = vsel %vm1865, %v1828, %v1303
        %v1878 = vsel %vm1865, %v1829, %v1305
        %v1879 = vsel %vm1865, %v1830, %v1307
        %v1880 = vsel %vm1865, %v1831, %v1309
        %v1881 = vsel %vm1865, %v1832, %v1311
        %v1882 = vsel %vm1865, %v1833, %v1313
        %v1883 = vsel %vm1865, %v1834, %v1315
        %v1884 = vsel %vm1865, %v1835, %v1317
        %v1885 = vsel %vm1865, %v1836, %v1319
        %v1886 = vsel %vm1865, %v1837, %v1321
        %v1887 = vsel %vm1865, %v1838, %v1323
        %v1888 = vsel %vm1865, %v1839, %v1325
        %v1889 = vsel %vm1865, %v1840, %v1327
        %v1890 = vsel %vm1865, %v1841, %v1329
        %v1891 = vsel %vm1865, %v1842, %v1331
        %v1892 = vsel %vm1865, %v1843, %v1333
        %v1893 = vsel %vm1865, %v1844, %v1335
        %v1894 = vsel %vm1865, %v1845, %v1337
        %v1895 = vsel %vm1865, %v1846, %v1339
        %v1896 = vsel %vm1865, %v1847, %v1341
        %v1897 = vsel %vm1865, %v1848, %v1343
        %v1898 = vsel %vm1865, %v1849, %v1345
        %v1899 = vsel %vm1865, %v1850, %v1347
        %v1900 = vsel %vm1865, %v1851, %v1349
        %v1901 = vsel %vm1865, %v1852, %v1351
        %v1902 = vsel %vm1865, %v1853, %v1353
        %v1903 = vsel %vm1865, %v1854, %v1355
        %v1904 = vsel %vm1865, %v1855, %v1357
        %v1905 = vsel %vm1865, %v1856, %v1359
        %v1906 = vsel %vm1865, %v1857, %v1361
        %v1907 = vsel %vm1865, %v1858, %v1363
        %v1908 = vsel %vm1865, %v1859, %v1365
        %v1909 = vsel %vm1865, %v1860, %v1367
        %v1910 = vsel %vm1865, %v1861, %v1369
        %v1911 = vsel %vm1865, %v1862, %v1371
        %v1912 = vsel %vm1865, %v1863, %v1373
        %v1913 = vsel %vm1865, %v1864, %v1375
        %vm1914 = vcmask 261120
        %v1915 = vsel %vm1914, %v1866, %v1428
        %v1916 = vsel %vm1914, %v1867, %v1430
        %v1917 = vsel %vm1914, %v1868, %v1432
        %v1918 = vsel %vm1914, %v1869, %v1434
        %v1919 = vsel %vm1914, %v1870, %v1436
        %v1920 = vsel %vm1914, %v1871, %v1438
        %v1921 = vsel %vm1914, %v1872, %v1440
        %v1922 = vsel %vm1914, %v1873, %v1442
        %v1923 = vsel %vm1914, %v1874, %v1444
        %v1924 = vsel %vm1914, %v1875, %v1446
        %v1925 = vsel %vm1914, %v1876, %v1448
        %v1926 = vsel %vm1914, %v1877, %v1450
        %v1927 = vsel %vm1914, %v1878, %v1452
        %v1928 = vsel %vm1914, %v1879, %v1454
        %v1929 = vsel %vm1914, %v1880, %v1456
        %v1930 = vsel %vm1914, %v1881, %v1458
        %v1931 = vsel %vm1914, %v1882, %v1460
        %v1932 = vsel %vm1914, %v1883, %v1462
        %v1933 = vsel %vm1914, %v1884, %v1464
        %v1934 = vsel %vm1914, %v1885, %v1466
        %v1935 = vsel %vm1914, %v1886, %v1468
        %v1936 = vsel %vm1914, %v1887, %v1470
        %v1937 = vsel %vm1914, %v1888, %v1472
        %v1938 = vsel %vm1914, %v1889, %v1474
        %v1939 = vsel %vm1914, %v1890, %v1476
        %v1940 = vsel %vm1914, %v1891, %v1478
        %v1941 = vsel %vm1914, %v1892, %v1480
        %v1942 = vsel %vm1914, %v1893, %v1482
        %v1943 = vsel %vm1914, %v1894, %v1484
        %v1944 = vsel %vm1914, %v1895, %v1486
        %v1945 = vsel %vm1914, %v1896, %v1488
        %v1946 = vsel %vm1914, %v1897, %v1490
        %v1947 = vsel %vm1914, %v1898, %v1492
        %v1948 = vsel %vm1914, %v1899, %v1494
        %v1949 = vsel %vm1914, %v1900, %v1496
        %v1950 = vsel %vm1914, %v1901, %v1498
        %v1951 = vsel %vm1914, %v1902, %v1500
        %v1952 = vsel %vm1914, %v1903, %v1502
        %v1953 = vsel %vm1914, %v1904, %v1504
        %v1954 = vsel %vm1914, %v1905, %v1506
        %v1955 = vsel %vm1914, %v1906, %v1508
        %v1956 = vsel %vm1914, %v1907, %v1510
        %v1957 = vsel %vm1914, %v1908, %v1512
        %v1958 = vsel %vm1914, %v1909, %v1514
        %v1959 = vsel %vm1914, %v1910, %v1516
        %v1960 = vsel %vm1914, %v1911, %v1518
        %v1961 = vsel %vm1914, %v1912, %v1520
        %v1962 = vsel %vm1914, %v1913, %v1522
        %v1963 = vpack.c.bf16 %v1916, %v1915
        %v1964 = vpack.c.bf16 %v1918, %v1917
        %v1965 = vpack.c.bf16 %v1920, %v1919
        %v1966 = vpack.c.bf16 %v1922, %v1921
        %v1967 = vpack.c.bf16 %v1924, %v1923
        %v1968 = vpack.c.bf16 %v1926, %v1925
        %v1969 = vpack.c.bf16 %v1928, %v1927
        %v1970 = vpack.c.bf16 %v1930, %v1929
        %v1971 = vpack.c.bf16 %v1932, %v1931
        %v1972 = vpack.c.bf16 %v1934, %v1933
        %v1973 = vpack.c.bf16 %v1936, %v1935
        %v1974 = vpack.c.bf16 %v1938, %v1937
        %v1975 = vpack.c.bf16 %v1940, %v1939
        %v1976 = vpack.c.bf16 %v1942, %v1941
        %v1977 = vpack.c.bf16 %v1944, %v1943
        %v1978 = vpack.c.bf16 %v1946, %v1945
        %v1979 = vpack.c.bf16 %v1948, %v1947
        %v1980 = vpack.c.bf16 %v1950, %v1949
        %v1981 = vpack.c.bf16 %v1952, %v1951
        %v1982 = vpack.c.bf16 %v1954, %v1953
        %v1983 = vpack.c.bf16 %v1956, %v1955
        %v1984 = vpack.c.bf16 %v1958, %v1957
        %v1985 = vpack.c.bf16 %v1960, %v1959
        %v1986 = vpack.c.bf16 %v1962, %v1961
        %v1987 = vld [vmem:[%s1] sm:$0xf]
        %v1988 = vld [vmem:[%s1 + $0x4] sm:$0xf]
        %v1989 = vld [vmem:[%s1 + $0x8] sm:$0xf]
        %v1990 = vld [vmem:[%s1 + $0xc] sm:$0xf]
        %v1991 = vld [vmem:[%s1 + $0x10] sm:$0x3]
        %v1997 = vunpack.c.l.b16 %v1987
        %v1998 = vunpack.c.l.b16 %v1988
        %v1999 = vunpack.c.l.b16 %v1989
        %v2000 = vunpack.c.l.b16 %v1990
        %v2001 = vunpack.c.l.b16 %v1991
        %v2002 = vpack.c.b16 %v1998, %v1997
        %v2003 = vpack.c.b16 %v2000, %v1999
        %v2004 = vpack.c.b16 %v2001, %v2001
        %vm2007 = vcmask 293888
        %v2009 = vsel %vm2007, %v1963, 0
        %v2012 = vsel %vm2007, %v1964, 0
        %v2015 = vsel %vm2007, %v1965, 0
        %v2018 = vsel %vm2007, %v1966, 0
        %v2021 = vsel %vm2007, %v1967, 0
        %v2024 = vsel %vm2007, %v1968, 0
        %v2027 = vsel %vm2007, %v1969, 0
        %v2030 = vsel %vm2007, %v1970, 0
        %v2033 = vsel %vm2007, %v1971, 0
        %v2036 = vsel %vm2007, %v1972, 0
        %v2039 = vsel %vm2007, %v1973, 0
        %v2042 = vsel %vm2007, %v1974, 0
        %v2045 = vsel %vm2007, %v1975, 0
        %v2048 = vsel %vm2007, %v1976, 0
        %v2051 = vsel %vm2007, %v1977, 0
        %v2054 = vsel %vm2007, %v1978, 0
        %v2057 = vsel %vm2007, %v1979, 0
        %v2060 = vsel %vm2007, %v1980, 0
        %v2063 = vsel %vm2007, %v1981, 0
        %v2066 = vsel %vm2007, %v1982, 0
        %v2069 = vsel %vm2007, %v1983, 0
        %v2072 = vsel %vm2007, %v1984, 0
        %v2075 = vsel %vm2007, %v1985, 0
        %v2078 = vsel %vm2007, %v1986, 0
        %vm2080 = vcmask 1041408
        %v2082 = vsel %vm2080, %v2004, 0
        %2084 = vmatprep.subr.bf16.mxu0 0
        %2085 = vmatpush1.bf16.msra.mxu0 %v2002
        %2086 = vmatprep.subr.bf16.mxu0 0
        %2087 = vmatpush1.bf16.msra.mxu0 %v2003
        %2088 = vmatprep.subr.bf16.mxu0 0
        %2089 = vmatpush1.bf16.msra.mxu0 %v2082
        %2090 = vmatprep.subr.bf16.mxu0 0
        %2091 = vmatpush1.bf16.msra.mxu0 0
        %2092 = vmatprep.subr.bf16.mxu0 0
        %2093 = vmatpush1.bf16.msra.mxu0 0
        %2094 = vmatprep.subr.bf16.mxu0 0
        %2095 = vmatpush1.bf16.msra.mxu0 0
        %2096 = vmatprep.subr.bf16.mxu0 0
        %2097 = vmatpush1.bf16.msra.mxu0 0
        %2098 = vmatprep.subr.bf16.mxu0 0
        %2099 = vmatpush1.bf16.msra.mxu0 0
        %2100 = vmatprep.subr.bf16.mxu0 0
        %2101 = vmatpush1.bf16.msra.mxu0 0
        %2102 = vmatprep.subr.bf16.mxu0 0
        %2103 = vmatpush1.bf16.msra.mxu0 0
        %2104 = vmatprep.subr.bf16.mxu0 0
        %2105 = vmatpush1.bf16.msra.mxu0 0
        %2106 = vmatprep.subr.bf16.mxu0 0
        %2107 = vmatpush1.bf16.msra.mxu0 0
        %2108 = vmatprep.subr.bf16.mxu0 0
        %2109 = vmatpush1.bf16.msra.mxu0 0
        %2110 = vmatprep.subr.bf16.mxu0 0
        %2111 = vmatpush1.bf16.msra.mxu0 0
        %2112 = vmatprep.subr.bf16.mxu0 0
        %2113 = vmatpush1.bf16.msra.mxu0 0
        %2114 = vmatprep.subr.bf16.mxu0 0
        %2115 = vmatpush1.bf16.msra.mxu0 0
        %2116 = vmatprep.mubr.bf16.mxu0 0
        %2117 = vmatmul.mubr.bf16.gmra.mrb[0].mxu0 %v2009
        %v2118 = vpop.f32.mrb[0].mxu0
        %v2119 = vadd.f32 0.0, %v2118
        %v2120 = vpop.f32.mrb[0].mxu0
        %v2121 = vpop.f32.mrb[0].mxu0
        %v2122 = vadd.f32 0.0, %v2121
        %v2123 = vpop.f32.mrb[0].mxu0
        %2124 = vmatprep.mubr.bf16.mxu0 0
        %2125 = vmatmul.mubr.bf16.gmra.mrb[0].mxu0 %v2012
        %v2126 = vpop.f32.mrb[0].mxu0
        %v2127 = vadd.f32 0.0, %v2126
        %v2128 = vpop.f32.mrb[0].mxu0
        %v2129 = vpop.f32.mrb[0].mxu0
        %v2130 = vadd.f32 0.0, %v2129
        %v2131 = vpop.f32.mrb[0].mxu0
        %2132 = vmatprep.mubr.bf16.mxu0 0
        %2133 = vmatmul.mubr.bf16.gmra.mrb[0].mxu0 %v2015
        %v2134 = vpop.f32.mrb[0].mxu0
        %v2135 = vadd.f32 0.0, %v2134
        %v2136 = vpop.f32.mrb[0].mxu0
        %v2137 = vpop.f32.mrb[0].mxu0
        %v2138 = vadd.f32 0.0, %v2137
        %v2139 = vpop.f32.mrb[0].mxu0
        %2140 = vmatprep.mubr.bf16.mxu0 0
        %2141 = vmatmul.mubr.bf16.gmra.mrb[0].mxu0 %v2018
        %v2142 = vpop.f32.mrb[0].mxu0
        %v2143 = vadd.f32 0.0, %v2142
        %v2144 = vpop.f32.mrb[0].mxu0
        %v2145 = vpop.f32.mrb[0].mxu0
        %v2146 = vadd.f32 0.0, %v2145
        %v2147 = vpop.f32.mrb[0].mxu0
        %2148 = vmatprep.mubr.bf16.mxu0 0
        %2149 = vmatmul.mubr.bf16.gmra.mrb[0].mxu0 %v2021
        %v2150 = vpop.f32.mrb[0].mxu0
        %v2151 = vadd.f32 0.0, %v2150
        %v2152 = vpop.f32.mrb[0].mxu0
        %v2153 = vpop.f32.mrb[0].mxu0
        %v2154 = vadd.f32 0.0, %v2153
        %v2155 = vpop.f32.mrb[0].mxu0
        %2156 = vmatprep.mubr.bf16.mxu0 0
        %2157 = vmatmul.mubr.bf16.gmra.mrb[0].mxu0 %v2024
        %v2158 = vpop.f32.mrb[0].mxu0
        %v2159 = vadd.f32 0.0, %v2158
        %v2160 = vpop.f32.mrb[0].mxu0
        %v2161 = vpop.f32.mrb[0].mxu0
        %v2162 = vadd.f32 0.0, %v2161
        %v2163 = vpop.f32.mrb[0].mxu0
        %2164 = vmatprep.mubr.bf16.mxu0 0
        %2165 = vmatmul.mubr.bf16.gmra.mrb[0].mxu0 %v2027
        %v2166 = vpop.f32.mrb[0].mxu0
        %v2167 = vadd.f32 0.0, %v2166
        %v2168 = vpop.f32.mrb[0].mxu0
        %v2169 = vpop.f32.mrb[0].mxu0
        %v2170 = vadd.f32 0.0, %v2169
        %v2171 = vpop.f32.mrb[0].mxu0
        %2172 = vmatprep.mubr.bf16.mxu0 0
        %2173 = vmatmul.mubr.bf16.gmra.mrb[0].mxu0 %v2030
        %v2174 = vpop.f32.mrb[0].mxu0
        %v2175 = vadd.f32 0.0, %v2174
        %v2176 = vpop.f32.mrb[0].mxu0
        %v2177 = vpop.f32.mrb[0].mxu0
        %v2178 = vadd.f32 0.0, %v2177
        %v2179 = vpop.f32.mrb[0].mxu0
        %2180 = vmatprep.mubr.bf16.mxu0 0
        %2181 = vmatmul.mubr.bf16.gmra.mrb[0].mxu0 %v2033
        %v2182 = vpop.f32.mrb[0].mxu0
        %v2183 = vadd.f32 0.0, %v2182
        %v2184 = vpop.f32.mrb[0].mxu0
        %v2185 = vpop.f32.mrb[0].mxu0
        %v2186 = vadd.f32 0.0, %v2185
        %v2187 = vpop.f32.mrb[0].mxu0
        %2188 = vmatprep.mubr.bf16.mxu0 0
        %2189 = vmatmul.mubr.bf16.gmra.mrb[0].mxu0 %v2036
        %v2190 = vpop.f32.mrb[0].mxu0
        %v2191 = vadd.f32 0.0, %v2190
        %v2192 = vpop.f32.mrb[0].mxu0
        %v2193 = vpop.f32.mrb[0].mxu0
        %v2194 = vadd.f32 0.0, %v2193
        %v2195 = vpop.f32.mrb[0].mxu0
        %2196 = vmatprep.mubr.bf16.mxu0 0
        %2197 = vmatmul.mubr.bf16.gmra.mrb[0].mxu0 %v2039
        %v2198 = vpop.f32.mrb[0].mxu0
        %v2199 = vadd.f32 0.0, %v2198
        %v2200 = vpop.f32.mrb[0].mxu0
        %v2201 = vpop.f32.mrb[0].mxu0
        %v2202 = vadd.f32 0.0, %v2201
        %v2203 = vpop.f32.mrb[0].mxu0
        %2204 = vmatprep.mubr.bf16.mxu0 0
        %2205 = vmatmul.mubr.bf16.gmra.mrb[0].mxu0 %v2042
        %v2206 = vpop.f32.mrb[0].mxu0
        %v2207 = vadd.f32 0.0, %v2206
        %v2208 = vpop.f32.mrb[0].mxu0
        %v2209 = vpop.f32.mrb[0].mxu0
        %v2210 = vadd.f32 0.0, %v2209
        %v2211 = vpop.f32.mrb[0].mxu0
        %2212 = vmatprep.mubr.bf16.mxu0 0
        %2213 = vmatmul.mubr.bf16.gmra.mrb[0].mxu0 %v2045
        %v2214 = vpop.f32.mrb[0].mxu0
        %v2215 = vadd.f32 0.0, %v2214
        %v2216 = vpop.f32.mrb[0].mxu0
        %v2217 = vpop.f32.mrb[0].mxu0
        %v2218 = vadd.f32 0.0, %v2217
        %v2219 = vpop.f32.mrb[0].mxu0
        %2220 = vmatprep.mubr.bf16.mxu0 0
        %2221 = vmatmul.mubr.bf16.gmra.mrb[0].mxu0 %v2048
        %v2222 = vpop.f32.mrb[0].mxu0
        %v2223 = vadd.f32 0.0, %v2222
        %v2224 = vpop.f32.mrb[0].mxu0
        %v2225 = vpop.f32.mrb[0].mxu0
        %v2226 = vadd.f32 0.0, %v2225
        %v2227 = vpop.f32.mrb[0].mxu0
        %2228 = vmatprep.mubr.bf16.mxu0 0
        %2229 = vmatmul.mubr.bf16.gmra.mrb[0].mxu0 %v2051
        %v2230 = vpop.f32.mrb[0].mxu0
        %v2231 = vadd.f32 0.0, %v2230
        %v2232 = vpop.f32.mrb[0].mxu0
        %v2233 = vpop.f32.mrb[0].mxu0
        %v2234 = vadd.f32 0.0, %v2233
        %v2235 = vpop.f32.mrb[0].mxu0
        %2236 = vmatprep.mubr.bf16.mxu0 0
        %2237 = vmatmul.mubr.bf16.gmra.mrb[0].mxu0 %v2054
        %v2238 = vpop.f32.mrb[0].mxu0
        %v2239 = vadd.f32 0.0, %v2238
        %v2240 = vpop.f32.mrb[0].mxu0
        %v2241 = vpop.f32.mrb[0].mxu0
        %v2242 = vadd.f32 0.0, %v2241
        %v2243 = vpop.f32.mrb[0].mxu0
        %2244 = vmatprep.mubr.bf16.mxu0 0
        %2245 = vmatmul.mubr.bf16.gmra.mrb[0].mxu0 %v2057
        %v2246 = vpop.f32.mrb[0].mxu0
        %v2247 = vadd.f32 0.0, %v2246
        %v2248 = vpop.f32.mrb[0].mxu0
        %v2249 = vpop.f32.mrb[0].mxu0
        %v2250 = vadd.f32 0.0, %v2249
        %v2251 = vpop.f32.mrb[0].mxu0
        %2252 = vmatprep.mubr.bf16.mxu0 0
        %2253 = vmatmul.mubr.bf16.gmra.mrb[0].mxu0 %v2060
        %v2254 = vpop.f32.mrb[0].mxu0
        %v2255 = vadd.f32 0.0, %v2254
        %v2256 = vpop.f32.mrb[0].mxu0
        %v2257 = vpop.f32.mrb[0].mxu0
        %v2258 = vadd.f32 0.0, %v2257
        %v2259 = vpop.f32.mrb[0].mxu0
        %2260 = vmatprep.mubr.bf16.mxu0 0
        %2261 = vmatmul.mubr.bf16.gmra.mrb[0].mxu0 %v2063
        %v2262 = vpop.f32.mrb[0].mxu0
        %v2263 = vadd.f32 0.0, %v2262
        %v2264 = vpop.f32.mrb[0].mxu0
        %v2265 = vpop.f32.mrb[0].mxu0
        %v2266 = vadd.f32 0.0, %v2265
        %v2267 = vpop.f32.mrb[0].mxu0
        %2268 = vmatprep.mubr.bf16.mxu0 0
        %2269 = vmatmul.mubr.bf16.gmra.mrb[0].mxu0 %v2066
        %v2270 = vpop.f32.mrb[0].mxu0
        %v2271 = vadd.f32 0.0, %v2270
        %v2272 = vpop.f32.mrb[0].mxu0
        %v2273 = vpop.f32.mrb[0].mxu0
        %v2274 = vadd.f32 0.0, %v2273
        %v2275 = vpop.f32.mrb[0].mxu0
        %2276 = vmatprep.mubr.bf16.mxu0 0
        %2277 = vmatmul.mubr.bf16.gmra.mrb[0].mxu0 %v2069
        %v2278 = vpop.f32.mrb[0].mxu0
        %v2279 = vadd.f32 0.0, %v2278
        %v2280 = vpop.f32.mrb[0].mxu0
        %v2281 = vpop.f32.mrb[0].mxu0
        %v2282 = vadd.f32 0.0, %v2281
        %v2283 = vpop.f32.mrb[0].mxu0
        %2284 = vmatprep.mubr.bf16.mxu0 0
        %2285 = vmatmul.mubr.bf16.gmra.mrb[0].mxu0 %v2072
        %v2286 = vpop.f32.mrb[0].mxu0
        %v2287 = vadd.f32 0.0, %v2286
        %v2288 = vpop.f32.mrb[0].mxu0
        %v2289 = vpop.f32.mrb[0].mxu0
        %v2290 = vadd.f32 0.0, %v2289
        %v2291 = vpop.f32.mrb[0].mxu0
        %2292 = vmatprep.mubr.bf16.mxu0 0
        %2293 = vmatmul.mubr.bf16.gmra.mrb[0].mxu0 %v2075
        %v2294 = vpop.f32.mrb[0].mxu0
        %v2295 = vadd.f32 0.0, %v2294
        %v2296 = vpop.f32.mrb[0].mxu0
        %v2297 = vpop.f32.mrb[0].mxu0
        %v2298 = vadd.f32 0.0, %v2297
        %v2299 = vpop.f32.mrb[0].mxu0
        %2300 = vmatprep.mubr.bf16.mxu0 0
        %2301 = vmatmul.mubr.bf16.gmra.mrb[0].mxu0 %v2078
        %v2302 = vpop.f32.mrb[0].mxu0
        %v2303 = vadd.f32 0.0, %v2302
        %v2304 = vpop.f32.mrb[0].mxu0
        %v2305 = vpop.f32.mrb[0].mxu0
        %v2306 = vadd.f32 0.0, %v2305
        %v2307 = vpop.f32.mrb[0].mxu0
        %2308 = vdwg.mxu0
        %v2309 = vld [vmem:[%s4] sm:$0xff]
        %v2310 = vld [vmem:[%s4 + $0x8] sm:$0xff]
        %v2311 = vld [vmem:[%s4 + $0x10] sm:$0xff]
        %v2312 = vadd.f32 %v2119, %v2309
        %v2313 = vadd.f32 %v2122, %v2310
        %v2314 = vadd.f32 %v2127, %v2311
        %v2315 = vadd.f32 %v2130, %v2309
        %v2316 = vadd.f32 %v2135, %v2310
        %v2317 = vadd.f32 %v2138, %v2311
        %v2318 = vadd.f32 %v2143, %v2309
        %v2319 = vadd.f32 %v2146, %v2310
        %v2320 = vadd.f32 %v2151, %v2311
        %v2321 = vadd.f32 %v2154, %v2309
        %v2322 = vadd.f32 %v2159, %v2310
        %v2323 = vadd.f32 %v2162, %v2311
        %v2324 = vadd.f32 %v2167, %v2309
        %v2325 = vadd.f32 %v2170, %v2310
        %v2326 = vadd.f32 %v2175, %v2311
        %v2327 = vadd.f32 %v2178, %v2309
        %v2328 = vadd.f32 %v2183, %v2310
        %v2329 = vadd.f32 %v2186, %v2311
        %v2330 = vadd.f32 %v2191, %v2309
        %v2331 = vadd.f32 %v2194, %v2310
        %v2332 = vadd.f32 %v2199, %v2311
        %v2333 = vadd.f32 %v2202, %v2309
        %v2334 = vadd.f32 %v2207, %v2310
        %v2335 = vadd.f32 %v2210, %v2311
        %v2336 = vadd.f32 %v2215, %v2309
        %v2337 = vadd.f32 %v2218, %v2310
        %v2338 = vadd.f32 %v2223, %v2311
        %v2339 = vadd.f32 %v2226, %v2309
        %v2340 = vadd.f32 %v2231, %v2310
        %v2341 = vadd.f32 %v2234, %v2311
        %v2342 = vadd.f32 %v2239, %v2309
        %v2343 = vadd.f32 %v2242, %v2310
        %v2344 = vadd.f32 %v2247, %v2311
        %v2345 = vadd.f32 %v2250, %v2309
        %v2346 = vadd.f32 %v2255, %v2310
        %v2347 = vadd.f32 %v2258, %v2311
        %v2348 = vadd.f32 %v2263, %v2309
        %v2349 = vadd.f32 %v2266, %v2310
        %v2350 = vadd.f32 %v2271, %v2311
        %v2351 = vadd.f32 %v2274, %v2309
        %v2352 = vadd.f32 %v2279, %v2310
        %v2353 = vadd.f32 %v2282, %v2311
        %v2354 = vadd.f32 %v2287, %v2309
        %v2355 = vadd.f32 %v2290, %v2310
        %v2356 = vadd.f32 %v2295, %v2311
        %v2357 = vadd.f32 %v2298, %v2309
        %v2358 = vadd.f32 %v2303, %v2310
        %v2359 = vadd.f32 %v2306, %v2311
        %vm2363 = vcmask 1046528
        %v2364 = vrot.slane %v278, 1
        %v2365 = vrot.slane %v279, 1
        %v2366 = vsel %vm2363, %v2364, %v2365
        %v2367 = vrot.slane %v280, 1
        %v2368 = vsel %vm2363, %v2365, %v2367
        %v2369 = vrot.slane %v281, 1
        %v2370 = vrot.slane %v282, 1
        %v2371 = vsel %vm2363, %v2369, %v2370
        %v2372 = vrot.slane %v283, 1
        %v2373 = vsel %vm2363, %v2370, %v2372
        %v2374 = vrot.slane %v284, 1
        %v2375 = vrot.slane %v285, 1
        %v2376 = vsel %vm2363, %v2374, %v2375
        %v2377 = vrot.slane %v286, 1
        %v2378 = vsel %vm2363, %v2375, %v2377
        %v2379 = vrot.slane %v287, 1
        %v2380 = vrot.slane %v288, 1
        %v2381 = vsel %vm2363, %v2379, %v2380
        %v2382 = vrot.slane %v289, 1
        %v2383 = vsel %vm2363, %v2380, %v2382
        %v2384 = vrot.slane %v290, 1
        %v2385 = vrot.slane %v291, 1
        %v2386 = vsel %vm2363, %v2384, %v2385
        %v2387 = vrot.slane %v292, 1
        %v2388 = vsel %vm2363, %v2385, %v2387
        %v2389 = vrot.slane %v293, 1
        %v2390 = vrot.slane %v294, 1
        %v2391 = vsel %vm2363, %v2389, %v2390
        %v2392 = vrot.slane %v295, 1
        %v2393 = vsel %vm2363, %v2390, %v2392
        %v2394 = vrot.slane %v296, 1
        %v2395 = vrot.slane %v297, 1
        %v2396 = vsel %vm2363, %v2394, %v2395
        %v2397 = vrot.slane %v298, 1
        %v2398 = vsel %vm2363, %v2395, %v2397
        %v2399 = vrot.slane %v299, 1
        %v2400 = vrot.slane %v300, 1
        %v2401 = vsel %vm2363, %v2399, %v2400
        %v2402 = vrot.slane %v301, 1
        %v2403 = vsel %vm2363, %v2400, %v2402
        %v2404 = vrot.slane %v302, 1
        %v2405 = vrot.slane %v303, 1
        %v2406 = vsel %vm2363, %v2404, %v2405
        %v2407 = vrot.slane %v304, 1
        %v2408 = vsel %vm2363, %v2405, %v2407
        %v2409 = vrot.slane %v305, 1
        %v2410 = vrot.slane %v306, 1
        %v2411 = vsel %vm2363, %v2409, %v2410
        %v2412 = vrot.slane %v307, 1
        %v2413 = vsel %vm2363, %v2410, %v2412
        %v2414 = vrot.slane %v308, 1
        %v2415 = vrot.slane %v309, 1
        %v2416 = vsel %vm2363, %v2414, %v2415
        %v2417 = vrot.slane %v310, 1
        %v2418 = vsel %vm2363, %v2415, %v2417
        %v2419 = vrot.slane %v311, 1
        %v2420 = vrot.slane %v312, 1
        %v2421 = vsel %vm2363, %v2419, %v2420
        %v2422 = vrot.slane %v313, 1
        %v2423 = vsel %vm2363, %v2420, %v2422
        %v2424 = vrot.slane %v314, 1
        %v2425 = vrot.slane %v315, 1
        %v2426 = vsel %vm2363, %v2424, %v2425
        %v2427 = vrot.slane %v316, 1
        %v2428 = vsel %vm2363, %v2425, %v2427
        %v2429 = vrot.slane %v317, 1
        %v2430 = vrot.slane %v318, 1
        %v2431 = vsel %vm2363, %v2429, %v2430
        %v2432 = vrot.slane %v319, 1
        %v2433 = vsel %vm2363, %v2430, %v2432
        %v2434 = vrot.slane %v320, 1
        %v2435 = vrot.slane %v321, 1
        %v2436 = vsel %vm2363, %v2434, %v2435
        %v2437 = vrot.slane %v322, 1
        %v2438 = vsel %vm2363, %v2435, %v2437
        %v2439 = vrot.slane %v323, 1
        %v2440 = vrot.slane %v324, 1
        %v2441 = vsel %vm2363, %v2439, %v2440
        %v2442 = vrot.slane %v325, 1
        %v2443 = vsel %vm2363, %v2440, %v2442
        %v2444 = vrot.slane %v326, 1
        %v2445 = vrot.slane %v327, 1
        %v2446 = vsel %vm2363, %v2444, %v2445
        %v2447 = vrot.slane %v328, 1
        %v2448 = vsel %vm2363, %v2445, %v2447
        %v2449 = vrot.slane %v329, 1
        %v2450 = vrot.slane %v330, 1
        %v2451 = vsel %vm2363, %v2449, %v2450
        %v2452 = vrot.slane %v331, 1
        %v2453 = vsel %vm2363, %v2450, %v2452
        %v2454 = vrot.slane %v332, 1
        %v2455 = vrot.slane %v333, 1
        %v2456 = vsel %vm2363, %v2454, %v2455
        %v2457 = vrot.slane %v334, 1
        %v2458 = vsel %vm2363, %v2455, %v2457
        %v2459 = vrot.slane %v335, 1
        %v2460 = vrot.slane %v336, 1
        %v2461 = vsel %vm2363, %v2459, %v2460
        %v2462 = vrot.slane %v337, 1
        %v2463 = vsel %vm2363, %v2460, %v2462
        %v2464 = vrot.slane %v338, 1
        %v2465 = vrot.slane %v339, 1
        %v2466 = vsel %vm2363, %v2464, %v2465
        %v2467 = vrot.slane %v340, 1
        %v2468 = vsel %vm2363, %v2465, %v2467
        %v2469 = vrot.slane %v341, 1
        %v2470 = vrot.slane %v342, 1
        %v2471 = vsel %vm2363, %v2469, %v2470
        %v2472 = vrot.slane %v343, 1
        %v2473 = vsel %vm2363, %v2470, %v2472
        %v2474 = vrot.slane %v344, 1
        %v2475 = vrot.slane %v345, 1
        %v2476 = vsel %vm2363, %v2474, %v2475
        %v2477 = vrot.slane %v346, 1
        %v2478 = vsel %vm2363, %v2475, %v2477
        %v2479 = vrot.slane %v347, 1
        %v2480 = vrot.slane %v348, 1
        %v2481 = vsel %vm2363, %v2479, %v2480
        %v2482 = vrot.slane %v349, 1
        %v2483 = vsel %vm2363, %v2480, %v2482
        %2484 = vrot.lane.b32.xlu0 %v2366, 4
        %v2485 = vpop.permute.xlu0 %2484
        %2486 = vrot.lane.b32.xlu0 %v2368, 4
        %v2487 = vpop.permute.xlu0 %2486
        %2488 = vrot.lane.b32.xlu0 %v2371, 4
        %v2489 = vpop.permute.xlu0 %2488
        %2490 = vrot.lane.b32.xlu0 %v2373, 4
        %v2491 = vpop.permute.xlu0 %2490
        %2492 = vrot.lane.b32.xlu0 %v2376, 4
        %v2493 = vpop.permute.xlu0 %2492
        %2494 = vrot.lane.b32.xlu0 %v2378, 4
        %v2495 = vpop.permute.xlu0 %2494
        %2496 = vrot.lane.b32.xlu0 %v2381, 4
        %v2497 = vpop.permute.xlu0 %2496
        %2498 = vrot.lane.b32.xlu0 %v2383, 4
        %v2499 = vpop.permute.xlu0 %2498
        %2500 = vrot.lane.b32.xlu0 %v2386, 4
        %v2501 = vpop.permute.xlu0 %2500
        %2502 = vrot.lane.b32.xlu0 %v2388, 4
        %v2503 = vpop.permute.xlu0 %2502
        %2504 = vrot.lane.b32.xlu0 %v2391, 4
        %v2505 = vpop.permute.xlu0 %2504
        %2506 = vrot.lane.b32.xlu0 %v2393, 4
        %v2507 = vpop.permute.xlu0 %2506
        %2508 = vrot.lane.b32.xlu0 %v2396, 4
        %v2509 = vpop.permute.xlu0 %2508
        %2510 = vrot.lane.b32.xlu0 %v2398, 4
        %v2511 = vpop.permute.xlu0 %2510
        %2512 = vrot.lane.b32.xlu0 %v2401, 4
        %v2513 = vpop.permute.xlu0 %2512
        %2514 = vrot.lane.b32.xlu0 %v2403, 4
        %v2515 = vpop.permute.xlu0 %2514
        %2516 = vrot.lane.b32.xlu0 %v2406, 4
        %v2517 = vpop.permute.xlu0 %2516
        %2518 = vrot.lane.b32.xlu0 %v2408, 4
        %v2519 = vpop.permute.xlu0 %2518
        %2520 = vrot.lane.b32.xlu0 %v2411, 4
        %v2521 = vpop.permute.xlu0 %2520
        %2522 = vrot.lane.b32.xlu0 %v2413, 4
        %v2523 = vpop.permute.xlu0 %2522
        %2524 = vrot.lane.b32.xlu0 %v2416, 4
        %v2525 = vpop.permute.xlu0 %2524
        %2526 = vrot.lane.b32.xlu0 %v2418, 4
        %v2527 = vpop.permute.xlu0 %2526
        %2528 = vrot.lane.b32.xlu0 %v2421, 4
        %v2529 = vpop.permute.xlu0 %2528
        %2530 = vrot.lane.b32.xlu0 %v2423, 4
        %v2531 = vpop.permute.xlu0 %2530
        %2532 = vrot.lane.b32.xlu0 %v2426, 4
        %v2533 = vpop.permute.xlu0 %2532
        %2534 = vrot.lane.b32.xlu0 %v2428, 4
        %v2535 = vpop.permute.xlu0 %2534
        %2536 = vrot.lane.b32.xlu0 %v2431, 4
        %v2537 = vpop.permute.xlu0 %2536
        %2538 = vrot.lane.b32.xlu0 %v2433, 4
        %v2539 = vpop.permute.xlu0 %2538
        %2540 = vrot.lane.b32.xlu0 %v2436, 4
        %v2541 = vpop.permute.xlu0 %2540
        %2542 = vrot.lane.b32.xlu0 %v2438, 4
        %v2543 = vpop.permute.xlu0 %2542
        %2544 = vrot.lane.b32.xlu0 %v2441, 4
        %v2545 = vpop.permute.xlu0 %2544
        %2546 = vrot.lane.b32.xlu0 %v2443, 4
        %v2547 = vpop.permute.xlu0 %2546
        %2548 = vrot.lane.b32.xlu0 %v2446, 4
        %v2549 = vpop.permute.xlu0 %2548
        %2550 = vrot.lane.b32.xlu0 %v2448, 4
        %v2551 = vpop.permute.xlu0 %2550
        %2552 = vrot.lane.b32.xlu0 %v2451, 4
        %v2553 = vpop.permute.xlu0 %2552
        %2554 = vrot.lane.b32.xlu0 %v2453, 4
        %v2555 = vpop.permute.xlu0 %2554
        %2556 = vrot.lane.b32.xlu0 %v2456, 4
        %v2557 = vpop.permute.xlu0 %2556
        %2558 = vrot.lane.b32.xlu0 %v2458, 4
        %v2559 = vpop.permute.xlu0 %2558
        %2560 = vrot.lane.b32.xlu0 %v2461, 4
        %v2561 = vpop.permute.xlu0 %2560
        %2562 = vrot.lane.b32.xlu0 %v2463, 4
        %v2563 = vpop.permute.xlu0 %2562
        %2564 = vrot.lane.b32.xlu0 %v2466, 4
        %v2565 = vpop.permute.xlu0 %2564
        %2566 = vrot.lane.b32.xlu0 %v2468, 4
        %v2567 = vpop.permute.xlu0 %2566
        %2568 = vrot.lane.b32.xlu0 %v2471, 4
        %v2569 = vpop.permute.xlu0 %2568
        %2570 = vrot.lane.b32.xlu0 %v2473, 4
        %v2571 = vpop.permute.xlu0 %2570
        %2572 = vrot.lane.b32.xlu0 %v2476, 4
        %v2573 = vpop.permute.xlu0 %2572
        %2574 = vrot.lane.b32.xlu0 %v2478, 4
        %v2575 = vpop.permute.xlu0 %2574
        %2576 = vrot.lane.b32.xlu0 %v2481, 4
        %v2577 = vpop.permute.xlu0 %2576
        %2578 = vrot.lane.b32.xlu0 %v2483, 4
        %v2579 = vpop.permute.xlu0 %2578
        %vm2628 = vcmask 1045504
        %v2629 = vrot.slane %v278, 2
        %v2630 = vrot.slane %v279, 2
        %v2631 = vsel %vm2628, %v2629, %v2630
        %v2632 = vrot.slane %v280, 2
        %v2633 = vsel %vm2628, %v2630, %v2632
        %v2634 = vrot.slane %v281, 2
        %v2635 = vrot.slane %v282, 2
        %v2636 = vsel %vm2628, %v2634, %v2635
        %v2637 = vrot.slane %v283, 2
        %v2638 = vsel %vm2628, %v2635, %v2637
        %v2639 = vrot.slane %v284, 2
        %v2640 = vrot.slane %v285, 2
        %v2641 = vsel %vm2628, %v2639, %v2640
        %v2642 = vrot.slane %v286, 2
        %v2643 = vsel %vm2628, %v2640, %v2642
        %v2644 = vrot.slane %v287, 2
        %v2645 = vrot.slane %v288, 2
        %v2646 = vsel %vm2628, %v2644, %v2645
        %v2647 = vrot.slane %v289, 2
        %v2648 = vsel %vm2628, %v2645, %v2647
        %v2649 = vrot.slane %v290, 2
        %v2650 = vrot.slane %v291, 2
        %v2651 = vsel %vm2628, %v2649, %v2650
        %v2652 = vrot.slane %v292, 2
        %v2653 = vsel %vm2628, %v2650, %v2652
        %v2654 = vrot.slane %v293, 2
        %v2655 = vrot.slane %v294, 2
        %v2656 = vsel %vm2628, %v2654, %v2655
        %v2657 = vrot.slane %v295, 2
        %v2658 = vsel %vm2628, %v2655, %v2657
        %v2659 = vrot.slane %v296, 2
        %v2660 = vrot.slane %v297, 2
        %v2661 = vsel %vm2628, %v2659, %v2660
        %v2662 = vrot.slane %v298, 2
        %v2663 = vsel %vm2628, %v2660, %v2662
        %v2664 = vrot.slane %v299, 2
        %v2665 = vrot.slane %v300, 2
        %v2666 = vsel %vm2628, %v2664, %v2665
        %v2667 = vrot.slane %v301, 2
        %v2668 = vsel %vm2628, %v2665, %v2667
        %v2669 = vrot.slane %v302, 2
        %v2670 = vrot.slane %v303, 2
        %v2671 = vsel %vm2628, %v2669, %v2670
        %v2672 = vrot.slane %v304, 2
        %v2673 = vsel %vm2628, %v2670, %v2672
        %v2674 = vrot.slane %v305, 2
        %v2675 = vrot.slane %v306, 2
        %v2676 = vsel %vm2628, %v2674, %v2675
        %v2677 = vrot.slane %v307, 2
        %v2678 = vsel %vm2628, %v2675, %v2677
        %v2679 = vrot.slane %v308, 2
        %v2680 = vrot.slane %v309, 2
        %v2681 = vsel %vm2628, %v2679, %v2680
        %v2682 = vrot.slane %v310, 2
        %v2683 = vsel %vm2628, %v2680, %v2682
        %v2684 = vrot.slane %v311, 2
        %v2685 = vrot.slane %v312, 2
        %v2686 = vsel %vm2628, %v2684, %v2685
        %v2687 = vrot.slane %v313, 2
        %v2688 = vsel %vm2628, %v2685, %v2687
        %v2689 = vrot.slane %v314, 2
        %v2690 = vrot.slane %v315, 2
        %v2691 = vsel %vm2628, %v2689, %v2690
        %v2692 = vrot.slane %v316, 2
        %v2693 = vsel %vm2628, %v2690, %v2692
        %v2694 = vrot.slane %v317, 2
        %v2695 = vrot.slane %v318, 2
        %v2696 = vsel %vm2628, %v2694, %v2695
        %v2697 = vrot.slane %v319, 2
        %v2698 = vsel %vm2628, %v2695, %v2697
        %v2699 = vrot.slane %v320, 2
        %v2700 = vrot.slane %v321, 2
        %v2701 = vsel %vm2628, %v2699, %v2700
        %v2702 = vrot.slane %v322, 2
        %v2703 = vsel %vm2628, %v2700, %v2702
        %v2704 = vrot.slane %v323, 2
        %v2705 = vrot.slane %v324, 2
        %v2706 = vsel %vm2628, %v2704, %v2705
        %v2707 = vrot.slane %v325, 2
        %v2708 = vsel %vm2628, %v2705, %v2707
        %v2709 = vrot.slane %v326, 2
        %v2710 = vrot.slane %v327, 2
        %v2711 = vsel %vm2628, %v2709, %v2710
        %v2712 = vrot.slane %v328, 2
        %v2713 = vsel %vm2628, %v2710, %v2712
        %v2714 = vrot.slane %v329, 2
        %v2715 = vrot.slane %v330, 2
        %v2716 = vsel %vm2628, %v2714, %v2715
        %v2717 = vrot.slane %v331, 2
        %v2718 = vsel %vm2628, %v2715, %v2717
        %v2719 = vrot.slane %v332, 2
        %v2720 = vrot.slane %v333, 2
        %v2721 = vsel %vm2628, %v2719, %v2720
        %v2722 = vrot.slane %v334, 2
        %v2723 = vsel %vm2628, %v2720, %v2722
        %v2724 = vrot.slane %v335, 2
        %v2725 = vrot.slane %v336, 2
        %v2726 = vsel %vm2628, %v2724, %v2725
        %v2727 = vrot.slane %v337, 2
        %v2728 = vsel %vm2628, %v2725, %v2727
        %v2729 = vrot.slane %v338, 2
        %v2730 = vrot.slane %v339, 2
        %v2731 = vsel %vm2628, %v2729, %v2730
        %v2732 = vrot.slane %v340, 2
        %v2733 = vsel %vm2628, %v2730, %v2732
        %v2734 = vrot.slane %v341, 2
        %v2735 = vrot.slane %v342, 2
        %v2736 = vsel %vm2628, %v2734, %v2735
        %v2737 = vrot.slane %v343, 2
        %v2738 = vsel %vm2628, %v2735, %v2737
        %v2739 = vrot.slane %v344, 2
        %v2740 = vrot.slane %v345, 2
        %v2741 = vsel %vm2628, %v2739, %v2740
        %v2742 = vrot.slane %v346, 2
        %v2743 = vsel %vm2628, %v2740, %v2742
        %v2744 = vrot.slane %v347, 2
        %v2745 = vrot.slane %v348, 2
        %v2746 = vsel %vm2628, %v2744, %v2745
        %v2747 = vrot.slane %v349, 2
        %v2748 = vsel %vm2628, %v2745, %v2747
        %2749 = vrot.lane.b32.xlu0 %v2631, 8
        %v2750 = vpop.permute.xlu0 %2749
        %2751 = vrot.lane.b32.xlu0 %v2633, 8
        %v2752 = vpop.permute.xlu0 %2751
        %2753 = vrot.lane.b32.xlu0 %v2636, 8
        %v2754 = vpop.permute.xlu0 %2753
        %2755 = vrot.lane.b32.xlu0 %v2638, 8
        %v2756 = vpop.permute.xlu0 %2755
        %2757 = vrot.lane.b32.xlu0 %v2641, 8
        %v2758 = vpop.permute.xlu0 %2757
        %2759 = vrot.lane.b32.xlu0 %v2643, 8
        %v2760 = vpop.permute.xlu0 %2759
        %2761 = vrot.lane.b32.xlu0 %v2646, 8
        %v2762 = vpop.permute.xlu0 %2761
        %2763 = vrot.lane.b32.xlu0 %v2648, 8
        %v2764 = vpop.permute.xlu0 %2763
        %2765 = vrot.lane.b32.xlu0 %v2651, 8
        %v2766 = vpop.permute.xlu0 %2765
        %2767 = vrot.lane.b32.xlu0 %v2653, 8
        %v2768 = vpop.permute.xlu0 %2767
        %2769 = vrot.lane.b32.xlu0 %v2656, 8
        %v2770 = vpop.permute.xlu0 %2769
        %2771 = vrot.lane.b32.xlu0 %v2658, 8
        %v2772 = vpop.permute.xlu0 %2771
        %2773 = vrot.lane.b32.xlu0 %v2661, 8
        %v2774 = vpop.permute.xlu0 %2773
        %2775 = vrot.lane.b32.xlu0 %v2663, 8
        %v2776 = vpop.permute.xlu0 %2775
        %2777 = vrot.lane.b32.xlu0 %v2666, 8
        %v2778 = vpop.permute.xlu0 %2777
        %2779 = vrot.lane.b32.xlu0 %v2668, 8
        %v2780 = vpop.permute.xlu0 %2779
        %2781 = vrot.lane.b32.xlu0 %v2671, 8
        %v2782 = vpop.permute.xlu0 %2781
        %2783 = vrot.lane.b32.xlu0 %v2673, 8
        %v2784 = vpop.permute.xlu0 %2783
        %2785 = vrot.lane.b32.xlu0 %v2676, 8
        %v2786 = vpop.permute.xlu0 %2785
        %2787 = vrot.lane.b32.xlu0 %v2678, 8
        %v2788 = vpop.permute.xlu0 %2787
        %2789 = vrot.lane.b32.xlu0 %v2681, 8
        %v2790 = vpop.permute.xlu0 %2789
        %2791 = vrot.lane.b32.xlu0 %v2683, 8
        %v2792 = vpop.permute.xlu0 %2791
        %2793 = vrot.lane.b32.xlu0 %v2686, 8
        %v2794 = vpop.permute.xlu0 %2793
        %2795 = vrot.lane.b32.xlu0 %v2688, 8
        %v2796 = vpop.permute.xlu0 %2795
        %2797 = vrot.lane.b32.xlu0 %v2691, 8
        %v2798 = vpop.permute.xlu0 %2797
        %2799 = vrot.lane.b32.xlu0 %v2693, 8
        %v2800 = vpop.permute.xlu0 %2799
        %2801 = vrot.lane.b32.xlu0 %v2696, 8
        %v2802 = vpop.permute.xlu0 %2801
        %2803 = vrot.lane.b32.xlu0 %v2698, 8
        %v2804 = vpop.permute.xlu0 %2803
        %2805 = vrot.lane.b32.xlu0 %v2701, 8
        %v2806 = vpop.permute.xlu0 %2805
        %2807 = vrot.lane.b32.xlu0 %v2703, 8
        %v2808 = vpop.permute.xlu0 %2807
        %2809 = vrot.lane.b32.xlu0 %v2706, 8
        %v2810 = vpop.permute.xlu0 %2809
        %2811 = vrot.lane.b32.xlu0 %v2708, 8
        %v2812 = vpop.permute.xlu0 %2811
        %2813 = vrot.lane.b32.xlu0 %v2711, 8
        %v2814 = vpop.permute.xlu0 %2813
        %2815 = vrot.lane.b32.xlu0 %v2713, 8
        %v2816 = vpop.permute.xlu0 %2815
        %2817 = vrot.lane.b32.xlu0 %v2716, 8
        %v2818 = vpop.permute.xlu0 %2817
        %2819 = vrot.lane.b32.xlu0 %v2718, 8
        %v2820 = vpop.permute.xlu0 %2819
        %2821 = vrot.lane.b32.xlu0 %v2721, 8
        %v2822 = vpop.permute.xlu0 %2821
        %2823 = vrot.lane.b32.xlu0 %v2723, 8
        %v2824 = vpop.permute.xlu0 %2823
        %2825 = vrot.lane.b32.xlu0 %v2726, 8
        %v2826 = vpop.permute.xlu0 %2825
        %2827 = vrot.lane.b32.xlu0 %v2728, 8
        %v2828 = vpop.permute.xlu0 %2827
        %2829 = vrot.lane.b32.xlu0 %v2731, 8
        %v2830 = vpop.permute.xlu0 %2829
        %2831 = vrot.lane.b32.xlu0 %v2733, 8
        %v2832 = vpop.permute.xlu0 %2831
        %2833 = vrot.lane.b32.xlu0 %v2736, 8
        %v2834 = vpop.permute.xlu0 %2833
        %2835 = vrot.lane.b32.xlu0 %v2738, 8
        %v2836 = vpop.permute.xlu0 %2835
        %2837 = vrot.lane.b32.xlu0 %v2741, 8
        %v2838 = vpop.permute.xlu0 %2837
        %2839 = vrot.lane.b32.xlu0 %v2743, 8
        %v2840 = vpop.permute.xlu0 %2839
        %2841 = vrot.lane.b32.xlu0 %v2746, 8
        %v2842 = vpop.permute.xlu0 %2841
        %2843 = vrot.lane.b32.xlu0 %v2748, 8
        %v2844 = vpop.permute.xlu0 %2843
        %vm2893 = vcmask 1044480
        %v2894 = vrot.slane %v278, 3
        %v2895 = vrot.slane %v279, 3
        %v2896 = vsel %vm2893, %v2894, %v2895
        %v2897 = vrot.slane %v280, 3
        %v2898 = vsel %vm2893, %v2895, %v2897
        %v2899 = vrot.slane %v281, 3
        %v2900 = vrot.slane %v282, 3
        %v2901 = vsel %vm2893, %v2899, %v2900
        %v2902 = vrot.slane %v283, 3
        %v2903 = vsel %vm2893, %v2900, %v2902
        %v2904 = vrot.slane %v284, 3
        %v2905 = vrot.slane %v285, 3
        %v2906 = vsel %vm2893, %v2904, %v2905
        %v2907 = vrot.slane %v286, 3
        %v2908 = vsel %vm2893, %v2905, %v2907
        %v2909 = vrot.slane %v287, 3
        %v2910 = vrot.slane %v288, 3
        %v2911 = vsel %vm2893, %v2909, %v2910
        %v2912 = vrot.slane %v289, 3
        %v2913 = vsel %vm2893, %v2910, %v2912
        %v2914 = vrot.slane %v290, 3
        %v2915 = vrot.slane %v291, 3
        %v2916 = vsel %vm2893, %v2914, %v2915
        %v2917 = vrot.slane %v292, 3
        %v2918 = vsel %vm2893, %v2915, %v2917
        %v2919 = vrot.slane %v293, 3
        %v2920 = vrot.slane %v294, 3
        %v2921 = vsel %vm2893, %v2919, %v2920
        %v2922 = vrot.slane %v295, 3
        %v2923 = vsel %vm2893, %v2920, %v2922
        %v2924 = vrot.slane %v296, 3
        %v2925 = vrot.slane %v297, 3
        %v2926 = vsel %vm2893, %v2924, %v2925
        %v2927 = vrot.slane %v298, 3
        %v2928 = vsel %vm2893, %v2925, %v2927
        %v2929 = vrot.slane %v299, 3
        %v2930 = vrot.slane %v300, 3
        %v2931 = vsel %vm2893, %v2929, %v2930
        %v2932 = vrot.slane %v301, 3
        %v2933 = vsel %vm2893, %v2930, %v2932
        %v2934 = vrot.slane %v302, 3
        %v2935 = vrot.slane %v303, 3
        %v2936 = vsel %vm2893, %v2934, %v2935
        %v2937 = vrot.slane %v304, 3
        %v2938 = vsel %vm2893, %v2935, %v2937
        %v2939 = vrot.slane %v305, 3
        %v2940 = vrot.slane %v306, 3
        %v2941 = vsel %vm2893, %v2939, %v2940
        %v2942 = vrot.slane %v307, 3
        %v2943 = vsel %vm2893, %v2940, %v2942
        %v2944 = vrot.slane %v308, 3
        %v2945 = vrot.slane %v309, 3
        %v2946 = vsel %vm2893, %v2944, %v2945
        %v2947 = vrot.slane %v310, 3
        %v2948 = vsel %vm2893, %v2945, %v2947
        %v2949 = vrot.slane %v311, 3
        %v2950 = vrot.slane %v312, 3
        %v2951 = vsel %vm2893, %v2949, %v2950
        %v2952 = vrot.slane %v313, 3
        %v2953 = vsel %vm2893, %v2950, %v2952
        %v2954 = vrot.slane %v314, 3
        %v2955 = vrot.slane %v315, 3
        %v2956 = vsel %vm2893, %v2954, %v2955
        %v2957 = vrot.slane %v316, 3
        %v2958 = vsel %vm2893, %v2955, %v2957
        %v2959 = vrot.slane %v317, 3
        %v2960 = vrot.slane %v318, 3
        %v2961 = vsel %vm2893, %v2959, %v2960
        %v2962 = vrot.slane %v319, 3
        %v2963 = vsel %vm2893, %v2960, %v2962
        %v2964 = vrot.slane %v320, 3
        %v2965 = vrot.slane %v321, 3
        %v2966 = vsel %vm2893, %v2964, %v2965
        %v2967 = vrot.slane %v322, 3
        %v2968 = vsel %vm2893, %v2965, %v2967
        %v2969 = vrot.slane %v323, 3
        %v2970 = vrot.slane %v324, 3
        %v2971 = vsel %vm2893, %v2969, %v2970
        %v2972 = vrot.slane %v325, 3
        %v2973 = vsel %vm2893, %v2970, %v2972
        %v2974 = vrot.slane %v326, 3
        %v2975 = vrot.slane %v327, 3
        %v2976 = vsel %vm2893, %v2974, %v2975
        %v2977 = vrot.slane %v328, 3
        %v2978 = vsel %vm2893, %v2975, %v2977
        %v2979 = vrot.slane %v329, 3
        %v2980 = vrot.slane %v330, 3
        %v2981 = vsel %vm2893, %v2979, %v2980
        %v2982 = vrot.slane %v331, 3
        %v2983 = vsel %vm2893, %v2980, %v2982
        %v2984 = vrot.slane %v332, 3
        %v2985 = vrot.slane %v333, 3
        %v2986 = vsel %vm2893, %v2984, %v2985
        %v2987 = vrot.slane %v334, 3
        %v2988 = vsel %vm2893, %v2985, %v2987
        %v2989 = vrot.slane %v335, 3
        %v2990 = vrot.slane %v336, 3
        %v2991 = vsel %vm2893, %v2989, %v2990
        %v2992 = vrot.slane %v337, 3
        %v2993 = vsel %vm2893, %v2990, %v2992
        %v2994 = vrot.slane %v338, 3
        %v2995 = vrot.slane %v339, 3
        %v2996 = vsel %vm2893, %v2994, %v2995
        %v2997 = vrot.slane %v340, 3
        %v2998 = vsel %vm2893, %v2995, %v2997
        %v2999 = vrot.slane %v341, 3
        %v3000 = vrot.slane %v342, 3
        %v3001 = vsel %vm2893, %v2999, %v3000
        %v3002 = vrot.slane %v343, 3
        %v3003 = vsel %vm2893, %v3000, %v3002
        %v3004 = vrot.slane %v344, 3
        %v3005 = vrot.slane %v345, 3
        %v3006 = vsel %vm2893, %v3004, %v3005
        %v3007 = vrot.slane %v346, 3
        %v3008 = vsel %vm2893, %v3005, %v3007
        %v3009 = vrot.slane %v347, 3
        %v3010 = vrot.slane %v348, 3
        %v3011 = vsel %vm2893, %v3009, %v3010
        %v3012 = vrot.slane %v349, 3
        %v3013 = vsel %vm2893, %v3010, %v3012
        %3014 = vrot.lane.b32.xlu0 %v2896, 12
        %v3015 = vpop.permute.xlu0 %3014
        %3016 = vrot.lane.b32.xlu0 %v2898, 12
        %v3017 = vpop.permute.xlu0 %3016
        %3018 = vrot.lane.b32.xlu0 %v2901, 12
        %v3019 = vpop.permute.xlu0 %3018
        %3020 = vrot.lane.b32.xlu0 %v2903, 12
        %v3021 = vpop.permute.xlu0 %3020
        %3022 = vrot.lane.b32.xlu0 %v2906, 12
        %v3023 = vpop.permute.xlu0 %3022
        %3024 = vrot.lane.b32.xlu0 %v2908, 12
        %v3025 = vpop.permute.xlu0 %3024
        %3026 = vrot.lane.b32.xlu0 %v2911, 12
        %v3027 = vpop.permute.xlu0 %3026
        %3028 = vrot.lane.b32.xlu0 %v2913, 12
        %v3029 = vpop.permute.xlu0 %3028
        %3030 = vrot.lane.b32.xlu0 %v2916, 12
        %v3031 = vpop.permute.xlu0 %3030
        %3032 = vrot.lane.b32.xlu0 %v2918, 12
        %v3033 = vpop.permute.xlu0 %3032
        %3034 = vrot.lane.b32.xlu0 %v2921, 12
        %v3035 = vpop.permute.xlu0 %3034
        %3036 = vrot.lane.b32.xlu0 %v2923, 12
        %v3037 = vpop.permute.xlu0 %3036
        %3038 = vrot.lane.b32.xlu0 %v2926, 12
        %v3039 = vpop.permute.xlu0 %3038
        %3040 = vrot.lane.b32.xlu0 %v2928, 12
        %v3041 = vpop.permute.xlu0 %3040
        %3042 = vrot.lane.b32.xlu0 %v2931, 12
        %v3043 = vpop.permute.xlu0 %3042
        %3044 = vrot.lane.b32.xlu0 %v2933, 12
        %v3045 = vpop.permute.xlu0 %3044
        %3046 = vrot.lane.b32.xlu0 %v2936, 12
        %v3047 = vpop.permute.xlu0 %3046
        %3048 = vrot.lane.b32.xlu0 %v2938, 12
        %v3049 = vpop.permute.xlu0 %3048
        %3050 = vrot.lane.b32.xlu0 %v2941, 12
        %v3051 = vpop.permute.xlu0 %3050
        %3052 = vrot.lane.b32.xlu0 %v2943, 12
        %v3053 = vpop.permute.xlu0 %3052
        %3054 = vrot.lane.b32.xlu0 %v2946, 12
        %v3055 = vpop.permute.xlu0 %3054
        %3056 = vrot.lane.b32.xlu0 %v2948, 12
        %v3057 = vpop.permute.xlu0 %3056
        %3058 = vrot.lane.b32.xlu0 %v2951, 12
        %v3059 = vpop.permute.xlu0 %3058
        %3060 = vrot.lane.b32.xlu0 %v2953, 12
        %v3061 = vpop.permute.xlu0 %3060
        %3062 = vrot.lane.b32.xlu0 %v2956, 12
        %v3063 = vpop.permute.xlu0 %3062
        %3064 = vrot.lane.b32.xlu0 %v2958, 12
        %v3065 = vpop.permute.xlu0 %3064
        %3066 = vrot.lane.b32.xlu0 %v2961, 12
        %v3067 = vpop.permute.xlu0 %3066
        %3068 = vrot.lane.b32.xlu0 %v2963, 12
        %v3069 = vpop.permute.xlu0 %3068
        %3070 = vrot.lane.b32.xlu0 %v2966, 12
        %v3071 = vpop.permute.xlu0 %3070
        %3072 = vrot.lane.b32.xlu0 %v2968, 12
        %v3073 = vpop.permute.xlu0 %3072
        %3074 = vrot.lane.b32.xlu0 %v2971, 12
        %v3075 = vpop.permute.xlu0 %3074
        %3076 = vrot.lane.b32.xlu0 %v2973, 12
        %v3077 = vpop.permute.xlu0 %3076
        %3078 = vrot.lane.b32.xlu0 %v2976, 12
        %v3079 = vpop.permute.xlu0 %3078
        %3080 = vrot.lane.b32.xlu0 %v2978, 12
        %v3081 = vpop.permute.xlu0 %3080
        %3082 = vrot.lane.b32.xlu0 %v2981, 12
        %v3083 = vpop.permute.xlu0 %3082
        %3084 = vrot.lane.b32.xlu0 %v2983, 12
        %v3085 = vpop.permute.xlu0 %3084
        %3086 = vrot.lane.b32.xlu0 %v2986, 12
        %v3087 = vpop.permute.xlu0 %3086
        %3088 = vrot.lane.b32.xlu0 %v2988, 12
        %v3089 = vpop.permute.xlu0 %3088
        %3090 = vrot.lane.b32.xlu0 %v2991, 12
        %v3091 = vpop.permute.xlu0 %3090
        %3092 = vrot.lane.b32.xlu0 %v2993, 12
        %v3093 = vpop.permute.xlu0 %3092
        %3094 = vrot.lane.b32.xlu0 %v2996, 12
        %v3095 = vpop.permute.xlu0 %3094
        %3096 = vrot.lane.b32.xlu0 %v2998, 12
        %v3097 = vpop.permute.xlu0 %3096
        %3098 = vrot.lane.b32.xlu0 %v3001, 12
        %v3099 = vpop.permute.xlu0 %3098
        %3100 = vrot.lane.b32.xlu0 %v3003, 12
        %v3101 = vpop.permute.xlu0 %3100
        %3102 = vrot.lane.b32.xlu0 %v3006, 12
        %v3103 = vpop.permute.xlu0 %3102
        %3104 = vrot.lane.b32.xlu0 %v3008, 12
        %v3105 = vpop.permute.xlu0 %3104
        %3106 = vrot.lane.b32.xlu0 %v3011, 12
        %v3107 = vpop.permute.xlu0 %3106
        %3108 = vrot.lane.b32.xlu0 %v3013, 12
        %v3109 = vpop.permute.xlu0 %3108
        %vm3158 = vcmask 1043456
        %v3159 = vrot.slane %v278, 4
        %v3160 = vrot.slane %v279, 4
        %v3161 = vsel %vm3158, %v3159, %v3160
        %v3162 = vrot.slane %v280, 4
        %v3163 = vsel %vm3158, %v3160, %v3162
        %v3164 = vrot.slane %v281, 4
        %v3165 = vrot.slane %v282, 4
        %v3166 = vsel %vm3158, %v3164, %v3165
        %v3167 = vrot.slane %v283, 4
        %v3168 = vsel %vm3158, %v3165, %v3167
        %v3169 = vrot.slane %v284, 4
        %v3170 = vrot.slane %v285, 4
        %v3171 = vsel %vm3158, %v3169, %v3170
        %v3172 = vrot.slane %v286, 4
        %v3173 = vsel %vm3158, %v3170, %v3172
        %v3174 = vrot.slane %v287, 4
        %v3175 = vrot.slane %v288, 4
        %v3176 = vsel %vm3158, %v3174, %v3175
        %v3177 = vrot.slane %v289, 4
        %v3178 = vsel %vm3158, %v3175, %v3177
        %v3179 = vrot.slane %v290, 4
        %v3180 = vrot.slane %v291, 4
        %v3181 = vsel %vm3158, %v3179, %v3180
        %v3182 = vrot.slane %v292, 4
        %v3183 = vsel %vm3158, %v3180, %v3182
        %v3184 = vrot.slane %v293, 4
        %v3185 = vrot.slane %v294, 4
        %v3186 = vsel %vm3158, %v3184, %v3185
        %v3187 = vrot.slane %v295, 4
        %v3188 = vsel %vm3158, %v3185, %v3187
        %v3189 = vrot.slane %v296, 4
        %v3190 = vrot.slane %v297, 4
        %v3191 = vsel %vm3158, %v3189, %v3190
        %v3192 = vrot.slane %v298, 4
        %v3193 = vsel %vm3158, %v3190, %v3192
        %v3194 = vrot.slane %v299, 4
        %v3195 = vrot.slane %v300, 4
        %v3196 = vsel %vm3158, %v3194, %v3195
        %v3197 = vrot.slane %v301, 4
        %v3198 = vsel %vm3158, %v3195, %v3197
        %v3199 = vrot.slane %v302, 4
        %v3200 = vrot.slane %v303, 4
        %v3201 = vsel %vm3158, %v3199, %v3200
        %v3202 = vrot.slane %v304, 4
        %v3203 = vsel %vm3158, %v3200, %v3202
        %v3204 = vrot.slane %v305, 4
        %v3205 = vrot.slane %v306, 4
        %v3206 = vsel %vm3158, %v3204, %v3205
        %v3207 = vrot.slane %v307, 4
        %v3208 = vsel %vm3158, %v3205, %v3207
        %v3209 = vrot.slane %v308, 4
        %v3210 = vrot.slane %v309, 4
        %v3211 = vsel %vm3158, %v3209, %v3210
        %v3212 = vrot.slane %v310, 4
        %v3213 = vsel %vm3158, %v3210, %v3212
        %v3214 = vrot.slane %v311, 4
        %v3215 = vrot.slane %v312, 4
        %v3216 = vsel %vm3158, %v3214, %v3215
        %v3217 = vrot.slane %v313, 4
        %v3218 = vsel %vm3158, %v3215, %v3217
        %v3219 = vrot.slane %v314, 4
        %v3220 = vrot.slane %v315, 4
        %v3221 = vsel %vm3158, %v3219, %v3220
        %v3222 = vrot.slane %v316, 4
        %v3223 = vsel %vm3158, %v3220, %v3222
        %v3224 = vrot.slane %v317, 4
        %v3225 = vrot.slane %v318, 4
        %v3226 = vsel %vm3158, %v3224, %v3225
        %v3227 = vrot.slane %v319, 4
        %v3228 = vsel %vm3158, %v3225, %v3227
        %v3229 = vrot.slane %v320, 4
        %v3230 = vrot.slane %v321, 4
        %v3231 = vsel %vm3158, %v3229, %v3230
        %v3232 = vrot.slane %v322, 4
        %v3233 = vsel %vm3158, %v3230, %v3232
        %v3234 = vrot.slane %v323, 4
        %v3235 = vrot.slane %v324, 4
        %v3236 = vsel %vm3158, %v3234, %v3235
        %v3237 = vrot.slane %v325, 4
        %v3238 = vsel %vm3158, %v3235, %v3237
        %v3239 = vrot.slane %v326, 4
        %v3240 = vrot.slane %v327, 4
        %v3241 = vsel %vm3158, %v3239, %v3240
        %v3242 = vrot.slane %v328, 4
        %v3243 = vsel %vm3158, %v3240, %v3242
        %v3244 = vrot.slane %v329, 4
        %v3245 = vrot.slane %v330, 4
        %v3246 = vsel %vm3158, %v3244, %v3245
        %v3247 = vrot.slane %v331, 4
        %v3248 = vsel %vm3158, %v3245, %v3247
        %v3249 = vrot.slane %v332, 4
        %v3250 = vrot.slane %v333, 4
        %v3251 = vsel %vm3158, %v3249, %v3250
        %v3252 = vrot.slane %v334, 4
        %v3253 = vsel %vm3158, %v3250, %v3252
        %v3254 = vrot.slane %v335, 4
        %v3255 = vrot.slane %v336, 4
        %v3256 = vsel %vm3158, %v3254, %v3255
        %v3257 = vrot.slane %v337, 4
        %v3258 = vsel %vm3158, %v3255, %v3257
        %v3259 = vrot.slane %v338, 4
        %v3260 = vrot.slane %v339, 4
        %v3261 = vsel %vm3158, %v3259, %v3260
        %v3262 = vrot.slane %v340, 4
        %v3263 = vsel %vm3158, %v3260, %v3262
        %v3264 = vrot.slane %v341, 4
        %v3265 = vrot.slane %v342, 4
        %v3266 = vsel %vm3158, %v3264, %v3265
        %v3267 = vrot.slane %v343, 4
        %v3268 = vsel %vm3158, %v3265, %v3267
        %v3269 = vrot.slane %v344, 4
        %v3270 = vrot.slane %v345, 4
        %v3271 = vsel %vm3158, %v3269, %v3270
        %v3272 = vrot.slane %v346, 4
        %v3273 = vsel %vm3158, %v3270, %v3272
        %v3274 = vrot.slane %v347, 4
        %v3275 = vrot.slane %v348, 4
        %v3276 = vsel %vm3158, %v3274, %v3275
        %v3277 = vrot.slane %v349, 4
        %v3278 = vsel %vm3158, %v3275, %v3277
        %3279 = vrot.lane.b32.xlu0 %v3161, 16
        %v3280 = vpop.permute.xlu0 %3279
        %3281 = vrot.lane.b32.xlu0 %v3163, 16
        %v3282 = vpop.permute.xlu0 %3281
        %3283 = vrot.lane.b32.xlu0 %v3166, 16
        %v3284 = vpop.permute.xlu0 %3283
        %3285 = vrot.lane.b32.xlu0 %v3168, 16
        %v3286 = vpop.permute.xlu0 %3285
        %3287 = vrot.lane.b32.xlu0 %v3171, 16
        %v3288 = vpop.permute.xlu0 %3287
        %3289 = vrot.lane.b32.xlu0 %v3173, 16
        %v3290 = vpop.permute.xlu0 %3289
        %3291 = vrot.lane.b32.xlu0 %v3176, 16
        %v3292 = vpop.permute.xlu0 %3291
        %3293 = vrot.lane.b32.xlu0 %v3178, 16
        %v3294 = vpop.permute.xlu0 %3293
        %3295 = vrot.lane.b32.xlu0 %v3181, 16
        %v3296 = vpop.permute.xlu0 %3295
        %3297 = vrot.lane.b32.xlu0 %v3183, 16
        %v3298 = vpop.permute.xlu0 %3297
        %3299 = vrot.lane.b32.xlu0 %v3186, 16
        %v3300 = vpop.permute.xlu0 %3299
        %3301 = vrot.lane.b32.xlu0 %v3188, 16
        %v3302 = vpop.permute.xlu0 %3301
        %3303 = vrot.lane.b32.xlu0 %v3191, 16
        %v3304 = vpop.permute.xlu0 %3303
        %3305 = vrot.lane.b32.xlu0 %v3193, 16
        %v3306 = vpop.permute.xlu0 %3305
        %3307 = vrot.lane.b32.xlu0 %v3196, 16
        %v3308 = vpop.permute.xlu0 %3307
        %3309 = vrot.lane.b32.xlu0 %v3198, 16
        %v3310 = vpop.permute.xlu0 %3309
        %3311 = vrot.lane.b32.xlu0 %v3201, 16
        %v3312 = vpop.permute.xlu0 %3311
        %3313 = vrot.lane.b32.xlu0 %v3203, 16
        %v3314 = vpop.permute.xlu0 %3313
        %3315 = vrot.lane.b32.xlu0 %v3206, 16
        %v3316 = vpop.permute.xlu0 %3315
        %3317 = vrot.lane.b32.xlu0 %v3208, 16
        %v3318 = vpop.permute.xlu0 %3317
        %3319 = vrot.lane.b32.xlu0 %v3211, 16
        %v3320 = vpop.permute.xlu0 %3319
        %3321 = vrot.lane.b32.xlu0 %v3213, 16
        %v3322 = vpop.permute.xlu0 %3321
        %3323 = vrot.lane.b32.xlu0 %v3216, 16
        %v3324 = vpop.permute.xlu0 %3323
        %3325 = vrot.lane.b32.xlu0 %v3218, 16
        %v3326 = vpop.permute.xlu0 %3325
        %3327 = vrot.lane.b32.xlu0 %v3221, 16
        %v3328 = vpop.permute.xlu0 %3327
        %3329 = vrot.lane.b32.xlu0 %v3223, 16
        %v3330 = vpop.permute.xlu0 %3329
        %3331 = vrot.lane.b32.xlu0 %v3226, 16
        %v3332 = vpop.permute.xlu0 %3331
        %3333 = vrot.lane.b32.xlu0 %v3228, 16
        %v3334 = vpop.permute.xlu0 %3333
        %3335 = vrot.lane.b32.xlu0 %v3231, 16
        %v3336 = vpop.permute.xlu0 %3335
        %3337 = vrot.lane.b32.xlu0 %v3233, 16
        %v3338 = vpop.permute.xlu0 %3337
        %3339 = vrot.lane.b32.xlu0 %v3236, 16
        %v3340 = vpop.permute.xlu0 %3339
        %3341 = vrot.lane.b32.xlu0 %v3238, 16
        %v3342 = vpop.permute.xlu0 %3341
        %3343 = vrot.lane.b32.xlu0 %v3241, 16
        %v3344 = vpop.permute.xlu0 %3343
        %3345 = vrot.lane.b32.xlu0 %v3243, 16
        %v3346 = vpop.permute.xlu0 %3345
        %3347 = vrot.lane.b32.xlu0 %v3246, 16
        %v3348 = vpop.permute.xlu0 %3347
        %3349 = vrot.lane.b32.xlu0 %v3248, 16
        %v3350 = vpop.permute.xlu0 %3349
        %3351 = vrot.lane.b32.xlu0 %v3251, 16
        %v3352 = vpop.permute.xlu0 %3351
        %3353 = vrot.lane.b32.xlu0 %v3253, 16
        %v3354 = vpop.permute.xlu0 %3353
        %3355 = vrot.lane.b32.xlu0 %v3256, 16
        %v3356 = vpop.permute.xlu0 %3355
        %3357 = vrot.lane.b32.xlu0 %v3258, 16
        %v3358 = vpop.permute.xlu0 %3357
        %3359 = vrot.lane.b32.xlu0 %v3261, 16
        %v3360 = vpop.permute.xlu0 %3359
        %3361 = vrot.lane.b32.xlu0 %v3263, 16
        %v3362 = vpop.permute.xlu0 %3361
        %3363 = vrot.lane.b32.xlu0 %v3266, 16
        %v3364 = vpop.permute.xlu0 %3363
        %3365 = vrot.lane.b32.xlu0 %v3268, 16
        %v3366 = vpop.permute.xlu0 %3365
        %3367 = vrot.lane.b32.xlu0 %v3271, 16
        %v3368 = vpop.permute.xlu0 %3367
        %3369 = vrot.lane.b32.xlu0 %v3273, 16
        %v3370 = vpop.permute.xlu0 %3369
        %3371 = vrot.lane.b32.xlu0 %v3276, 16
        %v3372 = vpop.permute.xlu0 %3371
        %3373 = vrot.lane.b32.xlu0 %v3278, 16
        %v3374 = vpop.permute.xlu0 %3373
        %vm3423 = vcmask 1042432
        %v3424 = vrot.slane %v278, 5
        %v3425 = vrot.slane %v279, 5
        %v3426 = vsel %vm3423, %v3424, %v3425
        %v3427 = vrot.slane %v280, 5
        %v3428 = vsel %vm3423, %v3425, %v3427
        %v3429 = vrot.slane %v281, 5
        %v3430 = vrot.slane %v282, 5
        %v3431 = vsel %vm3423, %v3429, %v3430
        %v3432 = vrot.slane %v283, 5
        %v3433 = vsel %vm3423, %v3430, %v3432
        %v3434 = vrot.slane %v284, 5
        %v3435 = vrot.slane %v285, 5
        %v3436 = vsel %vm3423, %v3434, %v3435
        %v3437 = vrot.slane %v286, 5
        %v3438 = vsel %vm3423, %v3435, %v3437
        %v3439 = vrot.slane %v287, 5
        %v3440 = vrot.slane %v288, 5
        %v3441 = vsel %vm3423, %v3439, %v3440
        %v3442 = vrot.slane %v289, 5
        %v3443 = vsel %vm3423, %v3440, %v3442
        %v3444 = vrot.slane %v290, 5
        %v3445 = vrot.slane %v291, 5
        %v3446 = vsel %vm3423, %v3444, %v3445
        %v3447 = vrot.slane %v292, 5
        %v3448 = vsel %vm3423, %v3445, %v3447
        %v3449 = vrot.slane %v293, 5
        %v3450 = vrot.slane %v294, 5
        %v3451 = vsel %vm3423, %v3449, %v3450
        %v3452 = vrot.slane %v295, 5
        %v3453 = vsel %vm3423, %v3450, %v3452
        %v3454 = vrot.slane %v296, 5
        %v3455 = vrot.slane %v297, 5
        %v3456 = vsel %vm3423, %v3454, %v3455
        %v3457 = vrot.slane %v298, 5
        %v3458 = vsel %vm3423, %v3455, %v3457
        %v3459 = vrot.slane %v299, 5
        %v3460 = vrot.slane %v300, 5
        %v3461 = vsel %vm3423, %v3459, %v3460
        %v3462 = vrot.slane %v301, 5
        %v3463 = vsel %vm3423, %v3460, %v3462
        %v3464 = vrot.slane %v302, 5
        %v3465 = vrot.slane %v303, 5
        %v3466 = vsel %vm3423, %v3464, %v3465
        %v3467 = vrot.slane %v304, 5
        %v3468 = vsel %vm3423, %v3465, %v3467
        %v3469 = vrot.slane %v305, 5
        %v3470 = vrot.slane %v306, 5
        %v3471 = vsel %vm3423, %v3469, %v3470
        %v3472 = vrot.slane %v307, 5
        %v3473 = vsel %vm3423, %v3470, %v3472
        %v3474 = vrot.slane %v308, 5
        %v3475 = vrot.slane %v309, 5
        %v3476 = vsel %vm3423, %v3474, %v3475
        %v3477 = vrot.slane %v310, 5
        %v3478 = vsel %vm3423, %v3475, %v3477
        %v3479 = vrot.slane %v311, 5
        %v3480 = vrot.slane %v312, 5
        %v3481 = vsel %vm3423, %v3479, %v3480
        %v3482 = vrot.slane %v313, 5
        %v3483 = vsel %vm3423, %v3480, %v3482
        %v3484 = vrot.slane %v314, 5
        %v3485 = vrot.slane %v315, 5
        %v3486 = vsel %vm3423, %v3484, %v3485
        %v3487 = vrot.slane %v316, 5
        %v3488 = vsel %vm3423, %v3485, %v3487
        %v3489 = vrot.slane %v317, 5
        %v3490 = vrot.slane %v318, 5
        %v3491 = vsel %vm3423, %v3489, %v3490
        %v3492 = vrot.slane %v319, 5
        %v3493 = vsel %vm3423, %v3490, %v3492
        %v3494 = vrot.slane %v320, 5
        %v3495 = vrot.slane %v321, 5
        %v3496 = vsel %vm3423, %v3494, %v3495
        %v3497 = vrot.slane %v322, 5
        %v3498 = vsel %vm3423, %v3495, %v3497
        %v3499 = vrot.slane %v323, 5
        %v3500 = vrot.slane %v324, 5
        %v3501 = vsel %vm3423, %v3499, %v3500
        %v3502 = vrot.slane %v325, 5
        %v3503 = vsel %vm3423, %v3500, %v3502
        %v3504 = vrot.slane %v326, 5
        %v3505 = vrot.slane %v327, 5
        %v3506 = vsel %vm3423, %v3504, %v3505
        %v3507 = vrot.slane %v328, 5
        %v3508 = vsel %vm3423, %v3505, %v3507
        %v3509 = vrot.slane %v329, 5
        %v3510 = vrot.slane %v330, 5
        %v3511 = vsel %vm3423, %v3509, %v3510
        %v3512 = vrot.slane %v331, 5
        %v3513 = vsel %vm3423, %v3510, %v3512
        %v3514 = vrot.slane %v332, 5
        %v3515 = vrot.slane %v333, 5
        %v3516 = vsel %vm3423, %v3514, %v3515
        %v3517 = vrot.slane %v334, 5
        %v3518 = vsel %vm3423, %v3515, %v3517
        %v3519 = vrot.slane %v335, 5
        %v3520 = vrot.slane %v336, 5
        %v3521 = vsel %vm3423, %v3519, %v3520
        %v3522 = vrot.slane %v337, 5
        %v3523 = vsel %vm3423, %v3520, %v3522
        %v3524 = vrot.slane %v338, 5
        %v3525 = vrot.slane %v339, 5
        %v3526 = vsel %vm3423, %v3524, %v3525
        %v3527 = vrot.slane %v340, 5
        %v3528 = vsel %vm3423, %v3525, %v3527
        %v3529 = vrot.slane %v341, 5
        %v3530 = vrot.slane %v342, 5
        %v3531 = vsel %vm3423, %v3529, %v3530
        %v3532 = vrot.slane %v343, 5
        %v3533 = vsel %vm3423, %v3530, %v3532
        %v3534 = vrot.slane %v344, 5
        %v3535 = vrot.slane %v345, 5
        %v3536 = vsel %vm3423, %v3534, %v3535
        %v3537 = vrot.slane %v346, 5
        %v3538 = vsel %vm3423, %v3535, %v3537
        %v3539 = vrot.slane %v347, 5
        %v3540 = vrot.slane %v348, 5
        %v3541 = vsel %vm3423, %v3539, %v3540
        %v3542 = vrot.slane %v349, 5
        %v3543 = vsel %vm3423, %v3540, %v3542
        %3544 = vrot.lane.b32.xlu0 %v3426, 20
        %v3545 = vpop.permute.xlu0 %3544
        %3546 = vrot.lane.b32.xlu0 %v3428, 20
        %v3547 = vpop.permute.xlu0 %3546
        %3548 = vrot.lane.b32.xlu0 %v3431, 20
        %v3549 = vpop.permute.xlu0 %3548
        %3550 = vrot.lane.b32.xlu0 %v3433, 20
        %v3551 = vpop.permute.xlu0 %3550
        %3552 = vrot.lane.b32.xlu0 %v3436, 20
        %v3553 = vpop.permute.xlu0 %3552
        %3554 = vrot.lane.b32.xlu0 %v3438, 20
        %v3555 = vpop.permute.xlu0 %3554
        %3556 = vrot.lane.b32.xlu0 %v3441, 20
        %v3557 = vpop.permute.xlu0 %3556
        %3558 = vrot.lane.b32.xlu0 %v3443, 20
        %v3559 = vpop.permute.xlu0 %3558
        %3560 = vrot.lane.b32.xlu0 %v3446, 20
        %v3561 = vpop.permute.xlu0 %3560
        %3562 = vrot.lane.b32.xlu0 %v3448, 20
        %v3563 = vpop.permute.xlu0 %3562
        %3564 = vrot.lane.b32.xlu0 %v3451, 20
        %v3565 = vpop.permute.xlu0 %3564
        %3566 = vrot.lane.b32.xlu0 %v3453, 20
        %v3567 = vpop.permute.xlu0 %3566
        %3568 = vrot.lane.b32.xlu0 %v3456, 20
        %v3569 = vpop.permute.xlu0 %3568
        %3570 = vrot.lane.b32.xlu0 %v3458, 20
        %v3571 = vpop.permute.xlu0 %3570
        %3572 = vrot.lane.b32.xlu0 %v3461, 20
        %v3573 = vpop.permute.xlu0 %3572
        %3574 = vrot.lane.b32.xlu0 %v3463, 20
        %v3575 = vpop.permute.xlu0 %3574
        %3576 = vrot.lane.b32.xlu0 %v3466, 20
        %v3577 = vpop.permute.xlu0 %3576
        %3578 = vrot.lane.b32.xlu0 %v3468, 20
        %v3579 = vpop.permute.xlu0 %3578
        %3580 = vrot.lane.b32.xlu0 %v3471, 20
        %v3581 = vpop.permute.xlu0 %3580
        %3582 = vrot.lane.b32.xlu0 %v3473, 20
        %v3583 = vpop.permute.xlu0 %3582
        %3584 = vrot.lane.b32.xlu0 %v3476, 20
        %v3585 = vpop.permute.xlu0 %3584
        %3586 = vrot.lane.b32.xlu0 %v3478, 20
        %v3587 = vpop.permute.xlu0 %3586
        %3588 = vrot.lane.b32.xlu0 %v3481, 20
        %v3589 = vpop.permute.xlu0 %3588
        %3590 = vrot.lane.b32.xlu0 %v3483, 20
        %v3591 = vpop.permute.xlu0 %3590
        %3592 = vrot.lane.b32.xlu0 %v3486, 20
        %v3593 = vpop.permute.xlu0 %3592
        %3594 = vrot.lane.b32.xlu0 %v3488, 20
        %v3595 = vpop.permute.xlu0 %3594
        %3596 = vrot.lane.b32.xlu0 %v3491, 20
        %v3597 = vpop.permute.xlu0 %3596
        %3598 = vrot.lane.b32.xlu0 %v3493, 20
        %v3599 = vpop.permute.xlu0 %3598
        %3600 = vrot.lane.b32.xlu0 %v3496, 20
        %v3601 = vpop.permute.xlu0 %3600
        %3602 = vrot.lane.b32.xlu0 %v3498, 20
        %v3603 = vpop.permute.xlu0 %3602
        %3604 = vrot.lane.b32.xlu0 %v3501, 20
        %v3605 = vpop.permute.xlu0 %3604
        %3606 = vrot.lane.b32.xlu0 %v3503, 20
        %v3607 = vpop.permute.xlu0 %3606
        %3608 = vrot.lane.b32.xlu0 %v3506, 20
        %v3609 = vpop.permute.xlu0 %3608
        %3610 = vrot.lane.b32.xlu0 %v3508, 20
        %v3611 = vpop.permute.xlu0 %3610
        %3612 = vrot.lane.b32.xlu0 %v3511, 20
        %v3613 = vpop.permute.xlu0 %3612
        %3614 = vrot.lane.b32.xlu0 %v3513, 20
        %v3615 = vpop.permute.xlu0 %3614
        %3616 = vrot.lane.b32.xlu0 %v3516, 20
        %v3617 = vpop.permute.xlu0 %3616
        %3618 = vrot.lane.b32.xlu0 %v3518, 20
        %v3619 = vpop.permute.xlu0 %3618
        %3620 = vrot.lane.b32.xlu0 %v3521, 20
        %v3621 = vpop.permute.xlu0 %3620
        %3622 = vrot.lane.b32.xlu0 %v3523, 20
        %v3623 = vpop.permute.xlu0 %3622
        %3624 = vrot.lane.b32.xlu0 %v3526, 20
        %v3625 = vpop.permute.xlu0 %3624
        %3626 = vrot.lane.b32.xlu0 %v3528, 20
        %v3627 = vpop.permute.xlu0 %3626
        %3628 = vrot.lane.b32.xlu0 %v3531, 20
        %v3629 = vpop.permute.xlu0 %3628
        %3630 = vrot.lane.b32.xlu0 %v3533, 20
        %v3631 = vpop.permute.xlu0 %3630
        %3632 = vrot.lane.b32.xlu0 %v3536, 20
        %v3633 = vpop.permute.xlu0 %3632
        %3634 = vrot.lane.b32.xlu0 %v3538, 20
        %v3635 = vpop.permute.xlu0 %3634
        %3636 = vrot.lane.b32.xlu0 %v3541, 20
        %v3637 = vpop.permute.xlu0 %3636
        %3638 = vrot.lane.b32.xlu0 %v3543, 20
        %v3639 = vpop.permute.xlu0 %3638
        %v3688 = vrot.slane %v278, 6
        %v3689 = vrot.slane %v279, 6
        %v3690 = vsel %vm2080, %v3688, %v3689
        %v3691 = vrot.slane %v280, 6
        %v3692 = vsel %vm2080, %v3689, %v3691
        %v3693 = vrot.slane %v281, 6
        %v3694 = vrot.slane %v282, 6
        %v3695 = vsel %vm2080, %v3693, %v3694
        %v3696 = vrot.slane %v283, 6
        %v3697 = vsel %vm2080, %v3694, %v3696
        %v3698 = vrot.slane %v284, 6
        %v3699 = vrot.slane %v285, 6
        %v3700 = vsel %vm2080, %v3698, %v3699
        %v3701 = vrot.slane %v286, 6
        %v3702 = vsel %vm2080, %v3699, %v3701
        %v3703 = vrot.slane %v287, 6
        %v3704 = vrot.slane %v288, 6
        %v3705 = vsel %vm2080, %v3703, %v3704
        %v3706 = vrot.slane %v289, 6
        %v3707 = vsel %vm2080, %v3704, %v3706
        %v3708 = vrot.slane %v290, 6
        %v3709 = vrot.slane %v291, 6
        %v3710 = vsel %vm2080, %v3708, %v3709
        %v3711 = vrot.slane %v292, 6
        %v3712 = vsel %vm2080, %v3709, %v3711
        %v3713 = vrot.slane %v293, 6
        %v3714 = vrot.slane %v294, 6
        %v3715 = vsel %vm2080, %v3713, %v3714
        %v3716 = vrot.slane %v295, 6
        %v3717 = vsel %vm2080, %v3714, %v3716
        %v3718 = vrot.slane %v296, 6
        %v3719 = vrot.slane %v297, 6
        %v3720 = vsel %vm2080, %v3718, %v3719
        %v3721 = vrot.slane %v298, 6
        %v3722 = vsel %vm2080, %v3719, %v3721
        %v3723 = vrot.slane %v299, 6
        %v3724 = vrot.slane %v300, 6
        %v3725 = vsel %vm2080, %v3723, %v3724
        %v3726 = vrot.slane %v301, 6
        %v3727 = vsel %vm2080, %v3724, %v3726
        %v3728 = vrot.slane %v302, 6
        %v3729 = vrot.slane %v303, 6
        %v3730 = vsel %vm2080, %v3728, %v3729
        %v3731 = vrot.slane %v304, 6
        %v3732 = vsel %vm2080, %v3729, %v3731
        %v3733 = vrot.slane %v305, 6
        %v3734 = vrot.slane %v306, 6
        %v3735 = vsel %vm2080, %v3733, %v3734
        %v3736 = vrot.slane %v307, 6
        %v3737 = vsel %vm2080, %v3734, %v3736
        %v3738 = vrot.slane %v308, 6
        %v3739 = vrot.slane %v309, 6
        %v3740 = vsel %vm2080, %v3738, %v3739
        %v3741 = vrot.slane %v310, 6
        %v3742 = vsel %vm2080, %v3739, %v3741
        %v3743 = vrot.slane %v311, 6
        %v3744 = vrot.slane %v312, 6
        %v3745 = vsel %vm2080, %v3743, %v3744
        %v3746 = vrot.slane %v313, 6
        %v3747 = vsel %vm2080, %v3744, %v3746
        %v3748 = vrot.slane %v314, 6
        %v3749 = vrot.slane %v315, 6
        %v3750 = vsel %vm2080, %v3748, %v3749
        %v3751 = vrot.slane %v316, 6
        %v3752 = vsel %vm2080, %v3749, %v3751
        %v3753 = vrot.slane %v317, 6
        %v3754 = vrot.slane %v318, 6
        %v3755 = vsel %vm2080, %v3753, %v3754
        %v3756 = vrot.slane %v319, 6
        %v3757 = vsel %vm2080, %v3754, %v3756
        %v3758 = vrot.slane %v320, 6
        %v3759 = vrot.slane %v321, 6
        %v3760 = vsel %vm2080, %v3758, %v3759
        %v3761 = vrot.slane %v322, 6
        %v3762 = vsel %vm2080, %v3759, %v3761
        %v3763 = vrot.slane %v323, 6
        %v3764 = vrot.slane %v324, 6
        %v3765 = vsel %vm2080, %v3763, %v3764
        %v3766 = vrot.slane %v325, 6
        %v3767 = vsel %vm2080, %v3764, %v3766
        %v3768 = vrot.slane %v326, 6
        %v3769 = vrot.slane %v327, 6
        %v3770 = vsel %vm2080, %v3768, %v3769
        %v3771 = vrot.slane %v328, 6
        %v3772 = vsel %vm2080, %v3769, %v3771
        %v3773 = vrot.slane %v329, 6
        %v3774 = vrot.slane %v330, 6
        %v3775 = vsel %vm2080, %v3773, %v3774
        %v3776 = vrot.slane %v331, 6
        %v3777 = vsel %vm2080, %v3774, %v3776
        %v3778 = vrot.slane %v332, 6
        %v3779 = vrot.slane %v333, 6
        %v3780 = vsel %vm2080, %v3778, %v3779
        %v3781 = vrot.slane %v334, 6
        %v3782 = vsel %vm2080, %v3779, %v3781
        %v3783 = vrot.slane %v335, 6
        %v3784 = vrot.slane %v336, 6
        %v3785 = vsel %vm2080, %v3783, %v3784
        %v3786 = vrot.slane %v337, 6
        %v3787 = vsel %vm2080, %v3784, %v3786
        %v3788 = vrot.slane %v338, 6
        %v3789 = vrot.slane %v339, 6
        %v3790 = vsel %vm2080, %v3788, %v3789
        %v3791 = vrot.slane %v340, 6
        %v3792 = vsel %vm2080, %v3789, %v3791
        %v3793 = vrot.slane %v341, 6
        %v3794 = vrot.slane %v342, 6
        %v3795 = vsel %vm2080, %v3793, %v3794
        %v3796 = vrot.slane %v343, 6
        %v3797 = vsel %vm2080, %v3794, %v3796
        %v3798 = vrot.slane %v344, 6
        %v3799 = vrot.slane %v345, 6
        %v3800 = vsel %vm2080, %v3798, %v3799
        %v3801 = vrot.slane %v346, 6
        %v3802 = vsel %vm2080, %v3799, %v3801
        %v3803 = vrot.slane %v347, 6
        %v3804 = vrot.slane %v348, 6
        %v3805 = vsel %vm2080, %v3803, %v3804
        %v3806 = vrot.slane %v349, 6
        %v3807 = vsel %vm2080, %v3804, %v3806
        %3808 = vrot.lane.b32.xlu0 %v3690, 24
        %v3809 = vpop.permute.xlu0 %3808
        %3810 = vrot.lane.b32.xlu0 %v3692, 24
        %v3811 = vpop.permute.xlu0 %3810
        %3812 = vrot.lane.b32.xlu0 %v3695, 24
        %v3813 = vpop.permute.xlu0 %3812
        %3814 = vrot.lane.b32.xlu0 %v3697, 24
        %v3815 = vpop.permute.xlu0 %3814
        %3816 = vrot.lane.b32.xlu0 %v3700, 24
        %v3817 = vpop.permute.xlu0 %3816
        %3818 = vrot.lane.b32.xlu0 %v3702, 24
        %v3819 = vpop.permute.xlu0 %3818
        %3820 = vrot.lane.b32.xlu0 %v3705, 24
        %v3821 = vpop.permute.xlu0 %3820
        %3822 = vrot.lane.b32.xlu0 %v3707, 24
        %v3823 = vpop.permute.xlu0 %3822
        %3824 = vrot.lane.b32.xlu0 %v3710, 24
        %v3825 = vpop.permute.xlu0 %3824
        %3826 = vrot.lane.b32.xlu0 %v3712, 24
        %v3827 = vpop.permute.xlu0 %3826
        %3828 = vrot.lane.b32.xlu0 %v3715, 24
        %v3829 = vpop.permute.xlu0 %3828
        %3830 = vrot.lane.b32.xlu0 %v3717, 24
        %v3831 = vpop.permute.xlu0 %3830
        %3832 = vrot.lane.b32.xlu0 %v3720, 24
        %v3833 = vpop.permute.xlu0 %3832
        %3834 = vrot.lane.b32.xlu0 %v3722, 24
        %v3835 = vpop.permute.xlu0 %3834
        %3836 = vrot.lane.b32.xlu0 %v3725, 24
        %v3837 = vpop.permute.xlu0 %3836
        %3838 = vrot.lane.b32.xlu0 %v3727, 24
        %v3839 = vpop.permute.xlu0 %3838
        %3840 = vrot.lane.b32.xlu0 %v3730, 24
        %v3841 = vpop.permute.xlu0 %3840
        %3842 = vrot.lane.b32.xlu0 %v3732, 24
        %v3843 = vpop.permute.xlu0 %3842
        %3844 = vrot.lane.b32.xlu0 %v3735, 24
        %v3845 = vpop.permute.xlu0 %3844
        %3846 = vrot.lane.b32.xlu0 %v3737, 24
        %v3847 = vpop.permute.xlu0 %3846
        %3848 = vrot.lane.b32.xlu0 %v3740, 24
        %v3849 = vpop.permute.xlu0 %3848
        %3850 = vrot.lane.b32.xlu0 %v3742, 24
        %v3851 = vpop.permute.xlu0 %3850
        %3852 = vrot.lane.b32.xlu0 %v3745, 24
        %v3853 = vpop.permute.xlu0 %3852
        %3854 = vrot.lane.b32.xlu0 %v3747, 24
        %v3855 = vpop.permute.xlu0 %3854
        %3856 = vrot.lane.b32.xlu0 %v3750, 24
        %v3857 = vpop.permute.xlu0 %3856
        %3858 = vrot.lane.b32.xlu0 %v3752, 24
        %v3859 = vpop.permute.xlu0 %3858
        %3860 = vrot.lane.b32.xlu0 %v3755, 24
        %v3861 = vpop.permute.xlu0 %3860
        %3862 = vrot.lane.b32.xlu0 %v3757, 24
        %v3863 = vpop.permute.xlu0 %3862
        %3864 = vrot.lane.b32.xlu0 %v3760, 24
        %v3865 = vpop.permute.xlu0 %3864
        %3866 = vrot.lane.b32.xlu0 %v3762, 24
        %v3867 = vpop.permute.xlu0 %3866
        %3868 = vrot.lane.b32.xlu0 %v3765, 24
        %v3869 = vpop.permute.xlu0 %3868
        %3870 = vrot.lane.b32.xlu0 %v3767, 24
        %v3871 = vpop.permute.xlu0 %3870
        %3872 = vrot.lane.b32.xlu0 %v3770, 24
        %v3873 = vpop.permute.xlu0 %3872
        %3874 = vrot.lane.b32.xlu0 %v3772, 24
        %v3875 = vpop.permute.xlu0 %3874
        %3876 = vrot.lane.b32.xlu0 %v3775, 24
        %v3877 = vpop.permute.xlu0 %3876
        %3878 = vrot.lane.b32.xlu0 %v3777, 24
        %v3879 = vpop.permute.xlu0 %3878
        %3880 = vrot.lane.b32.xlu0 %v3780, 24
        %v3881 = vpop.permute.xlu0 %3880
        %3882 = vrot.lane.b32.xlu0 %v3782, 24
        %v3883 = vpop.permute.xlu0 %3882
        %3884 = vrot.lane.b32.xlu0 %v3785, 24
        %v3885 = vpop.permute.xlu0 %3884
        %3886 = vrot.lane.b32.xlu0 %v3787, 24
        %v3887 = vpop.permute.xlu0 %3886
        %3888 = vrot.lane.b32.xlu0 %v3790, 24
        %v3889 = vpop.permute.xlu0 %3888
        %3890 = vrot.lane.b32.xlu0 %v3792, 24
        %v3891 = vpop.permute.xlu0 %3890
        %3892 = vrot.lane.b32.xlu0 %v3795, 24
        %v3893 = vpop.permute.xlu0 %3892
        %3894 = vrot.lane.b32.xlu0 %v3797, 24
        %v3895 = vpop.permute.xlu0 %3894
        %3896 = vrot.lane.b32.xlu0 %v3800, 24
        %v3897 = vpop.permute.xlu0 %3896
        %3898 = vrot.lane.b32.xlu0 %v3802, 24
        %v3899 = vpop.permute.xlu0 %3898
        %3900 = vrot.lane.b32.xlu0 %v3805, 24
        %v3901 = vpop.permute.xlu0 %3900
        %3902 = vrot.lane.b32.xlu0 %v3807, 24
        %v3903 = vpop.permute.xlu0 %3902
        %vm3952 = vcmask 1040384
        %v3953 = vrot.slane %v278, 7
        %v3954 = vrot.slane %v279, 7
        %v3955 = vsel %vm3952, %v3953, %v3954
        %v3956 = vrot.slane %v280, 7
        %v3957 = vsel %vm3952, %v3954, %v3956
        %v3958 = vrot.slane %v281, 7
        %v3959 = vrot.slane %v282, 7
        %v3960 = vsel %vm3952, %v3958, %v3959
        %v3961 = vrot.slane %v283, 7
        %v3962 = vsel %vm3952, %v3959, %v3961
        %v3963 = vrot.slane %v284, 7
        %v3964 = vrot.slane %v285, 7
        %v3965 = vsel %vm3952, %v3963, %v3964
        %v3966 = vrot.slane %v286, 7
        %v3967 = vsel %vm3952, %v3964, %v3966
        %v3968 = vrot.slane %v287, 7
        %v3969 = vrot.slane %v288, 7
        %v3970 = vsel %vm3952, %v3968, %v3969
        %v3971 = vrot.slane %v289, 7
        %v3972 = vsel %vm3952, %v3969, %v3971
        %v3973 = vrot.slane %v290, 7
        %v3974 = vrot.slane %v291, 7
        %v3975 = vsel %vm3952, %v3973, %v3974
        %v3976 = vrot.slane %v292, 7
        %v3977 = vsel %vm3952, %v3974, %v3976
        %v3978 = vrot.slane %v293, 7
        %v3979 = vrot.slane %v294, 7
        %v3980 = vsel %vm3952, %v3978, %v3979
        %v3981 = vrot.slane %v295, 7
        %v3982 = vsel %vm3952, %v3979, %v3981
        %v3983 = vrot.slane %v296, 7
        %v3984 = vrot.slane %v297, 7
        %v3985 = vsel %vm3952, %v3983, %v3984
        %v3986 = vrot.slane %v298, 7
        %v3987 = vsel %vm3952, %v3984, %v3986
        %v3988 = vrot.slane %v299, 7
        %v3989 = vrot.slane %v300, 7
        %v3990 = vsel %vm3952, %v3988, %v3989
        %v3991 = vrot.slane %v301, 7
        %v3992 = vsel %vm3952, %v3989, %v3991
        %v3993 = vrot.slane %v302, 7
        %v3994 = vrot.slane %v303, 7
        %v3995 = vsel %vm3952, %v3993, %v3994
        %v3996 = vrot.slane %v304, 7
        %v3997 = vsel %vm3952, %v3994, %v3996
        %v3998 = vrot.slane %v305, 7
        %v3999 = vrot.slane %v306, 7
        %v4000 = vsel %vm3952, %v3998, %v3999
        %v4001 = vrot.slane %v307, 7
        %v4002 = vsel %vm3952, %v3999, %v4001
        %v4003 = vrot.slane %v308, 7
        %v4004 = vrot.slane %v309, 7
        %v4005 = vsel %vm3952, %v4003, %v4004
        %v4006 = vrot.slane %v310, 7
        %v4007 = vsel %vm3952, %v4004, %v4006
        %v4008 = vrot.slane %v311, 7
        %v4009 = vrot.slane %v312, 7
        %v4010 = vsel %vm3952, %v4008, %v4009
        %v4011 = vrot.slane %v313, 7
        %v4012 = vsel %vm3952, %v4009, %v4011
        %v4013 = vrot.slane %v314, 7
        %v4014 = vrot.slane %v315, 7
        %v4015 = vsel %vm3952, %v4013, %v4014
        %v4016 = vrot.slane %v316, 7
        %v4017 = vsel %vm3952, %v4014, %v4016
        %v4018 = vrot.slane %v317, 7
        %v4019 = vrot.slane %v318, 7
        %v4020 = vsel %vm3952, %v4018, %v4019
        %v4021 = vrot.slane %v319, 7
        %v4022 = vsel %vm3952, %v4019, %v4021
        %v4023 = vrot.slane %v320, 7
        %v4024 = vrot.slane %v321, 7
        %v4025 = vsel %vm3952, %v4023, %v4024
        %v4026 = vrot.slane %v322, 7
        %v4027 = vsel %vm3952, %v4024, %v4026
        %v4028 = vrot.slane %v323, 7
        %v4029 = vrot.slane %v324, 7
        %v4030 = vsel %vm3952, %v4028, %v4029
        %v4031 = vrot.slane %v325, 7
        %v4032 = vsel %vm3952, %v4029, %v4031
        %v4033 = vrot.slane %v326, 7
        %v4034 = vrot.slane %v327, 7
        %v4035 = vsel %vm3952, %v4033, %v4034
        %v4036 = vrot.slane %v328, 7
        %v4037 = vsel %vm3952, %v4034, %v4036
        %v4038 = vrot.slane %v329, 7
        %v4039 = vrot.slane %v330, 7
        %v4040 = vsel %vm3952, %v4038, %v4039
        %v4041 = vrot.slane %v331, 7
        %v4042 = vsel %vm3952, %v4039, %v4041
        %v4043 = vrot.slane %v332, 7
        %v4044 = vrot.slane %v333, 7
        %v4045 = vsel %vm3952, %v4043, %v4044
        %v4046 = vrot.slane %v334, 7
        %v4047 = vsel %vm3952, %v4044, %v4046
        %v4048 = vrot.slane %v335, 7
        %v4049 = vrot.slane %v336, 7
        %v4050 = vsel %vm3952, %v4048, %v4049
        %v4051 = vrot.slane %v337, 7
        %v4052 = vsel %vm3952, %v4049, %v4051
        %v4053 = vrot.slane %v338, 7
        %v4054 = vrot.slane %v339, 7
        %v4055 = vsel %vm3952, %v4053, %v4054
        %v4056 = vrot.slane %v340, 7
        %v4057 = vsel %vm3952, %v4054, %v4056
        %v4058 = vrot.slane %v341, 7
        %v4059 = vrot.slane %v342, 7
        %v4060 = vsel %vm3952, %v4058, %v4059
        %v4061 = vrot.slane %v343, 7
        %v4062 = vsel %vm3952, %v4059, %v4061
        %v4063 = vrot.slane %v344, 7
        %v4064 = vrot.slane %v345, 7
        %v4065 = vsel %vm3952, %v4063, %v4064
        %v4066 = vrot.slane %v346, 7
        %v4067 = vsel %vm3952, %v4064, %v4066
        %v4068 = vrot.slane %v347, 7
        %v4069 = vrot.slane %v348, 7
        %v4070 = vsel %vm3952, %v4068, %v4069
        %v4071 = vrot.slane %v349, 7
        %v4072 = vsel %vm3952, %v4069, %v4071
        %4073 = vrot.lane.b32.xlu0 %v3955, 28
        %v4074 = vpop.permute.xlu0 %4073
        %4075 = vrot.lane.b32.xlu0 %v3957, 28
        %v4076 = vpop.permute.xlu0 %4075
        %4077 = vrot.lane.b32.xlu0 %v3960, 28
        %v4078 = vpop.permute.xlu0 %4077
        %4079 = vrot.lane.b32.xlu0 %v3962, 28
        %v4080 = vpop.permute.xlu0 %4079
        %4081 = vrot.lane.b32.xlu0 %v3965, 28
        %v4082 = vpop.permute.xlu0 %4081
        %4083 = vrot.lane.b32.xlu0 %v3967, 28
        %v4084 = vpop.permute.xlu0 %4083
        %4085 = vrot.lane.b32.xlu0 %v3970, 28
        %v4086 = vpop.permute.xlu0 %4085
        %4087 = vrot.lane.b32.xlu0 %v3972, 28
        %v4088 = vpop.permute.xlu0 %4087
        %4089 = vrot.lane.b32.xlu0 %v3975, 28
        %v4090 = vpop.permute.xlu0 %4089
        %4091 = vrot.lane.b32.xlu0 %v3977, 28
        %v4092 = vpop.permute.xlu0 %4091
        %4093 = vrot.lane.b32.xlu0 %v3980, 28
        %v4094 = vpop.permute.xlu0 %4093
        %4095 = vrot.lane.b32.xlu0 %v3982, 28
        %v4096 = vpop.permute.xlu0 %4095
        %4097 = vrot.lane.b32.xlu0 %v3985, 28
        %v4098 = vpop.permute.xlu0 %4097
        %4099 = vrot.lane.b32.xlu0 %v3987, 28
        %v4100 = vpop.permute.xlu0 %4099
        %4101 = vrot.lane.b32.xlu0 %v3990, 28
        %v4102 = vpop.permute.xlu0 %4101
        %4103 = vrot.lane.b32.xlu0 %v3992, 28
        %v4104 = vpop.permute.xlu0 %4103
        %4105 = vrot.lane.b32.xlu0 %v3995, 28
        %v4106 = vpop.permute.xlu0 %4105
        %4107 = vrot.lane.b32.xlu0 %v3997, 28
        %v4108 = vpop.permute.xlu0 %4107
        %4109 = vrot.lane.b32.xlu0 %v4000, 28
        %v4110 = vpop.permute.xlu0 %4109
        %4111 = vrot.lane.b32.xlu0 %v4002, 28
        %v4112 = vpop.permute.xlu0 %4111
        %4113 = vrot.lane.b32.xlu0 %v4005, 28
        %v4114 = vpop.permute.xlu0 %4113
        %4115 = vrot.lane.b32.xlu0 %v4007, 28
        %v4116 = vpop.permute.xlu0 %4115
        %4117 = vrot.lane.b32.xlu0 %v4010, 28
        %v4118 = vpop.permute.xlu0 %4117
        %4119 = vrot.lane.b32.xlu0 %v4012, 28
        %v4120 = vpop.permute.xlu0 %4119
        %4121 = vrot.lane.b32.xlu0 %v4015, 28
        %v4122 = vpop.permute.xlu0 %4121
        %4123 = vrot.lane.b32.xlu0 %v4017, 28
        %v4124 = vpop.permute.xlu0 %4123
        %4125 = vrot.lane.b32.xlu0 %v4020, 28
        %v4126 = vpop.permute.xlu0 %4125
        %4127 = vrot.lane.b32.xlu0 %v4022, 28
        %v4128 = vpop.permute.xlu0 %4127
        %4129 = vrot.lane.b32.xlu0 %v4025, 28
        %v4130 = vpop.permute.xlu0 %4129
        %4131 = vrot.lane.b32.xlu0 %v4027, 28
        %v4132 = vpop.permute.xlu0 %4131
        %4133 = vrot.lane.b32.xlu0 %v4030, 28
        %v4134 = vpop.permute.xlu0 %4133
        %4135 = vrot.lane.b32.xlu0 %v4032, 28
        %v4136 = vpop.permute.xlu0 %4135
        %4137 = vrot.lane.b32.xlu0 %v4035, 28
        %v4138 = vpop.permute.xlu0 %4137
        %4139 = vrot.lane.b32.xlu0 %v4037, 28
        %v4140 = vpop.permute.xlu0 %4139
        %4141 = vrot.lane.b32.xlu0 %v4040, 28
        %v4142 = vpop.permute.xlu0 %4141
        %4143 = vrot.lane.b32.xlu0 %v4042, 28
        %v4144 = vpop.permute.xlu0 %4143
        %4145 = vrot.lane.b32.xlu0 %v4045, 28
        %v4146 = vpop.permute.xlu0 %4145
        %4147 = vrot.lane.b32.xlu0 %v4047, 28
        %v4148 = vpop.permute.xlu0 %4147
        %4149 = vrot.lane.b32.xlu0 %v4050, 28
        %v4150 = vpop.permute.xlu0 %4149
        %4151 = vrot.lane.b32.xlu0 %v4052, 28
        %v4152 = vpop.permute.xlu0 %4151
        %4153 = vrot.lane.b32.xlu0 %v4055, 28
        %v4154 = vpop.permute.xlu0 %4153
        %4155 = vrot.lane.b32.xlu0 %v4057, 28
        %v4156 = vpop.permute.xlu0 %4155
        %4157 = vrot.lane.b32.xlu0 %v4060, 28
        %v4158 = vpop.permute.xlu0 %4157
        %4159 = vrot.lane.b32.xlu0 %v4062, 28
        %v4160 = vpop.permute.xlu0 %4159
        %4161 = vrot.lane.b32.xlu0 %v4065, 28
        %v4162 = vpop.permute.xlu0 %4161
        %4163 = vrot.lane.b32.xlu0 %v4067, 28
        %v4164 = vpop.permute.xlu0 %4163
        %4165 = vrot.lane.b32.xlu0 %v4070, 28
        %v4166 = vpop.permute.xlu0 %4165
        %4167 = vrot.lane.b32.xlu0 %v4072, 28
        %v4168 = vpop.permute.xlu0 %4167
        %4217 = vrot.lane.b32.xlu0 %v279, 32
        %v4218 = vpop.permute.xlu0 %4217
        %4219 = vrot.lane.b32.xlu0 %v280, 32
        %v4220 = vpop.permute.xlu0 %4219
        %4221 = vrot.lane.b32.xlu0 %v282, 32
        %v4222 = vpop.permute.xlu0 %4221
        %4223 = vrot.lane.b32.xlu0 %v283, 32
        %v4224 = vpop.permute.xlu0 %4223
        %4225 = vrot.lane.b32.xlu0 %v285, 32
        %v4226 = vpop.permute.xlu0 %4225
        %4227 = vrot.lane.b32.xlu0 %v286, 32
        %v4228 = vpop.permute.xlu0 %4227
        %4229 = vrot.lane.b32.xlu0 %v288, 32
        %v4230 = vpop.permute.xlu0 %4229
        %4231 = vrot.lane.b32.xlu0 %v289, 32
        %v4232 = vpop.permute.xlu0 %4231
        %4233 = vrot.lane.b32.xlu0 %v291, 32
        %v4234 = vpop.permute.xlu0 %4233
        %4235 = vrot.lane.b32.xlu0 %v292, 32
        %v4236 = vpop.permute.xlu0 %4235
        %4237 = vrot.lane.b32.xlu0 %v294, 32
        %v4238 = vpop.permute.xlu0 %4237
        %4239 = vrot.lane.b32.xlu0 %v295, 32
        %v4240 = vpop.permute.xlu0 %4239
        %4241 = vrot.lane.b32.xlu0 %v297, 32
        %v4242 = vpop.permute.xlu0 %4241
        %4243 = vrot.lane.b32.xlu0 %v298, 32
        %v4244 = vpop.permute.xlu0 %4243
        %4245 = vrot.lane.b32.xlu0 %v300, 32
        %v4246 = vpop.permute.xlu0 %4245
        %4247 = vrot.lane.b32.xlu0 %v301, 32
        %v4248 = vpop.permute.xlu0 %4247
        %v4265 = vsel %vm1571, %v278, %v2485
        %v4266 = vsel %vm1571, %v279, %v2487
        %v4267 = vsel %vm1571, %v281, %v2489
        %v4268 = vsel %vm1571, %v282, %v2491
        %v4269 = vsel %vm1571, %v284, %v2493
        %v4270 = vsel %vm1571, %v285, %v2495
        %v4271 = vsel %vm1571, %v287, %v2497
        %v4272 = vsel %vm1571, %v288, %v2499
        %v4273 = vsel %vm1571, %v290, %v2501
        %v4274 = vsel %vm1571, %v291, %v2503
        %v4275 = vsel %vm1571, %v293, %v2505
        %v4276 = vsel %vm1571, %v294, %v2507
        %v4277 = vsel %vm1571, %v296, %v2509
        %v4278 = vsel %vm1571, %v297, %v2511
        %v4279 = vsel %vm1571, %v299, %v2513
        %v4280 = vsel %vm1571, %v300, %v2515
        %v4281 = vsel %vm1571, %v302, %v2517
        %v4282 = vsel %vm1571, %v303, %v2519
        %v4283 = vsel %vm1571, %v305, %v2521
        %v4284 = vsel %vm1571, %v306, %v2523
        %v4285 = vsel %vm1571, %v308, %v2525
        %v4286 = vsel %vm1571, %v309, %v2527
        %v4287 = vsel %vm1571, %v311, %v2529
        %v4288 = vsel %vm1571, %v312, %v2531
        %v4289 = vsel %vm1571, %v314, %v2533
        %v4290 = vsel %vm1571, %v315, %v2535
        %v4291 = vsel %vm1571, %v317, %v2537
        %v4292 = vsel %vm1571, %v318, %v2539
        %v4293 = vsel %vm1571, %v320, %v2541
        %v4294 = vsel %vm1571, %v321, %v2543
        %v4295 = vsel %vm1571, %v323, %v2545
        %v4296 = vsel %vm1571, %v324, %v2547
        %v4297 = vsel %vm1571, %v326, %v2549
        %v4298 = vsel %vm1571, %v327, %v2551
        %v4299 = vsel %vm1571, %v329, %v2553
        %v4300 = vsel %vm1571, %v330, %v2555
        %v4301 = vsel %vm1571, %v332, %v2557
        %v4302 = vsel %vm1571, %v333, %v2559
        %v4303 = vsel %vm1571, %v335, %v2561
        %v4304 = vsel %vm1571, %v336, %v2563
        %v4305 = vsel %vm1571, %v338, %v2565
        %v4306 = vsel %vm1571, %v339, %v2567
        %v4307 = vsel %vm1571, %v341, %v2569
        %v4308 = vsel %vm1571, %v342, %v2571
        %v4309 = vsel %vm1571, %v344, %v2573
        %v4310 = vsel %vm1571, %v345, %v2575
        %v4311 = vsel %vm1571, %v347, %v2577
        %v4312 = vsel %vm1571, %v348, %v2579
        %v4313 = vsel %vm1620, %v4265, %v2750
        %v4314 = vsel %vm1620, %v4266, %v2752
        %v4315 = vsel %vm1620, %v4267, %v2754
        %v4316 = vsel %vm1620, %v4268, %v2756
        %v4317 = vsel %vm1620, %v4269, %v2758
        %v4318 = vsel %vm1620, %v4270, %v2760
        %v4319 = vsel %vm1620, %v4271, %v2762
        %v4320 = vsel %vm1620, %v4272, %v2764
        %v4321 = vsel %vm1620, %v4273, %v2766
        %v4322 = vsel %vm1620, %v4274, %v2768
        %v4323 = vsel %vm1620, %v4275, %v2770
        %v4324 = vsel %vm1620, %v4276, %v2772
        %v4325 = vsel %vm1620, %v4277, %v2774
        %v4326 = vsel %vm1620, %v4278, %v2776
        %v4327 = vsel %vm1620, %v4279, %v2778
        %v4328 = vsel %vm1620, %v4280, %v2780
        %v4329 = vsel %vm1620, %v4281, %v2782
        %v4330 = vsel %vm1620, %v4282, %v2784
        %v4331 = vsel %vm1620, %v4283, %v2786
        %v4332 = vsel %vm1620, %v4284, %v2788
        %v4333 = vsel %vm1620, %v4285, %v2790
        %v4334 = vsel %vm1620, %v4286, %v2792
        %v4335 = vsel %vm1620, %v4287, %v2794
        %v4336 = vsel %vm1620, %v4288, %v2796
        %v4337 = vsel %vm1620, %v4289, %v2798
        %v4338 = vsel %vm1620, %v4290, %v2800
        %v4339 = vsel %vm1620, %v4291, %v2802
        %v4340 = vsel %vm1620, %v4292, %v2804
        %v4341 = vsel %vm1620, %v4293, %v2806
        %v4342 = vsel %vm1620, %v4294, %v2808
        %v4343 = vsel %vm1620, %v4295, %v2810
        %v4344 = vsel %vm1620, %v4296, %v2812
        %v4345 = vsel %vm1620, %v4297, %v2814
        %v4346 = vsel %vm1620, %v4298, %v2816
        %v4347 = vsel %vm1620, %v4299, %v2818
        %v4348 = vsel %vm1620, %v4300, %v2820
        %v4349 = vsel %vm1620, %v4301, %v2822
        %v4350 = vsel %vm1620, %v4302, %v2824
        %v4351 = vsel %vm1620, %v4303, %v2826
        %v4352 = vsel %vm1620, %v4304, %v2828
        %v4353 = vsel %vm1620, %v4305, %v2830
        %v4354 = vsel %vm1620, %v4306, %v2832
        %v4355 = vsel %vm1620, %v4307, %v2834
        %v4356 = vsel %vm1620, %v4308, %v2836
        %v4357 = vsel %vm1620, %v4309, %v2838
        %v4358 = vsel %vm1620, %v4310, %v2840
        %v4359 = vsel %vm1620, %v4311, %v2842
        %v4360 = vsel %vm1620, %v4312, %v2844
        %v4361 = vsel %vm1669, %v4313, %v3015
        %v4362 = vsel %vm1669, %v4314, %v3017
        %v4363 = vsel %vm1669, %v4315, %v3019
        %v4364 = vsel %vm1669, %v4316, %v3021
        %v4365 = vsel %vm1669, %v4317, %v3023
        %v4366 = vsel %vm1669, %v4318, %v3025
        %v4367 = vsel %vm1669, %v4319, %v3027
        %v4368 = vsel %vm1669, %v4320, %v3029
        %v4369 = vsel %vm1669, %v4321, %v3031
        %v4370 = vsel %vm1669, %v4322, %v3033
        %v4371 = vsel %vm1669, %v4323, %v3035
        %v4372 = vsel %vm1669, %v4324, %v3037
        %v4373 = vsel %vm1669, %v4325, %v3039
        %v4374 = vsel %vm1669, %v4326, %v3041
        %v4375 = vsel %vm1669, %v4327, %v3043
        %v4376 = vsel %vm1669, %v4328, %v3045
        %v4377 = vsel %vm1669, %v4329, %v3047
        %v4378 = vsel %vm1669, %v4330, %v3049
        %v4379 = vsel %vm1669, %v4331, %v3051
        %v4380 = vsel %vm1669, %v4332, %v3053
        %v4381 = vsel %vm1669, %v4333, %v3055
        %v4382 = vsel %vm1669, %v4334, %v3057
        %v4383 = vsel %vm1669, %v4335, %v3059
        %v4384 = vsel %vm1669, %v4336, %v3061
        %v4385 = vsel %vm1669, %v4337, %v3063
        %v4386 = vsel %vm1669, %v4338, %v3065
        %v4387 = vsel %vm1669, %v4339, %v3067
        %v4388 = vsel %vm1669, %v4340, %v3069
        %v4389 = vsel %vm1669, %v4341, %v3071
        %v4390 = vsel %vm1669, %v4342, %v3073
        %v4391 = vsel %vm1669, %v4343, %v3075
        %v4392 = vsel %vm1669, %v4344, %v3077
        %v4393 = vsel %vm1669, %v4345, %v3079
        %v4394 = vsel %vm1669, %v4346, %v3081
        %v4395 = vsel %vm1669, %v4347, %v3083
        %v4396 = vsel %vm1669, %v4348, %v3085
        %v4397 = vsel %vm1669, %v4349, %v3087
        %v4398 = vsel %vm1669, %v4350, %v3089
        %v4399 = vsel %vm1669, %v4351, %v3091
        %v4400 = vsel %vm1669, %v4352, %v3093
        %v4401 = vsel %vm1669, %v4353, %v3095
        %v4402 = vsel %vm1669, %v4354, %v3097
        %v4403 = vsel %vm1669, %v4355, %v3099
        %v4404 = vsel %vm1669, %v4356, %v3101
        %v4405 = vsel %vm1669, %v4357, %v3103
        %v4406 = vsel %vm1669, %v4358, %v3105
        %v4407 = vsel %vm1669, %v4359, %v3107
        %v4408 = vsel %vm1669, %v4360, %v3109
        %v4409 = vsel %vm1718, %v4361, %v3280
        %v4410 = vsel %vm1718, %v4362, %v3282
        %v4411 = vsel %vm1718, %v4363, %v3284
        %v4412 = vsel %vm1718, %v4364, %v3286
        %v4413 = vsel %vm1718, %v4365, %v3288
        %v4414 = vsel %vm1718, %v4366, %v3290
        %v4415 = vsel %vm1718, %v4367, %v3292
        %v4416 = vsel %vm1718, %v4368, %v3294
        %v4417 = vsel %vm1718, %v4369, %v3296
        %v4418 = vsel %vm1718, %v4370, %v3298
        %v4419 = vsel %vm1718, %v4371, %v3300
        %v4420 = vsel %vm1718, %v4372, %v3302
        %v4421 = vsel %vm1718, %v4373, %v3304
        %v4422 = vsel %vm1718, %v4374, %v3306
        %v4423 = vsel %vm1718, %v4375, %v3308
        %v4424 = vsel %vm1718, %v4376, %v3310
        %v4425 = vsel %vm1718, %v4377, %v3312
        %v4426 = vsel %vm1718, %v4378, %v3314
        %v4427 = vsel %vm1718, %v4379, %v3316
        %v4428 = vsel %vm1718, %v4380, %v3318
        %v4429 = vsel %vm1718, %v4381, %v3320
        %v4430 = vsel %vm1718, %v4382, %v3322
        %v4431 = vsel %vm1718, %v4383, %v3324
        %v4432 = vsel %vm1718, %v4384, %v3326
        %v4433 = vsel %vm1718, %v4385, %v3328
        %v4434 = vsel %vm1718, %v4386, %v3330
        %v4435 = vsel %vm1718, %v4387, %v3332
        %v4436 = vsel %vm1718, %v4388, %v3334
        %v4437 = vsel %vm1718, %v4389, %v3336
        %v4438 = vsel %vm1718, %v4390, %v3338
        %v4439 = vsel %vm1718, %v4391, %v3340
        %v4440 = vsel %vm1718, %v4392, %v3342
        %v4441 = vsel %vm1718, %v4393, %v3344
        %v4442 = vsel %vm1718, %v4394, %v3346
        %v4443 = vsel %vm1718, %v4395, %v3348
        %v4444 = vsel %vm1718, %v4396, %v3350
        %v4445 = vsel %vm1718, %v4397, %v3352
        %v4446 = vsel %vm1718, %v4398, %v3354
        %v4447 = vsel %vm1718, %v4399, %v3356
        %v4448 = vsel %vm1718, %v4400, %v3358
        %v4449 = vsel %vm1718, %v4401, %v3360
        %v4450 = vsel %vm1718, %v4402, %v3362
        %v4451 = vsel %vm1718, %v4403, %v3364
        %v4452 = vsel %vm1718, %v4404, %v3366
        %v4453 = vsel %vm1718, %v4405, %v3368
        %v4454 = vsel %vm1718, %v4406, %v3370
        %v4455 = vsel %vm1718, %v4407, %v3372
        %v4456 = vsel %vm1718, %v4408, %v3374
        %v4457 = vsel %vm1767, %v4409, %v3545
        %v4458 = vsel %vm1767, %v4410, %v3547
        %v4459 = vsel %vm1767, %v4411, %v3549
        %v4460 = vsel %vm1767, %v4412, %v3551
        %v4461 = vsel %vm1767, %v4413, %v3553
        %v4462 = vsel %vm1767, %v4414, %v3555
        %v4463 = vsel %vm1767, %v4415, %v3557
        %v4464 = vsel %vm1767, %v4416, %v3559
        %v4465 = vsel %vm1767, %v4417, %v3561
        %v4466 = vsel %vm1767, %v4418, %v3563
        %v4467 = vsel %vm1767, %v4419, %v3565
        %v4468 = vsel %vm1767, %v4420, %v3567
        %v4469 = vsel %vm1767, %v4421, %v3569
        %v4470 = vsel %vm1767, %v4422, %v3571
        %v4471 = vsel %vm1767, %v4423, %v3573
        %v4472 = vsel %vm1767, %v4424, %v3575
        %v4473 = vsel %vm1767, %v4425, %v3577
        %v4474 = vsel %vm1767, %v4426, %v3579
        %v4475 = vsel %vm1767, %v4427, %v3581
        %v4476 = vsel %vm1767, %v4428, %v3583
        %v4477 = vsel %vm1767, %v4429, %v3585
        %v4478 = vsel %vm1767, %v4430, %v3587
        %v4479 = vsel %vm1767, %v4431, %v3589
        %v4480 = vsel %vm1767, %v4432, %v3591
        %v4481 = vsel %vm1767, %v4433, %v3593
        %v4482 = vsel %vm1767, %v4434, %v3595
        %v4483 = vsel %vm1767, %v4435, %v3597
        %v4484 = vsel %vm1767, %v4436, %v3599
        %v4485 = vsel %vm1767, %v4437, %v3601
        %v4486 = vsel %vm1767, %v4438, %v3603
        %v4487 = vsel %vm1767, %v4439, %v3605
        %v4488 = vsel %vm1767, %v4440, %v3607
        %v4489 = vsel %vm1767, %v4441, %v3609
        %v4490 = vsel %vm1767, %v4442, %v3611
        %v4491 = vsel %vm1767, %v4443, %v3613
        %v4492 = vsel %vm1767, %v4444, %v3615
        %v4493 = vsel %vm1767, %v4445, %v3617
        %v4494 = vsel %vm1767, %v4446, %v3619
        %v4495 = vsel %vm1767, %v4447, %v3621
        %v4496 = vsel %vm1767, %v4448, %v3623
        %v4497 = vsel %vm1767, %v4449, %v3625
        %v4498 = vsel %vm1767, %v4450, %v3627
        %v4499 = vsel %vm1767, %v4451, %v3629
        %v4500 = vsel %vm1767, %v4452, %v3631
        %v4501 = vsel %vm1767, %v4453, %v3633
        %v4502 = vsel %vm1767, %v4454, %v3635
        %v4503 = vsel %vm1767, %v4455, %v3637
        %v4504 = vsel %vm1767, %v4456, %v3639
        %v4505 = vsel %vm1816, %v4457, %v3809
        %v4506 = vsel %vm1816, %v4458, %v3811
        %v4507 = vsel %vm1816, %v4459, %v3813
        %v4508 = vsel %vm1816, %v4460, %v3815
        %v4509 = vsel %vm1816, %v4461, %v3817
        %v4510 = vsel %vm1816, %v4462, %v3819
        %v4511 = vsel %vm1816, %v4463, %v3821
        %v4512 = vsel %vm1816, %v4464, %v3823
        %v4513 = vsel %vm1816, %v4465, %v3825
        %v4514 = vsel %vm1816, %v4466, %v3827
        %v4515 = vsel %vm1816, %v4467, %v3829
        %v4516 = vsel %vm1816, %v4468, %v3831
        %v4517 = vsel %vm1816, %v4469, %v3833
        %v4518 = vsel %vm1816, %v4470, %v3835
        %v4519 = vsel %vm1816, %v4471, %v3837
        %v4520 = vsel %vm1816, %v4472, %v3839
        %v4521 = vsel %vm1816, %v4473, %v3841
        %v4522 = vsel %vm1816, %v4474, %v3843
        %v4523 = vsel %vm1816, %v4475, %v3845
        %v4524 = vsel %vm1816, %v4476, %v3847
        %v4525 = vsel %vm1816, %v4477, %v3849
        %v4526 = vsel %vm1816, %v4478, %v3851
        %v4527 = vsel %vm1816, %v4479, %v3853
        %v4528 = vsel %vm1816, %v4480, %v3855
        %v4529 = vsel %vm1816, %v4481, %v3857
        %v4530 = vsel %vm1816, %v4482, %v3859
        %v4531 = vsel %vm1816, %v4483, %v3861
        %v4532 = vsel %vm1816, %v4484, %v3863
        %v4533 = vsel %vm1816, %v4485, %v3865
        %v4534 = vsel %vm1816, %v4486, %v3867
        %v4535 = vsel %vm1816, %v4487, %v3869
        %v4536 = vsel %vm1816, %v4488, %v3871
        %v4537 = vsel %vm1816, %v4489, %v3873
        %v4538 = vsel %vm1816, %v4490, %v3875
        %v4539 = vsel %vm1816, %v4491, %v3877
        %v4540 = vsel %vm1816, %v4492, %v3879
        %v4541 = vsel %vm1816, %v4493, %v3881
        %v4542 = vsel %vm1816, %v4494, %v3883
        %v4543 = vsel %vm1816, %v4495, %v3885
        %v4544 = vsel %vm1816, %v4496, %v3887
        %v4545 = vsel %vm1816, %v4497, %v3889
        %v4546 = vsel %vm1816, %v4498, %v3891
        %v4547 = vsel %vm1816, %v4499, %v3893
        %v4548 = vsel %vm1816, %v4500, %v3895
        %v4549 = vsel %vm1816, %v4501, %v3897
        %v4550 = vsel %vm1816, %v4502, %v3899
        %v4551 = vsel %vm1816, %v4503, %v3901
        %v4552 = vsel %vm1816, %v4504, %v3903
        %v4553 = vsel %vm1865, %v4505, %v4074
        %v4554 = vsel %vm1865, %v4506, %v4076
        %v4555 = vsel %vm1865, %v4507, %v4078
        %v4556 = vsel %vm1865, %v4508, %v4080
        %v4557 = vsel %vm1865, %v4509, %v4082
        %v4558 = vsel %vm1865, %v4510, %v4084
        %v4559 = vsel %vm1865, %v4511, %v4086
        %v4560 = vsel %vm1865, %v4512, %v4088
        %v4561 = vsel %vm1865, %v4513, %v4090
        %v4562 = vsel %vm1865, %v4514, %v4092
        %v4563 = vsel %vm1865, %v4515, %v4094
        %v4564 = vsel %vm1865, %v4516, %v4096
        %v4565 = vsel %vm1865, %v4517, %v4098
        %v4566 = vsel %vm1865, %v4518, %v4100
        %v4567 = vsel %vm1865, %v4519, %v4102
        %v4568 = vsel %vm1865, %v4520, %v4104
        %v4569 = vsel %vm1865, %v4521, %v4106
        %v4570 = vsel %vm1865, %v4522, %v4108
        %v4571 = vsel %vm1865, %v4523, %v4110
        %v4572 = vsel %vm1865, %v4524, %v4112
        %v4573 = vsel %vm1865, %v4525, %v4114
        %v4574 = vsel %vm1865, %v4526, %v4116
        %v4575 = vsel %vm1865, %v4527, %v4118
        %v4576 = vsel %vm1865, %v4528, %v4120
        %v4577 = vsel %vm1865, %v4529, %v4122
        %v4578 = vsel %vm1865, %v4530, %v4124
        %v4579 = vsel %vm1865, %v4531, %v4126
        %v4580 = vsel %vm1865, %v4532, %v4128
        %v4581 = vsel %vm1865, %v4533, %v4130
        %v4582 = vsel %vm1865, %v4534, %v4132
        %v4583 = vsel %vm1865, %v4535, %v4134
        %v4584 = vsel %vm1865, %v4536, %v4136
        %v4585 = vsel %vm1865, %v4537, %v4138
        %v4586 = vsel %vm1865, %v4538, %v4140
        %v4587 = vsel %vm1865, %v4539, %v4142
        %v4588 = vsel %vm1865, %v4540, %v4144
        %v4589 = vsel %vm1865, %v4541, %v4146
        %v4590 = vsel %vm1865, %v4542, %v4148
        %v4591 = vsel %vm1865, %v4543, %v4150
        %v4592 = vsel %vm1865, %v4544, %v4152
        %v4593 = vsel %vm1865, %v4545, %v4154
        %v4594 = vsel %vm1865, %v4546, %v4156
        %v4595 = vsel %vm1865, %v4547, %v4158
        %v4596 = vsel %vm1865, %v4548, %v4160
        %v4597 = vsel %vm1865, %v4549, %v4162
        %v4598 = vsel %vm1865, %v4550, %v4164
        %v4599 = vsel %vm1865, %v4551, %v4166
        %v4600 = vsel %vm1865, %v4552, %v4168
        %v4601 = vsel %vm1914, %v4553, %v4218
        %v4602 = vsel %vm1914, %v4554, %v4220
        %v4603 = vsel %vm1914, %v4555, %v4222
        %v4604 = vsel %vm1914, %v4556, %v4224
        %v4605 = vsel %vm1914, %v4557, %v4226
        %v4606 = vsel %vm1914, %v4558, %v4228
        %v4607 = vsel %vm1914, %v4559, %v4230
        %v4608 = vsel %vm1914, %v4560, %v4232
        %v4609 = vsel %vm1914, %v4561, %v4234
        %v4610 = vsel %vm1914, %v4562, %v4236
        %v4611 = vsel %vm1914, %v4563, %v4238
        %v4612 = vsel %vm1914, %v4564, %v4240
        %v4613 = vsel %vm1914, %v4565, %v4242
        %v4614 = vsel %vm1914, %v4566, %v4244
        %v4615 = vsel %vm1914, %v4567, %v4246
        %v4616 = vsel %vm1914, %v4568, %v4248
        %v4617 = vsel %vm1914, %v4569, %v1430
        %v4618 = vsel %vm1914, %v4570, %v1432
        %v4619 = vsel %vm1914, %v4571, %v1436
        %v4620 = vsel %vm1914, %v4572, %v1438
        %v4621 = vsel %vm1914, %v4573, %v1442
        %v4622 = vsel %vm1914, %v4574, %v1444
        %v4623 = vsel %vm1914, %v4575, %v1448
        %v4624 = vsel %vm1914, %v4576, %v1450
        %v4625 = vsel %vm1914, %v4577, %v1454
        %v4626 = vsel %vm1914, %v4578, %v1456
        %v4627 = vsel %vm1914, %v4579, %v1460
        %v4628 = vsel %vm1914, %v4580, %v1462
        %v4629 = vsel %vm1914, %v4581, %v1466
        %v4630 = vsel %vm1914, %v4582, %v1468
        %v4631 = vsel %vm1914, %v4583, %v1472
        %v4632 = vsel %vm1914, %v4584, %v1474
        %v4633 = vsel %vm1914, %v4585, %v1478
        %v4634 = vsel %vm1914, %v4586, %v1480
        %v4635 = vsel %vm1914, %v4587, %v1484
        %v4636 = vsel %vm1914, %v4588, %v1486
        %v4637 = vsel %vm1914, %v4589, %v1490
        %v4638 = vsel %vm1914, %v4590, %v1492
        %v4639 = vsel %vm1914, %v4591, %v1496
        %v4640 = vsel %vm1914, %v4592, %v1498
        %v4641 = vsel %vm1914, %v4593, %v1502
        %v4642 = vsel %vm1914, %v4594, %v1504
        %v4643 = vsel %vm1914, %v4595, %v1508
        %v4644 = vsel %vm1914, %v4596, %v1510
        %v4645 = vsel %vm1914, %v4597, %v1514
        %v4646 = vsel %vm1914, %v4598, %v1516
        %v4647 = vsel %vm1914, %v4599, %v1520
        %v4648 = vsel %vm1914, %v4600, %v1522
        %v4649 = vpack.c.bf16 %v4602, %v4601
        %v4650 = vpack.c.bf16 %v4604, %v4603
        %v4651 = vpack.c.bf16 %v4606, %v4605
        %v4652 = vpack.c.bf16 %v4608, %v4607
        %v4653 = vpack.c.bf16 %v4610, %v4609
        %v4654 = vpack.c.bf16 %v4612, %v4611
        %v4655 = vpack.c.bf16 %v4614, %v4613
        %v4656 = vpack.c.bf16 %v4616, %v4615
        %v4657 = vpack.c.bf16 %v4618, %v4617
        %v4658 = vpack.c.bf16 %v4620, %v4619
        %v4659 = vpack.c.bf16 %v4622, %v4621
        %v4660 = vpack.c.bf16 %v4624, %v4623
        %v4661 = vpack.c.bf16 %v4626, %v4625
        %v4662 = vpack.c.bf16 %v4628, %v4627
        %v4663 = vpack.c.bf16 %v4630, %v4629
        %v4664 = vpack.c.bf16 %v4632, %v4631
        %v4665 = vpack.c.bf16 %v4634, %v4633
        %v4666 = vpack.c.bf16 %v4636, %v4635
        %v4667 = vpack.c.bf16 %v4638, %v4637
        %v4668 = vpack.c.bf16 %v4640, %v4639
        %v4669 = vpack.c.bf16 %v4642, %v4641
        %v4670 = vpack.c.bf16 %v4644, %v4643
        %v4671 = vpack.c.bf16 %v4646, %v4645
        %v4672 = vpack.c.bf16 %v4648, %v4647
        %v4673 = vld [vmem:[%s2] sm:$0xf]
        %v4674 = vld [vmem:[%s2 + $0x4] sm:$0xf]
        %v4675 = vld [vmem:[%s2 + $0x8] sm:$0xf]
        %v4676 = vld [vmem:[%s2 + $0xc] sm:$0xf]
        %v4677 = vld [vmem:[%s2 + $0x10] sm:$0x3]
        %v4683 = vunpack.c.l.b16 %v4673
        %v4684 = vunpack.c.l.b16 %v4674
        %v4685 = vunpack.c.l.b16 %v4675
        %v4686 = vunpack.c.l.b16 %v4676
        %v4687 = vunpack.c.l.b16 %v4677
        %v4688 = vpack.c.b16 %v4684, %v4683
        %v4689 = vpack.c.b16 %v4686, %v4685
        %v4690 = vpack.c.b16 %v4687, %v4687
        %v4694 = vsel %vm2007, %v4649, 0
        %v4697 = vsel %vm2007, %v4650, 0
        %v4700 = vsel %vm2007, %v4651, 0
        %v4703 = vsel %vm2007, %v4652, 0
        %v4706 = vsel %vm2007, %v4653, 0
        %v4709 = vsel %vm2007, %v4654, 0
        %v4712 = vsel %vm2007, %v4655, 0
        %v4715 = vsel %vm2007, %v4656, 0
        %v4718 = vsel %vm2007, %v4657, 0
        %v4721 = vsel %vm2007, %v4658, 0
        %v4724 = vsel %vm2007, %v4659, 0
        %v4727 = vsel %vm2007, %v4660, 0
        %v4730 = vsel %vm2007, %v4661, 0
        %v4733 = vsel %vm2007, %v4662, 0
        %v4736 = vsel %vm2007, %v4663, 0
        %v4739 = vsel %vm2007, %v4664, 0
        %v4742 = vsel %vm2007, %v4665, 0
        %v4745 = vsel %vm2007, %v4666, 0
        %v4748 = vsel %vm2007, %v4667, 0
        %v4751 = vsel %vm2007, %v4668, 0
        %v4754 = vsel %vm2007, %v4669, 0
        %v4757 = vsel %vm2007, %v4670, 0
        %v4760 = vsel %vm2007, %v4671, 0
        %v4763 = vsel %vm2007, %v4672, 0
        %v4766 = vsel %vm2080, %v4690, 0
        %4768 = vmatprep.subr.bf16.mxu0 0
        %4769 = vmatpush1.bf16.msra.mxu0 %v4688
        %4770 = vmatprep.subr.bf16.mxu0 0
        %4771 = vmatpush1.bf16.msra.mxu0 %v4689
        %4772 = vmatprep.subr.bf16.mxu0 0
        %4773 = vmatpush1.bf16.msra.mxu0 %v4766
        %4774 = vmatprep.subr.bf16.mxu0 0
        %4775 = vmatpush1.bf16.msra.mxu0 0
        %4776 = vmatprep.subr.bf16.mxu0 0
        %4777 = vmatpush1.bf16.msra.mxu0 0
        %4778 = vmatprep.subr.bf16.mxu0 0
        %4779 = vmatpush1.bf16.msra.mxu0 0
        %4780 = vmatprep.subr.bf16.mxu0 0
        %4781 = vmatpush1.bf16.msra.mxu0 0
        %4782 = vmatprep.subr.bf16.mxu0 0
        %4783 = vmatpush1.bf16.msra.mxu0 0
        %4784 = vmatprep.subr.bf16.mxu0 0
        %4785 = vmatpush1.bf16.msra.mxu0 0
        %4786 = vmatprep.subr.bf16.mxu0 0
        %4787 = vmatpush1.bf16.msra.mxu0 0
        %4788 = vmatprep.subr.bf16.mxu0 0
        %4789 = vmatpush1.bf16.msra.mxu0 0
        %4790 = vmatprep.subr.bf16.mxu0 0
        %4791 = vmatpush1.bf16.msra.mxu0 0
        %4792 = vmatprep.subr.bf16.mxu0 0
        %4793 = vmatpush1.bf16.msra.mxu0 0
        %4794 = vmatprep.subr.bf16.mxu0 0
        %4795 = vmatpush1.bf16.msra.mxu0 0
        %4796 = vmatprep.subr.bf16.mxu0 0
        %4797 = vmatpush1.bf16.msra.mxu0 0
        %4798 = vmatprep.subr.bf16.mxu0 0
        %4799 = vmatpush1.bf16.msra.mxu0 0
        %4800 = vmatprep.mubr.bf16.mxu0 0
        %4801 = vmatmul.mubr.bf16.gmra.mrb[0].mxu0 %v4694
        %v4802 = vpop.f32.mrb[0].mxu0
        %v4803 = vadd.f32 0.0, %v4802
        %v4804 = vpop.f32.mrb[0].mxu0
        %v4805 = vpop.f32.mrb[0].mxu0
        %v4806 = vadd.f32 0.0, %v4805
        %v4807 = vpop.f32.mrb[0].mxu0
        %4808 = vmatprep.mubr.bf16.mxu0 0
        %4809 = vmatmul.mubr.bf16.gmra.mrb[0].mxu0 %v4697
        %v4810 = vpop.f32.mrb[0].mxu0
        %v4811 = vadd.f32 0.0, %v4810
        %v4812 = vpop.f32.mrb[0].mxu0
        %v4813 = vpop.f32.mrb[0].mxu0
        %v4814 = vadd.f32 0.0, %v4813
        %v4815 = vpop.f32.mrb[0].mxu0
        %4816 = vmatprep.mubr.bf16.mxu0 0
        %4817 = vmatmul.mubr.bf16.gmra.mrb[0].mxu0 %v4700
        %v4818 = vpop.f32.mrb[0].mxu0
        %v4819 = vadd.f32 0.0, %v4818
        %v4820 = vpop.f32.mrb[0].mxu0
        %v4821 = vpop.f32.mrb[0].mxu0
        %v4822 = vadd.f32 0.0, %v4821
        %v4823 = vpop.f32.mrb[0].mxu0
        %4824 = vmatprep.mubr.bf16.mxu0 0
        %4825 = vmatmul.mubr.bf16.gmra.mrb[0].mxu0 %v4703
        %v4826 = vpop.f32.mrb[0].mxu0
        %v4827 = vadd.f32 0.0, %v4826
        %v4828 = vpop.f32.mrb[0].mxu0
        %v4829 = vpop.f32.mrb[0].mxu0
        %v4830 = vadd.f32 0.0, %v4829
        %v4831 = vpop.f32.mrb[0].mxu0
        %4832 = vmatprep.mubr.bf16.mxu0 0
        %4833 = vmatmul.mubr.bf16.gmra.mrb[0].mxu0 %v4706
        %v4834 = vpop.f32.mrb[0].mxu0
        %v4835 = vadd.f32 0.0, %v4834
        %v4836 = vpop.f32.mrb[0].mxu0
        %v4837 = vpop.f32.mrb[0].mxu0
        %v4838 = vadd.f32 0.0, %v4837
        %v4839 = vpop.f32.mrb[0].mxu0
        %4840 = vmatprep.mubr.bf16.mxu0 0
        %4841 = vmatmul.mubr.bf16.gmra.mrb[0].mxu0 %v4709
        %v4842 = vpop.f32.mrb[0].mxu0
        %v4843 = vadd.f32 0.0, %v4842
        %v4844 = vpop.f32.mrb[0].mxu0
        %v4845 = vpop.f32.mrb[0].mxu0
        %v4846 = vadd.f32 0.0, %v4845
        %v4847 = vpop.f32.mrb[0].mxu0
        %4848 = vmatprep.mubr.bf16.mxu0 0
        %4849 = vmatmul.mubr.bf16.gmra.mrb[0].mxu0 %v4712
        %v4850 = vpop.f32.mrb[0].mxu0
        %v4851 = vadd.f32 0.0, %v4850
        %v4852 = vpop.f32.mrb[0].mxu0
        %v4853 = vpop.f32.mrb[0].mxu0
        %v4854 = vadd.f32 0.0, %v4853
        %v4855 = vpop.f32.mrb[0].mxu0
        %4856 = vmatprep.mubr.bf16.mxu0 0
        %4857 = vmatmul.mubr.bf16.gmra.mrb[0].mxu0 %v4715
        %v4858 = vpop.f32.mrb[0].mxu0
        %v4859 = vadd.f32 0.0, %v4858
        %v4860 = vpop.f32.mrb[0].mxu0
        %v4861 = vpop.f32.mrb[0].mxu0
        %v4862 = vadd.f32 0.0, %v4861
        %v4863 = vpop.f32.mrb[0].mxu0
        %4864 = vmatprep.mubr.bf16.mxu0 0
        %4865 = vmatmul.mubr.bf16.gmra.mrb[0].mxu0 %v4718
        %v4866 = vpop.f32.mrb[0].mxu0
        %v4867 = vadd.f32 0.0, %v4866
        %v4868 = vpop.f32.mrb[0].mxu0
        %v4869 = vpop.f32.mrb[0].mxu0
        %v4870 = vadd.f32 0.0, %v4869
        %v4871 = vpop.f32.mrb[0].mxu0
        %4872 = vmatprep.mubr.bf16.mxu0 0
        %4873 = vmatmul.mubr.bf16.gmra.mrb[0].mxu0 %v4721
        %v4874 = vpop.f32.mrb[0].mxu0
        %v4875 = vadd.f32 0.0, %v4874
        %v4876 = vpop.f32.mrb[0].mxu0
        %v4877 = vpop.f32.mrb[0].mxu0
        %v4878 = vadd.f32 0.0, %v4877
        %v4879 = vpop.f32.mrb[0].mxu0
        %4880 = vmatprep.mubr.bf16.mxu0 0
        %4881 = vmatmul.mubr.bf16.gmra.mrb[0].mxu0 %v4724
        %v4882 = vpop.f32.mrb[0].mxu0
        %v4883 = vadd.f32 0.0, %v4882
        %v4884 = vpop.f32.mrb[0].mxu0
        %v4885 = vpop.f32.mrb[0].mxu0
        %v4886 = vadd.f32 0.0, %v4885
        %v4887 = vpop.f32.mrb[0].mxu0
        %4888 = vmatprep.mubr.bf16.mxu0 0
        %4889 = vmatmul.mubr.bf16.gmra.mrb[0].mxu0 %v4727
        %v4890 = vpop.f32.mrb[0].mxu0
        %v4891 = vadd.f32 0.0, %v4890
        %v4892 = vpop.f32.mrb[0].mxu0
        %v4893 = vpop.f32.mrb[0].mxu0
        %v4894 = vadd.f32 0.0, %v4893
        %v4895 = vpop.f32.mrb[0].mxu0
        %4896 = vmatprep.mubr.bf16.mxu0 0
        %4897 = vmatmul.mubr.bf16.gmra.mrb[0].mxu0 %v4730
        %v4898 = vpop.f32.mrb[0].mxu0
        %v4899 = vadd.f32 0.0, %v4898
        %v4900 = vpop.f32.mrb[0].mxu0
        %v4901 = vpop.f32.mrb[0].mxu0
        %v4902 = vadd.f32 0.0, %v4901
        %v4903 = vpop.f32.mrb[0].mxu0
        %4904 = vmatprep.mubr.bf16.mxu0 0
        %4905 = vmatmul.mubr.bf16.gmra.mrb[0].mxu0 %v4733
        %v4906 = vpop.f32.mrb[0].mxu0
        %v4907 = vadd.f32 0.0, %v4906
        %v4908 = vpop.f32.mrb[0].mxu0
        %v4909 = vpop.f32.mrb[0].mxu0
        %v4910 = vadd.f32 0.0, %v4909
        %v4911 = vpop.f32.mrb[0].mxu0
        %4912 = vmatprep.mubr.bf16.mxu0 0
        %4913 = vmatmul.mubr.bf16.gmra.mrb[0].mxu0 %v4736
        %v4914 = vpop.f32.mrb[0].mxu0
        %v4915 = vadd.f32 0.0, %v4914
        %v4916 = vpop.f32.mrb[0].mxu0
        %v4917 = vpop.f32.mrb[0].mxu0
        %v4918 = vadd.f32 0.0, %v4917
        %v4919 = vpop.f32.mrb[0].mxu0
        %4920 = vmatprep.mubr.bf16.mxu0 0
        %4921 = vmatmul.mubr.bf16.gmra.mrb[0].mxu0 %v4739
        %v4922 = vpop.f32.mrb[0].mxu0
        %v4923 = vadd.f32 0.0, %v4922
        %v4924 = vpop.f32.mrb[0].mxu0
        %v4925 = vpop.f32.mrb[0].mxu0
        %v4926 = vadd.f32 0.0, %v4925
        %v4927 = vpop.f32.mrb[0].mxu0
        %4928 = vmatprep.mubr.bf16.mxu0 0
        %4929 = vmatmul.mubr.bf16.gmra.mrb[0].mxu0 %v4742
        %v4930 = vpop.f32.mrb[0].mxu0
        %v4931 = vadd.f32 0.0, %v4930
        %v4932 = vpop.f32.mrb[0].mxu0
        %v4933 = vpop.f32.mrb[0].mxu0
        %v4934 = vadd.f32 0.0, %v4933
        %v4935 = vpop.f32.mrb[0].mxu0
        %4936 = vmatprep.mubr.bf16.mxu0 0
        %4937 = vmatmul.mubr.bf16.gmra.mrb[0].mxu0 %v4745
        %v4938 = vpop.f32.mrb[0].mxu0
        %v4939 = vadd.f32 0.0, %v4938
        %v4940 = vpop.f32.mrb[0].mxu0
        %v4941 = vpop.f32.mrb[0].mxu0
        %v4942 = vadd.f32 0.0, %v4941
        %v4943 = vpop.f32.mrb[0].mxu0
        %4944 = vmatprep.mubr.bf16.mxu0 0
        %4945 = vmatmul.mubr.bf16.gmra.mrb[0].mxu0 %v4748
        %v4946 = vpop.f32.mrb[0].mxu0
        %v4947 = vadd.f32 0.0, %v4946
        %v4948 = vpop.f32.mrb[0].mxu0
        %v4949 = vpop.f32.mrb[0].mxu0
        %v4950 = vadd.f32 0.0, %v4949
        %v4951 = vpop.f32.mrb[0].mxu0
        %4952 = vmatprep.mubr.bf16.mxu0 0
        %4953 = vmatmul.mubr.bf16.gmra.mrb[0].mxu0 %v4751
        %v4954 = vpop.f32.mrb[0].mxu0
        %v4955 = vadd.f32 0.0, %v4954
        %v4956 = vpop.f32.mrb[0].mxu0
        %v4957 = vpop.f32.mrb[0].mxu0
        %v4958 = vadd.f32 0.0, %v4957
        %v4959 = vpop.f32.mrb[0].mxu0
        %4960 = vmatprep.mubr.bf16.mxu0 0
        %4961 = vmatmul.mubr.bf16.gmra.mrb[0].mxu0 %v4754
        %v4962 = vpop.f32.mrb[0].mxu0
        %v4963 = vadd.f32 0.0, %v4962
        %v4964 = vpop.f32.mrb[0].mxu0
        %v4965 = vpop.f32.mrb[0].mxu0
        %v4966 = vadd.f32 0.0, %v4965
        %v4967 = vpop.f32.mrb[0].mxu0
        %4968 = vmatprep.mubr.bf16.mxu0 0
        %4969 = vmatmul.mubr.bf16.gmra.mrb[0].mxu0 %v4757
        %v4970 = vpop.f32.mrb[0].mxu0
        %v4971 = vadd.f32 0.0, %v4970
        %v4972 = vpop.f32.mrb[0].mxu0
        %v4973 = vpop.f32.mrb[0].mxu0
        %v4974 = vadd.f32 0.0, %v4973
        %v4975 = vpop.f32.mrb[0].mxu0
        %4976 = vmatprep.mubr.bf16.mxu0 0
        %4977 = vmatmul.mubr.bf16.gmra.mrb[0].mxu0 %v4760
        %v4978 = vpop.f32.mrb[0].mxu0
        %v4979 = vadd.f32 0.0, %v4978
        %v4980 = vpop.f32.mrb[0].mxu0
        %v4981 = vpop.f32.mrb[0].mxu0
        %v4982 = vadd.f32 0.0, %v4981
        %v4983 = vpop.f32.mrb[0].mxu0
        %4984 = vmatprep.mubr.bf16.mxu0 0
        %4985 = vmatmul.mubr.bf16.gmra.mrb[0].mxu0 %v4763
        %v4986 = vpop.f32.mrb[0].mxu0
        %v4987 = vadd.f32 0.0, %v4986
        %v4988 = vpop.f32.mrb[0].mxu0
        %v4989 = vpop.f32.mrb[0].mxu0
        %v4990 = vadd.f32 0.0, %v4989
        %v4991 = vpop.f32.mrb[0].mxu0
        %4992 = vdwg.mxu0
        %v4993 = vld [vmem:[%s5] sm:$0x1]
        %v4994 = vld [vmem:[%s5 + $0x1] sm:$0x1]
        %v4995 = vld [vmem:[%s5 + $0x2] sm:$0x1]
        %v4996 = vld [vmem:[%s5 + $0x3] sm:$0x1]
        %v4997 = vld [vmem:[%s5 + $0x4] sm:$0x1]
        %v4998 = vld [vmem:[%s5 + $0x5] sm:$0x1]
        %v4999 = vld [vmem:[%s5 + $0x6] sm:$0x1]
        %v5000 = vld [vmem:[%s5 + $0x7] sm:$0x1]
        %v5001 = vld [vmem:[%s5 + $0x8] sm:$0x1]
        %v5002 = vld [vmem:[%s5 + $0x9] sm:$0x1]
        %v5003 = vld [vmem:[%s5 + $0xa] sm:$0x1]
        %v5004 = vld [vmem:[%s5 + $0xb] sm:$0x1]
        %v5005 = vld [vmem:[%s5 + $0xc] sm:$0x1]
        %v5006 = vld [vmem:[%s5 + $0xd] sm:$0x1]
        %v5007 = vld [vmem:[%s5 + $0xe] sm:$0x1]
        %v5008 = vld [vmem:[%s5 + $0xf] sm:$0x1]
        %v5009 = vld [vmem:[%s5 + $0x10] sm:$0x1]
        %v5010 = vld [vmem:[%s5 + $0x11] sm:$0x1]
        %v5011 = vld [vmem:[%s5 + $0x12] sm:$0x1]
        %v5012 = vld [vmem:[%s5 + $0x13] sm:$0x1]
        %v5013 = vld [vmem:[%s5 + $0x14] sm:$0x1]
        %v5014 = vld [vmem:[%s5 + $0x15] sm:$0x1]
        %v5015 = vld [vmem:[%s5 + $0x16] sm:$0x1]
        %v5016 = vld [vmem:[%s5 + $0x17] sm:$0x1]
        %v5041 = vlaneseq
        %v5042 = vshrl.u32 %v5041, 7
        %v5043 = vsub.s32 0, %v5042
        %v5044 = vrot.slane %v4993, %v5043
        %v5045 = vlaneseq
        %v5046 = vshrl.u32 %v5045, 7
        %v5047 = vsub.s32 0, %v5046
        %v5048 = vrot.slane %v4994, %v5047
        %v5049 = vlaneseq
        %v5050 = vshrl.u32 %v5049, 7
        %v5051 = vsub.s32 0, %v5050
        %v5052 = vrot.slane %v4995, %v5051
        %v5053 = vlaneseq
        %v5054 = vshrl.u32 %v5053, 7
        %v5055 = vsub.s32 0, %v5054
        %v5056 = vrot.slane %v4996, %v5055
        %v5057 = vlaneseq
        %v5058 = vshrl.u32 %v5057, 7
        %v5059 = vsub.s32 0, %v5058
        %v5060 = vrot.slane %v4997, %v5059
        %v5061 = vlaneseq
        %v5062 = vshrl.u32 %v5061, 7
        %v5063 = vsub.s32 0, %v5062
        %v5064 = vrot.slane %v4998, %v5063
        %v5065 = vlaneseq
        %v5066 = vshrl.u32 %v5065, 7
        %v5067 = vsub.s32 0, %v5066
        %v5068 = vrot.slane %v4999, %v5067
        %v5069 = vlaneseq
        %v5070 = vshrl.u32 %v5069, 7
        %v5071 = vsub.s32 0, %v5070
        %v5072 = vrot.slane %v5000, %v5071
        %v5073 = vlaneseq
        %v5074 = vshrl.u32 %v5073, 7
        %v5075 = vsub.s32 0, %v5074
        %v5076 = vrot.slane %v5001, %v5075
        %v5077 = vlaneseq
        %v5078 = vshrl.u32 %v5077, 7
        %v5079 = vsub.s32 0, %v5078
        %v5080 = vrot.slane %v5002, %v5079
        %v5081 = vlaneseq
        %v5082 = vshrl.u32 %v5081, 7
        %v5083 = vsub.s32 0, %v5082
        %v5084 = vrot.slane %v5003, %v5083
        %v5085 = vlaneseq
        %v5086 = vshrl.u32 %v5085, 7
        %v5087 = vsub.s32 0, %v5086
        %v5088 = vrot.slane %v5004, %v5087
        %v5089 = vlaneseq
        %v5090 = vshrl.u32 %v5089, 7
        %v5091 = vsub.s32 0, %v5090
        %v5092 = vrot.slane %v5005, %v5091
        %v5093 = vlaneseq
        %v5094 = vshrl.u32 %v5093, 7
        %v5095 = vsub.s32 0, %v5094
        %v5096 = vrot.slane %v5006, %v5095
        %v5097 = vlaneseq
        %v5098 = vshrl.u32 %v5097, 7
        %v5099 = vsub.s32 0, %v5098
        %v5100 = vrot.slane %v5007, %v5099
        %v5101 = vlaneseq
        %v5102 = vshrl.u32 %v5101, 7
        %v5103 = vsub.s32 0, %v5102
        %v5104 = vrot.slane %v5008, %v5103
        %v5105 = vlaneseq
        %v5106 = vshrl.u32 %v5105, 7
        %v5107 = vsub.s32 0, %v5106
        %v5108 = vrot.slane %v5009, %v5107
        %v5109 = vlaneseq
        %v5110 = vshrl.u32 %v5109, 7
        %v5111 = vsub.s32 0, %v5110
        %v5112 = vrot.slane %v5010, %v5111
        %v5113 = vlaneseq
        %v5114 = vshrl.u32 %v5113, 7
        %v5115 = vsub.s32 0, %v5114
        %v5116 = vrot.slane %v5011, %v5115
        %v5117 = vlaneseq
        %v5118 = vshrl.u32 %v5117, 7
        %v5119 = vsub.s32 0, %v5118
        %v5120 = vrot.slane %v5012, %v5119
        %v5121 = vlaneseq
        %v5122 = vshrl.u32 %v5121, 7
        %v5123 = vsub.s32 0, %v5122
        %v5124 = vrot.slane %v5013, %v5123
        %v5125 = vlaneseq
        %v5126 = vshrl.u32 %v5125, 7
        %v5127 = vsub.s32 0, %v5126
        %v5128 = vrot.slane %v5014, %v5127
        %v5129 = vlaneseq
        %v5130 = vshrl.u32 %v5129, 7
        %v5131 = vsub.s32 0, %v5130
        %v5132 = vrot.slane %v5015, %v5131
        %v5133 = vlaneseq
        %v5134 = vshrl.u32 %v5133, 7
        %v5135 = vsub.s32 0, %v5134
        %v5136 = vrot.slane %v5016, %v5135
        %v5161 = vadd.f32 %v4803, %v5044
        %v5162 = vadd.f32 %v4806, %v5044
        %v5163 = vadd.f32 %v4811, %v5048
        %v5164 = vadd.f32 %v4814, %v5048
        %v5165 = vadd.f32 %v4819, %v5052
        %v5166 = vadd.f32 %v4822, %v5052
        %v5167 = vadd.f32 %v4827, %v5056
        %v5168 = vadd.f32 %v4830, %v5056
        %v5169 = vadd.f32 %v4835, %v5060
        %v5170 = vadd.f32 %v4838, %v5060
        %v5171 = vadd.f32 %v4843, %v5064
        %v5172 = vadd.f32 %v4846, %v5064
        %v5173 = vadd.f32 %v4851, %v5068
        %v5174 = vadd.f32 %v4854, %v5068
        %v5175 = vadd.f32 %v4859, %v5072
        %v5176 = vadd.f32 %v4862, %v5072
        %v5177 = vadd.f32 %v4867, %v5076
        %v5178 = vadd.f32 %v4870, %v5076
        %v5179 = vadd.f32 %v4875, %v5080
        %v5180 = vadd.f32 %v4878, %v5080
        %v5181 = vadd.f32 %v4883, %v5084
        %v5182 = vadd.f32 %v4886, %v5084
        %v5183 = vadd.f32 %v4891, %v5088
        %v5184 = vadd.f32 %v4894, %v5088
        %v5185 = vadd.f32 %v4899, %v5092
        %v5186 = vadd.f32 %v4902, %v5092
        %v5187 = vadd.f32 %v4907, %v5096
        %v5188 = vadd.f32 %v4910, %v5096
        %v5189 = vadd.f32 %v4915, %v5100
        %v5190 = vadd.f32 %v4918, %v5100
        %v5191 = vadd.f32 %v4923, %v5104
        %v5192 = vadd.f32 %v4926, %v5104
        %v5193 = vadd.f32 %v4931, %v5108
        %v5194 = vadd.f32 %v4934, %v5108
        %v5195 = vadd.f32 %v4939, %v5112
        %v5196 = vadd.f32 %v4942, %v5112
        %v5197 = vadd.f32 %v4947, %v5116
        %v5198 = vadd.f32 %v4950, %v5116
        %v5199 = vadd.f32 %v4955, %v5120
        %v5200 = vadd.f32 %v4958, %v5120
        %v5201 = vadd.f32 %v4963, %v5124
        %v5202 = vadd.f32 %v4966, %v5124
        %v5203 = vadd.f32 %v4971, %v5128
        %v5204 = vadd.f32 %v4974, %v5128
        %v5205 = vadd.f32 %v4979, %v5132
        %v5206 = vadd.f32 %v4982, %v5132
        %v5207 = vadd.f32 %v4987, %v5136
        %v5208 = vadd.f32 %v4990, %v5136
        %v5257 = vrot.slane %v2312, 1
        %v5258 = vrot.slane %v2313, 1
        %v5259 = vsel %vm2363, %v5257, %v5258
        %v5260 = vrot.slane %v2314, 1
        %v5261 = vsel %vm2363, %v5258, %v5260
        %v5262 = vrot.slane %v2315, 1
        %v5263 = vrot.slane %v2316, 1
        %v5264 = vsel %vm2363, %v5262, %v5263
        %v5265 = vrot.slane %v2317, 1
        %v5266 = vsel %vm2363, %v5263, %v5265
        %v5267 = vrot.slane %v2318, 1
        %v5268 = vrot.slane %v2319, 1
        %v5269 = vsel %vm2363, %v5267, %v5268
        %v5270 = vrot.slane %v2320, 1
        %v5271 = vsel %vm2363, %v5268, %v5270
        %v5272 = vrot.slane %v2321, 1
        %v5273 = vrot.slane %v2322, 1
        %v5274 = vsel %vm2363, %v5272, %v5273
        %v5275 = vrot.slane %v2323, 1
        %v5276 = vsel %vm2363, %v5273, %v5275
        %v5277 = vrot.slane %v2324, 1
        %v5278 = vrot.slane %v2325, 1
        %v5279 = vsel %vm2363, %v5277, %v5278
        %v5280 = vrot.slane %v2326, 1
        %v5281 = vsel %vm2363, %v5278, %v5280
        %v5282 = vrot.slane %v2327, 1
        %v5283 = vrot.slane %v2328, 1
        %v5284 = vsel %vm2363, %v5282, %v5283
        %v5285 = vrot.slane %v2329, 1
        %v5286 = vsel %vm2363, %v5283, %v5285
        %v5287 = vrot.slane %v2330, 1
        %v5288 = vrot.slane %v2331, 1
        %v5289 = vsel %vm2363, %v5287, %v5288
        %v5290 = vrot.slane %v2332, 1
        %v5291 = vsel %vm2363, %v5288, %v5290
        %v5292 = vrot.slane %v2333, 1
        %v5293 = vrot.slane %v2334, 1
        %v5294 = vsel %vm2363, %v5292, %v5293
        %v5295 = vrot.slane %v2335, 1
        %v5296 = vsel %vm2363, %v5293, %v5295
        %v5297 = vrot.slane %v2336, 1
        %v5298 = vrot.slane %v2337, 1
        %v5299 = vsel %vm2363, %v5297, %v5298
        %v5300 = vrot.slane %v2338, 1
        %v5301 = vsel %vm2363, %v5298, %v5300
        %v5302 = vrot.slane %v2339, 1
        %v5303 = vrot.slane %v2340, 1
        %v5304 = vsel %vm2363, %v5302, %v5303
        %v5305 = vrot.slane %v2341, 1
        %v5306 = vsel %vm2363, %v5303, %v5305
        %v5307 = vrot.slane %v2342, 1
        %v5308 = vrot.slane %v2343, 1
        %v5309 = vsel %vm2363, %v5307, %v5308
        %v5310 = vrot.slane %v2344, 1
        %v5311 = vsel %vm2363, %v5308, %v5310
        %v5312 = vrot.slane %v2345, 1
        %v5313 = vrot.slane %v2346, 1
        %v5314 = vsel %vm2363, %v5312, %v5313
        %v5315 = vrot.slane %v2347, 1
        %v5316 = vsel %vm2363, %v5313, %v5315
        %v5317 = vrot.slane %v2348, 1
        %v5318 = vrot.slane %v2349, 1
        %v5319 = vsel %vm2363, %v5317, %v5318
        %v5320 = vrot.slane %v2350, 1
        %v5321 = vsel %vm2363, %v5318, %v5320
        %v5322 = vrot.slane %v2351, 1
        %v5323 = vrot.slane %v2352, 1
        %v5324 = vsel %vm2363, %v5322, %v5323
        %v5325 = vrot.slane %v2353, 1
        %v5326 = vsel %vm2363, %v5323, %v5325
        %v5327 = vrot.slane %v2354, 1
        %v5328 = vrot.slane %v2355, 1
        %v5329 = vsel %vm2363, %v5327, %v5328
        %v5330 = vrot.slane %v2356, 1
        %v5331 = vsel %vm2363, %v5328, %v5330
        %v5332 = vrot.slane %v2357, 1
        %v5333 = vrot.slane %v2358, 1
        %v5334 = vsel %vm2363, %v5332, %v5333
        %v5335 = vrot.slane %v2359, 1
        %v5336 = vsel %vm2363, %v5333, %v5335
        %5337 = vrot.lane.b32.xlu0 %v5259, 8
        %v5338 = vpop.permute.xlu0 %5337
        %5339 = vrot.lane.b32.xlu0 %v5261, 8
        %v5340 = vpop.permute.xlu0 %5339
        %5341 = vrot.lane.b32.xlu0 %v5264, 8
        %v5342 = vpop.permute.xlu0 %5341
        %5343 = vrot.lane.b32.xlu0 %v5266, 8
        %v5344 = vpop.permute.xlu0 %5343
        %5345 = vrot.lane.b32.xlu0 %v5269, 8
        %v5346 = vpop.permute.xlu0 %5345
        %5347 = vrot.lane.b32.xlu0 %v5271, 8
        %v5348 = vpop.permute.xlu0 %5347
        %5349 = vrot.lane.b32.xlu0 %v5274, 8
        %v5350 = vpop.permute.xlu0 %5349
        %5351 = vrot.lane.b32.xlu0 %v5276, 8
        %v5352 = vpop.permute.xlu0 %5351
        %5353 = vrot.lane.b32.xlu0 %v5279, 8
        %v5354 = vpop.permute.xlu0 %5353
        %5355 = vrot.lane.b32.xlu0 %v5281, 8
        %v5356 = vpop.permute.xlu0 %5355
        %5357 = vrot.lane.b32.xlu0 %v5284, 8
        %v5358 = vpop.permute.xlu0 %5357
        %5359 = vrot.lane.b32.xlu0 %v5286, 8
        %v5360 = vpop.permute.xlu0 %5359
        %5361 = vrot.lane.b32.xlu0 %v5289, 8
        %v5362 = vpop.permute.xlu0 %5361
        %5363 = vrot.lane.b32.xlu0 %v5291, 8
        %v5364 = vpop.permute.xlu0 %5363
        %5365 = vrot.lane.b32.xlu0 %v5294, 8
        %v5366 = vpop.permute.xlu0 %5365
        %5367 = vrot.lane.b32.xlu0 %v5296, 8
        %v5368 = vpop.permute.xlu0 %5367
        %5369 = vrot.lane.b32.xlu0 %v5299, 8
        %v5370 = vpop.permute.xlu0 %5369
        %5371 = vrot.lane.b32.xlu0 %v5301, 8
        %v5372 = vpop.permute.xlu0 %5371
        %5373 = vrot.lane.b32.xlu0 %v5304, 8
        %v5374 = vpop.permute.xlu0 %5373
        %5375 = vrot.lane.b32.xlu0 %v5306, 8
        %v5376 = vpop.permute.xlu0 %5375
        %5377 = vrot.lane.b32.xlu0 %v5309, 8
        %v5378 = vpop.permute.xlu0 %5377
        %5379 = vrot.lane.b32.xlu0 %v5311, 8
        %v5380 = vpop.permute.xlu0 %5379
        %5381 = vrot.lane.b32.xlu0 %v5314, 8
        %v5382 = vpop.permute.xlu0 %5381
        %5383 = vrot.lane.b32.xlu0 %v5316, 8
        %v5384 = vpop.permute.xlu0 %5383
        %5385 = vrot.lane.b32.xlu0 %v5319, 8
        %v5386 = vpop.permute.xlu0 %5385
        %5387 = vrot.lane.b32.xlu0 %v5321, 8
        %v5388 = vpop.permute.xlu0 %5387
        %5389 = vrot.lane.b32.xlu0 %v5324, 8
        %v5390 = vpop.permute.xlu0 %5389
        %5391 = vrot.lane.b32.xlu0 %v5326, 8
        %v5392 = vpop.permute.xlu0 %5391
        %5393 = vrot.lane.b32.xlu0 %v5329, 8
        %v5394 = vpop.permute.xlu0 %5393
        %5395 = vrot.lane.b32.xlu0 %v5331, 8
        %v5396 = vpop.permute.xlu0 %5395
        %5397 = vrot.lane.b32.xlu0 %v5334, 8
        %v5398 = vpop.permute.xlu0 %5397
        %5399 = vrot.lane.b32.xlu0 %v5336, 8
        %v5400 = vpop.permute.xlu0 %5399
        %v5433 = vrot.slane %v2312, 2
        %v5434 = vrot.slane %v2313, 2
        %v5435 = vsel %vm2628, %v5433, %v5434
        %v5436 = vrot.slane %v2314, 2
        %v5437 = vsel %vm2628, %v5434, %v5436
        %v5438 = vrot.slane %v2315, 2
        %v5439 = vrot.slane %v2316, 2
        %v5440 = vsel %vm2628, %v5438, %v5439
        %v5441 = vrot.slane %v2317, 2
        %v5442 = vsel %vm2628, %v5439, %v5441
        %v5443 = vrot.slane %v2318, 2
        %v5444 = vrot.slane %v2319, 2
        %v5445 = vsel %vm2628, %v5443, %v5444
        %v5446 = vrot.slane %v2320, 2
        %v5447 = vsel %vm2628, %v5444, %v5446
        %v5448 = vrot.slane %v2321, 2
        %v5449 = vrot.slane %v2322, 2
        %v5450 = vsel %vm2628, %v5448, %v5449
        %v5451 = vrot.slane %v2323, 2
        %v5452 = vsel %vm2628, %v5449, %v5451
        %v5453 = vrot.slane %v2324, 2
        %v5454 = vrot.slane %v2325, 2
        %v5455 = vsel %vm2628, %v5453, %v5454
        %v5456 = vrot.slane %v2326, 2
        %v5457 = vsel %vm2628, %v5454, %v5456
        %v5458 = vrot.slane %v2327, 2
        %v5459 = vrot.slane %v2328, 2
        %v5460 = vsel %vm2628, %v5458, %v5459
        %v5461 = vrot.slane %v2329, 2
        %v5462 = vsel %vm2628, %v5459, %v5461
        %v5463 = vrot.slane %v2330, 2
        %v5464 = vrot.slane %v2331, 2
        %v5465 = vsel %vm2628, %v5463, %v5464
        %v5466 = vrot.slane %v2332, 2
        %v5467 = vsel %vm2628, %v5464, %v5466
        %v5468 = vrot.slane %v2333, 2
        %v5469 = vrot.slane %v2334, 2
        %v5470 = vsel %vm2628, %v5468, %v5469
        %v5471 = vrot.slane %v2335, 2
        %v5472 = vsel %vm2628, %v5469, %v5471
        %v5473 = vrot.slane %v2336, 2
        %v5474 = vrot.slane %v2337, 2
        %v5475 = vsel %vm2628, %v5473, %v5474
        %v5476 = vrot.slane %v2338, 2
        %v5477 = vsel %vm2628, %v5474, %v5476
        %v5478 = vrot.slane %v2339, 2
        %v5479 = vrot.slane %v2340, 2
        %v5480 = vsel %vm2628, %v5478, %v5479
        %v5481 = vrot.slane %v2341, 2
        %v5482 = vsel %vm2628, %v5479, %v5481
        %v5483 = vrot.slane %v2342, 2
        %v5484 = vrot.slane %v2343, 2
        %v5485 = vsel %vm2628, %v5483, %v5484
        %v5486 = vrot.slane %v2344, 2
        %v5487 = vsel %vm2628, %v5484, %v5486
        %v5488 = vrot.slane %v2345, 2
        %v5489 = vrot.slane %v2346, 2
        %v5490 = vsel %vm2628, %v5488, %v5489
        %v5491 = vrot.slane %v2347, 2
        %v5492 = vsel %vm2628, %v5489, %v5491
        %v5493 = vrot.slane %v2348, 2
        %v5494 = vrot.slane %v2349, 2
        %v5495 = vsel %vm2628, %v5493, %v5494
        %v5496 = vrot.slane %v2350, 2
        %v5497 = vsel %vm2628, %v5494, %v5496
        %v5498 = vrot.slane %v2351, 2
        %v5499 = vrot.slane %v2352, 2
        %v5500 = vsel %vm2628, %v5498, %v5499
        %v5501 = vrot.slane %v2353, 2
        %v5502 = vsel %vm2628, %v5499, %v5501
        %v5503 = vrot.slane %v2354, 2
        %v5504 = vrot.slane %v2355, 2
        %v5505 = vsel %vm2628, %v5503, %v5504
        %v5506 = vrot.slane %v2356, 2
        %v5507 = vsel %vm2628, %v5504, %v5506
        %v5508 = vrot.slane %v2357, 2
        %v5509 = vrot.slane %v2358, 2
        %v5510 = vsel %vm2628, %v5508, %v5509
        %v5511 = vrot.slane %v2359, 2
        %v5512 = vsel %vm2628, %v5509, %v5511
        %5513 = vrot.lane.b32.xlu0 %v5435, 16
        %v5514 = vpop.permute.xlu0 %5513
        %5515 = vrot.lane.b32.xlu0 %v5437, 16
        %v5516 = vpop.permute.xlu0 %5515
        %5517 = vrot.lane.b32.xlu0 %v5440, 16
        %v5518 = vpop.permute.xlu0 %5517
        %5519 = vrot.lane.b32.xlu0 %v5442, 16
        %v5520 = vpop.permute.xlu0 %5519
        %5521 = vrot.lane.b32.xlu0 %v5445, 16
        %v5522 = vpop.permute.xlu0 %5521
        %5523 = vrot.lane.b32.xlu0 %v5447, 16
        %v5524 = vpop.permute.xlu0 %5523
        %5525 = vrot.lane.b32.xlu0 %v5450, 16
        %v5526 = vpop.permute.xlu0 %5525
        %5527 = vrot.lane.b32.xlu0 %v5452, 16
        %v5528 = vpop.permute.xlu0 %5527
        %5529 = vrot.lane.b32.xlu0 %v5455, 16
        %v5530 = vpop.permute.xlu0 %5529
        %5531 = vrot.lane.b32.xlu0 %v5457, 16
        %v5532 = vpop.permute.xlu0 %5531
        %5533 = vrot.lane.b32.xlu0 %v5460, 16
        %v5534 = vpop.permute.xlu0 %5533
        %5535 = vrot.lane.b32.xlu0 %v5462, 16
        %v5536 = vpop.permute.xlu0 %5535
        %5537 = vrot.lane.b32.xlu0 %v5465, 16
        %v5538 = vpop.permute.xlu0 %5537
        %5539 = vrot.lane.b32.xlu0 %v5467, 16
        %v5540 = vpop.permute.xlu0 %5539
        %5541 = vrot.lane.b32.xlu0 %v5470, 16
        %v5542 = vpop.permute.xlu0 %5541
        %5543 = vrot.lane.b32.xlu0 %v5472, 16
        %v5544 = vpop.permute.xlu0 %5543
        %5545 = vrot.lane.b32.xlu0 %v5475, 16
        %v5546 = vpop.permute.xlu0 %5545
        %5547 = vrot.lane.b32.xlu0 %v5477, 16
        %v5548 = vpop.permute.xlu0 %5547
        %5549 = vrot.lane.b32.xlu0 %v5480, 16
        %v5550 = vpop.permute.xlu0 %5549
        %5551 = vrot.lane.b32.xlu0 %v5482, 16
        %v5552 = vpop.permute.xlu0 %5551
        %5553 = vrot.lane.b32.xlu0 %v5485, 16
        %v5554 = vpop.permute.xlu0 %5553
        %5555 = vrot.lane.b32.xlu0 %v5487, 16
        %v5556 = vpop.permute.xlu0 %5555
        %5557 = vrot.lane.b32.xlu0 %v5490, 16
        %v5558 = vpop.permute.xlu0 %5557
        %5559 = vrot.lane.b32.xlu0 %v5492, 16
        %v5560 = vpop.permute.xlu0 %5559
        %5561 = vrot.lane.b32.xlu0 %v5495, 16
        %v5562 = vpop.permute.xlu0 %5561
        %5563 = vrot.lane.b32.xlu0 %v5497, 16
        %v5564 = vpop.permute.xlu0 %5563
        %5565 = vrot.lane.b32.xlu0 %v5500, 16
        %v5566 = vpop.permute.xlu0 %5565
        %5567 = vrot.lane.b32.xlu0 %v5502, 16
        %v5568 = vpop.permute.xlu0 %5567
        %5569 = vrot.lane.b32.xlu0 %v5505, 16
        %v5570 = vpop.permute.xlu0 %5569
        %5571 = vrot.lane.b32.xlu0 %v5507, 16
        %v5572 = vpop.permute.xlu0 %5571
        %5573 = vrot.lane.b32.xlu0 %v5510, 16
        %v5574 = vpop.permute.xlu0 %5573
        %5575 = vrot.lane.b32.xlu0 %v5512, 16
        %v5576 = vpop.permute.xlu0 %5575
        %v5609 = vrot.slane %v2312, 3
        %v5610 = vrot.slane %v2313, 3
        %v5611 = vsel %vm2893, %v5609, %v5610
        %v5612 = vrot.slane %v2314, 3
        %v5613 = vsel %vm2893, %v5610, %v5612
        %v5614 = vrot.slane %v2315, 3
        %v5615 = vrot.slane %v2316, 3
        %v5616 = vsel %vm2893, %v5614, %v5615
        %v5617 = vrot.slane %v2317, 3
        %v5618 = vsel %vm2893, %v5615, %v5617
        %v5619 = vrot.slane %v2318, 3
        %v5620 = vrot.slane %v2319, 3
        %v5621 = vsel %vm2893, %v5619, %v5620
        %v5622 = vrot.slane %v2320, 3
        %v5623 = vsel %vm2893, %v5620, %v5622
        %v5624 = vrot.slane %v2321, 3
        %v5625 = vrot.slane %v2322, 3
        %v5626 = vsel %vm2893, %v5624, %v5625
        %v5627 = vrot.slane %v2323, 3
        %v5628 = vsel %vm2893, %v5625, %v5627
        %v5629 = vrot.slane %v2324, 3
        %v5630 = vrot.slane %v2325, 3
        %v5631 = vsel %vm2893, %v5629, %v5630
        %v5632 = vrot.slane %v2326, 3
        %v5633 = vsel %vm2893, %v5630, %v5632
        %v5634 = vrot.slane %v2327, 3
        %v5635 = vrot.slane %v2328, 3
        %v5636 = vsel %vm2893, %v5634, %v5635
        %v5637 = vrot.slane %v2329, 3
        %v5638 = vsel %vm2893, %v5635, %v5637
        %v5639 = vrot.slane %v2330, 3
        %v5640 = vrot.slane %v2331, 3
        %v5641 = vsel %vm2893, %v5639, %v5640
        %v5642 = vrot.slane %v2332, 3
        %v5643 = vsel %vm2893, %v5640, %v5642
        %v5644 = vrot.slane %v2333, 3
        %v5645 = vrot.slane %v2334, 3
        %v5646 = vsel %vm2893, %v5644, %v5645
        %v5647 = vrot.slane %v2335, 3
        %v5648 = vsel %vm2893, %v5645, %v5647
        %v5649 = vrot.slane %v2336, 3
        %v5650 = vrot.slane %v2337, 3
        %v5651 = vsel %vm2893, %v5649, %v5650
        %v5652 = vrot.slane %v2338, 3
        %v5653 = vsel %vm2893, %v5650, %v5652
        %v5654 = vrot.slane %v2339, 3
        %v5655 = vrot.slane %v2340, 3
        %v5656 = vsel %vm2893, %v5654, %v5655
        %v5657 = vrot.slane %v2341, 3
        %v5658 = vsel %vm2893, %v5655, %v5657
        %v5659 = vrot.slane %v2342, 3
        %v5660 = vrot.slane %v2343, 3
        %v5661 = vsel %vm2893, %v5659, %v5660
        %v5662 = vrot.slane %v2344, 3
        %v5663 = vsel %vm2893, %v5660, %v5662
        %v5664 = vrot.slane %v2345, 3
        %v5665 = vrot.slane %v2346, 3
        %v5666 = vsel %vm2893, %v5664, %v5665
        %v5667 = vrot.slane %v2347, 3
        %v5668 = vsel %vm2893, %v5665, %v5667
        %v5669 = vrot.slane %v2348, 3
        %v5670 = vrot.slane %v2349, 3
        %v5671 = vsel %vm2893, %v5669, %v5670
        %v5672 = vrot.slane %v2350, 3
        %v5673 = vsel %vm2893, %v5670, %v5672
        %v5674 = vrot.slane %v2351, 3
        %v5675 = vrot.slane %v2352, 3
        %v5676 = vsel %vm2893, %v5674, %v5675
        %v5677 = vrot.slane %v2353, 3
        %v5678 = vsel %vm2893, %v5675, %v5677
        %v5679 = vrot.slane %v2354, 3
        %v5680 = vrot.slane %v2355, 3
        %v5681 = vsel %vm2893, %v5679, %v5680
        %v5682 = vrot.slane %v2356, 3
        %v5683 = vsel %vm2893, %v5680, %v5682
        %v5684 = vrot.slane %v2357, 3
        %v5685 = vrot.slane %v2358, 3
        %v5686 = vsel %vm2893, %v5684, %v5685
        %v5687 = vrot.slane %v2359, 3
        %v5688 = vsel %vm2893, %v5685, %v5687
        %5689 = vrot.lane.b32.xlu0 %v5611, 24
        %v5690 = vpop.permute.xlu0 %5689
        %5691 = vrot.lane.b32.xlu0 %v5613, 24
        %v5692 = vpop.permute.xlu0 %5691
        %5693 = vrot.lane.b32.xlu0 %v5616, 24
        %v5694 = vpop.permute.xlu0 %5693
        %5695 = vrot.lane.b32.xlu0 %v5618, 24
        %v5696 = vpop.permute.xlu0 %5695
        %5697 = vrot.lane.b32.xlu0 %v5621, 24
        %v5698 = vpop.permute.xlu0 %5697
        %5699 = vrot.lane.b32.xlu0 %v5623, 24
        %v5700 = vpop.permute.xlu0 %5699
        %5701 = vrot.lane.b32.xlu0 %v5626, 24
        %v5702 = vpop.permute.xlu0 %5701
        %5703 = vrot.lane.b32.xlu0 %v5628, 24
        %v5704 = vpop.permute.xlu0 %5703
        %5705 = vrot.lane.b32.xlu0 %v5631, 24
        %v5706 = vpop.permute.xlu0 %5705
        %5707 = vrot.lane.b32.xlu0 %v5633, 24
        %v5708 = vpop.permute.xlu0 %5707
        %5709 = vrot.lane.b32.xlu0 %v5636, 24
        %v5710 = vpop.permute.xlu0 %5709
        %5711 = vrot.lane.b32.xlu0 %v5638, 24
        %v5712 = vpop.permute.xlu0 %5711
        %5713 = vrot.lane.b32.xlu0 %v5641, 24
        %v5714 = vpop.permute.xlu0 %5713
        %5715 = vrot.lane.b32.xlu0 %v5643, 24
        %v5716 = vpop.permute.xlu0 %5715
        %5717 = vrot.lane.b32.xlu0 %v5646, 24
        %v5718 = vpop.permute.xlu0 %5717
        %5719 = vrot.lane.b32.xlu0 %v5648, 24
        %v5720 = vpop.permute.xlu0 %5719
        %5721 = vrot.lane.b32.xlu0 %v5651, 24
        %v5722 = vpop.permute.xlu0 %5721
        %5723 = vrot.lane.b32.xlu0 %v5653, 24
        %v5724 = vpop.permute.xlu0 %5723
        %5725 = vrot.lane.b32.xlu0 %v5656, 24
        %v5726 = vpop.permute.xlu0 %5725
        %5727 = vrot.lane.b32.xlu0 %v5658, 24
        %v5728 = vpop.permute.xlu0 %5727
        %5729 = vrot.lane.b32.xlu0 %v5661, 24
        %v5730 = vpop.permute.xlu0 %5729
        %5731 = vrot.lane.b32.xlu0 %v5663, 24
        %v5732 = vpop.permute.xlu0 %5731
        %5733 = vrot.lane.b32.xlu0 %v5666, 24
        %v5734 = vpop.permute.xlu0 %5733
        %5735 = vrot.lane.b32.xlu0 %v5668, 24
        %v5736 = vpop.permute.xlu0 %5735
        %5737 = vrot.lane.b32.xlu0 %v5671, 24
        %v5738 = vpop.permute.xlu0 %5737
        %5739 = vrot.lane.b32.xlu0 %v5673, 24
        %v5740 = vpop.permute.xlu0 %5739
        %5741 = vrot.lane.b32.xlu0 %v5676, 24
        %v5742 = vpop.permute.xlu0 %5741
        %5743 = vrot.lane.b32.xlu0 %v5678, 24
        %v5744 = vpop.permute.xlu0 %5743
        %5745 = vrot.lane.b32.xlu0 %v5681, 24
        %v5746 = vpop.permute.xlu0 %5745
        %5747 = vrot.lane.b32.xlu0 %v5683, 24
        %v5748 = vpop.permute.xlu0 %5747
        %5749 = vrot.lane.b32.xlu0 %v5686, 24
        %v5750 = vpop.permute.xlu0 %5749
        %5751 = vrot.lane.b32.xlu0 %v5688, 24
        %v5752 = vpop.permute.xlu0 %5751
        %v5785 = vrot.slane %v2312, 4
        %v5786 = vrot.slane %v2313, 4
        %v5787 = vsel %vm3158, %v5785, %v5786
        %v5788 = vrot.slane %v2314, 4
        %v5789 = vsel %vm3158, %v5786, %v5788
        %v5790 = vrot.slane %v2315, 4
        %v5791 = vrot.slane %v2316, 4
        %v5792 = vsel %vm3158, %v5790, %v5791
        %v5793 = vrot.slane %v2317, 4
        %v5794 = vsel %vm3158, %v5791, %v5793
        %v5795 = vrot.slane %v2318, 4
        %v5796 = vrot.slane %v2319, 4
        %v5797 = vsel %vm3158, %v5795, %v5796
        %v5798 = vrot.slane %v2320, 4
        %v5799 = vsel %vm3158, %v5796, %v5798
        %v5800 = vrot.slane %v2321, 4
        %v5801 = vrot.slane %v2322, 4
        %v5802 = vsel %vm3158, %v5800, %v5801
        %v5803 = vrot.slane %v2323, 4
        %v5804 = vsel %vm3158, %v5801, %v5803
        %v5805 = vrot.slane %v2324, 4
        %v5806 = vrot.slane %v2325, 4
        %v5807 = vsel %vm3158, %v5805, %v5806
        %v5808 = vrot.slane %v2326, 4
        %v5809 = vsel %vm3158, %v5806, %v5808
        %v5810 = vrot.slane %v2327, 4
        %v5811 = vrot.slane %v2328, 4
        %v5812 = vsel %vm3158, %v5810, %v5811
        %v5813 = vrot.slane %v2329, 4
        %v5814 = vsel %vm3158, %v5811, %v5813
        %v5815 = vrot.slane %v2330, 4
        %v5816 = vrot.slane %v2331, 4
        %v5817 = vsel %vm3158, %v5815, %v5816
        %v5818 = vrot.slane %v2332, 4
        %v5819 = vsel %vm3158, %v5816, %v5818
        %v5820 = vrot.slane %v2333, 4
        %v5821 = vrot.slane %v2334, 4
        %v5822 = vsel %vm3158, %v5820, %v5821
        %v5823 = vrot.slane %v2335, 4
        %v5824 = vsel %vm3158, %v5821, %v5823
        %v5825 = vrot.slane %v2336, 4
        %v5826 = vrot.slane %v2337, 4
        %v5827 = vsel %vm3158, %v5825, %v5826
        %v5828 = vrot.slane %v2338, 4
        %v5829 = vsel %vm3158, %v5826, %v5828
        %v5830 = vrot.slane %v2339, 4
        %v5831 = vrot.slane %v2340, 4
        %v5832 = vsel %vm3158, %v5830, %v5831
        %v5833 = vrot.slane %v2341, 4
        %v5834 = vsel %vm3158, %v5831, %v5833
        %v5835 = vrot.slane %v2342, 4
        %v5836 = vrot.slane %v2343, 4
        %v5837 = vsel %vm3158, %v5835, %v5836
        %v5838 = vrot.slane %v2344, 4
        %v5839 = vsel %vm3158, %v5836, %v5838
        %v5840 = vrot.slane %v2345, 4
        %v5841 = vrot.slane %v2346, 4
        %v5842 = vsel %vm3158, %v5840, %v5841
        %v5843 = vrot.slane %v2347, 4
        %v5844 = vsel %vm3158, %v5841, %v5843
        %v5845 = vrot.slane %v2348, 4
        %v5846 = vrot.slane %v2349, 4
        %v5847 = vsel %vm3158, %v5845, %v5846
        %v5848 = vrot.slane %v2350, 4
        %v5849 = vsel %vm3158, %v5846, %v5848
        %v5850 = vrot.slane %v2351, 4
        %v5851 = vrot.slane %v2352, 4
        %v5852 = vsel %vm3158, %v5850, %v5851
        %v5853 = vrot.slane %v2353, 4
        %v5854 = vsel %vm3158, %v5851, %v5853
        %v5855 = vrot.slane %v2354, 4
        %v5856 = vrot.slane %v2355, 4
        %v5857 = vsel %vm3158, %v5855, %v5856
        %v5858 = vrot.slane %v2356, 4
        %v5859 = vsel %vm3158, %v5856, %v5858
        %v5860 = vrot.slane %v2357, 4
        %v5861 = vrot.slane %v2358, 4
        %v5862 = vsel %vm3158, %v5860, %v5861
        %v5863 = vrot.slane %v2359, 4
        %v5864 = vsel %vm3158, %v5861, %v5863
        %5865 = vrot.lane.b32.xlu0 %v5787, 32
        %v5866 = vpop.permute.xlu0 %5865
        %5867 = vrot.lane.b32.xlu0 %v5789, 32
        %v5868 = vpop.permute.xlu0 %5867
        %5869 = vrot.lane.b32.xlu0 %v5792, 32
        %v5870 = vpop.permute.xlu0 %5869
        %5871 = vrot.lane.b32.xlu0 %v5794, 32
        %v5872 = vpop.permute.xlu0 %5871
        %5873 = vrot.lane.b32.xlu0 %v5797, 32
        %v5874 = vpop.permute.xlu0 %5873
        %5875 = vrot.lane.b32.xlu0 %v5799, 32
        %v5876 = vpop.permute.xlu0 %5875
        %5877 = vrot.lane.b32.xlu0 %v5802, 32
        %v5878 = vpop.permute.xlu0 %5877
        %5879 = vrot.lane.b32.xlu0 %v5804, 32
        %v5880 = vpop.permute.xlu0 %5879
        %5881 = vrot.lane.b32.xlu0 %v5807, 32
        %v5882 = vpop.permute.xlu0 %5881
        %5883 = vrot.lane.b32.xlu0 %v5809, 32
        %v5884 = vpop.permute.xlu0 %5883
        %5885 = vrot.lane.b32.xlu0 %v5812, 32
        %v5886 = vpop.permute.xlu0 %5885
        %5887 = vrot.lane.b32.xlu0 %v5814, 32
        %v5888 = vpop.permute.xlu0 %5887
        %5889 = vrot.lane.b32.xlu0 %v5817, 32
        %v5890 = vpop.permute.xlu0 %5889
        %5891 = vrot.lane.b32.xlu0 %v5819, 32
        %v5892 = vpop.permute.xlu0 %5891
        %5893 = vrot.lane.b32.xlu0 %v5822, 32
        %v5894 = vpop.permute.xlu0 %5893
        %5895 = vrot.lane.b32.xlu0 %v5824, 32
        %v5896 = vpop.permute.xlu0 %5895
        %5897 = vrot.lane.b32.xlu0 %v5827, 32
        %v5898 = vpop.permute.xlu0 %5897
        %5899 = vrot.lane.b32.xlu0 %v5829, 32
        %v5900 = vpop.permute.xlu0 %5899
        %5901 = vrot.lane.b32.xlu0 %v5832, 32
        %v5902 = vpop.permute.xlu0 %5901
        %5903 = vrot.lane.b32.xlu0 %v5834, 32
        %v5904 = vpop.permute.xlu0 %5903
        %5905 = vrot.lane.b32.xlu0 %v5837, 32
        %v5906 = vpop.permute.xlu0 %5905
        %5907 = vrot.lane.b32.xlu0 %v5839, 32
        %v5908 = vpop.permute.xlu0 %5907
        %5909 = vrot.lane.b32.xlu0 %v5842, 32
        %v5910 = vpop.permute.xlu0 %5909
        %5911 = vrot.lane.b32.xlu0 %v5844, 32
        %v5912 = vpop.permute.xlu0 %5911
        %5913 = vrot.lane.b32.xlu0 %v5847, 32
        %v5914 = vpop.permute.xlu0 %5913
        %5915 = vrot.lane.b32.xlu0 %v5849, 32
        %v5916 = vpop.permute.xlu0 %5915
        %5917 = vrot.lane.b32.xlu0 %v5852, 32
        %v5918 = vpop.permute.xlu0 %5917
        %5919 = vrot.lane.b32.xlu0 %v5854, 32
        %v5920 = vpop.permute.xlu0 %5919
        %5921 = vrot.lane.b32.xlu0 %v5857, 32
        %v5922 = vpop.permute.xlu0 %5921
        %5923 = vrot.lane.b32.xlu0 %v5859, 32
        %v5924 = vpop.permute.xlu0 %5923
        %5925 = vrot.lane.b32.xlu0 %v5862, 32
        %v5926 = vpop.permute.xlu0 %5925
        %5927 = vrot.lane.b32.xlu0 %v5864, 32
        %v5928 = vpop.permute.xlu0 %5927
        %v5961 = vrot.slane %v2312, 5
        %v5962 = vrot.slane %v2313, 5
        %v5963 = vsel %vm3423, %v5961, %v5962
        %v5964 = vrot.slane %v2314, 5
        %v5965 = vsel %vm3423, %v5962, %v5964
        %v5966 = vrot.slane %v2315, 5
        %v5967 = vrot.slane %v2316, 5
        %v5968 = vsel %vm3423, %v5966, %v5967
        %v5969 = vrot.slane %v2317, 5
        %v5970 = vsel %vm3423, %v5967, %v5969
        %v5971 = vrot.slane %v2318, 5
        %v5972 = vrot.slane %v2319, 5
        %v5973 = vsel %vm3423, %v5971, %v5972
        %v5974 = vrot.slane %v2320, 5
        %v5975 = vsel %vm3423, %v5972, %v5974
        %v5976 = vrot.slane %v2321, 5
        %v5977 = vrot.slane %v2322, 5
        %v5978 = vsel %vm3423, %v5976, %v5977
        %v5979 = vrot.slane %v2323, 5
        %v5980 = vsel %vm3423, %v5977, %v5979
        %v5981 = vrot.slane %v2324, 5
        %v5982 = vrot.slane %v2325, 5
        %v5983 = vsel %vm3423, %v5981, %v5982
        %v5984 = vrot.slane %v2326, 5
        %v5985 = vsel %vm3423, %v5982, %v5984
        %v5986 = vrot.slane %v2327, 5
        %v5987 = vrot.slane %v2328, 5
        %v5988 = vsel %vm3423, %v5986, %v5987
        %v5989 = vrot.slane %v2329, 5
        %v5990 = vsel %vm3423, %v5987, %v5989
        %v5991 = vrot.slane %v2330, 5
        %v5992 = vrot.slane %v2331, 5
        %v5993 = vsel %vm3423, %v5991, %v5992
        %v5994 = vrot.slane %v2332, 5
        %v5995 = vsel %vm3423, %v5992, %v5994
        %v5996 = vrot.slane %v2333, 5
        %v5997 = vrot.slane %v2334, 5
        %v5998 = vsel %vm3423, %v5996, %v5997
        %v5999 = vrot.slane %v2335, 5
        %v6000 = vsel %vm3423, %v5997, %v5999
        %v6001 = vrot.slane %v2336, 5
        %v6002 = vrot.slane %v2337, 5
        %v6003 = vsel %vm3423, %v6001, %v6002
        %v6004 = vrot.slane %v2338, 5
        %v6005 = vsel %vm3423, %v6002, %v6004
        %v6006 = vrot.slane %v2339, 5
        %v6007 = vrot.slane %v2340, 5
        %v6008 = vsel %vm3423, %v6006, %v6007
        %v6009 = vrot.slane %v2341, 5
        %v6010 = vsel %vm3423, %v6007, %v6009
        %v6011 = vrot.slane %v2342, 5
        %v6012 = vrot.slane %v2343, 5
        %v6013 = vsel %vm3423, %v6011, %v6012
        %v6014 = vrot.slane %v2344, 5
        %v6015 = vsel %vm3423, %v6012, %v6014
        %v6016 = vrot.slane %v2345, 5
        %v6017 = vrot.slane %v2346, 5
        %v6018 = vsel %vm3423, %v6016, %v6017
        %v6019 = vrot.slane %v2347, 5
        %v6020 = vsel %vm3423, %v6017, %v6019
        %v6021 = vrot.slane %v2348, 5
        %v6022 = vrot.slane %v2349, 5
        %v6023 = vsel %vm3423, %v6021, %v6022
        %v6024 = vrot.slane %v2350, 5
        %v6025 = vsel %vm3423, %v6022, %v6024
        %v6026 = vrot.slane %v2351, 5
        %v6027 = vrot.slane %v2352, 5
        %v6028 = vsel %vm3423, %v6026, %v6027
        %v6029 = vrot.slane %v2353, 5
        %v6030 = vsel %vm3423, %v6027, %v6029
        %v6031 = vrot.slane %v2354, 5
        %v6032 = vrot.slane %v2355, 5
        %v6033 = vsel %vm3423, %v6031, %v6032
        %v6034 = vrot.slane %v2356, 5
        %v6035 = vsel %vm3423, %v6032, %v6034
        %v6036 = vrot.slane %v2357, 5
        %v6037 = vrot.slane %v2358, 5
        %v6038 = vsel %vm3423, %v6036, %v6037
        %v6039 = vrot.slane %v2359, 5
        %v6040 = vsel %vm3423, %v6037, %v6039
        %6041 = vrot.lane.b32.xlu0 %v5963, 40
        %v6042 = vpop.permute.xlu0 %6041
        %6043 = vrot.lane.b32.xlu0 %v5965, 40
        %v6044 = vpop.permute.xlu0 %6043
        %6045 = vrot.lane.b32.xlu0 %v5968, 40
        %v6046 = vpop.permute.xlu0 %6045
        %6047 = vrot.lane.b32.xlu0 %v5970, 40
        %v6048 = vpop.permute.xlu0 %6047
        %6049 = vrot.lane.b32.xlu0 %v5973, 40
        %v6050 = vpop.permute.xlu0 %6049
        %6051 = vrot.lane.b32.xlu0 %v5975, 40
        %v6052 = vpop.permute.xlu0 %6051
        %6053 = vrot.lane.b32.xlu0 %v5978, 40
        %v6054 = vpop.permute.xlu0 %6053
        %6055 = vrot.lane.b32.xlu0 %v5980, 40
        %v6056 = vpop.permute.xlu0 %6055
        %6057 = vrot.lane.b32.xlu0 %v5983, 40
        %v6058 = vpop.permute.xlu0 %6057
        %6059 = vrot.lane.b32.xlu0 %v5985, 40
        %v6060 = vpop.permute.xlu0 %6059
        %6061 = vrot.lane.b32.xlu0 %v5988, 40
        %v6062 = vpop.permute.xlu0 %6061
        %6063 = vrot.lane.b32.xlu0 %v5990, 40
        %v6064 = vpop.permute.xlu0 %6063
        %6065 = vrot.lane.b32.xlu0 %v5993, 40
        %v6066 = vpop.permute.xlu0 %6065
        %6067 = vrot.lane.b32.xlu0 %v5995, 40
        %v6068 = vpop.permute.xlu0 %6067
        %6069 = vrot.lane.b32.xlu0 %v5998, 40
        %v6070 = vpop.permute.xlu0 %6069
        %6071 = vrot.lane.b32.xlu0 %v6000, 40
        %v6072 = vpop.permute.xlu0 %6071
        %6073 = vrot.lane.b32.xlu0 %v6003, 40
        %v6074 = vpop.permute.xlu0 %6073
        %6075 = vrot.lane.b32.xlu0 %v6005, 40
        %v6076 = vpop.permute.xlu0 %6075
        %6077 = vrot.lane.b32.xlu0 %v6008, 40
        %v6078 = vpop.permute.xlu0 %6077
        %6079 = vrot.lane.b32.xlu0 %v6010, 40
        %v6080 = vpop.permute.xlu0 %6079
        %6081 = vrot.lane.b32.xlu0 %v6013, 40
        %v6082 = vpop.permute.xlu0 %6081
        %6083 = vrot.lane.b32.xlu0 %v6015, 40
        %v6084 = vpop.permute.xlu0 %6083
        %6085 = vrot.lane.b32.xlu0 %v6018, 40
        %v6086 = vpop.permute.xlu0 %6085
        %6087 = vrot.lane.b32.xlu0 %v6020, 40
        %v6088 = vpop.permute.xlu0 %6087
        %6089 = vrot.lane.b32.xlu0 %v6023, 40
        %v6090 = vpop.permute.xlu0 %6089
        %6091 = vrot.lane.b32.xlu0 %v6025, 40
        %v6092 = vpop.permute.xlu0 %6091
        %6093 = vrot.lane.b32.xlu0 %v6028, 40
        %v6094 = vpop.permute.xlu0 %6093
        %6095 = vrot.lane.b32.xlu0 %v6030, 40
        %v6096 = vpop.permute.xlu0 %6095
        %6097 = vrot.lane.b32.xlu0 %v6033, 40
        %v6098 = vpop.permute.xlu0 %6097
        %6099 = vrot.lane.b32.xlu0 %v6035, 40
        %v6100 = vpop.permute.xlu0 %6099
        %6101 = vrot.lane.b32.xlu0 %v6038, 40
        %v6102 = vpop.permute.xlu0 %6101
        %6103 = vrot.lane.b32.xlu0 %v6040, 40
        %v6104 = vpop.permute.xlu0 %6103
        %v6137 = vrot.slane %v2312, 6
        %v6138 = vrot.slane %v2313, 6
        %v6139 = vsel %vm2080, %v6137, %v6138
        %v6140 = vrot.slane %v2314, 6
        %v6141 = vsel %vm2080, %v6138, %v6140
        %v6142 = vrot.slane %v2315, 6
        %v6143 = vrot.slane %v2316, 6
        %v6144 = vsel %vm2080, %v6142, %v6143
        %v6145 = vrot.slane %v2317, 6
        %v6146 = vsel %vm2080, %v6143, %v6145
        %v6147 = vrot.slane %v2318, 6
        %v6148 = vrot.slane %v2319, 6
        %v6149 = vsel %vm2080, %v6147, %v6148
        %v6150 = vrot.slane %v2320, 6
        %v6151 = vsel %vm2080, %v6148, %v6150
        %v6152 = vrot.slane %v2321, 6
        %v6153 = vrot.slane %v2322, 6
        %v6154 = vsel %vm2080, %v6152, %v6153
        %v6155 = vrot.slane %v2323, 6
        %v6156 = vsel %vm2080, %v6153, %v6155
        %v6157 = vrot.slane %v2324, 6
        %v6158 = vrot.slane %v2325, 6
        %v6159 = vsel %vm2080, %v6157, %v6158
        %v6160 = vrot.slane %v2326, 6
        %v6161 = vsel %vm2080, %v6158, %v6160
        %v6162 = vrot.slane %v2327, 6
        %v6163 = vrot.slane %v2328, 6
        %v6164 = vsel %vm2080, %v6162, %v6163
        %v6165 = vrot.slane %v2329, 6
        %v6166 = vsel %vm2080, %v6163, %v6165
        %v6167 = vrot.slane %v2330, 6
        %v6168 = vrot.slane %v2331, 6
        %v6169 = vsel %vm2080, %v6167, %v6168
        %v6170 = vrot.slane %v2332, 6
        %v6171 = vsel %vm2080, %v6168, %v6170
        %v6172 = vrot.slane %v2333, 6
        %v6173 = vrot.slane %v2334, 6
        %v6174 = vsel %vm2080, %v6172, %v6173
        %v6175 = vrot.slane %v2335, 6
        %v6176 = vsel %vm2080, %v6173, %v6175
        %v6177 = vrot.slane %v2336, 6
        %v6178 = vrot.slane %v2337, 6
        %v6179 = vsel %vm2080, %v6177, %v6178
        %v6180 = vrot.slane %v2338, 6
        %v6181 = vsel %vm2080, %v6178, %v6180
        %v6182 = vrot.slane %v2339, 6
        %v6183 = vrot.slane %v2340, 6
        %v6184 = vsel %vm2080, %v6182, %v6183
        %v6185 = vrot.slane %v2341, 6
        %v6186 = vsel %vm2080, %v6183, %v6185
        %v6187 = vrot.slane %v2342, 6
        %v6188 = vrot.slane %v2343, 6
        %v6189 = vsel %vm2080, %v6187, %v6188
        %v6190 = vrot.slane %v2344, 6
        %v6191 = vsel %vm2080, %v6188, %v6190
        %v6192 = vrot.slane %v2345, 6
        %v6193 = vrot.slane %v2346, 6
        %v6194 = vsel %vm2080, %v6192, %v6193
        %v6195 = vrot.slane %v2347, 6
        %v6196 = vsel %vm2080, %v6193, %v6195
        %v6197 = vrot.slane %v2348, 6
        %v6198 = vrot.slane %v2349, 6
        %v6199 = vsel %vm2080, %v6197, %v6198
        %v6200 = vrot.slane %v2350, 6
        %v6201 = vsel %vm2080, %v6198, %v6200
        %v6202 = vrot.slane %v2351, 6
        %v6203 = vrot.slane %v2352, 6
        %v6204 = vsel %vm2080, %v6202, %v6203
        %v6205 = vrot.slane %v2353, 6
        %v6206 = vsel %vm2080, %v6203, %v6205
        %v6207 = vrot.slane %v2354, 6
        %v6208 = vrot.slane %v2355, 6
        %v6209 = vsel %vm2080, %v6207, %v6208
        %v6210 = vrot.slane %v2356, 6
        %v6211 = vsel %vm2080, %v6208, %v6210
        %v6212 = vrot.slane %v2357, 6
        %v6213 = vrot.slane %v2358, 6
        %v6214 = vsel %vm2080, %v6212, %v6213
        %v6215 = vrot.slane %v2359, 6
        %v6216 = vsel %vm2080, %v6213, %v6215
        %6217 = vrot.lane.b32.xlu0 %v6139, 48
        %v6218 = vpop.permute.xlu0 %6217
        %6219 = vrot.lane.b32.xlu0 %v6141, 48
        %v6220 = vpop.permute.xlu0 %6219
        %6221 = vrot.lane.b32.xlu0 %v6144, 48
        %v6222 = vpop.permute.xlu0 %6221
        %6223 = vrot.lane.b32.xlu0 %v6146, 48
        %v6224 = vpop.permute.xlu0 %6223
        %6225 = vrot.lane.b32.xlu0 %v6149, 48
        %v6226 = vpop.permute.xlu0 %6225
        %6227 = vrot.lane.b32.xlu0 %v6151, 48
        %v6228 = vpop.permute.xlu0 %6227
        %6229 = vrot.lane.b32.xlu0 %v6154, 48
        %v6230 = vpop.permute.xlu0 %6229
        %6231 = vrot.lane.b32.xlu0 %v6156, 48
        %v6232 = vpop.permute.xlu0 %6231
        %6233 = vrot.lane.b32.xlu0 %v6159, 48
        %v6234 = vpop.permute.xlu0 %6233
        %6235 = vrot.lane.b32.xlu0 %v6161, 48
        %v6236 = vpop.permute.xlu0 %6235
        %6237 = vrot.lane.b32.xlu0 %v6164, 48
        %v6238 = vpop.permute.xlu0 %6237
        %6239 = vrot.lane.b32.xlu0 %v6166, 48
        %v6240 = vpop.permute.xlu0 %6239
        %6241 = vrot.lane.b32.xlu0 %v6169, 48
        %v6242 = vpop.permute.xlu0 %6241
        %6243 = vrot.lane.b32.xlu0 %v6171, 48
        %v6244 = vpop.permute.xlu0 %6243
        %6245 = vrot.lane.b32.xlu0 %v6174, 48
        %v6246 = vpop.permute.xlu0 %6245
        %6247 = vrot.lane.b32.xlu0 %v6176, 48
        %v6248 = vpop.permute.xlu0 %6247
        %6249 = vrot.lane.b32.xlu0 %v6179, 48
        %v6250 = vpop.permute.xlu0 %6249
        %6251 = vrot.lane.b32.xlu0 %v6181, 48
        %v6252 = vpop.permute.xlu0 %6251
        %6253 = vrot.lane.b32.xlu0 %v6184, 48
        %v6254 = vpop.permute.xlu0 %6253
        %6255 = vrot.lane.b32.xlu0 %v6186, 48
        %v6256 = vpop.permute.xlu0 %6255
        %6257 = vrot.lane.b32.xlu0 %v6189, 48
        %v6258 = vpop.permute.xlu0 %6257
        %6259 = vrot.lane.b32.xlu0 %v6191, 48
        %v6260 = vpop.permute.xlu0 %6259
        %6261 = vrot.lane.b32.xlu0 %v6194, 48
        %v6262 = vpop.permute.xlu0 %6261
        %6263 = vrot.lane.b32.xlu0 %v6196, 48
        %v6264 = vpop.permute.xlu0 %6263
        %6265 = vrot.lane.b32.xlu0 %v6199, 48
        %v6266 = vpop.permute.xlu0 %6265
        %6267 = vrot.lane.b32.xlu0 %v6201, 48
        %v6268 = vpop.permute.xlu0 %6267
        %6269 = vrot.lane.b32.xlu0 %v6204, 48
        %v6270 = vpop.permute.xlu0 %6269
        %6271 = vrot.lane.b32.xlu0 %v6206, 48
        %v6272 = vpop.permute.xlu0 %6271
        %6273 = vrot.lane.b32.xlu0 %v6209, 48
        %v6274 = vpop.permute.xlu0 %6273
        %6275 = vrot.lane.b32.xlu0 %v6211, 48
        %v6276 = vpop.permute.xlu0 %6275
        %6277 = vrot.lane.b32.xlu0 %v6214, 48
        %v6278 = vpop.permute.xlu0 %6277
        %6279 = vrot.lane.b32.xlu0 %v6216, 48
        %v6280 = vpop.permute.xlu0 %6279
        %v6313 = vrot.slane %v2312, 7
        %v6314 = vrot.slane %v2313, 7
        %v6315 = vsel %vm3952, %v6313, %v6314
        %v6316 = vrot.slane %v2314, 7
        %v6317 = vsel %vm3952, %v6314, %v6316
        %v6318 = vrot.slane %v2315, 7
        %v6319 = vrot.slane %v2316, 7
        %v6320 = vsel %vm3952, %v6318, %v6319
        %v6321 = vrot.slane %v2317, 7
        %v6322 = vsel %vm3952, %v6319, %v6321
        %v6323 = vrot.slane %v2318, 7
        %v6324 = vrot.slane %v2319, 7
        %v6325 = vsel %vm3952, %v6323, %v6324
        %v6326 = vrot.slane %v2320, 7
        %v6327 = vsel %vm3952, %v6324, %v6326
        %v6328 = vrot.slane %v2321, 7
        %v6329 = vrot.slane %v2322, 7
        %v6330 = vsel %vm3952, %v6328, %v6329
        %v6331 = vrot.slane %v2323, 7
        %v6332 = vsel %vm3952, %v6329, %v6331
        %v6333 = vrot.slane %v2324, 7
        %v6334 = vrot.slane %v2325, 7
        %v6335 = vsel %vm3952, %v6333, %v6334
        %v6336 = vrot.slane %v2326, 7
        %v6337 = vsel %vm3952, %v6334, %v6336
        %v6338 = vrot.slane %v2327, 7
        %v6339 = vrot.slane %v2328, 7
        %v6340 = vsel %vm3952, %v6338, %v6339
        %v6341 = vrot.slane %v2329, 7
        %v6342 = vsel %vm3952, %v6339, %v6341
        %v6343 = vrot.slane %v2330, 7
        %v6344 = vrot.slane %v2331, 7
        %v6345 = vsel %vm3952, %v6343, %v6344
        %v6346 = vrot.slane %v2332, 7
        %v6347 = vsel %vm3952, %v6344, %v6346
        %v6348 = vrot.slane %v2333, 7
        %v6349 = vrot.slane %v2334, 7
        %v6350 = vsel %vm3952, %v6348, %v6349
        %v6351 = vrot.slane %v2335, 7
        %v6352 = vsel %vm3952, %v6349, %v6351
        %v6353 = vrot.slane %v2336, 7
        %v6354 = vrot.slane %v2337, 7
        %v6355 = vsel %vm3952, %v6353, %v6354
        %v6356 = vrot.slane %v2338, 7
        %v6357 = vsel %vm3952, %v6354, %v6356
        %v6358 = vrot.slane %v2339, 7
        %v6359 = vrot.slane %v2340, 7
        %v6360 = vsel %vm3952, %v6358, %v6359
        %v6361 = vrot.slane %v2341, 7
        %v6362 = vsel %vm3952, %v6359, %v6361
        %v6363 = vrot.slane %v2342, 7
        %v6364 = vrot.slane %v2343, 7
        %v6365 = vsel %vm3952, %v6363, %v6364
        %v6366 = vrot.slane %v2344, 7
        %v6367 = vsel %vm3952, %v6364, %v6366
        %v6368 = vrot.slane %v2345, 7
        %v6369 = vrot.slane %v2346, 7
        %v6370 = vsel %vm3952, %v6368, %v6369
        %v6371 = vrot.slane %v2347, 7
        %v6372 = vsel %vm3952, %v6369, %v6371
        %v6373 = vrot.slane %v2348, 7
        %v6374 = vrot.slane %v2349, 7
        %v6375 = vsel %vm3952, %v6373, %v6374
        %v6376 = vrot.slane %v2350, 7
        %v6377 = vsel %vm3952, %v6374, %v6376
        %v6378 = vrot.slane %v2351, 7
        %v6379 = vrot.slane %v2352, 7
        %v6380 = vsel %vm3952, %v6378, %v6379
        %v6381 = vrot.slane %v2353, 7
        %v6382 = vsel %vm3952, %v6379, %v6381
        %v6383 = vrot.slane %v2354, 7
        %v6384 = vrot.slane %v2355, 7
        %v6385 = vsel %vm3952, %v6383, %v6384
        %v6386 = vrot.slane %v2356, 7
        %v6387 = vsel %vm3952, %v6384, %v6386
        %v6388 = vrot.slane %v2357, 7
        %v6389 = vrot.slane %v2358, 7
        %v6390 = vsel %vm3952, %v6388, %v6389
        %v6391 = vrot.slane %v2359, 7
        %v6392 = vsel %vm3952, %v6389, %v6391
        %6393 = vrot.lane.b32.xlu0 %v6315, 56
        %v6394 = vpop.permute.xlu0 %6393
        %6395 = vrot.lane.b32.xlu0 %v6317, 56
        %v6396 = vpop.permute.xlu0 %6395
        %6397 = vrot.lane.b32.xlu0 %v6320, 56
        %v6398 = vpop.permute.xlu0 %6397
        %6399 = vrot.lane.b32.xlu0 %v6322, 56
        %v6400 = vpop.permute.xlu0 %6399
        %6401 = vrot.lane.b32.xlu0 %v6325, 56
        %v6402 = vpop.permute.xlu0 %6401
        %6403 = vrot.lane.b32.xlu0 %v6327, 56
        %v6404 = vpop.permute.xlu0 %6403
        %6405 = vrot.lane.b32.xlu0 %v6330, 56
        %v6406 = vpop.permute.xlu0 %6405
        %6407 = vrot.lane.b32.xlu0 %v6332, 56
        %v6408 = vpop.permute.xlu0 %6407
        %6409 = vrot.lane.b32.xlu0 %v6335, 56
        %v6410 = vpop.permute.xlu0 %6409
        %6411 = vrot.lane.b32.xlu0 %v6337, 56
        %v6412 = vpop.permute.xlu0 %6411
        %6413 = vrot.lane.b32.xlu0 %v6340, 56
        %v6414 = vpop.permute.xlu0 %6413
        %6415 = vrot.lane.b32.xlu0 %v6342, 56
        %v6416 = vpop.permute.xlu0 %6415
        %6417 = vrot.lane.b32.xlu0 %v6345, 56
        %v6418 = vpop.permute.xlu0 %6417
        %6419 = vrot.lane.b32.xlu0 %v6347, 56
        %v6420 = vpop.permute.xlu0 %6419
        %6421 = vrot.lane.b32.xlu0 %v6350, 56
        %v6422 = vpop.permute.xlu0 %6421
        %6423 = vrot.lane.b32.xlu0 %v6352, 56
        %v6424 = vpop.permute.xlu0 %6423
        %6425 = vrot.lane.b32.xlu0 %v6355, 56
        %v6426 = vpop.permute.xlu0 %6425
        %6427 = vrot.lane.b32.xlu0 %v6357, 56
        %v6428 = vpop.permute.xlu0 %6427
        %6429 = vrot.lane.b32.xlu0 %v6360, 56
        %v6430 = vpop.permute.xlu0 %6429
        %6431 = vrot.lane.b32.xlu0 %v6362, 56
        %v6432 = vpop.permute.xlu0 %6431
        %6433 = vrot.lane.b32.xlu0 %v6365, 56
        %v6434 = vpop.permute.xlu0 %6433
        %6435 = vrot.lane.b32.xlu0 %v6367, 56
        %v6436 = vpop.permute.xlu0 %6435
        %6437 = vrot.lane.b32.xlu0 %v6370, 56
        %v6438 = vpop.permute.xlu0 %6437
        %6439 = vrot.lane.b32.xlu0 %v6372, 56
        %v6440 = vpop.permute.xlu0 %6439
        %6441 = vrot.lane.b32.xlu0 %v6375, 56
        %v6442 = vpop.permute.xlu0 %6441
        %6443 = vrot.lane.b32.xlu0 %v6377, 56
        %v6444 = vpop.permute.xlu0 %6443
        %6445 = vrot.lane.b32.xlu0 %v6380, 56
        %v6446 = vpop.permute.xlu0 %6445
        %6447 = vrot.lane.b32.xlu0 %v6382, 56
        %v6448 = vpop.permute.xlu0 %6447
        %6449 = vrot.lane.b32.xlu0 %v6385, 56
        %v6450 = vpop.permute.xlu0 %6449
        %6451 = vrot.lane.b32.xlu0 %v6387, 56
        %v6452 = vpop.permute.xlu0 %6451
        %6453 = vrot.lane.b32.xlu0 %v6390, 56
        %v6454 = vpop.permute.xlu0 %6453
        %6455 = vrot.lane.b32.xlu0 %v6392, 56
        %v6456 = vpop.permute.xlu0 %6455
        %6489 = vrot.lane.b32.xlu0 %v2313, 64
        %v6490 = vpop.permute.xlu0 %6489
        %6491 = vrot.lane.b32.xlu0 %v2314, 64
        %v6492 = vpop.permute.xlu0 %6491
        %6493 = vrot.lane.b32.xlu0 %v2316, 64
        %v6494 = vpop.permute.xlu0 %6493
        %6495 = vrot.lane.b32.xlu0 %v2317, 64
        %v6496 = vpop.permute.xlu0 %6495
        %6497 = vrot.lane.b32.xlu0 %v2319, 64
        %v6498 = vpop.permute.xlu0 %6497
        %6499 = vrot.lane.b32.xlu0 %v2320, 64
        %v6500 = vpop.permute.xlu0 %6499
        %6501 = vrot.lane.b32.xlu0 %v2322, 64
        %v6502 = vpop.permute.xlu0 %6501
        %6503 = vrot.lane.b32.xlu0 %v2323, 64
        %v6504 = vpop.permute.xlu0 %6503
        %6505 = vrot.lane.b32.xlu0 %v2325, 64
        %v6506 = vpop.permute.xlu0 %6505
        %6507 = vrot.lane.b32.xlu0 %v2326, 64
        %v6508 = vpop.permute.xlu0 %6507
        %6509 = vrot.lane.b32.xlu0 %v2328, 64
        %v6510 = vpop.permute.xlu0 %6509
        %6511 = vrot.lane.b32.xlu0 %v2329, 64
        %v6512 = vpop.permute.xlu0 %6511
        %6513 = vrot.lane.b32.xlu0 %v2331, 64
        %v6514 = vpop.permute.xlu0 %6513
        %6515 = vrot.lane.b32.xlu0 %v2332, 64
        %v6516 = vpop.permute.xlu0 %6515
        %6517 = vrot.lane.b32.xlu0 %v2334, 64
        %v6518 = vpop.permute.xlu0 %6517
        %6519 = vrot.lane.b32.xlu0 %v2335, 64
        %v6520 = vpop.permute.xlu0 %6519
        %6521 = vrot.lane.b32.xlu0 %v2337, 64
        %v6522 = vpop.permute.xlu0 %6521
        %6523 = vrot.lane.b32.xlu0 %v2338, 64
        %v6524 = vpop.permute.xlu0 %6523
        %6525 = vrot.lane.b32.xlu0 %v2340, 64
        %v6526 = vpop.permute.xlu0 %6525
        %6527 = vrot.lane.b32.xlu0 %v2341, 64
        %v6528 = vpop.permute.xlu0 %6527
        %6529 = vrot.lane.b32.xlu0 %v2343, 64
        %v6530 = vpop.permute.xlu0 %6529
        %6531 = vrot.lane.b32.xlu0 %v2344, 64
        %v6532 = vpop.permute.xlu0 %6531
        %6533 = vrot.lane.b32.xlu0 %v2346, 64
        %v6534 = vpop.permute.xlu0 %6533
        %6535 = vrot.lane.b32.xlu0 %v2347, 64
        %v6536 = vpop.permute.xlu0 %6535
        %6537 = vrot.lane.b32.xlu0 %v2349, 64
        %v6538 = vpop.permute.xlu0 %6537
        %6539 = vrot.lane.b32.xlu0 %v2350, 64
        %v6540 = vpop.permute.xlu0 %6539
        %6541 = vrot.lane.b32.xlu0 %v2352, 64
        %v6542 = vpop.permute.xlu0 %6541
        %6543 = vrot.lane.b32.xlu0 %v2353, 64
        %v6544 = vpop.permute.xlu0 %6543
        %6545 = vrot.lane.b32.xlu0 %v2355, 64
        %v6546 = vpop.permute.xlu0 %6545
        %6547 = vrot.lane.b32.xlu0 %v2356, 64
        %v6548 = vpop.permute.xlu0 %6547
        %6549 = vrot.lane.b32.xlu0 %v2358, 64
        %v6550 = vpop.permute.xlu0 %6549
        %6551 = vrot.lane.b32.xlu0 %v2359, 64
        %v6552 = vpop.permute.xlu0 %6551
        %6617 = vrot.lane.b32.xlu0 %v5161, 72
        %v6618 = vpop.permute.xlu0 %6617
        %6619 = vrot.lane.b32.xlu0 %v5162, 72
        %v6620 = vpop.permute.xlu0 %6619
        %6621 = vrot.lane.b32.xlu0 %v5163, 72
        %v6622 = vpop.permute.xlu0 %6621
        %6623 = vrot.lane.b32.xlu0 %v5164, 72
        %v6624 = vpop.permute.xlu0 %6623
        %6625 = vrot.lane.b32.xlu0 %v5165, 72
        %v6626 = vpop.permute.xlu0 %6625
        %6627 = vrot.lane.b32.xlu0 %v5166, 72
        %v6628 = vpop.permute.xlu0 %6627
        %6629 = vrot.lane.b32.xlu0 %v5167, 72
        %v6630 = vpop.permute.xlu0 %6629
        %6631 = vrot.lane.b32.xlu0 %v5168, 72
        %v6632 = vpop.permute.xlu0 %6631
        %6633 = vrot.lane.b32.xlu0 %v5169, 72
        %v6634 = vpop.permute.xlu0 %6633
        %6635 = vrot.lane.b32.xlu0 %v5170, 72
        %v6636 = vpop.permute.xlu0 %6635
        %6637 = vrot.lane.b32.xlu0 %v5171, 72
        %v6638 = vpop.permute.xlu0 %6637
        %6639 = vrot.lane.b32.xlu0 %v5172, 72
        %v6640 = vpop.permute.xlu0 %6639
        %6641 = vrot.lane.b32.xlu0 %v5173, 72
        %v6642 = vpop.permute.xlu0 %6641
        %6643 = vrot.lane.b32.xlu0 %v5174, 72
        %v6644 = vpop.permute.xlu0 %6643
        %6645 = vrot.lane.b32.xlu0 %v5175, 72
        %v6646 = vpop.permute.xlu0 %6645
        %6647 = vrot.lane.b32.xlu0 %v5176, 72
        %v6648 = vpop.permute.xlu0 %6647
        %6649 = vrot.lane.b32.xlu0 %v5177, 72
        %v6650 = vpop.permute.xlu0 %6649
        %6651 = vrot.lane.b32.xlu0 %v5178, 72
        %v6652 = vpop.permute.xlu0 %6651
        %6653 = vrot.lane.b32.xlu0 %v5179, 72
        %v6654 = vpop.permute.xlu0 %6653
        %6655 = vrot.lane.b32.xlu0 %v5180, 72
        %v6656 = vpop.permute.xlu0 %6655
        %6657 = vrot.lane.b32.xlu0 %v5181, 72
        %v6658 = vpop.permute.xlu0 %6657
        %6659 = vrot.lane.b32.xlu0 %v5182, 72
        %v6660 = vpop.permute.xlu0 %6659
        %6661 = vrot.lane.b32.xlu0 %v5183, 72
        %v6662 = vpop.permute.xlu0 %6661
        %6663 = vrot.lane.b32.xlu0 %v5184, 72
        %v6664 = vpop.permute.xlu0 %6663
        %6665 = vrot.lane.b32.xlu0 %v5185, 72
        %v6666 = vpop.permute.xlu0 %6665
        %6667 = vrot.lane.b32.xlu0 %v5186, 72
        %v6668 = vpop.permute.xlu0 %6667
        %6669 = vrot.lane.b32.xlu0 %v5187, 72
        %v6670 = vpop.permute.xlu0 %6669
        %6671 = vrot.lane.b32.xlu0 %v5188, 72
        %v6672 = vpop.permute.xlu0 %6671
        %6673 = vrot.lane.b32.xlu0 %v5189, 72
        %v6674 = vpop.permute.xlu0 %6673
        %6675 = vrot.lane.b32.xlu0 %v5190, 72
        %v6676 = vpop.permute.xlu0 %6675
        %6677 = vrot.lane.b32.xlu0 %v5191, 72
        %v6678 = vpop.permute.xlu0 %6677
        %6679 = vrot.lane.b32.xlu0 %v5192, 72
        %v6680 = vpop.permute.xlu0 %6679
        %6715 = vrot.lane.b32.xlu0 %v5163, 80
        %v6716 = vpop.permute.xlu0 %6715
        %6717 = vrot.lane.b32.xlu0 %v5164, 80
        %v6718 = vpop.permute.xlu0 %6717
        %6719 = vrot.lane.b32.xlu0 %v5165, 80
        %v6720 = vpop.permute.xlu0 %6719
        %6721 = vrot.lane.b32.xlu0 %v5166, 80
        %v6722 = vpop.permute.xlu0 %6721
        %6723 = vrot.lane.b32.xlu0 %v5167, 80
        %v6724 = vpop.permute.xlu0 %6723
        %6725 = vrot.lane.b32.xlu0 %v5168, 80
        %v6726 = vpop.permute.xlu0 %6725
        %6727 = vrot.lane.b32.xlu0 %v5169, 80
        %v6728 = vpop.permute.xlu0 %6727
        %6729 = vrot.lane.b32.xlu0 %v5170, 80
        %v6730 = vpop.permute.xlu0 %6729
        %6731 = vrot.lane.b32.xlu0 %v5171, 80
        %v6732 = vpop.permute.xlu0 %6731
        %6733 = vrot.lane.b32.xlu0 %v5172, 80
        %v6734 = vpop.permute.xlu0 %6733
        %6735 = vrot.lane.b32.xlu0 %v5173, 80
        %v6736 = vpop.permute.xlu0 %6735
        %6737 = vrot.lane.b32.xlu0 %v5174, 80
        %v6738 = vpop.permute.xlu0 %6737
        %6739 = vrot.lane.b32.xlu0 %v5175, 80
        %v6740 = vpop.permute.xlu0 %6739
        %6741 = vrot.lane.b32.xlu0 %v5176, 80
        %v6742 = vpop.permute.xlu0 %6741
        %6743 = vrot.lane.b32.xlu0 %v5177, 80
        %v6744 = vpop.permute.xlu0 %6743
        %6745 = vrot.lane.b32.xlu0 %v5178, 80
        %v6746 = vpop.permute.xlu0 %6745
        %6747 = vrot.lane.b32.xlu0 %v5179, 80
        %v6748 = vpop.permute.xlu0 %6747
        %6749 = vrot.lane.b32.xlu0 %v5180, 80
        %v6750 = vpop.permute.xlu0 %6749
        %6751 = vrot.lane.b32.xlu0 %v5181, 80
        %v6752 = vpop.permute.xlu0 %6751
        %6753 = vrot.lane.b32.xlu0 %v5182, 80
        %v6754 = vpop.permute.xlu0 %6753
        %6755 = vrot.lane.b32.xlu0 %v5183, 80
        %v6756 = vpop.permute.xlu0 %6755
        %6757 = vrot.lane.b32.xlu0 %v5184, 80
        %v6758 = vpop.permute.xlu0 %6757
        %6759 = vrot.lane.b32.xlu0 %v5185, 80
        %v6760 = vpop.permute.xlu0 %6759
        %6761 = vrot.lane.b32.xlu0 %v5186, 80
        %v6762 = vpop.permute.xlu0 %6761
        %6763 = vrot.lane.b32.xlu0 %v5187, 80
        %v6764 = vpop.permute.xlu0 %6763
        %6765 = vrot.lane.b32.xlu0 %v5188, 80
        %v6766 = vpop.permute.xlu0 %6765
        %6767 = vrot.lane.b32.xlu0 %v5189, 80
        %v6768 = vpop.permute.xlu0 %6767
        %6769 = vrot.lane.b32.xlu0 %v5190, 80
        %v6770 = vpop.permute.xlu0 %6769
        %6771 = vrot.lane.b32.xlu0 %v5191, 80
        %v6772 = vpop.permute.xlu0 %6771
        %6773 = vrot.lane.b32.xlu0 %v5192, 80
        %v6774 = vpop.permute.xlu0 %6773
        %6775 = vrot.lane.b32.xlu0 %v5193, 80
        %v6776 = vpop.permute.xlu0 %6775
        %6777 = vrot.lane.b32.xlu0 %v5194, 80
        %v6778 = vpop.permute.xlu0 %6777
        %6813 = vrot.lane.b32.xlu0 %v5165, 88
        %v6814 = vpop.permute.xlu0 %6813
        %6815 = vrot.lane.b32.xlu0 %v5166, 88
        %v6816 = vpop.permute.xlu0 %6815
        %6817 = vrot.lane.b32.xlu0 %v5167, 88
        %v6818 = vpop.permute.xlu0 %6817
        %6819 = vrot.lane.b32.xlu0 %v5168, 88
        %v6820 = vpop.permute.xlu0 %6819
        %6821 = vrot.lane.b32.xlu0 %v5169, 88
        %v6822 = vpop.permute.xlu0 %6821
        %6823 = vrot.lane.b32.xlu0 %v5170, 88
        %v6824 = vpop.permute.xlu0 %6823
        %6825 = vrot.lane.b32.xlu0 %v5171, 88
        %v6826 = vpop.permute.xlu0 %6825
        %6827 = vrot.lane.b32.xlu0 %v5172, 88
        %v6828 = vpop.permute.xlu0 %6827
        %6829 = vrot.lane.b32.xlu0 %v5173, 88
        %v6830 = vpop.permute.xlu0 %6829
        %6831 = vrot.lane.b32.xlu0 %v5174, 88
        %v6832 = vpop.permute.xlu0 %6831
        %6833 = vrot.lane.b32.xlu0 %v5175, 88
        %v6834 = vpop.permute.xlu0 %6833
        %6835 = vrot.lane.b32.xlu0 %v5176, 88
        %v6836 = vpop.permute.xlu0 %6835
        %6837 = vrot.lane.b32.xlu0 %v5177, 88
        %v6838 = vpop.permute.xlu0 %6837
        %6839 = vrot.lane.b32.xlu0 %v5178, 88
        %v6840 = vpop.permute.xlu0 %6839
        %6841 = vrot.lane.b32.xlu0 %v5179, 88
        %v6842 = vpop.permute.xlu0 %6841
        %6843 = vrot.lane.b32.xlu0 %v5180, 88
        %v6844 = vpop.permute.xlu0 %6843
        %6845 = vrot.lane.b32.xlu0 %v5181, 88
        %v6846 = vpop.permute.xlu0 %6845
        %6847 = vrot.lane.b32.xlu0 %v5182, 88
        %v6848 = vpop.permute.xlu0 %6847
        %6849 = vrot.lane.b32.xlu0 %v5183, 88
        %v6850 = vpop.permute.xlu0 %6849
        %6851 = vrot.lane.b32.xlu0 %v5184, 88
        %v6852 = vpop.permute.xlu0 %6851
        %6853 = vrot.lane.b32.xlu0 %v5185, 88
        %v6854 = vpop.permute.xlu0 %6853
        %6855 = vrot.lane.b32.xlu0 %v5186, 88
        %v6856 = vpop.permute.xlu0 %6855
        %6857 = vrot.lane.b32.xlu0 %v5187, 88
        %v6858 = vpop.permute.xlu0 %6857
        %6859 = vrot.lane.b32.xlu0 %v5188, 88
        %v6860 = vpop.permute.xlu0 %6859
        %6861 = vrot.lane.b32.xlu0 %v5189, 88
        %v6862 = vpop.permute.xlu0 %6861
        %6863 = vrot.lane.b32.xlu0 %v5190, 88
        %v6864 = vpop.permute.xlu0 %6863
        %6865 = vrot.lane.b32.xlu0 %v5191, 88
        %v6866 = vpop.permute.xlu0 %6865
        %6867 = vrot.lane.b32.xlu0 %v5192, 88
        %v6868 = vpop.permute.xlu0 %6867
        %6869 = vrot.lane.b32.xlu0 %v5193, 88
        %v6870 = vpop.permute.xlu0 %6869
        %6871 = vrot.lane.b32.xlu0 %v5194, 88
        %v6872 = vpop.permute.xlu0 %6871
        %6873 = vrot.lane.b32.xlu0 %v5195, 88
        %v6874 = vpop.permute.xlu0 %6873
        %6875 = vrot.lane.b32.xlu0 %v5196, 88
        %v6876 = vpop.permute.xlu0 %6875
        %6911 = vrot.lane.b32.xlu0 %v5167, 96
        %v6912 = vpop.permute.xlu0 %6911
        %6913 = vrot.lane.b32.xlu0 %v5168, 96
        %v6914 = vpop.permute.xlu0 %6913
        %6915 = vrot.lane.b32.xlu0 %v5169, 96
        %v6916 = vpop.permute.xlu0 %6915
        %6917 = vrot.lane.b32.xlu0 %v5170, 96
        %v6918 = vpop.permute.xlu0 %6917
        %6919 = vrot.lane.b32.xlu0 %v5171, 96
        %v6920 = vpop.permute.xlu0 %6919
        %6921 = vrot.lane.b32.xlu0 %v5172, 96
        %v6922 = vpop.permute.xlu0 %6921
        %6923 = vrot.lane.b32.xlu0 %v5173, 96
        %v6924 = vpop.permute.xlu0 %6923
        %6925 = vrot.lane.b32.xlu0 %v5174, 96
        %v6926 = vpop.permute.xlu0 %6925
        %6927 = vrot.lane.b32.xlu0 %v5175, 96
        %v6928 = vpop.permute.xlu0 %6927
        %6929 = vrot.lane.b32.xlu0 %v5176, 96
        %v6930 = vpop.permute.xlu0 %6929
        %6931 = vrot.lane.b32.xlu0 %v5177, 96
        %v6932 = vpop.permute.xlu0 %6931
        %6933 = vrot.lane.b32.xlu0 %v5178, 96
        %v6934 = vpop.permute.xlu0 %6933
        %6935 = vrot.lane.b32.xlu0 %v5179, 96
        %v6936 = vpop.permute.xlu0 %6935
        %6937 = vrot.lane.b32.xlu0 %v5180, 96
        %v6938 = vpop.permute.xlu0 %6937
        %6939 = vrot.lane.b32.xlu0 %v5181, 96
        %v6940 = vpop.permute.xlu0 %6939
        %6941 = vrot.lane.b32.xlu0 %v5182, 96
        %v6942 = vpop.permute.xlu0 %6941
        %6943 = vrot.lane.b32.xlu0 %v5183, 96
        %v6944 = vpop.permute.xlu0 %6943
        %6945 = vrot.lane.b32.xlu0 %v5184, 96
        %v6946 = vpop.permute.xlu0 %6945
        %6947 = vrot.lane.b32.xlu0 %v5185, 96
        %v6948 = vpop.permute.xlu0 %6947
        %6949 = vrot.lane.b32.xlu0 %v5186, 96
        %v6950 = vpop.permute.xlu0 %6949
        %6951 = vrot.lane.b32.xlu0 %v5187, 96
        %v6952 = vpop.permute.xlu0 %6951
        %6953 = vrot.lane.b32.xlu0 %v5188, 96
        %v6954 = vpop.permute.xlu0 %6953
        %6955 = vrot.lane.b32.xlu0 %v5189, 96
        %v6956 = vpop.permute.xlu0 %6955
        %6957 = vrot.lane.b32.xlu0 %v5190, 96
        %v6958 = vpop.permute.xlu0 %6957
        %6959 = vrot.lane.b32.xlu0 %v5191, 96
        %v6960 = vpop.permute.xlu0 %6959
        %6961 = vrot.lane.b32.xlu0 %v5192, 96
        %v6962 = vpop.permute.xlu0 %6961
        %6963 = vrot.lane.b32.xlu0 %v5193, 96
        %v6964 = vpop.permute.xlu0 %6963
        %6965 = vrot.lane.b32.xlu0 %v5194, 96
        %v6966 = vpop.permute.xlu0 %6965
        %6967 = vrot.lane.b32.xlu0 %v5195, 96
        %v6968 = vpop.permute.xlu0 %6967
        %6969 = vrot.lane.b32.xlu0 %v5196, 96
        %v6970 = vpop.permute.xlu0 %6969
        %6971 = vrot.lane.b32.xlu0 %v5197, 96
        %v6972 = vpop.permute.xlu0 %6971
        %6973 = vrot.lane.b32.xlu0 %v5198, 96
        %v6974 = vpop.permute.xlu0 %6973
        %7009 = vrot.lane.b32.xlu0 %v5169, 104
        %v7010 = vpop.permute.xlu0 %7009
        %7011 = vrot.lane.b32.xlu0 %v5170, 104
        %v7012 = vpop.permute.xlu0 %7011
        %7013 = vrot.lane.b32.xlu0 %v5171, 104
        %v7014 = vpop.permute.xlu0 %7013
        %7015 = vrot.lane.b32.xlu0 %v5172, 104
        %v7016 = vpop.permute.xlu0 %7015
        %7017 = vrot.lane.b32.xlu0 %v5173, 104
        %v7018 = vpop.permute.xlu0 %7017
        %7019 = vrot.lane.b32.xlu0 %v5174, 104
        %v7020 = vpop.permute.xlu0 %7019
        %7021 = vrot.lane.b32.xlu0 %v5175, 104
        %v7022 = vpop.permute.xlu0 %7021
        %7023 = vrot.lane.b32.xlu0 %v5176, 104
        %v7024 = vpop.permute.xlu0 %7023
        %7025 = vrot.lane.b32.xlu0 %v5177, 104
        %v7026 = vpop.permute.xlu0 %7025
        %7027 = vrot.lane.b32.xlu0 %v5178, 104
        %v7028 = vpop.permute.xlu0 %7027
        %7029 = vrot.lane.b32.xlu0 %v5179, 104
        %v7030 = vpop.permute.xlu0 %7029
        %7031 = vrot.lane.b32.xlu0 %v5180, 104
        %v7032 = vpop.permute.xlu0 %7031
        %7033 = vrot.lane.b32.xlu0 %v5181, 104
        %v7034 = vpop.permute.xlu0 %7033
        %7035 = vrot.lane.b32.xlu0 %v5182, 104
        %v7036 = vpop.permute.xlu0 %7035
        %7037 = vrot.lane.b32.xlu0 %v5183, 104
        %v7038 = vpop.permute.xlu0 %7037
        %7039 = vrot.lane.b32.xlu0 %v5184, 104
        %v7040 = vpop.permute.xlu0 %7039
        %7041 = vrot.lane.b32.xlu0 %v5185, 104
        %v7042 = vpop.permute.xlu0 %7041
        %7043 = vrot.lane.b32.xlu0 %v5186, 104
        %v7044 = vpop.permute.xlu0 %7043
        %7045 = vrot.lane.b32.xlu0 %v5187, 104
        %v7046 = vpop.permute.xlu0 %7045
        %7047 = vrot.lane.b32.xlu0 %v5188, 104
        %v7048 = vpop.permute.xlu0 %7047
        %7049 = vrot.lane.b32.xlu0 %v5189, 104
        %v7050 = vpop.permute.xlu0 %7049
        %7051 = vrot.lane.b32.xlu0 %v5190, 104
        %v7052 = vpop.permute.xlu0 %7051
        %7053 = vrot.lane.b32.xlu0 %v5191, 104
        %v7054 = vpop.permute.xlu0 %7053
        %7055 = vrot.lane.b32.xlu0 %v5192, 104
        %v7056 = vpop.permute.xlu0 %7055
        %7057 = vrot.lane.b32.xlu0 %v5193, 104
        %v7058 = vpop.permute.xlu0 %7057
        %7059 = vrot.lane.b32.xlu0 %v5194, 104
        %v7060 = vpop.permute.xlu0 %7059
        %7061 = vrot.lane.b32.xlu0 %v5195, 104
        %v7062 = vpop.permute.xlu0 %7061
        %7063 = vrot.lane.b32.xlu0 %v5196, 104
        %v7064 = vpop.permute.xlu0 %7063
        %7065 = vrot.lane.b32.xlu0 %v5197, 104
        %v7066 = vpop.permute.xlu0 %7065
        %7067 = vrot.lane.b32.xlu0 %v5198, 104
        %v7068 = vpop.permute.xlu0 %7067
        %7069 = vrot.lane.b32.xlu0 %v5199, 104
        %v7070 = vpop.permute.xlu0 %7069
        %7071 = vrot.lane.b32.xlu0 %v5200, 104
        %v7072 = vpop.permute.xlu0 %7071
        %7107 = vrot.lane.b32.xlu0 %v5171, 112
        %v7108 = vpop.permute.xlu0 %7107
        %7109 = vrot.lane.b32.xlu0 %v5172, 112
        %v7110 = vpop.permute.xlu0 %7109
        %7111 = vrot.lane.b32.xlu0 %v5173, 112
        %v7112 = vpop.permute.xlu0 %7111
        %7113 = vrot.lane.b32.xlu0 %v5174, 112
        %v7114 = vpop.permute.xlu0 %7113
        %7115 = vrot.lane.b32.xlu0 %v5175, 112
        %v7116 = vpop.permute.xlu0 %7115
        %7117 = vrot.lane.b32.xlu0 %v5176, 112
        %v7118 = vpop.permute.xlu0 %7117
        %7119 = vrot.lane.b32.xlu0 %v5177, 112
        %v7120 = vpop.permute.xlu0 %7119
        %7121 = vrot.lane.b32.xlu0 %v5178, 112
        %v7122 = vpop.permute.xlu0 %7121
        %7123 = vrot.lane.b32.xlu0 %v5179, 112
        %v7124 = vpop.permute.xlu0 %7123
        %7125 = vrot.lane.b32.xlu0 %v5180, 112
        %v7126 = vpop.permute.xlu0 %7125
        %7127 = vrot.lane.b32.xlu0 %v5181, 112
        %v7128 = vpop.permute.xlu0 %7127
        %7129 = vrot.lane.b32.xlu0 %v5182, 112
        %v7130 = vpop.permute.xlu0 %7129
        %7131 = vrot.lane.b32.xlu0 %v5183, 112
        %v7132 = vpop.permute.xlu0 %7131
        %7133 = vrot.lane.b32.xlu0 %v5184, 112
        %v7134 = vpop.permute.xlu0 %7133
        %7135 = vrot.lane.b32.xlu0 %v5185, 112
        %v7136 = vpop.permute.xlu0 %7135
        %7137 = vrot.lane.b32.xlu0 %v5186, 112
        %v7138 = vpop.permute.xlu0 %7137
        %7139 = vrot.lane.b32.xlu0 %v5187, 112
        %v7140 = vpop.permute.xlu0 %7139
        %7141 = vrot.lane.b32.xlu0 %v5188, 112
        %v7142 = vpop.permute.xlu0 %7141
        %7143 = vrot.lane.b32.xlu0 %v5189, 112
        %v7144 = vpop.permute.xlu0 %7143
        %7145 = vrot.lane.b32.xlu0 %v5190, 112
        %v7146 = vpop.permute.xlu0 %7145
        %7147 = vrot.lane.b32.xlu0 %v5191, 112
        %v7148 = vpop.permute.xlu0 %7147
        %7149 = vrot.lane.b32.xlu0 %v5192, 112
        %v7150 = vpop.permute.xlu0 %7149
        %7151 = vrot.lane.b32.xlu0 %v5193, 112
        %v7152 = vpop.permute.xlu0 %7151
        %7153 = vrot.lane.b32.xlu0 %v5194, 112
        %v7154 = vpop.permute.xlu0 %7153
        %7155 = vrot.lane.b32.xlu0 %v5195, 112
        %v7156 = vpop.permute.xlu0 %7155
        %7157 = vrot.lane.b32.xlu0 %v5196, 112
        %v7158 = vpop.permute.xlu0 %7157
        %7159 = vrot.lane.b32.xlu0 %v5197, 112
        %v7160 = vpop.permute.xlu0 %7159
        %7161 = vrot.lane.b32.xlu0 %v5198, 112
        %v7162 = vpop.permute.xlu0 %7161
        %7163 = vrot.lane.b32.xlu0 %v5199, 112
        %v7164 = vpop.permute.xlu0 %7163
        %7165 = vrot.lane.b32.xlu0 %v5200, 112
        %v7166 = vpop.permute.xlu0 %7165
        %7167 = vrot.lane.b32.xlu0 %v5201, 112
        %v7168 = vpop.permute.xlu0 %7167
        %7169 = vrot.lane.b32.xlu0 %v5202, 112
        %v7170 = vpop.permute.xlu0 %7169
        %7205 = vrot.lane.b32.xlu0 %v5173, 120
        %v7206 = vpop.permute.xlu0 %7205
        %7207 = vrot.lane.b32.xlu0 %v5174, 120
        %v7208 = vpop.permute.xlu0 %7207
        %7209 = vrot.lane.b32.xlu0 %v5175, 120
        %v7210 = vpop.permute.xlu0 %7209
        %7211 = vrot.lane.b32.xlu0 %v5176, 120
        %v7212 = vpop.permute.xlu0 %7211
        %7213 = vrot.lane.b32.xlu0 %v5177, 120
        %v7214 = vpop.permute.xlu0 %7213
        %7215 = vrot.lane.b32.xlu0 %v5178, 120
        %v7216 = vpop.permute.xlu0 %7215
        %7217 = vrot.lane.b32.xlu0 %v5179, 120
        %v7218 = vpop.permute.xlu0 %7217
        %7219 = vrot.lane.b32.xlu0 %v5180, 120
        %v7220 = vpop.permute.xlu0 %7219
        %7221 = vrot.lane.b32.xlu0 %v5181, 120
        %v7222 = vpop.permute.xlu0 %7221
        %7223 = vrot.lane.b32.xlu0 %v5182, 120
        %v7224 = vpop.permute.xlu0 %7223
        %7225 = vrot.lane.b32.xlu0 %v5183, 120
        %v7226 = vpop.permute.xlu0 %7225
        %7227 = vrot.lane.b32.xlu0 %v5184, 120
        %v7228 = vpop.permute.xlu0 %7227
        %7229 = vrot.lane.b32.xlu0 %v5185, 120
        %v7230 = vpop.permute.xlu0 %7229
        %7231 = vrot.lane.b32.xlu0 %v5186, 120
        %v7232 = vpop.permute.xlu0 %7231
        %7233 = vrot.lane.b32.xlu0 %v5187, 120
        %v7234 = vpop.permute.xlu0 %7233
        %7235 = vrot.lane.b32.xlu0 %v5188, 120
        %v7236 = vpop.permute.xlu0 %7235
        %7237 = vrot.lane.b32.xlu0 %v5189, 120
        %v7238 = vpop.permute.xlu0 %7237
        %7239 = vrot.lane.b32.xlu0 %v5190, 120
        %v7240 = vpop.permute.xlu0 %7239
        %7241 = vrot.lane.b32.xlu0 %v5191, 120
        %v7242 = vpop.permute.xlu0 %7241
        %7243 = vrot.lane.b32.xlu0 %v5192, 120
        %v7244 = vpop.permute.xlu0 %7243
        %7245 = vrot.lane.b32.xlu0 %v5193, 120
        %v7246 = vpop.permute.xlu0 %7245
        %7247 = vrot.lane.b32.xlu0 %v5194, 120
        %v7248 = vpop.permute.xlu0 %7247
        %7249 = vrot.lane.b32.xlu0 %v5195, 120
        %v7250 = vpop.permute.xlu0 %7249
        %7251 = vrot.lane.b32.xlu0 %v5196, 120
        %v7252 = vpop.permute.xlu0 %7251
        %7253 = vrot.lane.b32.xlu0 %v5197, 120
        %v7254 = vpop.permute.xlu0 %7253
        %7255 = vrot.lane.b32.xlu0 %v5198, 120
        %v7256 = vpop.permute.xlu0 %7255
        %7257 = vrot.lane.b32.xlu0 %v5199, 120
        %v7258 = vpop.permute.xlu0 %7257
        %7259 = vrot.lane.b32.xlu0 %v5200, 120
        %v7260 = vpop.permute.xlu0 %7259
        %7261 = vrot.lane.b32.xlu0 %v5201, 120
        %v7262 = vpop.permute.xlu0 %7261
        %7263 = vrot.lane.b32.xlu0 %v5202, 120
        %v7264 = vpop.permute.xlu0 %7263
        %7265 = vrot.lane.b32.xlu0 %v5203, 120
        %v7266 = vpop.permute.xlu0 %7265
        %7267 = vrot.lane.b32.xlu0 %v5204, 120
        %v7268 = vpop.permute.xlu0 %7267
        %v7301 = vsel %vm1620, %v2312, %v5338
        %v7302 = vsel %vm1620, %v2313, %v5340
        %v7303 = vsel %vm1620, %v2315, %v5342
        %v7304 = vsel %vm1620, %v2316, %v5344
        %v7305 = vsel %vm1620, %v2318, %v5346
        %v7306 = vsel %vm1620, %v2319, %v5348
        %v7307 = vsel %vm1620, %v2321, %v5350
        %v7308 = vsel %vm1620, %v2322, %v5352
        %v7309 = vsel %vm1620, %v2324, %v5354
        %v7310 = vsel %vm1620, %v2325, %v5356
        %v7311 = vsel %vm1620, %v2327, %v5358
        %v7312 = vsel %vm1620, %v2328, %v5360
        %v7313 = vsel %vm1620, %v2330, %v5362
        %v7314 = vsel %vm1620, %v2331, %v5364
        %v7315 = vsel %vm1620, %v2333, %v5366
        %v7316 = vsel %vm1620, %v2334, %v5368
        %v7317 = vsel %vm1620, %v2336, %v5370
        %v7318 = vsel %vm1620, %v2337, %v5372
        %v7319 = vsel %vm1620, %v2339, %v5374
        %v7320 = vsel %vm1620, %v2340, %v5376
        %v7321 = vsel %vm1620, %v2342, %v5378
        %v7322 = vsel %vm1620, %v2343, %v5380
        %v7323 = vsel %vm1620, %v2345, %v5382
        %v7324 = vsel %vm1620, %v2346, %v5384
        %v7325 = vsel %vm1620, %v2348, %v5386
        %v7326 = vsel %vm1620, %v2349, %v5388
        %v7327 = vsel %vm1620, %v2351, %v5390
        %v7328 = vsel %vm1620, %v2352, %v5392
        %v7329 = vsel %vm1620, %v2354, %v5394
        %v7330 = vsel %vm1620, %v2355, %v5396
        %v7331 = vsel %vm1620, %v2357, %v5398
        %v7332 = vsel %vm1620, %v2358, %v5400
        %v7333 = vsel %vm1718, %v7301, %v5514
        %v7334 = vsel %vm1718, %v7302, %v5516
        %v7335 = vsel %vm1718, %v7303, %v5518
        %v7336 = vsel %vm1718, %v7304, %v5520
        %v7337 = vsel %vm1718, %v7305, %v5522
        %v7338 = vsel %vm1718, %v7306, %v5524
        %v7339 = vsel %vm1718, %v7307, %v5526
        %v7340 = vsel %vm1718, %v7308, %v5528
        %v7341 = vsel %vm1718, %v7309, %v5530
        %v7342 = vsel %vm1718, %v7310, %v5532
        %v7343 = vsel %vm1718, %v7311, %v5534
        %v7344 = vsel %vm1718, %v7312, %v5536
        %v7345 = vsel %vm1718, %v7313, %v5538
        %v7346 = vsel %vm1718, %v7314, %v5540
        %v7347 = vsel %vm1718, %v7315, %v5542
        %v7348 = vsel %vm1718, %v7316, %v5544
        %v7349 = vsel %vm1718, %v7317, %v5546
        %v7350 = vsel %vm1718, %v7318, %v5548
        %v7351 = vsel %vm1718, %v7319, %v5550
        %v7352 = vsel %vm1718, %v7320, %v5552
        %v7353 = vsel %vm1718, %v7321, %v5554
        %v7354 = vsel %vm1718, %v7322, %v5556
        %v7355 = vsel %vm1718, %v7323, %v5558
        %v7356 = vsel %vm1718, %v7324, %v5560
        %v7357 = vsel %vm1718, %v7325, %v5562
        %v7358 = vsel %vm1718, %v7326, %v5564
        %v7359 = vsel %vm1718, %v7327, %v5566
        %v7360 = vsel %vm1718, %v7328, %v5568
        %v7361 = vsel %vm1718, %v7329, %v5570
        %v7362 = vsel %vm1718, %v7330, %v5572
        %v7363 = vsel %vm1718, %v7331, %v5574
        %v7364 = vsel %vm1718, %v7332, %v5576
        %v7365 = vsel %vm1816, %v7333, %v5690
        %v7366 = vsel %vm1816, %v7334, %v5692
        %v7367 = vsel %vm1816, %v7335, %v5694
        %v7368 = vsel %vm1816, %v7336, %v5696
        %v7369 = vsel %vm1816, %v7337, %v5698
        %v7370 = vsel %vm1816, %v7338, %v5700
        %v7371 = vsel %vm1816, %v7339, %v5702
        %v7372 = vsel %vm1816, %v7340, %v5704
        %v7373 = vsel %vm1816, %v7341, %v5706
        %v7374 = vsel %vm1816, %v7342, %v5708
        %v7375 = vsel %vm1816, %v7343, %v5710
        %v7376 = vsel %vm1816, %v7344, %v5712
        %v7377 = vsel %vm1816, %v7345, %v5714
        %v7378 = vsel %vm1816, %v7346, %v5716
        %v7379 = vsel %vm1816, %v7347, %v5718
        %v7380 = vsel %vm1816, %v7348, %v5720
        %v7381 = vsel %vm1816, %v7349, %v5722
        %v7382 = vsel %vm1816, %v7350, %v5724
        %v7383 = vsel %vm1816, %v7351, %v5726
        %v7384 = vsel %vm1816, %v7352, %v5728
        %v7385 = vsel %vm1816, %v7353, %v5730
        %v7386 = vsel %vm1816, %v7354, %v5732
        %v7387 = vsel %vm1816, %v7355, %v5734
        %v7388 = vsel %vm1816, %v7356, %v5736
        %v7389 = vsel %vm1816, %v7357, %v5738
        %v7390 = vsel %vm1816, %v7358, %v5740
        %v7391 = vsel %vm1816, %v7359, %v5742
        %v7392 = vsel %vm1816, %v7360, %v5744
        %v7393 = vsel %vm1816, %v7361, %v5746
        %v7394 = vsel %vm1816, %v7362, %v5748
        %v7395 = vsel %vm1816, %v7363, %v5750
        %v7396 = vsel %vm1816, %v7364, %v5752
        %v7397 = vsel %vm1914, %v7365, %v5866
        %v7398 = vsel %vm1914, %v7366, %v5868
        %v7399 = vsel %vm1914, %v7367, %v5870
        %v7400 = vsel %vm1914, %v7368, %v5872
        %v7401 = vsel %vm1914, %v7369, %v5874
        %v7402 = vsel %vm1914, %v7370, %v5876
        %v7403 = vsel %vm1914, %v7371, %v5878
        %v7404 = vsel %vm1914, %v7372, %v5880
        %v7405 = vsel %vm1914, %v7373, %v5882
        %v7406 = vsel %vm1914, %v7374, %v5884
        %v7407 = vsel %vm1914, %v7375, %v5886
        %v7408 = vsel %vm1914, %v7376, %v5888
        %v7409 = vsel %vm1914, %v7377, %v5890
        %v7410 = vsel %vm1914, %v7378, %v5892
        %v7411 = vsel %vm1914, %v7379, %v5894
        %v7412 = vsel %vm1914, %v7380, %v5896
        %v7413 = vsel %vm1914, %v7381, %v5898
        %v7414 = vsel %vm1914, %v7382, %v5900
        %v7415 = vsel %vm1914, %v7383, %v5902
        %v7416 = vsel %vm1914, %v7384, %v5904
        %v7417 = vsel %vm1914, %v7385, %v5906
        %v7418 = vsel %vm1914, %v7386, %v5908
        %v7419 = vsel %vm1914, %v7387, %v5910
        %v7420 = vsel %vm1914, %v7388, %v5912
        %v7421 = vsel %vm1914, %v7389, %v5914
        %v7422 = vsel %vm1914, %v7390, %v5916
        %v7423 = vsel %vm1914, %v7391, %v5918
        %v7424 = vsel %vm1914, %v7392, %v5920
        %v7425 = vsel %vm1914, %v7393, %v5922
        %v7426 = vsel %vm1914, %v7394, %v5924
        %v7427 = vsel %vm1914, %v7395, %v5926
        %v7428 = vsel %vm1914, %v7396, %v5928
        %vm7429 = vcmask 326656
        %v7430 = vsel %vm7429, %v7397, %v6042
        %v7431 = vsel %vm7429, %v7398, %v6044
        %v7432 = vsel %vm7429, %v7399, %v6046
        %v7433 = vsel %vm7429, %v7400, %v6048
        %v7434 = vsel %vm7429, %v7401, %v6050
        %v7435 = vsel %vm7429, %v7402, %v6052
        %v7436 = vsel %vm7429, %v7403, %v6054
        %v7437 = vsel %vm7429, %v7404, %v6056
        %v7438 = vsel %vm7429, %v7405, %v6058
        %v7439 = vsel %vm7429, %v7406, %v6060
        %v7440 = vsel %vm7429, %v7407, %v6062
        %v7441 = vsel %vm7429, %v7408, %v6064
        %v7442 = vsel %vm7429, %v7409, %v6066
        %v7443 = vsel %vm7429, %v7410, %v6068
        %v7444 = vsel %vm7429, %v7411, %v6070
        %v7445 = vsel %vm7429, %v7412, %v6072
        %v7446 = vsel %vm7429, %v7413, %v6074
        %v7447 = vsel %vm7429, %v7414, %v6076
        %v7448 = vsel %vm7429, %v7415, %v6078
        %v7449 = vsel %vm7429, %v7416, %v6080
        %v7450 = vsel %vm7429, %v7417, %v6082
        %v7451 = vsel %vm7429, %v7418, %v6084
        %v7452 = vsel %vm7429, %v7419, %v6086
        %v7453 = vsel %vm7429, %v7420, %v6088
        %v7454 = vsel %vm7429, %v7421, %v6090
        %v7455 = vsel %vm7429, %v7422, %v6092
        %v7456 = vsel %vm7429, %v7423, %v6094
        %v7457 = vsel %vm7429, %v7424, %v6096
        %v7458 = vsel %vm7429, %v7425, %v6098
        %v7459 = vsel %vm7429, %v7426, %v6100
        %v7460 = vsel %vm7429, %v7427, %v6102
        %v7461 = vsel %vm7429, %v7428, %v6104
        %vm7462 = vcmask 392192
        %v7463 = vsel %vm7462, %v7430, %v6218
        %v7464 = vsel %vm7462, %v7431, %v6220
        %v7465 = vsel %vm7462, %v7432, %v6222
        %v7466 = vsel %vm7462, %v7433, %v6224
        %v7467 = vsel %vm7462, %v7434, %v6226
        %v7468 = vsel %vm7462, %v7435, %v6228
        %v7469 = vsel %vm7462, %v7436, %v6230
        %v7470 = vsel %vm7462, %v7437, %v6232
        %v7471 = vsel %vm7462, %v7438, %v6234
        %v7472 = vsel %vm7462, %v7439, %v6236
        %v7473 = vsel %vm7462, %v7440, %v6238
        %v7474 = vsel %vm7462, %v7441, %v6240
        %v7475 = vsel %vm7462, %v7442, %v6242
        %v7476 = vsel %vm7462, %v7443, %v6244
        %v7477 = vsel %vm7462, %v7444, %v6246
        %v7478 = vsel %vm7462, %v7445, %v6248
        %v7479 = vsel %vm7462, %v7446, %v6250
        %v7480 = vsel %vm7462, %v7447, %v6252
        %v7481 = vsel %vm7462, %v7448, %v6254
        %v7482 = vsel %vm7462, %v7449, %v6256
        %v7483 = vsel %vm7462, %v7450, %v6258
        %v7484 = vsel %vm7462, %v7451, %v6260
        %v7485 = vsel %vm7462, %v7452, %v6262
        %v7486 = vsel %vm7462, %v7453, %v6264
        %v7487 = vsel %vm7462, %v7454, %v6266
        %v7488 = vsel %vm7462, %v7455, %v6268
        %v7489 = vsel %vm7462, %v7456, %v6270
        %v7490 = vsel %vm7462, %v7457, %v6272
        %v7491 = vsel %vm7462, %v7458, %v6274
        %v7492 = vsel %vm7462, %v7459, %v6276
        %v7493 = vsel %vm7462, %v7460, %v6278
        %v7494 = vsel %vm7462, %v7461, %v6280
        %vm7495 = vcmask 457728
        %v7496 = vsel %vm7495, %v7463, %v6394
        %v7497 = vsel %vm7495, %v7464, %v6396
        %v7498 = vsel %vm7495, %v7465, %v6398
        %v7499 = vsel %vm7495, %v7466, %v6400
        %v7500 = vsel %vm7495, %v7467, %v6402
        %v7501 = vsel %vm7495, %v7468, %v6404
        %v7502 = vsel %vm7495, %v7469, %v6406
        %v7503 = vsel %vm7495, %v7470, %v6408
        %v7504 = vsel %vm7495, %v7471, %v6410
        %v7505 = vsel %vm7495, %v7472, %v6412
        %v7506 = vsel %vm7495, %v7473, %v6414
        %v7507 = vsel %vm7495, %v7474, %v6416
        %v7508 = vsel %vm7495, %v7475, %v6418
        %v7509 = vsel %vm7495, %v7476, %v6420
        %v7510 = vsel %vm7495, %v7477, %v6422
        %v7511 = vsel %vm7495, %v7478, %v6424
        %v7512 = vsel %vm7495, %v7479, %v6426
        %v7513 = vsel %vm7495, %v7480, %v6428
        %v7514 = vsel %vm7495, %v7481, %v6430
        %v7515 = vsel %vm7495, %v7482, %v6432
        %v7516 = vsel %vm7495, %v7483, %v6434
        %v7517 = vsel %vm7495, %v7484, %v6436
        %v7518 = vsel %vm7495, %v7485, %v6438
        %v7519 = vsel %vm7495, %v7486, %v6440
        %v7520 = vsel %vm7495, %v7487, %v6442
        %v7521 = vsel %vm7495, %v7488, %v6444
        %v7522 = vsel %vm7495, %v7489, %v6446
        %v7523 = vsel %vm7495, %v7490, %v6448
        %v7524 = vsel %vm7495, %v7491, %v6450
        %v7525 = vsel %vm7495, %v7492, %v6452
        %v7526 = vsel %vm7495, %v7493, %v6454
        %v7527 = vsel %vm7495, %v7494, %v6456
        %vm7528 = vcmask 523264
        %v7529 = vsel %vm7528, %v7496, %v6490
        %v7530 = vsel %vm7528, %v7497, %v6492
        %v7531 = vsel %vm7528, %v7498, %v6494
        %v7532 = vsel %vm7528, %v7499, %v6496
        %v7533 = vsel %vm7528, %v7500, %v6498
        %v7534 = vsel %vm7528, %v7501, %v6500
        %v7535 = vsel %vm7528, %v7502, %v6502
        %v7536 = vsel %vm7528, %v7503, %v6504
        %v7537 = vsel %vm7528, %v7504, %v6506
        %v7538 = vsel %vm7528, %v7505, %v6508
        %v7539 = vsel %vm7528, %v7506, %v6510
        %v7540 = vsel %vm7528, %v7507, %v6512
        %v7541 = vsel %vm7528, %v7508, %v6514
        %v7542 = vsel %vm7528, %v7509, %v6516
        %v7543 = vsel %vm7528, %v7510, %v6518
        %v7544 = vsel %vm7528, %v7511, %v6520
        %v7545 = vsel %vm7528, %v7512, %v6522
        %v7546 = vsel %vm7528, %v7513, %v6524
        %v7547 = vsel %vm7528, %v7514, %v6526
        %v7548 = vsel %vm7528, %v7515, %v6528
        %v7549 = vsel %vm7528, %v7516, %v6530
        %v7550 = vsel %vm7528, %v7517, %v6532
        %v7551 = vsel %vm7528, %v7518, %v6534
        %v7552 = vsel %vm7528, %v7519, %v6536
        %v7553 = vsel %vm7528, %v7520, %v6538
        %v7554 = vsel %vm7528, %v7521, %v6540
        %v7555 = vsel %vm7528, %v7522, %v6542
        %v7556 = vsel %vm7528, %v7523, %v6544
        %v7557 = vsel %vm7528, %v7524, %v6546
        %v7558 = vsel %vm7528, %v7525, %v6548
        %v7559 = vsel %vm7528, %v7526, %v6550
        %v7560 = vsel %vm7528, %v7527, %v6552
        %vm7561 = vcmask 588800
        %v7562 = vsel %vm7561, %v7529, %v6618
        %v7563 = vsel %vm7561, %v7530, %v6620
        %v7564 = vsel %vm7561, %v7531, %v6622
        %v7565 = vsel %vm7561, %v7532, %v6624
        %v7566 = vsel %vm7561, %v7533, %v6626
        %v7567 = vsel %vm7561, %v7534, %v6628
        %v7568 = vsel %vm7561, %v7535, %v6630
        %v7569 = vsel %vm7561, %v7536, %v6632
        %v7570 = vsel %vm7561, %v7537, %v6634
        %v7571 = vsel %vm7561, %v7538, %v6636
        %v7572 = vsel %vm7561, %v7539, %v6638
        %v7573 = vsel %vm7561, %v7540, %v6640
        %v7574 = vsel %vm7561, %v7541, %v6642
        %v7575 = vsel %vm7561, %v7542, %v6644
        %v7576 = vsel %vm7561, %v7543, %v6646
        %v7577 = vsel %vm7561, %v7544, %v6648
        %v7578 = vsel %vm7561, %v7545, %v6650
        %v7579 = vsel %vm7561, %v7546, %v6652
        %v7580 = vsel %vm7561, %v7547, %v6654
        %v7581 = vsel %vm7561, %v7548, %v6656
        %v7582 = vsel %vm7561, %v7549, %v6658
        %v7583 = vsel %vm7561, %v7550, %v6660
        %v7584 = vsel %vm7561, %v7551, %v6662
        %v7585 = vsel %vm7561, %v7552, %v6664
        %v7586 = vsel %vm7561, %v7553, %v6666
        %v7587 = vsel %vm7561, %v7554, %v6668
        %v7588 = vsel %vm7561, %v7555, %v6670
        %v7589 = vsel %vm7561, %v7556, %v6672
        %v7590 = vsel %vm7561, %v7557, %v6674
        %v7591 = vsel %vm7561, %v7558, %v6676
        %v7592 = vsel %vm7561, %v7559, %v6678
        %v7593 = vsel %vm7561, %v7560, %v6680
        %vm7594 = vcmask 654336
        %v7595 = vsel %vm7594, %v7562, %v6716
        %v7596 = vsel %vm7594, %v7563, %v6718
        %v7597 = vsel %vm7594, %v7564, %v6720
        %v7598 = vsel %vm7594, %v7565, %v6722
        %v7599 = vsel %vm7594, %v7566, %v6724
        %v7600 = vsel %vm7594, %v7567, %v6726
        %v7601 = vsel %vm7594, %v7568, %v6728
        %v7602 = vsel %vm7594, %v7569, %v6730
        %v7603 = vsel %vm7594, %v7570, %v6732
        %v7604 = vsel %vm7594, %v7571, %v6734
        %v7605 = vsel %vm7594, %v7572, %v6736
        %v7606 = vsel %vm7594, %v7573, %v6738
        %v7607 = vsel %vm7594, %v7574, %v6740
        %v7608 = vsel %vm7594, %v7575, %v6742
        %v7609 = vsel %vm7594, %v7576, %v6744
        %v7610 = vsel %vm7594, %v7577, %v6746
        %v7611 = vsel %vm7594, %v7578, %v6748
        %v7612 = vsel %vm7594, %v7579, %v6750
        %v7613 = vsel %vm7594, %v7580, %v6752
        %v7614 = vsel %vm7594, %v7581, %v6754
        %v7615 = vsel %vm7594, %v7582, %v6756
        %v7616 = vsel %vm7594, %v7583, %v6758
        %v7617 = vsel %vm7594, %v7584, %v6760
        %v7618 = vsel %vm7594, %v7585, %v6762
        %v7619 = vsel %vm7594, %v7586, %v6764
        %v7620 = vsel %vm7594, %v7587, %v6766
        %v7621 = vsel %vm7594, %v7588, %v6768
        %v7622 = vsel %vm7594, %v7589, %v6770
        %v7623 = vsel %vm7594, %v7590, %v6772
        %v7624 = vsel %vm7594, %v7591, %v6774
        %v7625 = vsel %vm7594, %v7592, %v6776
        %v7626 = vsel %vm7594, %v7593, %v6778
        %vm7627 = vcmask 719872
        %v7628 = vsel %vm7627, %v7595, %v6814
        %v7629 = vsel %vm7627, %v7596, %v6816
        %v7630 = vsel %vm7627, %v7597, %v6818
        %v7631 = vsel %vm7627, %v7598, %v6820
        %v7632 = vsel %vm7627, %v7599, %v6822
        %v7633 = vsel %vm7627, %v7600, %v6824
        %v7634 = vsel %vm7627, %v7601, %v6826
        %v7635 = vsel %vm7627, %v7602, %v6828
        %v7636 = vsel %vm7627, %v7603, %v6830
        %v7637 = vsel %vm7627, %v7604, %v6832
        %v7638 = vsel %vm7627, %v7605, %v6834
        %v7639 = vsel %vm7627, %v7606, %v6836
        %v7640 = vsel %vm7627, %v7607, %v6838
        %v7641 = vsel %vm7627, %v7608, %v6840
        %v7642 = vsel %vm7627, %v7609, %v6842
        %v7643 = vsel %vm7627, %v7610, %v6844
        %v7644 = vsel %vm7627, %v7611, %v6846
        %v7645 = vsel %vm7627, %v7612, %v6848
        %v7646 = vsel %vm7627, %v7613, %v6850
        %v7647 = vsel %vm7627, %v7614, %v6852
        %v7648 = vsel %vm7627, %v7615, %v6854
        %v7649 = vsel %vm7627, %v7616, %v6856
        %v7650 = vsel %vm7627, %v7617, %v6858
        %v7651 = vsel %vm7627, %v7618, %v6860
        %v7652 = vsel %vm7627, %v7619, %v6862
        %v7653 = vsel %vm7627, %v7620, %v6864
        %v7654 = vsel %vm7627, %v7621, %v6866
        %v7655 = vsel %vm7627, %v7622, %v6868
        %v7656 = vsel %vm7627, %v7623, %v6870
        %v7657 = vsel %vm7627, %v7624, %v6872
        %v7658 = vsel %vm7627, %v7625, %v6874
        %v7659 = vsel %vm7627, %v7626, %v6876
        %vm7660 = vcmask 785408
        %v7661 = vsel %vm7660, %v7628, %v6912
        %v7662 = vsel %vm7660, %v7629, %v6914
        %v7663 = vsel %vm7660, %v7630, %v6916
        %v7664 = vsel %vm7660, %v7631, %v6918
        %v7665 = vsel %vm7660, %v7632, %v6920
        %v7666 = vsel %vm7660, %v7633, %v6922
        %v7667 = vsel %vm7660, %v7634, %v6924
        %v7668 = vsel %vm7660, %v7635, %v6926
        %v7669 = vsel %vm7660, %v7636, %v6928
        %v7670 = vsel %vm7660, %v7637, %v6930
        %v7671 = vsel %vm7660, %v7638, %v6932
        %v7672 = vsel %vm7660, %v7639, %v6934
        %v7673 = vsel %vm7660, %v7640, %v6936
        %v7674 = vsel %vm7660, %v7641, %v6938
        %v7675 = vsel %vm7660, %v7642, %v6940
        %v7676 = vsel %vm7660, %v7643, %v6942
        %v7677 = vsel %vm7660, %v7644, %v6944
        %v7678 = vsel %vm7660, %v7645, %v6946
        %v7679 = vsel %vm7660, %v7646, %v6948
        %v7680 = vsel %vm7660, %v7647, %v6950
        %v7681 = vsel %vm7660, %v7648, %v6952
        %v7682 = vsel %vm7660, %v7649, %v6954
        %v7683 = vsel %vm7660, %v7650, %v6956
        %v7684 = vsel %vm7660, %v7651, %v6958
        %v7685 = vsel %vm7660, %v7652, %v6960
        %v7686 = vsel %vm7660, %v7653, %v6962
        %v7687 = vsel %vm7660, %v7654, %v6964
        %v7688 = vsel %vm7660, %v7655, %v6966
        %v7689 = vsel %vm7660, %v7656, %v6968
        %v7690 = vsel %vm7660, %v7657, %v6970
        %v7691 = vsel %vm7660, %v7658, %v6972
        %v7692 = vsel %vm7660, %v7659, %v6974
        %vm7693 = vcmask 850944
        %v7694 = vsel %vm7693, %v7661, %v7010
        %v7695 = vsel %vm7693, %v7662, %v7012
        %v7696 = vsel %vm7693, %v7663, %v7014
        %v7697 = vsel %vm7693, %v7664, %v7016
        %v7698 = vsel %vm7693, %v7665, %v7018
        %v7699 = vsel %vm7693, %v7666, %v7020
        %v7700 = vsel %vm7693, %v7667, %v7022
        %v7701 = vsel %vm7693, %v7668, %v7024
        %v7702 = vsel %vm7693, %v7669, %v7026
        %v7703 = vsel %vm7693, %v7670, %v7028
        %v7704 = vsel %vm7693, %v7671, %v7030
        %v7705 = vsel %vm7693, %v7672, %v7032
        %v7706 = vsel %vm7693, %v7673, %v7034
        %v7707 = vsel %vm7693, %v7674, %v7036
        %v7708 = vsel %vm7693, %v7675, %v7038
        %v7709 = vsel %vm7693, %v7676, %v7040
        %v7710 = vsel %vm7693, %v7677, %v7042
        %v7711 = vsel %vm7693, %v7678, %v7044
        %v7712 = vsel %vm7693, %v7679, %v7046
        %v7713 = vsel %vm7693, %v7680, %v7048
        %v7714 = vsel %vm7693, %v7681, %v7050
        %v7715 = vsel %vm7693, %v7682, %v7052
        %v7716 = vsel %vm7693, %v7683, %v7054
        %v7717 = vsel %vm7693, %v7684, %v7056
        %v7718 = vsel %vm7693, %v7685, %v7058
        %v7719 = vsel %vm7693, %v7686, %v7060
        %v7720 = vsel %vm7693, %v7687, %v7062
        %v7721 = vsel %vm7693, %v7688, %v7064
        %v7722 = vsel %vm7693, %v7689, %v7066
        %v7723 = vsel %vm7693, %v7690, %v7068
        %v7724 = vsel %vm7693, %v7691, %v7070
        %v7725 = vsel %vm7693, %v7692, %v7072
        %vm7726 = vcmask 916480
        %v7727 = vsel %vm7726, %v7694, %v7108
        %v7728 = vsel %vm7726, %v7695, %v7110
        %v7729 = vsel %vm7726, %v7696, %v7112
        %v7730 = vsel %vm7726, %v7697, %v7114
        %v7731 = vsel %vm7726, %v7698, %v7116
        %v7732 = vsel %vm7726, %v7699, %v7118
        %v7733 = vsel %vm7726, %v7700, %v7120
        %v7734 = vsel %vm7726, %v7701, %v7122
        %v7735 = vsel %vm7726, %v7702, %v7124
        %v7736 = vsel %vm7726, %v7703, %v7126
        %v7737 = vsel %vm7726, %v7704, %v7128
        %v7738 = vsel %vm7726, %v7705, %v7130
        %v7739 = vsel %vm7726, %v7706, %v7132
        %v7740 = vsel %vm7726, %v7707, %v7134
        %v7741 = vsel %vm7726, %v7708, %v7136
        %v7742 = vsel %vm7726, %v7709, %v7138
        %v7743 = vsel %vm7726, %v7710, %v7140
        %v7744 = vsel %vm7726, %v7711, %v7142
        %v7745 = vsel %vm7726, %v7712, %v7144
        %v7746 = vsel %vm7726, %v7713, %v7146
        %v7747 = vsel %vm7726, %v7714, %v7148
        %v7748 = vsel %vm7726, %v7715, %v7150
        %v7749 = vsel %vm7726, %v7716, %v7152
        %v7750 = vsel %vm7726, %v7717, %v7154
        %v7751 = vsel %vm7726, %v7718, %v7156
        %v7752 = vsel %vm7726, %v7719, %v7158
        %v7753 = vsel %vm7726, %v7720, %v7160
        %v7754 = vsel %vm7726, %v7721, %v7162
        %v7755 = vsel %vm7726, %v7722, %v7164
        %v7756 = vsel %vm7726, %v7723, %v7166
        %v7757 = vsel %vm7726, %v7724, %v7168
        %v7758 = vsel %vm7726, %v7725, %v7170
        %vm7759 = vcmask 982016
        %v7760 = vsel %vm7759, %v7727, %v7206
        %v7761 = vsel %vm7759, %v7728, %v7208
        %v7762 = vsel %vm7759, %v7729, %v7210
        %v7763 = vsel %vm7759, %v7730, %v7212
        %v7764 = vsel %vm7759, %v7731, %v7214
        %v7765 = vsel %vm7759, %v7732, %v7216
        %v7766 = vsel %vm7759, %v7733, %v7218
        %v7767 = vsel %vm7759, %v7734, %v7220
        %v7768 = vsel %vm7759, %v7735, %v7222
        %v7769 = vsel %vm7759, %v7736, %v7224
        %v7770 = vsel %vm7759, %v7737, %v7226
        %v7771 = vsel %vm7759, %v7738, %v7228
        %v7772 = vsel %vm7759, %v7739, %v7230
        %v7773 = vsel %vm7759, %v7740, %v7232
        %v7774 = vsel %vm7759, %v7741, %v7234
        %v7775 = vsel %vm7759, %v7742, %v7236
        %v7776 = vsel %vm7759, %v7743, %v7238
        %v7777 = vsel %vm7759, %v7744, %v7240
        %v7778 = vsel %vm7759, %v7745, %v7242
        %v7779 = vsel %vm7759, %v7746, %v7244
        %v7780 = vsel %vm7759, %v7747, %v7246
        %v7781 = vsel %vm7759, %v7748, %v7248
        %v7782 = vsel %vm7759, %v7749, %v7250
        %v7783 = vsel %vm7759, %v7750, %v7252
        %v7784 = vsel %vm7759, %v7751, %v7254
        %v7785 = vsel %vm7759, %v7752, %v7256
        %v7786 = vsel %vm7759, %v7753, %v7258
        %v7787 = vsel %vm7759, %v7754, %v7260
        %v7788 = vsel %vm7759, %v7755, %v7262
        %v7789 = vsel %vm7759, %v7756, %v7264
        %v7790 = vsel %vm7759, %v7757, %v7266
        %v7791 = vsel %vm7759, %v7758, %v7268
        %7796 = vrot.lane.b32.xlu0 %v5177, 8
        %v7797 = vpop.permute.xlu0 %7796
        %7798 = vrot.lane.b32.xlu0 %v5178, 8
        %v7799 = vpop.permute.xlu0 %7798
        %7800 = vrot.lane.b32.xlu0 %v5179, 8
        %v7801 = vpop.permute.xlu0 %7800
        %7802 = vrot.lane.b32.xlu0 %v5180, 8
        %v7803 = vpop.permute.xlu0 %7802
        %7804 = vrot.lane.b32.xlu0 %v5181, 8
        %v7805 = vpop.permute.xlu0 %7804
        %7806 = vrot.lane.b32.xlu0 %v5182, 8
        %v7807 = vpop.permute.xlu0 %7806
        %7808 = vrot.lane.b32.xlu0 %v5183, 8
        %v7809 = vpop.permute.xlu0 %7808
        %7810 = vrot.lane.b32.xlu0 %v5184, 8
        %v7811 = vpop.permute.xlu0 %7810
        %7812 = vrot.lane.b32.xlu0 %v5185, 8
        %v7813 = vpop.permute.xlu0 %7812
        %7814 = vrot.lane.b32.xlu0 %v5186, 8
        %v7815 = vpop.permute.xlu0 %7814
        %7816 = vrot.lane.b32.xlu0 %v5187, 8
        %v7817 = vpop.permute.xlu0 %7816
        %7818 = vrot.lane.b32.xlu0 %v5188, 8
        %v7819 = vpop.permute.xlu0 %7818
        %7820 = vrot.lane.b32.xlu0 %v5189, 8
        %v7821 = vpop.permute.xlu0 %7820
        %7822 = vrot.lane.b32.xlu0 %v5190, 8
        %v7823 = vpop.permute.xlu0 %7822
        %7824 = vrot.lane.b32.xlu0 %v5191, 8
        %v7825 = vpop.permute.xlu0 %7824
        %7826 = vrot.lane.b32.xlu0 %v5192, 8
        %v7827 = vpop.permute.xlu0 %7826
        %7828 = vrot.lane.b32.xlu0 %v5193, 8
        %v7829 = vpop.permute.xlu0 %7828
        %7830 = vrot.lane.b32.xlu0 %v5194, 8
        %v7831 = vpop.permute.xlu0 %7830
        %7832 = vrot.lane.b32.xlu0 %v5195, 8
        %v7833 = vpop.permute.xlu0 %7832
        %7834 = vrot.lane.b32.xlu0 %v5196, 8
        %v7835 = vpop.permute.xlu0 %7834
        %7836 = vrot.lane.b32.xlu0 %v5197, 8
        %v7837 = vpop.permute.xlu0 %7836
        %7838 = vrot.lane.b32.xlu0 %v5198, 8
        %v7839 = vpop.permute.xlu0 %7838
        %7840 = vrot.lane.b32.xlu0 %v5199, 8
        %v7841 = vpop.permute.xlu0 %7840
        %7842 = vrot.lane.b32.xlu0 %v5200, 8
        %v7843 = vpop.permute.xlu0 %7842
        %7844 = vrot.lane.b32.xlu0 %v5201, 8
        %v7845 = vpop.permute.xlu0 %7844
        %7846 = vrot.lane.b32.xlu0 %v5202, 8
        %v7847 = vpop.permute.xlu0 %7846
        %7848 = vrot.lane.b32.xlu0 %v5203, 8
        %v7849 = vpop.permute.xlu0 %7848
        %7850 = vrot.lane.b32.xlu0 %v5204, 8
        %v7851 = vpop.permute.xlu0 %7850
        %7852 = vrot.lane.b32.xlu0 %v5205, 8
        %v7853 = vpop.permute.xlu0 %7852
        %7854 = vrot.lane.b32.xlu0 %v5206, 8
        %v7855 = vpop.permute.xlu0 %7854
        %7856 = vrot.lane.b32.xlu0 %v5207, 8
        %v7857 = vpop.permute.xlu0 %7856
        %7858 = vrot.lane.b32.xlu0 %v5208, 8
        %v7859 = vpop.permute.xlu0 %7858
        %v7892 = vsel %vm1620, %v5175, %v7797
        %v7893 = vsel %vm1620, %v5176, %v7799
        %v7894 = vsel %vm1620, %v5177, %v7801
        %v7895 = vsel %vm1620, %v5178, %v7803
        %v7896 = vsel %vm1620, %v5179, %v7805
        %v7897 = vsel %vm1620, %v5180, %v7807
        %v7898 = vsel %vm1620, %v5181, %v7809
        %v7899 = vsel %vm1620, %v5182, %v7811
        %v7900 = vsel %vm1620, %v5183, %v7813
        %v7901 = vsel %vm1620, %v5184, %v7815
        %v7902 = vsel %vm1620, %v5185, %v7817
        %v7903 = vsel %vm1620, %v5186, %v7819
        %v7904 = vsel %vm1620, %v5187, %v7821
        %v7905 = vsel %vm1620, %v5188, %v7823
        %v7906 = vsel %vm1620, %v5189, %v7825
        %v7907 = vsel %vm1620, %v5190, %v7827
        %v7908 = vsel %vm1620, %v5191, %v7829
        %v7909 = vsel %vm1620, %v5192, %v7831
        %v7910 = vsel %vm1620, %v5193, %v7833
        %v7911 = vsel %vm1620, %v5194, %v7835
        %v7912 = vsel %vm1620, %v5195, %v7837
        %v7913 = vsel %vm1620, %v5196, %v7839
        %v7914 = vsel %vm1620, %v5197, %v7841
        %v7915 = vsel %vm1620, %v5198, %v7843
        %v7916 = vsel %vm1620, %v5199, %v7845
        %v7917 = vsel %vm1620, %v5200, %v7847
        %v7918 = vsel %vm1620, %v5201, %v7849
        %v7919 = vsel %vm1620, %v5202, %v7851
        %v7920 = vsel %vm1620, %v5203, %v7853
        %v7921 = vsel %vm1620, %v5204, %v7855
        %v7922 = vsel %vm1620, %v5205, %v7857
        %v7923 = vsel %vm1620, %v5206, %v7859
        %v7924 = vpack.c.bf16 %v7761, %v7760
        %v7925 = vpack.c.bf16 %v7893, %v7892
        %v7926 = vpack.c.bf16 %v7763, %v7762
        %v7927 = vpack.c.bf16 %v7895, %v7894
        %v7928 = vpack.c.bf16 %v7765, %v7764
        %v7929 = vpack.c.bf16 %v7897, %v7896
        %v7930 = vpack.c.bf16 %v7767, %v7766
        %v7931 = vpack.c.bf16 %v7899, %v7898
        %v7932 = vpack.c.bf16 %v7769, %v7768
        %v7933 = vpack.c.bf16 %v7901, %v7900
        %v7934 = vpack.c.bf16 %v7771, %v7770
        %v7935 = vpack.c.bf16 %v7903, %v7902
        %v7936 = vpack.c.bf16 %v7773, %v7772
        %v7937 = vpack.c.bf16 %v7905, %v7904
        %v7938 = vpack.c.bf16 %v7775, %v7774
        %v7939 = vpack.c.bf16 %v7907, %v7906
        %v7940 = vpack.c.bf16 %v7777, %v7776
        %v7941 = vpack.c.bf16 %v7909, %v7908
        %v7942 = vpack.c.bf16 %v7779, %v7778
        %v7943 = vpack.c.bf16 %v7911, %v7910
        %v7944 = vpack.c.bf16 %v7781, %v7780
        %v7945 = vpack.c.bf16 %v7913, %v7912
        %v7946 = vpack.c.bf16 %v7783, %v7782
        %v7947 = vpack.c.bf16 %v7915, %v7914
        %v7948 = vpack.c.bf16 %v7785, %v7784
        %v7949 = vpack.c.bf16 %v7917, %v7916
        %v7950 = vpack.c.bf16 %v7787, %v7786
        %v7951 = vpack.c.bf16 %v7919, %v7918
        %v7952 = vpack.c.bf16 %v7789, %v7788
        %v7953 = vpack.c.bf16 %v7921, %v7920
        %v7954 = vpack.c.bf16 %v7791, %v7790
        %v7955 = vpack.c.bf16 %v7923, %v7922
        %v7956 = vld [vmem:[%s3] sm:$0xf]
        %v7957 = vld [vmem:[%s3 + $0x4] sm:$0xf]
        %v7958 = vld [vmem:[%s3 + $0x8] sm:$0xf]
        %v7959 = vld [vmem:[%s3 + $0xc] sm:$0xf]
        %v7960 = vld [vmem:[%s3 + $0x10] sm:$0xf]
        %v7961 = vld [vmem:[%s3 + $0x14] sm:$0xf]
        %v7962 = vld [vmem:[%s3 + $0x18] sm:$0xf]
        %v7963 = vld [vmem:[%s3 + $0x1c] sm:$0xf]
        %v7964 = vld [vmem:[%s3 + $0x20] sm:$0xf]
        %v7965 = vld [vmem:[%s3 + $0x24] sm:$0xf]
        %v7966 = vld [vmem:[%s3 + $0x28] sm:$0xf]
        %v7967 = vld [vmem:[%s3 + $0x2c] sm:$0xf]
        %v7968 = vld [vmem:[%s3 + $0x30] sm:$0xf]
        %v7969 = vld [vmem:[%s3 + $0x34] sm:$0xf]
        %v7970 = vld [vmem:[%s3 + $0x38] sm:$0xf]
        %v7971 = vld [vmem:[%s3 + $0x3c] sm:$0xf]
        %v7972 = vld [vmem:[%s3 + $0x40] sm:$0xf]
        %v7973 = vld [vmem:[%s3 + $0x44] sm:$0xf]
        %v7974 = vld [vmem:[%s6] sm:$0x1]
        %v7976 = vlaneseq
        %v7977 = vshrl.u32 %v7976, 7
        %v7978 = vsub.s32 0, %v7977
        %v7979 = vrot.slane %v7974, %v7978
        %v7999 = vunpack.c.l.b16 %v7956
        %v8000 = vunpack.c.l.b16 %v7957
        %v8001 = vunpack.c.l.b16 %v7958
        %v8002 = vunpack.c.l.b16 %v7959
        %v8003 = vunpack.c.l.b16 %v7960
        %v8004 = vunpack.c.l.b16 %v7961
        %v8005 = vunpack.c.l.b16 %v7962
        %v8006 = vunpack.c.l.b16 %v7963
        %v8007 = vunpack.c.l.b16 %v7964
        %v8008 = vunpack.c.l.b16 %v7965
        %v8009 = vunpack.c.l.b16 %v7966
        %v8010 = vunpack.c.l.b16 %v7967
        %v8011 = vunpack.c.l.b16 %v7968
        %v8012 = vunpack.c.l.b16 %v7969
        %v8013 = vunpack.c.l.b16 %v7970
        %v8014 = vunpack.c.l.b16 %v7971
        %v8015 = vunpack.c.l.b16 %v7972
        %v8016 = vunpack.c.l.b16 %v7973
        %v8017 = vpack.c.b16 %v8000, %v7999
        %v8018 = vpack.c.b16 %v8002, %v8001
        %v8019 = vpack.c.b16 %v8004, %v8003
        %v8020 = vpack.c.b16 %v8006, %v8005
        %v8021 = vpack.c.b16 %v8008, %v8007
        %v8022 = vpack.c.b16 %v8010, %v8009
        %v8023 = vpack.c.b16 %v8012, %v8011
        %v8024 = vpack.c.b16 %v8014, %v8013
        %v8025 = vpack.c.b16 %v8016, %v8015
        %v8036 = vsel %vm1718, %v7925, 0
        %v8039 = vsel %vm1718, %v7927, 0
        %v8042 = vsel %vm1718, %v7929, 0
        %v8045 = vsel %vm1718, %v7931, 0
        %v8048 = vsel %vm1718, %v7933, 0
        %v8051 = vsel %vm1718, %v7935, 0
        %v8054 = vsel %vm1718, %v7937, 0
        %v8057 = vsel %vm1718, %v7939, 0
        %v8060 = vsel %vm1718, %v7941, 0
        %v8063 = vsel %vm1718, %v7943, 0
        %v8066 = vsel %vm1718, %v7945, 0
        %v8069 = vsel %vm1718, %v7947, 0
        %v8072 = vsel %vm1718, %v7949, 0
        %v8075 = vsel %vm1718, %v7951, 0
        %v8078 = vsel %vm1718, %v7953, 0
        %v8081 = vsel %vm1718, %v7955, 0
        %8083 = vmatprep.subr.bf16.mxu0 0
        %8084 = vmatpush1.bf16.msra.mxu0 %v8017
        %8085 = vmatprep.subr.bf16.mxu0 0
        %8086 = vmatpush1.bf16.msra.mxu0 %v8018
        %8087 = vmatprep.subr.bf16.mxu0 0
        %8088 = vmatpush1.bf16.msra.mxu0 %v8019
        %8089 = vmatprep.subr.bf16.mxu0 0
        %8090 = vmatpush1.bf16.msra.mxu0 %v8020
        %8091 = vmatprep.subr.bf16.mxu0 0
        %8092 = vmatpush1.bf16.msra.mxu0 %v8021
        %8093 = vmatprep.subr.bf16.mxu0 0
        %8094 = vmatpush1.bf16.msra.mxu0 %v8022
        %8095 = vmatprep.subr.bf16.mxu0 0
        %8096 = vmatpush1.bf16.msra.mxu0 %v8023
        %8097 = vmatprep.subr.bf16.mxu0 0
        %8098 = vmatpush1.bf16.msra.mxu0 %v8024
        %8099 = vmatprep.subr.bf16.mxu0 0
        %8100 = vmatpush1.bf16.msra.mxu0 %v8025
        %8101 = vmatprep.subr.bf16.mxu0 0
        %8102 = vmatpush1.bf16.msra.mxu0 0
        %8103 = vmatprep.subr.bf16.mxu0 0
        %8104 = vmatpush1.bf16.msra.mxu0 0
        %8105 = vmatprep.subr.bf16.mxu0 0
        %8106 = vmatpush1.bf16.msra.mxu0 0
        %8107 = vmatprep.subr.bf16.mxu0 0
        %8108 = vmatpush1.bf16.msra.mxu0 0
        %8109 = vmatprep.subr.bf16.mxu0 0
        %8110 = vmatpush1.bf16.msra.mxu0 0
        %8111 = vmatprep.subr.bf16.mxu0 0
        %8112 = vmatpush1.bf16.msra.mxu0 0
        %8113 = vmatprep.subr.bf16.mxu0 0
        %8114 = vmatpush1.bf16.msra.mxu0 0
        %8115 = vmatprep.mubr.bf16.mxu0 %v8036
        %8116 = vmatmul.mubr.bf16.gmra.mrb[0].mxu0 %v7924
        %v8117 = vpop.f32.mrb[0].mxu0
        %v8118 = vadd.f32 %v7979, %v8117
        %v8119 = vpop.f32.mrb[0].mxu0
        %v8120 = vpop.f32.mrb[0].mxu0
        %v8121 = vadd.f32 %v7979, %v8120
        %v8122 = vpop.f32.mrb[0].mxu0
        %8123 = vmatprep.mubr.bf16.mxu0 %v8039
        %8124 = vmatmul.mubr.bf16.gmra.mrb[0].mxu0 %v7926
        %v8125 = vpop.f32.mrb[0].mxu0
        %v8126 = vadd.f32 %v7979, %v8125
        %v8127 = vpop.f32.mrb[0].mxu0
        %v8128 = vpop.f32.mrb[0].mxu0
        %v8129 = vadd.f32 %v7979, %v8128
        %v8130 = vpop.f32.mrb[0].mxu0
        %8131 = vmatprep.mubr.bf16.mxu0 %v8042
        %8132 = vmatmul.mubr.bf16.gmra.mrb[0].mxu0 %v7928
        %v8133 = vpop.f32.mrb[0].mxu0
        %v8134 = vadd.f32 %v7979, %v8133
        %v8135 = vpop.f32.mrb[0].mxu0
        %v8136 = vpop.f32.mrb[0].mxu0
        %v8137 = vadd.f32 %v7979, %v8136
        %v8138 = vpop.f32.mrb[0].mxu0
        %8139 = vmatprep.mubr.bf16.mxu0 %v8045
        %8140 = vmatmul.mubr.bf16.gmra.mrb[0].mxu0 %v7930
        %v8141 = vpop.f32.mrb[0].mxu0
        %v8142 = vadd.f32 %v7979, %v8141
        %v8143 = vpop.f32.mrb[0].mxu0
        %v8144 = vpop.f32.mrb[0].mxu0
        %v8145 = vadd.f32 %v7979, %v8144
        %v8146 = vpop.f32.mrb[0].mxu0
        %8147 = vmatprep.mubr.bf16.mxu0 %v8048
        %8148 = vmatmul.mubr.bf16.gmra.mrb[0].mxu0 %v7932
        %v8149 = vpop.f32.mrb[0].mxu0
        %v8150 = vadd.f32 %v7979, %v8149
        %v8151 = vpop.f32.mrb[0].mxu0
        %v8152 = vpop.f32.mrb[0].mxu0
        %v8153 = vadd.f32 %v7979, %v8152
        %v8154 = vpop.f32.mrb[0].mxu0
        %8155 = vmatprep.mubr.bf16.mxu0 %v8051
        %8156 = vmatmul.mubr.bf16.gmra.mrb[0].mxu0 %v7934
        %v8157 = vpop.f32.mrb[0].mxu0
        %v8158 = vadd.f32 %v7979, %v8157
        %v8159 = vpop.f32.mrb[0].mxu0
        %v8160 = vpop.f32.mrb[0].mxu0
        %v8161 = vadd.f32 %v7979, %v8160
        %v8162 = vpop.f32.mrb[0].mxu0
        %8163 = vmatprep.mubr.bf16.mxu0 %v8054
        %8164 = vmatmul.mubr.bf16.gmra.mrb[0].mxu0 %v7936
        %v8165 = vpop.f32.mrb[0].mxu0
        %v8166 = vadd.f32 %v7979, %v8165
        %v8167 = vpop.f32.mrb[0].mxu0
        %v8168 = vpop.f32.mrb[0].mxu0
        %v8169 = vadd.f32 %v7979, %v8168
        %v8170 = vpop.f32.mrb[0].mxu0
        %8171 = vmatprep.mubr.bf16.mxu0 %v8057
        %8172 = vmatmul.mubr.bf16.gmra.mrb[0].mxu0 %v7938
        %v8173 = vpop.f32.mrb[0].mxu0
        %v8174 = vadd.f32 %v7979, %v8173
        %v8175 = vpop.f32.mrb[0].mxu0
        %v8176 = vpop.f32.mrb[0].mxu0
        %v8177 = vadd.f32 %v7979, %v8176
        %v8178 = vpop.f32.mrb[0].mxu0
        %8179 = vmatprep.mubr.bf16.mxu0 %v8060
        %8180 = vmatmul.mubr.bf16.gmra.mrb[0].mxu0 %v7940
        %v8181 = vpop.f32.mrb[0].mxu0
        %v8182 = vadd.f32 %v7979, %v8181
        %v8183 = vpop.f32.mrb[0].mxu0
        %v8184 = vpop.f32.mrb[0].mxu0
        %v8185 = vadd.f32 %v7979, %v8184
        %v8186 = vpop.f32.mrb[0].mxu0
        %8187 = vmatprep.mubr.bf16.mxu0 %v8063
        %8188 = vmatmul.mubr.bf16.gmra.mrb[0].mxu0 %v7942
        %v8189 = vpop.f32.mrb[0].mxu0
        %v8190 = vadd.f32 %v7979, %v8189
        %v8191 = vpop.f32.mrb[0].mxu0
        %v8192 = vpop.f32.mrb[0].mxu0
        %v8193 = vadd.f32 %v7979, %v8192
        %v8194 = vpop.f32.mrb[0].mxu0
        %8195 = vmatprep.mubr.bf16.mxu0 %v8066
        %8196 = vmatmul.mubr.bf16.gmra.mrb[0].mxu0 %v7944
        %v8197 = vpop.f32.mrb[0].mxu0
        %v8198 = vadd.f32 %v7979, %v8197
        %v8199 = vpop.f32.mrb[0].mxu0
        %v8200 = vpop.f32.mrb[0].mxu0
        %v8201 = vadd.f32 %v7979, %v8200
        %v8202 = vpop.f32.mrb[0].mxu0
        %8203 = vmatprep.mubr.bf16.mxu0 %v8069
        %8204 = vmatmul.mubr.bf16.gmra.mrb[0].mxu0 %v7946
        %v8205 = vpop.f32.mrb[0].mxu0
        %v8206 = vadd.f32 %v7979, %v8205
        %v8207 = vpop.f32.mrb[0].mxu0
        %v8208 = vpop.f32.mrb[0].mxu0
        %v8209 = vadd.f32 %v7979, %v8208
        %v8210 = vpop.f32.mrb[0].mxu0
        %8211 = vmatprep.mubr.bf16.mxu0 %v8072
        %8212 = vmatmul.mubr.bf16.gmra.mrb[0].mxu0 %v7948
        %v8213 = vpop.f32.mrb[0].mxu0
        %v8214 = vadd.f32 %v7979, %v8213
        %v8215 = vpop.f32.mrb[0].mxu0
        %v8216 = vpop.f32.mrb[0].mxu0
        %v8217 = vadd.f32 %v7979, %v8216
        %v8218 = vpop.f32.mrb[0].mxu0
        %8219 = vmatprep.mubr.bf16.mxu0 %v8075
        %8220 = vmatmul.mubr.bf16.gmra.mrb[0].mxu0 %v7950
        %v8221 = vpop.f32.mrb[0].mxu0
        %v8222 = vadd.f32 %v7979, %v8221
        %v8223 = vpop.f32.mrb[0].mxu0
        %v8224 = vpop.f32.mrb[0].mxu0
        %v8225 = vadd.f32 %v7979, %v8224
        %v8226 = vpop.f32.mrb[0].mxu0
        %8227 = vmatprep.mubr.bf16.mxu0 %v8078
        %8228 = vmatmul.mubr.bf16.gmra.mrb[0].mxu0 %v7952
        %v8229 = vpop.f32.mrb[0].mxu0
        %v8230 = vadd.f32 %v7979, %v8229
        %v8231 = vpop.f32.mrb[0].mxu0
        %v8232 = vpop.f32.mrb[0].mxu0
        %v8233 = vadd.f32 %v7979, %v8232
        %v8234 = vpop.f32.mrb[0].mxu0
        %8235 = vmatprep.mubr.bf16.mxu0 %v8081
        %8236 = vmatmul.mubr.bf16.gmra.mrb[0].mxu0 %v7954
        %v8237 = vpop.f32.mrb[0].mxu0
        %v8238 = vadd.f32 %v7979, %v8237
        %v8239 = vpop.f32.mrb[0].mxu0
        %v8240 = vpop.f32.mrb[0].mxu0
        %v8241 = vadd.f32 %v7979, %v8240
        %v8242 = vpop.f32.mrb[0].mxu0
        %8243 = vdwg.mxu0
        %8244 = vxpose.xlu0.b32.start [1/16] %v8118, 128
        %8245 = vxpose.xlu0.b32.cont [2/16] %v8121, 128
        %8246 = vxpose.xlu0.b32.cont [3/16] %v8126, 128
        %8247 = vxpose.xlu0.b32.cont [4/16] %v8129, 128
        %8248 = vxpose.xlu0.b32.cont [5/16] %v8134, 128
        %8249 = vxpose.xlu0.b32.cont [6/16] %v8137, 128
        %8250 = vxpose.xlu0.b32.cont [7/16] %v8142, 128
        %8251 = vxpose.xlu0.b32.cont [8/16] %v8145, 128
        %8252 = vxpose.xlu0.b32.cont [9/16] %v8150, 128
        %8253 = vxpose.xlu0.b32.cont [10/16] %v8153, 128
        %8254 = vxpose.xlu0.b32.cont [11/16] %v8158, 128
        %8255 = vxpose.xlu0.b32.cont [12/16] %v8161, 128
        %8256 = vxpose.xlu0.b32.cont [13/16] %v8166, 128
        %8257 = vxpose.xlu0.b32.cont [14/16] %v8169, 128
        %8258 = vxpose.xlu0.b32.cont [15/16] %v8174, 128
        %8259 = vxpose.xlu0.b32.end [16/16] %v8177, 128
        %v8260 = vpop.trf.xlu0
        %v8261 = vpop.trf.xlu0
        %v8262 = vpop.trf.xlu0
        %v8263 = vpop.trf.xlu0
        %v8264 = vpop.trf.xlu0
        %v8265 = vpop.trf.xlu0
        %v8266 = vpop.trf.xlu0
        %v8267 = vpop.trf.xlu0
        %v8268 = vpop.trf.xlu0
        %v8269 = vpop.trf.xlu0
        %v8270 = vpop.trf.xlu0
        %v8271 = vpop.trf.xlu0
        %v8272 = vpop.trf.xlu0
        %v8273 = vpop.trf.xlu0
        %v8274 = vpop.trf.xlu0
        %v8275 = vpop.trf.xlu0
        %8276 = vxpose.xlu0.b32.start [1/16] %v8182, 128
        %8277 = vxpose.xlu0.b32.cont [2/16] %v8185, 128
        %8278 = vxpose.xlu0.b32.cont [3/16] %v8190, 128
        %8279 = vxpose.xlu0.b32.cont [4/16] %v8193, 128
        %8280 = vxpose.xlu0.b32.cont [5/16] %v8198, 128
        %8281 = vxpose.xlu0.b32.cont [6/16] %v8201, 128
        %8282 = vxpose.xlu0.b32.cont [7/16] %v8206, 128
        %8283 = vxpose.xlu0.b32.cont [8/16] %v8209, 128
        %8284 = vxpose.xlu0.b32.cont [9/16] %v8214, 128
        %8285 = vxpose.xlu0.b32.cont [10/16] %v8217, 128
        %8286 = vxpose.xlu0.b32.cont [11/16] %v8222, 128
        %8287 = vxpose.xlu0.b32.cont [12/16] %v8225, 128
        %8288 = vxpose.xlu0.b32.cont [13/16] %v8230, 128
        %8289 = vxpose.xlu0.b32.cont [14/16] %v8233, 128
        %8290 = vxpose.xlu0.b32.cont [15/16] %v8238, 128
        %8291 = vxpose.xlu0.b32.end [16/16] %v8241, 128
        %v8292 = vpop.trf.xlu0
        %v8293 = vpop.trf.xlu0
        %v8294 = vpop.trf.xlu0
        %v8295 = vpop.trf.xlu0
        %v8296 = vpop.trf.xlu0
        %v8297 = vpop.trf.xlu0
        %v8298 = vpop.trf.xlu0
        %v8299 = vpop.trf.xlu0
        %v8300 = vpop.trf.xlu0
        %v8301 = vpop.trf.xlu0
        %v8302 = vpop.trf.xlu0
        %v8303 = vpop.trf.xlu0
        %v8304 = vpop.trf.xlu0
        %v8305 = vpop.trf.xlu0
        %v8306 = vpop.trf.xlu0
        %v8307 = vpop.trf.xlu0
        %8308 = vst [vmem:[%s271] sm:$0xff] %v8260
        %8309 = vst [vmem:[%s271 + $0x8] sm:$0xff] %v8292
        %8310 = vst [vmem:[%s271 + $0x10] sm:$0xff] %v8261
        %8311 = vst [vmem:[%s271 + $0x18] sm:$0xff] %v8293
        %s8312 = sand.u32 %s181, 1
        %s8313 = scalar_lea.sflag [#allocation3], %s8312
        %s8314 = sand.u32 %s181, 1
        %s8315 = smul.addr %s8314, 32
        %s8316 = scalar_lea.vmem [#allocation2], %s8315
        // Predicated region
        $region49: #{tpu_custom_call.1} parent=47 // pred_check
          %p8317 = pneg %p191
        $region50: #{tpu_custom_call.1} parent=47 // pred_check_branch
          %8319 = sbr.rel (%p8317) target = $region52
        $region51: #{tpu_custom_call.1} parent=47 // pred_region
          %s8321 = ssub.s32 512, 512
          %8322 = vsyncadd %s8313, %s8321
          %s8323 = smul.addr %s21, 4
          %s8324 = smul.addr %s8323, 128
          %s8325 = scalar_lea.hbm %s7, %s8324
          %s8326 = sshll.u32 %s8316, 4
          %s8327 = int_to_ptr.vmem [resolvable:$true] %s8326
          %8332 = dma.vmem_to_hbm [thread:$0]  %s8327, 512, %s8325, %s8313, 256, 256, 16
        $region52: #{tpu_custom_call.1} parent=47 // pred_fallthru
          _
      $region48: #{tpu_custom_call.1} parent=5 // pred_fallthru
        _
      %p8333 = scmp.le.s32.totalorder 2, %s16
      // Predicated region
      $region53: #{tpu_custom_call.1} parent=5 // pred_check
        %p8334 = pneg %p8333
      $region54: #{tpu_custom_call.1} parent=5 // pred_check_branch
        %8336 = sbr.rel (%p8334) target = $region56
      $region55: #{tpu_custom_call.1} parent=5 // pred_region
        %s8337 = ssub.s32 %s16, 2
        // Predicated region
        $region57: #{tpu_custom_call.1} parent=55 // pred_check
          %p8338 = pneg %p197
        $region58: #{tpu_custom_call.1} parent=55 // pred_check_branch
          %8340 = sbr.rel (%p8338) target = $region60
        $region59: #{tpu_custom_call.1} parent=55 // pred_region
          %s8341 = sand.u32 %s182, 1
          %s8342 = scalar_lea.sflag [#allocation3], %s8341
          %s8343 = sand.u32 %s182, 1
          %s8344 = smul.addr %s8343, 32
          %s8345 = scalar_lea.vmem [#allocation2], %s8344
          %8346 = dma.done %s8342, 512
        $region60: #{tpu_custom_call.1} parent=55 // pred_fallthru
          _
      $region56: #{tpu_custom_call.1} parent=5 // pred_fallthru
        _
    $region6: #{tpu_custom_call.1} parent=1 // loop_footer
      %s20 = sadd.s32 1, %s16
    $region7: #{tpu_custom_call.1} parent=1 // loop_footer_branch
      %15 = sbr.rel target = $region3
    $region8: #{tpu_custom_call.1} parent=1 // loop_exit
      _
    %8347 = vsyncpa [#allocation3], 1
    %s8348 = scalar_lea.sflag [#allocation3], 1
    %8349 = vsyncpa %s8348, 1

</llo_original>
